<compile_context>
chip_gen: v5e
topology: v5e:2x2
jax: 0.10.0
libtpu: 0.0.40
codegen_flags: <defaults>
</compile_context>

<pallas_src>
import functools

import jax
import jax.numpy as jnp
from jax import lax
from jax.experimental import pallas as pl
from jax.experimental.pallas import tpu as pltpu

_VMEM_LIMIT = 48 * 1024 * 1024   # <= v7x physical VMEM (64 MiB), fine on v5e/v6e
_BN_EPS = 1e-5


def _tile(dim, target=512):
    """Largest 128-multiple <= target that divides dim, else the full dim."""
    if dim <= target:
        return dim
    for cand in range(target, 127, -128):
        if cand % 128 == 0 and dim % cand == 0:
            return cand
    return dim


# ----------------------------- Pallas kernels ------------------------------

def _fused_matmul_kernel(a_ref, w_ref, b_ref, o_ref, acc_ref, *,
                         bn, act, bn_groups, eps):
    """acc += a @ w over the K grid axis; epilogue = bias (+BN) (+act)."""
    k = pl.program_id(1)

    @pl.when(k == 0)
    def _():
        acc_ref[...] = jnp.zeros_like(acc_ref)

    acc_ref[...] += jnp.dot(a_ref[...], w_ref[...],
                            preferred_element_type=jnp.float32)

    @pl.when(k == pl.num_programs(1) - 1)
    def _():
        y = acc_ref[...] + b_ref[...]
        if bn:
            # training-mode BatchNorm: batch stats, biased var, gamma=1, beta=0
            mean = jnp.mean(y, axis=0, keepdims=True)          # per column
            if bn_groups > 1:
                # columns are bn_groups repeated channel blocks -> pool groups
                cw = y.shape[1] // bn_groups
                mg = sum(mean[:, g * cw:(g + 1) * cw]
                         for g in range(bn_groups)) / bn_groups
                mean = jnp.concatenate([mg] * bn_groups, axis=1)
            yc = y - mean
            var = jnp.mean(yc * yc, axis=0, keepdims=True)
            if bn_groups > 1:
                cw = y.shape[1] // bn_groups
                vg = sum(var[:, g * cw:(g + 1) * cw]
                         for g in range(bn_groups)) / bn_groups
                var = jnp.concatenate([vg] * bn_groups, axis=1)
            y = yc * lax.rsqrt(var + eps)
        if act == "relu":
            y = jnp.maximum(y, 0.0)
        elif act == "tanh_scaled":            # Tanh followed by x*0.5 + 0.5
            y = jnp.tanh(y) * 0.5 + 0.5
        o_ref[...] = y.astype(o_ref.dtype)


def _efc2_reparam_kernel(a_ref, w_ref, b_ref, eps_ref,
                         z_ref, mu_ref, lv_ref, acc_ref, *, nz):
    """Fused encode_fc[-1]: matmul + bias + mu/logvar split + reparametrize."""
    k = pl.program_id(0)

    @pl.when(k == 0)
    def _():
        acc_ref[...] = jnp.zeros_like(acc_ref)

    acc_ref[...] += jnp.dot(a_ref[...], w_ref[...],
                            preferred_element_type=jnp.float32)

    @pl.when(k == pl.num_programs(0) - 1)
    def _():
        dist = acc_ref[...] + b_ref[...]
        mu = dist[:, :nz]
        lv = dist[:, nz:]
        mu_ref[...] = mu
        lv_ref[...] = lv
        z_ref[...] = mu + jnp.exp(lv * 0.5) * eps_ref[...]


# ----------------------------- kernel wrappers ------------------------------

def fused_matmul(a, w, b, *, bn=False, act="none", bn_groups=1,
                 out_dtype=jnp.float32, tk_target=512, tn_target=512):
    """(M,K) @ (K,N) + bias [+BN(batch stats)] [+act], bf16 MXU / f32 acc."""
    M, K = a.shape
    N = w.shape[1]
    tk = _tile(K, tk_target)
    tn = N if (bn and bn_groups > 1) else _tile(N, tn_target)
    grid = (N // tn, K // tk)
    kern = functools.partial(_fused_matmul_kernel, bn=bn, act=act,
                             bn_groups=bn_groups, eps=_BN_EPS)
    return pl.pallas_call(
        kern,
        out_shape=jax.ShapeDtypeStruct((M, N), out_dtype),
        grid=grid,
        in_specs=[
            pl.BlockSpec((M, tk), lambda j, k: (0, k)),
            pl.BlockSpec((tk, tn), lambda j, k: (k, j)),
            pl.BlockSpec((1, tn), lambda j, k: (0, j)),
        ],
        out_specs=pl.BlockSpec((M, tn), lambda j, k: (0, j)),
        scratch_shapes=[pltpu.VMEM((M, tn), jnp.float32)],
        compiler_params=pltpu.CompilerParams(
            dimension_semantics=("parallel", "arbitrary"),
            vmem_limit_bytes=_VMEM_LIMIT),
    )(a.astype(jnp.bfloat16), w.astype(jnp.bfloat16),
      b.reshape(1, N).astype(jnp.float32))


def efc2_reparam(a, w, b, eps_noise, nz, *, tk_target=512):
    """Final encoder FC fused with mu/logvar slicing and reparametrization."""
    M, K = a.shape
    N = w.shape[1]                       # 2 * nz
    tk = _tile(K, tk_target)
    kern = functools.partial(_efc2_reparam_kernel, nz=nz)
    out_sds = jax.ShapeDtypeStruct((M, nz), jnp.float32)
    out_spec = pl.BlockSpec((M, nz), lambda k: (0, 0))
    z, mu, lv = pl.pallas_call(
        kern,
        out_shape=(out_sds, out_sds, out_sds),
        grid=(K // tk,),
        in_specs=[
            pl.BlockSpec((M, tk), lambda k: (0, k)),
            pl.BlockSpec((tk, N), lambda k: (k, 0)),
            pl.BlockSpec((1, N), lambda k: (0, 0)),
            pl.BlockSpec((M, nz), lambda k: (0, 0)),
        ],
        out_specs=(out_spec, out_spec, out_spec),
        scratch_shapes=[pltpu.VMEM((M, N), jnp.float32)],
        compiler_params=pltpu.CompilerParams(
            dimension_semantics=("arbitrary",),
            vmem_limit_bytes=_VMEM_LIMIT),
    )(a.astype(jnp.bfloat16), w.astype(jnp.bfloat16),
      b.reshape(1, N).astype(jnp.float32), eps_noise.astype(jnp.float32))
    return z, mu, lv


# ------------------------------- JAX glue ----------------------------------

def im2col(x_nhwc, k, stride, pad):
    """(B,H,W,C) -> (B*oh*ow, k*k*C) patch matrix (pure data movement)."""
    x = jnp.pad(x_nhwc, ((0, 0), (pad, pad), (pad, pad), (0, 0)))
    B, H, W, C = x.shape
    oh = (H - k) // stride + 1
    ow = (W - k) // stride + 1
    cols = []
    for dy in range(k):
        for dx in range(k):
            cols.append(
                x[:, dy:dy + stride * oh:stride, dx:dx + stride * ow:stride, :])
    patches = jnp.stack(cols, axis=3)                 # (B, oh, ow, k*k, C)
    return patches.reshape(B * oh * ow, k * k * C), oh, ow


def conv2d(x_nhwc, w_mat, b, *, k, stride, pad, bn, act, out_dtype):
    """PyTorch-semantics Conv2d with fused bias/BN/activation epilogue."""
    B = x_nhwc.shape[0]
    cols, oh, ow = im2col(x_nhwc, k, stride, pad)
    y = fused_matmul(cols, w_mat, b, bn=bn, act=act, out_dtype=out_dtype)
    return y.reshape(B, oh, ow, w_mat.shape[1])


def conv_transpose2d_s2k4(x_nhwc, w_mat, b_tiled, *, bn, act, out_dtype):
    """ConvTranspose2d(k=4, stride=2, pad=1) via subpixel decomposition.

    w_mat is the pre-built (9*Cin, 4*Cout) superset weight; the matmul over
    3x3 patches of the 1-padded input produces all 4 output parities at once
    (no zero-insertion upsampling). BN (if any) pools stats over the 4 parity
    groups inside the kernel; the parity interleave is a pure reshape here.
    """
    B, H, W, _ = x_nhwc.shape
    cout = w_mat.shape[1] // 4
    cols, _, _ = im2col(x_nhwc, 3, 1, 1)              # (B*H*W, 9*Cin)
    y = fused_matmul(cols, w_mat, b_tiled, bn=bn, act=act,
                     bn_groups=4 if bn else 1, out_dtype=out_dtype)
    y = y.reshape(B, H, W, 2, 2, cout).transpose(0, 1, 3, 2, 4, 5)
    return y.reshape(B, 2 * H, 2 * W, cout)


# ------------------------------- parameters --------------------------------

def init_params(key, nc, image_size, nz):
    """PyTorch-layout parameters (normal(0, 0.02) weights, zero biases)."""
    s4 = image_size // 4
    feat = 128 * s4 * s4
    ks = jax.random.split(key, 8)
    std = 0.02
    return dict(
        conv1_w=jax.random.normal(ks[0], (64, nc, 4, 4)) * std,
        conv1_b=jnp.zeros((64,)),
        conv2_w=jax.random.normal(ks[1], (128, 64, 4, 4)) * std,
        conv2_b=jnp.zeros((128,)),
        efc1_w=jax.random.normal(ks[2], (feat, 1024)) * std,
        efc1_b=jnp.zeros((1024,)),
        efc2_w=jax.random.normal(ks[3], (1024, 2 * nz)) * std,
        efc2_b=jnp.zeros((2 * nz,)),
        dfc1_w=jax.random.normal(ks[4], (nz, 1024)) * std,
        dfc1_b=jnp.zeros((1024,)),
        dfc2_w=jax.random.normal(ks[5], (1024, feat)) * std,
        dfc2_b=jnp.zeros((feat,)),
        dconv1_w=jax.random.normal(ks[6], (128, 64, 4, 4)) * std,
        dconv1_b=jnp.zeros((64,)),
        dconv2_w=jax.random.normal(ks[7], (64, nc, 4, 4)) * std,
        dconv2_b=jnp.zeros((nc,)),
    )


def prepare_params(params, nc, image_size, nz):
    """One-time weight re-layout: matmul layouts, channels-last FC permutes,
    subpixel deconv weight matrices, bf16 cast for MXU operands."""
    del nc, nz
    s4 = image_size // 4
    feat = 128 * s4 * s4

    def conv_w(w):                               # (O,I,k,k) -> (k*k*I, O)
        O, I, k, _ = w.shape
        return jnp.transpose(w, (2, 3, 1, 0)).reshape(k * k * I, O) \
                  .astype(jnp.bfloat16)

    def deconv_w(w):                             # (I,O,4,4) -> (9*I, 4*O)
        I, O, _, _ = w.shape
        wm = jnp.zeros((3, 3, I, 2, 2, O), jnp.float32)
        for ry in range(2):
            for rx in range(2):
                for u in range(3):
                    for v in range(3):
                        p = 3 + ry - 2 * u       # tap of the 4x4 transposed kernel
                        q = 3 + rx - 2 * v
                        if 0 <= p < 4 and 0 <= q < 4:
                            wm = wm.at[u, v, :, ry, rx, :].set(w[:, :, p, q])
        return wm.reshape(9 * I, 4 * O).astype(jnp.bfloat16)

    # permute efc1 rows / dfc2 cols from PyTorch NCHW-flatten to NHWC-flatten
    efc1_w = params["efc1_w"].reshape(128, s4, s4, 1024) \
                             .transpose(1, 2, 0, 3).reshape(feat, 1024)
    dfc2_w = params["dfc2_w"].reshape(1024, 128, s4, s4) \
                             .transpose(0, 2, 3, 1).reshape(1024, feat)
    dfc2_b = params["dfc2_b"].reshape(128, s4, s4).transpose(1, 2, 0).reshape(feat)

    return dict(
        conv1_w=conv_w(params["conv1_w"]), conv1_b=params["conv1_b"],
        conv2_w=conv_w(params["conv2_w"]), conv2_b=params["conv2_b"],
        efc1_w=efc1_w.astype(jnp.bfloat16), efc1_b=params["efc1_b"],
        efc2_w=params["efc2_w"].astype(jnp.bfloat16), efc2_b=params["efc2_b"],
        dfc1_w=params["dfc1_w"].astype(jnp.bfloat16), dfc1_b=params["dfc1_b"],
        dfc2_w=dfc2_w.astype(jnp.bfloat16), dfc2_b=dfc2_b,
        dconv1_w=deconv_w(params["dconv1_w"]),
        dconv1_b=jnp.tile(params["dconv1_b"], 4),
        dconv2_w=deconv_w(params["dconv2_w"]),
        dconv2_b=jnp.tile(params["dconv2_b"], 4),
    )


# ------------------------------- ConvVAE -----------------------------------

def conv_vae_forward(p, x_nchw, eps_noise, *, nc, image_size, nz):
    B = x_nchw.shape[0]
    s4 = image_size // 4
    feat = 128 * s4 * s4
    x = jnp.transpose(x_nchw, (0, 2, 3, 1)).astype(jnp.bfloat16)   # -> NHWC

    # ---------------- encoder ----------------
    h = conv2d(x, p["conv1_w"], p["conv1_b"], k=4, stride=2, pad=1,
               bn=False, act="relu", out_dtype=jnp.bfloat16)
    h = conv2d(h, p["conv2_w"], p["conv2_b"], k=4, stride=2, pad=1,
               bn=True, act="relu", out_dtype=jnp.bfloat16)
    flat = h.reshape(B, feat)          # channels-last flatten (weights permuted)

    h = fused_matmul(flat, p["efc1_w"], p["efc1_b"],
                     bn=True, act="relu", out_dtype=jnp.bfloat16)
    z, mu, logvar = efc2_reparam(h, p["efc2_w"], p["efc2_b"], eps_noise, nz)

    # ---------------- decoder ----------------
    h = fused_matmul(z, p["dfc1_w"], p["dfc1_b"],
                     bn=True, act="relu", out_dtype=jnp.bfloat16)
    h = fused_matmul(h, p["dfc2_w"], p["dfc2_b"],
                     bn=True, act="relu", out_dtype=jnp.bfloat16)
    h = h.reshape(B, s4, s4, 128)                                   # NHWC

    h = conv_transpose2d_s2k4(h, p["dconv1_w"], p["dconv1_b"],
                              bn=True, act="relu", out_dtype=jnp.bfloat16)
    # Tanh then x*0.5 + 0.5 (loss_type != 'Perceptual'), fused in the epilogue
    out = conv_transpose2d_s2k4(h, p["dconv2_w"], p["dconv2_b"],
                                bn=False, act="tanh_scaled",
                                out_dtype=jnp.float32)              # (B,H,W,nc)
    decoded = jnp.transpose(out, (0, 3, 1, 2))                      # -> NCHW
    return decoded, z, mu, logvar


if __name__ == "__main__":
    # args: dataset='mnist' -> nc=1, image_size=16, num_latent=8, batch=2
    NC, IMG, NZ, B = 1, 16, 8, 2
    key = jax.random.PRNGKey(0)
    k_param, k_x, k_eps = jax.random.split(key, 3)

    params = init_params(k_param, NC, IMG, NZ)
    prepared = prepare_params(params, NC, IMG, NZ)
    x = jax.random.normal(k_x, (B, NC, IMG, IMG), dtype=jnp.float32)
    eps = jax.random.normal(k_eps, (B, NZ), dtype=jnp.float32)   # reparam noise

    fwd = jax.jit(functools.partial(conv_vae_forward,
                                    nc=NC, image_size=IMG, nz=NZ))
    decoded, z, mu, logvar = fwd(prepared, x, eps)
    jax.block_until_ready((decoded, z, mu, logvar))

    assert decoded.shape == (B, NC, IMG, IMG)
    assert z.shape == (B, NZ) and mu.shape == (B, NZ) and logvar.shape == (B, NZ)
    assert bool(jnp.all(jnp.isfinite(decoded)))
    assert bool(jnp.all(jnp.isfinite(z)))
    print("KERNEL_OK")
</pallas_src>

<mosaic_0001>
module attributes {stable_mosaic.version = 11 : i64} {
  func.func @_fused_matmul_kernel(%arg0: i32, %arg1: i32, %arg2: memref<128x16xbf16, #tpu.memory_space<vmem>>, %arg3: memref<16x64xbf16, #tpu.memory_space<vmem>>, %arg4: memref<1x64xf32, #tpu.memory_space<vmem>>, %arg5: memref<128x64xbf16, #tpu.memory_space<vmem>>, %arg6: memref<128x64xf32, #tpu.memory_space<vmem>>) attributes {dimension_semantics = [#tpu.dimension_semantics<parallel>, #tpu.dimension_semantics<arbitrary>], iteration_bounds = array<i64: 1, 1>, scalar_prefetch = 0 : i64, scratch_operands = 1 : i64, tpu.core_type = #tpu.core_type<tc>, window_params = [{transform_indices = @transform_0, window_bounds = array<i64: 128, 16>}, {transform_indices = @transform_1, window_bounds = array<i64: 16, 64>}, {transform_indices = @transform_2, window_bounds = array<i64: 1, 64>}, {transform_indices = @transform_3, window_bounds = array<i64: 128, 64>}]} {
    %c0_i32 = arith.constant 0 : i32
    %0 = arith.cmpi eq, %arg1, %c0_i32 : i32
    %1 = arith.extui %0 : i1 to i32
    %c0_i32_0 = arith.constant 0 : i32
    %2 = arith.cmpi ne, %1, %c0_i32_0 : i32
    scf.if %2 {
      %cst_10 = arith.constant 0.000000e+00 : f32
      %12 = vector.broadcast %cst_10 : f32 to vector<128x64xf32>
      %c0_11 = arith.constant 0 : index
      %c0_12 = arith.constant 0 : index
      %13 = vector.load %arg6[%c0_11, %c0_12] : memref<128x64xf32, #tpu.memory_space<vmem>>, vector<128x64xf32>
      tpu.vector_store %arg6[%c0_11, %c0_12], %12 {strides = array<i32>} : memref<128x64xf32, #tpu.memory_space<vmem>>, vector<128x64xf32>,
    } else {
    }
    %c0 = arith.constant 0 : index
    %c0_1 = arith.constant 0 : index
    %3 = vector.load %arg6[%c0, %c0_1] : memref<128x64xf32, #tpu.memory_space<vmem>>, vector<128x64xf32>
    %c0_2 = arith.constant 0 : index
    %c0_3 = arith.constant 0 : index
    %4 = vector.load %arg2[%c0_2, %c0_3] : memref<128x16xbf16, #tpu.memory_space<vmem>>, vector<128x16xbf16>
    %c0_4 = arith.constant 0 : index
    %c0_5 = arith.constant 0 : index
    %5 = vector.load %arg3[%c0_4, %c0_5] : memref<16x64xbf16, #tpu.memory_space<vmem>>, vector<16x64xbf16>
    %cst = arith.constant dense<0.000000e+00> : vector<128x64xf32>
    %6 = tpu.matmul %4, %5, %cst {dimension_numbers = #tpu.dot_dimension_numbers<[1], [0], [0], [1], [0, 0, 1, 1], [], []>} : vector<128x16xbf16>, vector<16x64xbf16>, vector<128x64xf32> -> vector<128x64xf32>
    %7 = arith.addf %3, %6 : vector<128x64xf32>
    %c0_6 = arith.constant 0 : index
    %c0_7 = arith.constant 0 : index
    %8 = vector.load %arg6[%c0_6, %c0_7] : memref<128x64xf32, #tpu.memory_space<vmem>>, vector<128x64xf32>
    tpu.vector_store %arg6[%c0_6, %c0_7], %7 {strides = array<i32>} : memref<128x64xf32, #tpu.memory_space<vmem>>, vector<128x64xf32>,
    %c0_i32_8 = arith.constant 0 : i32
    %9 = arith.cmpi eq, %arg1, %c0_i32_8 : i32
    %10 = arith.extui %9 : i1 to i32
    %c0_i32_9 = arith.constant 0 : i32
    %11 = arith.cmpi ne, %10, %c0_i32_9 : i32
    scf.if %11 {
      %c0_10 = arith.constant 0 : index
      %c0_11 = arith.constant 0 : index
      %12 = vector.load %arg6[%c0_10, %c0_11] : memref<128x64xf32, #tpu.memory_space<vmem>>, vector<128x64xf32>
      %c0_12 = arith.constant 0 : index
      %c0_13 = arith.constant 0 : index
      %13 = vector.load %arg4[%c0_12, %c0_13] : memref<1x64xf32, #tpu.memory_space<vmem>>, vector<1x64xf32>
      %14 = vector.broadcast %13 : vector<1x64xf32> to vector<128x64xf32>
      %15 = arith.addf %12, %14 : vector<128x64xf32>
      %cst_14 = arith.constant 0.000000e+00 : f32
      %16 = vector.broadcast %cst_14 : f32 to vector<128x64xf32>
      %17 = arith.maximumf %15, %16 : vector<128x64xf32>
      %18 = arith.truncf %17 : vector<128x64xf32> to vector<128x64xbf16>
      %c0_15 = arith.constant 0 : index
      %c0_16 = arith.constant 0 : index
      %19 = vector.load %arg5[%c0_15, %c0_16] : memref<128x64xbf16, #tpu.memory_space<vmem>>, vector<128x64xbf16>
      tpu.vector_store %arg5[%c0_15, %c0_16], %18 {strides = array<i32>} : memref<128x64xbf16, #tpu.memory_space<vmem>>, vector<128x64xbf16>,
    } else {
    }
    return
  }
  func.func @transform_0(%arg0: i32, %arg1: i32) -> (i32, i32) {
    %c0_i32 = arith.constant 0 : i32
    %c0_i32_0 = arith.constant 0 : i32
    return %c0_i32, %arg1 : i32, i32
  }
  func.func @transform_1(%arg0: i32, %arg1: i32) -> (i32, i32) {
    %c0_i32 = arith.constant 0 : i32
    return %arg1, %arg0 : i32, i32
  }
  func.func @transform_2(%arg0: i32, %arg1: i32) -> (i32, i32) {
    %c0_i32 = arith.constant 0 : i32
    %c0_i32_0 = arith.constant 0 : i32
    return %c0_i32, %arg0 : i32, i32
  }
  func.func @transform_3(%arg0: i32, %arg1: i32) -> (i32, i32) {
    %c0_i32 = arith.constant 0 : i32
    %c0_i32_0 = arith.constant 0 : i32
    return %c0_i32, %arg0 : i32, i32
  }
}

module attributes {stable_mosaic.version = 11 : i64} {
  func.func @_fused_matmul_kernel(%arg0: i32, %arg1: i32, %arg2: memref<32x512xbf16, #tpu.memory_space<vmem>>, %arg3: memref<512x128xbf16, #tpu.memory_space<vmem>>, %arg4: memref<1x128xf32, #tpu.memory_space<vmem>>, %arg5: memref<32x128xbf16, #tpu.memory_space<vmem>>, %arg6: memref<32x128xf32, #tpu.memory_space<vmem>>) attributes {dimension_semantics = [#tpu.dimension_semantics<parallel>, #tpu.dimension_semantics<arbitrary>], iteration_bounds = array<i64: 1, 2>, scalar_prefetch = 0 : i64, scratch_operands = 1 : i64, tpu.core_type = #tpu.core_type<tc>, window_params = [{transform_indices = @transform_0, window_bounds = array<i64: 32, 512>}, {transform_indices = @transform_1, window_bounds = array<i64: 512, 128>}, {transform_indices = @transform_2, window_bounds = array<i64: 1, 128>}, {transform_indices = @transform_3, window_bounds = array<i64: 32, 128>}]} {
    %c0_i32 = arith.constant 0 : i32
    %0 = arith.cmpi eq, %arg1, %c0_i32 : i32
    %1 = arith.extui %0 : i1 to i32
    %c0_i32_0 = arith.constant 0 : i32
    %2 = arith.cmpi ne, %1, %c0_i32_0 : i32
    scf.if %2 {
      %cst_9 = arith.constant 0.000000e+00 : f32
      %12 = vector.broadcast %cst_9 : f32 to vector<32x128xf32>
      %c0_10 = arith.constant 0 : index
      %c0_11 = arith.constant 0 : index
      %13 = vector.load %arg6[%c0_10, %c0_11] : memref<32x128xf32, #tpu.memory_space<vmem>>, vector<32x128xf32>
      tpu.vector_store %arg6[%c0_10, %c0_11], %12 {strides = array<i32>} : memref<32x128xf32, #tpu.memory_space<vmem>>, vector<32x128xf32>,
    } else {
    }
    %c0 = arith.constant 0 : index
    %c0_1 = arith.constant 0 : index
    %3 = vector.load %arg6[%c0, %c0_1] : memref<32x128xf32, #tpu.memory_space<vmem>>, vector<32x128xf32>
    %c0_2 = arith.constant 0 : index
    %c0_3 = arith.constant 0 : index
    %4 = vector.load %arg2[%c0_2, %c0_3] : memref<32x512xbf16, #tpu.memory_space<vmem>>, vector<32x512xbf16>
    %c0_4 = arith.constant 0 : index
    %c0_5 = arith.constant 0 : index
    %5 = vector.load %arg3[%c0_4, %c0_5] : memref<512x128xbf16, #tpu.memory_space<vmem>>, vector<512x128xbf16>
    %cst = arith.constant dense<0.000000e+00> : vector<32x128xf32>
    %6 = tpu.matmul %4, %5, %cst {dimension_numbers = #tpu.dot_dimension_numbers<[1], [0], [0], [1], [0, 0, 1, 1], [], []>} : vector<32x512xbf16>, vector<512x128xbf16>, vector<32x128xf32> -> vector<32x128xf32>
    %7 = arith.addf %3, %6 : vector<32x128xf32>
    %c0_6 = arith.constant 0 : index
    %c0_7 = arith.constant 0 : index
    %8 = vector.load %arg6[%c0_6, %c0_7] : memref<32x128xf32, #tpu.memory_space<vmem>>, vector<32x128xf32>
    tpu.vector_store %arg6[%c0_6, %c0_7], %7 {strides = array<i32>} : memref<32x128xf32, #tpu.memory_space<vmem>>, vector<32x128xf32>,
    %c1_i32 = arith.constant 1 : i32
    %9 = arith.cmpi eq, %arg1, %c1_i32 : i32
    %10 = arith.extui %9 : i1 to i32
    %c0_i32_8 = arith.constant 0 : i32
    %11 = arith.cmpi ne, %10, %c0_i32_8 : i32
    scf.if %11 {
      %c0_9 = arith.constant 0 : index
      %c0_10 = arith.constant 0 : index
      %12 = vector.load %arg6[%c0_9, %c0_10] : memref<32x128xf32, #tpu.memory_space<vmem>>, vector<32x128xf32>
      %c0_11 = arith.constant 0 : index
      %c0_12 = arith.constant 0 : index
      %13 = vector.load %arg4[%c0_11, %c0_12] : memref<1x128xf32, #tpu.memory_space<vmem>>, vector<1x128xf32>
      %14 = vector.broadcast %13 : vector<1x128xf32> to vector<32x128xf32>
      %15 = arith.addf %12, %14 : vector<32x128xf32>
      %cst_13 = arith.constant dense<0.000000e+00> : vector<128xf32>
      %16 = vector.multi_reduction <add>, %15, %cst_13 [0] : vector<32x128xf32> to vector<128xf32>
      %17 = vector.shape_cast %16 : vector<128xf32> to vector<1x128xf32>
      %cst_14 = arith.constant 3.200000e+01 : f32
      %18 = vector.broadcast %cst_14 : f32 to vector<1x128xf32>
      %19 = arith.divf %17, %18 : vector<1x128xf32>
      %20 = vector.broadcast %19 : vector<1x128xf32> to vector<32x128xf32>
      %21 = arith.subf %15, %20 : vector<32x128xf32>
      %22 = arith.mulf %21, %21 : vector<32x128xf32>
      %cst_15 = arith.constant dense<0.000000e+00> : vector<128xf32>
      %23 = vector.multi_reduction <add>, %22, %cst_15 [0] : vector<32x128xf32> to vector<128xf32>
      %24 = vector.shape_cast %23 : vector<128xf32> to vector<1x128xf32>
      %cst_16 = arith.constant 3.200000e+01 : f32
      %25 = vector.broadcast %cst_16 : f32 to vector<1x128xf32>
      %26 = arith.divf %24, %25 : vector<1x128xf32>
      %cst_17 = arith.constant 9.99999974E-6 : f32
      %27 = vector.broadcast %cst_17 : f32 to vector<1x128xf32>
      %28 = arith.addf %26, %27 : vector<1x128xf32>
      %29 = math.rsqrt %28 : vector<1x128xf32>
      %30 = vector.broadcast %29 : vector<1x128xf32> to vector<32x128xf32>
      %31 = arith.mulf %21, %30 : vector<32x128xf32>
      %cst_18 = arith.constant 0.000000e+00 : f32
      %32 = vector.broadcast %cst_18 : f32 to vector<32x128xf32>
      %33 = arith.maximumf %31, %32 : vector<32x128xf32>
      %34 = arith.truncf %33 : vector<32x128xf32> to vector<32x128xbf16>
      %c0_19 = arith.constant 0 : index
      %c0_20 = arith.constant 0 : index
      %35 = vector.load %arg5[%c0_19, %c0_20] : memref<32x128xbf16, #tpu.memory_space<vmem>>, vector<32x128xbf16>
      tpu.vector_store %arg5[%c0_19, %c0_20], %34 {strides = array<i32>} : memref<32x128xbf16, #tpu.memory_space<vmem>>, vector<32x128xbf16>,
    } else {
    }
    return
  }
  func.func @transform_0(%arg0: i32, %arg1: i32) -> (i32, i32) {
    %c0_i32 = arith.constant 0 : i32
    %c0_i32_0 = arith.constant 0 : i32
    return %c0_i32, %arg1 : i32, i32
  }
  func.func @transform_1(%arg0: i32, %arg1: i32) -> (i32, i32) {
    %c0_i32 = arith.constant 0 : i32
    return %arg1, %arg0 : i32, i32
  }
  func.func @transform_2(%arg0: i32, %arg1: i32) -> (i32, i32) {
    %c0_i32 = arith.constant 0 : i32
    %c0_i32_0 = arith.constant 0 : i32
    return %c0_i32, %arg0 : i32, i32
  }
  func.func @transform_3(%arg0: i32, %arg1: i32) -> (i32, i32) {
    %c0_i32 = arith.constant 0 : i32
    %c0_i32_0 = arith.constant 0 : i32
    return %c0_i32, %arg0 : i32, i32
  }
}

module attributes {stable_mosaic.version = 11 : i64} {
  func.func @_fused_matmul_kernel(%arg0: i32, %arg1: i32, %arg2: memref<2x512xbf16, #tpu.memory_space<vmem>>, %arg3: memref<512x512xbf16, #tpu.memory_space<vmem>>, %arg4: memref<1x512xf32, #tpu.memory_space<vmem>>, %arg5: memref<2x512xbf16, #tpu.memory_space<vmem>>, %arg6: memref<2x512xf32, #tpu.memory_space<vmem>>) attributes {dimension_semantics = [#tpu.dimension_semantics<parallel>, #tpu.dimension_semantics<arbitrary>], iteration_bounds = array<i64: 2, 4>, scalar_prefetch = 0 : i64, scratch_operands = 1 : i64, tpu.core_type = #tpu.core_type<tc>, window_params = [{transform_indices = @transform_0, window_bounds = array<i64: 2, 512>}, {transform_indices = @transform_1, window_bounds = array<i64: 512, 512>}, {transform_indices = @transform_2, window_bounds = array<i64: 1, 512>}, {transform_indices = @transform_3, window_bounds = array<i64: 2, 512>}]} {
    %c0_i32 = arith.constant 0 : i32
    %0 = arith.cmpi eq, %arg1, %c0_i32 : i32
    %1 = arith.extui %0 : i1 to i32
    %c0_i32_0 = arith.constant 0 : i32
    %2 = arith.cmpi ne, %1, %c0_i32_0 : i32
    scf.if %2 {
      %cst_9 = arith.constant 0.000000e+00 : f32
      %12 = vector.broadcast %cst_9 : f32 to vector<2x512xf32>
      %c0_10 = arith.constant 0 : index
      %c0_11 = arith.constant 0 : index
      %13 = vector.load %arg6[%c0_10, %c0_11] : memref<2x512xf32, #tpu.memory_space<vmem>>, vector<2x512xf32>
      tpu.vector_store %arg6[%c0_10, %c0_11], %12 {strides = array<i32>} : memref<2x512xf32, #tpu.memory_space<vmem>>, vector<2x512xf32>,
    } else {
    }
    %c0 = arith.constant 0 : index
    %c0_1 = arith.constant 0 : index
    %3 = vector.load %arg6[%c0, %c0_1] : memref<2x512xf32, #tpu.memory_space<vmem>>, vector<2x512xf32>
    %c0_2 = arith.constant 0 : index
    %c0_3 = arith.constant 0 : index
    %4 = vector.load %arg2[%c0_2, %c0_3] : memref<2x512xbf16, #tpu.memory_space<vmem>>, vector<2x512xbf16>
    %c0_4 = arith.constant 0 : index
    %c0_5 = arith.constant 0 : index
    %5 = vector.load %arg3[%c0_4, %c0_5] : memref<512x512xbf16, #tpu.memory_space<vmem>>, vector<512x512xbf16>
    %cst = arith.constant dense<0.000000e+00> : vector<2x512xf32>
    %6 = tpu.matmul %4, %5, %cst {dimension_numbers = #tpu.dot_dimension_numbers<[1], [0], [0], [1], [0, 0, 1, 1], [], []>} : vector<2x512xbf16>, vector<512x512xbf16>, vector<2x512xf32> -> vector<2x512xf32>
    %7 = arith.addf %3, %6 : vector<2x512xf32>
    %c0_6 = arith.constant 0 : index
    %c0_7 = arith.constant 0 : index
    %8 = vector.load %arg6[%c0_6, %c0_7] : memref<2x512xf32, #tpu.memory_space<vmem>>, vector<2x512xf32>
    tpu.vector_store %arg6[%c0_6, %c0_7], %7 {strides = array<i32>} : memref<2x512xf32, #tpu.memory_space<vmem>>, vector<2x512xf32>,
    %c3_i32 = arith.constant 3 : i32
    %9 = arith.cmpi eq, %arg1, %c3_i32 : i32
    %10 = arith.extui %9 : i1 to i32
    %c0_i32_8 = arith.constant 0 : i32
    %11 = arith.cmpi ne, %10, %c0_i32_8 : i32
    scf.if %11 {
      %c0_9 = arith.constant 0 : index
      %c0_10 = arith.constant 0 : index
      %12 = vector.load %arg6[%c0_9, %c0_10] : memref<2x512xf32, #tpu.memory_space<vmem>>, vector<2x512xf32>
      %c0_11 = arith.constant 0 : index
      %c0_12 = arith.constant 0 : index
      %13 = vector.load %arg4[%c0_11, %c0_12] : memref<1x512xf32, #tpu.memory_space<vmem>>, vector<1x512xf32>
      %14 = vector.broadcast %13 : vector<1x512xf32> to vector<2x512xf32>
      %15 = arith.addf %12, %14 : vector<2x512xf32>
      %cst_13 = arith.constant dense<0.000000e+00> : vector<512xf32>
      %16 = vector.multi_reduction <add>, %15, %cst_13 [0] : vector<2x512xf32> to vector<512xf32>
      %17 = vector.shape_cast %16 : vector<512xf32> to vector<1x512xf32>
      %cst_14 = arith.constant 2.000000e+00 : f32
      %18 = vector.broadcast %cst_14 : f32 to vector<1x512xf32>
      %19 = arith.divf %17, %18 : vector<1x512xf32>
      %20 = vector.broadcast %19 : vector<1x512xf32> to vector<2x512xf32>
      %21 = arith.subf %15, %20 : vector<2x512xf32>
      %22 = arith.mulf %21, %21 : vector<2x512xf32>
      %cst_15 = arith.constant dense<0.000000e+00> : vector<512xf32>
      %23 = vector.multi_reduction <add>, %22, %cst_15 [0] : vector<2x512xf32> to vector<512xf32>
      %24 = vector.shape_cast %23 : vector<512xf32> to vector<1x512xf32>
      %cst_16 = arith.constant 2.000000e+00 : f32
      %25 = vector.broadcast %cst_16 : f32 to vector<1x512xf32>
      %26 = arith.divf %24, %25 : vector<1x512xf32>
      %cst_17 = arith.constant 9.99999974E-6 : f32
      %27 = vector.broadcast %cst_17 : f32 to vector<1x512xf32>
      %28 = arith.addf %26, %27 : vector<1x512xf32>
      %29 = math.rsqrt %28 : vector<1x512xf32>
      %30 = vector.broadcast %29 : vector<1x512xf32> to vector<2x512xf32>
      %31 = arith.mulf %21, %30 : vector<2x512xf32>
      %cst_18 = arith.constant 0.000000e+00 : f32
      %32 = vector.broadcast %cst_18 : f32 to vector<2x512xf32>
      %33 = arith.maximumf %31, %32 : vector<2x512xf32>
      %34 = arith.truncf %33 : vector<2x512xf32> to vector<2x512xbf16>
      %c0_19 = arith.constant 0 : index
      %c0_20 = arith.constant 0 : index
      %35 = vector.load %arg5[%c0_19, %c0_20] : memref<2x512xbf16, #tpu.memory_space<vmem>>, vector<2x512xbf16>
      tpu.vector_store %arg5[%c0_19, %c0_20], %34 {strides = array<i32>} : memref<2x512xbf16, #tpu.memory_space<vmem>>, vector<2x512xbf16>,
    } else {
    }
    return
  }
  func.func @transform_0(%arg0: i32, %arg1: i32) -> (i32, i32) {
    %c0_i32 = arith.constant 0 : i32
    %c0_i32_0 = arith.constant 0 : i32
    return %c0_i32, %arg1 : i32, i32
  }
  func.func @transform_1(%arg0: i32, %arg1: i32) -> (i32, i32) {
    %c0_i32 = arith.constant 0 : i32
    return %arg1, %arg0 : i32, i32
  }
  func.func @transform_2(%arg0: i32, %arg1: i32) -> (i32, i32) {
    %c0_i32 = arith.constant 0 : i32
    %c0_i32_0 = arith.constant 0 : i32
    return %c0_i32, %arg0 : i32, i32
  }
  func.func @transform_3(%arg0: i32, %arg1: i32) -> (i32, i32) {
    %c0_i32 = arith.constant 0 : i32
    %c0_i32_0 = arith.constant 0 : i32
    return %c0_i32, %arg0 : i32, i32
  }
}

module attributes {stable_mosaic.version = 11 : i64} {
  func.func @_efc2_reparam_kernel(%arg0: i32, %arg1: memref<2x512xbf16, #tpu.memory_space<vmem>>, %arg2: memref<512x16xbf16, #tpu.memory_space<vmem>>, %arg3: memref<1x16xf32, #tpu.memory_space<vmem>>, %arg4: memref<2x8xf32, #tpu.memory_space<vmem>>, %arg5: memref<2x8xf32, #tpu.memory_space<vmem>>, %arg6: memref<2x8xf32, #tpu.memory_space<vmem>>, %arg7: memref<2x8xf32, #tpu.memory_space<vmem>>, %arg8: memref<2x16xf32, #tpu.memory_space<vmem>>) attributes {dimension_semantics = [#tpu.dimension_semantics<arbitrary>], iteration_bounds = array<i64: 2>, scalar_prefetch = 0 : i64, scratch_operands = 1 : i64, tpu.core_type = #tpu.core_type<tc>, window_params = [{transform_indices = @transform_0, window_bounds = array<i64: 2, 512>}, {transform_indices = @transform_1, window_bounds = array<i64: 512, 16>}, {pipeline_mode = #tpu.pipeline_mode<synchronous>, transform_indices = @transform_2, window_bounds = array<i64: 1, 16>}, {pipeline_mode = #tpu.pipeline_mode<synchronous>, transform_indices = @transform_3, window_bounds = array<i64: 2, 8>}, {pipeline_mode = #tpu.pipeline_mode<synchronous>, transform_indices = @transform_4, window_bounds = array<i64: 2, 8>}, {pipeline_mode = #tpu.pipeline_mode<synchronous>, transform_indices = @transform_5, window_bounds = array<i64: 2, 8>}, {pipeline_mode = #tpu.pipeline_mode<synchronous>, transform_indices = @transform_6, window_bounds = array<i64: 2, 8>}]} {
    %c0_i32 = arith.constant 0 : i32
    %0 = arith.cmpi eq, %arg0, %c0_i32 : i32
    %1 = arith.extui %0 : i1 to i32
    %c0_i32_0 = arith.constant 0 : i32
    %2 = arith.cmpi ne, %1, %c0_i32_0 : i32
    scf.if %2 {
      %cst_9 = arith.constant 0.000000e+00 : f32
      %12 = vector.broadcast %cst_9 : f32 to vector<2x16xf32>
      %c0_10 = arith.constant 0 : index
      %c0_11 = arith.constant 0 : index
      %13 = vector.load %arg8[%c0_10, %c0_11] : memref<2x16xf32, #tpu.memory_space<vmem>>, vector<2x16xf32>
      tpu.vector_store %arg8[%c0_10, %c0_11], %12 {strides = array<i32>} : memref<2x16xf32, #tpu.memory_space<vmem>>, vector<2x16xf32>,
    } else {
    }
    %c0 = arith.constant 0 : index
    %c0_1 = arith.constant 0 : index
    %3 = vector.load %arg8[%c0, %c0_1] : memref<2x16xf32, #tpu.memory_space<vmem>>, vector<2x16xf32>
    %c0_2 = arith.constant 0 : index
    %c0_3 = arith.constant 0 : index
    %4 = vector.load %arg1[%c0_2, %c0_3] : memref<2x512xbf16, #tpu.memory_space<vmem>>, vector<2x512xbf16>
    %c0_4 = arith.constant 0 : index
    %c0_5 = arith.constant 0 : index
    %5 = vector.load %arg2[%c0_4, %c0_5] : memref<512x16xbf16, #tpu.memory_space<vmem>>, vector<512x16xbf16>
    %cst = arith.constant dense<0.000000e+00> : vector<2x16xf32>
    %6 = tpu.matmul %4, %5, %cst {dimension_numbers = #tpu.dot_dimension_numbers<[1], [0], [0], [1], [0, 0, 1, 1], [], []>} : vector<2x512xbf16>, vector<512x16xbf16>, vector<2x16xf32> -> vector<2x16xf32>
    %7 = arith.addf %3, %6 : vector<2x16xf32>
    %c0_6 = arith.constant 0 : index
    %c0_7 = arith.constant 0 : index
    %8 = vector.load %arg8[%c0_6, %c0_7] : memref<2x16xf32, #tpu.memory_space<vmem>>, vector<2x16xf32>
    tpu.vector_store %arg8[%c0_6, %c0_7], %7 {strides = array<i32>} : memref<2x16xf32, #tpu.memory_space<vmem>>, vector<2x16xf32>,
    %c1_i32 = arith.constant 1 : i32
    %9 = arith.cmpi eq, %arg0, %c1_i32 : i32
    %10 = arith.extui %9 : i1 to i32
    %c0_i32_8 = arith.constant 0 : i32
    %11 = arith.cmpi ne, %10, %c0_i32_8 : i32
    scf.if %11 {
      %c0_9 = arith.constant 0 : index
      %c0_10 = arith.constant 0 : index
      %12 = vector.load %arg8[%c0_9, %c0_10] : memref<2x16xf32, #tpu.memory_space<vmem>>, vector<2x16xf32>
      %c0_11 = arith.constant 0 : index
      %c0_12 = arith.constant 0 : index
      %13 = vector.load %arg3[%c0_11, %c0_12] : memref<1x16xf32, #tpu.memory_space<vmem>>, vector<1x16xf32>
      %14 = vector.broadcast %13 : vector<1x16xf32> to vector<2x16xf32>
      %15 = arith.addf %12, %14 : vector<2x16xf32>
      %16 = vector.extract_strided_slice %15 {offsets = [0, 0], sizes = [2, 8], strides = [1, 1]} : vector<2x16xf32> to vector<2x8xf32>
      %17 = vector.extract_strided_slice %15 {offsets = [0, 8], sizes = [2, 8], strides = [1, 1]} : vector<2x16xf32> to vector<2x8xf32>
      %c0_13 = arith.constant 0 : index
      %c0_14 = arith.constant 0 : index
      %18 = vector.load %arg6[%c0_13, %c0_14] : memref<2x8xf32, #tpu.memory_space<vmem>>, vector<2x8xf32>
      tpu.vector_store %arg6[%c0_13, %c0_14], %16 {strides = array<i32>} : memref<2x8xf32, #tpu.memory_space<vmem>>, vector<2x8xf32>,
      %c0_15 = arith.constant 0 : index
      %c0_16 = arith.constant 0 : index
      %19 = vector.load %arg7[%c0_15, %c0_16] : memref<2x8xf32, #tpu.memory_space<vmem>>, vector<2x8xf32>
      tpu.vector_store %arg7[%c0_15, %c0_16], %17 {strides = array<i32>} : memref<2x8xf32, #tpu.memory_space<vmem>>, vector<2x8xf32>,
      %cst_17 = arith.constant 5.000000e-01 : f32
      %20 = vector.broadcast %cst_17 : f32 to vector<2x8xf32>
      %21 = arith.mulf %17, %20 : vector<2x8xf32>
      %22 = math.exp %21 : vector<2x8xf32>
      %c0_18 = arith.constant 0 : index
      %c0_19 = arith.constant 0 : index
      %23 = vector.load %arg4[%c0_18, %c0_19] : memref<2x8xf32, #tpu.memory_space<vmem>>, vector<2x8xf32>
      %24 = arith.mulf %22, %23 : vector<2x8xf32>
      %25 = arith.addf %16, %24 : vector<2x8xf32>
      %c0_20 = arith.constant 0 : index
      %c0_21 = arith.constant 0 : index
      %26 = vector.load %arg5[%c0_20, %c0_21] : memref<2x8xf32, #tpu.memory_space<vmem>>, vector<2x8xf32>
      tpu.vector_store %arg5[%c0_20, %c0_21], %25 {strides = array<i32>} : memref<2x8xf32, #tpu.memory_space<vmem>>, vector<2x8xf32>,
    } else {
    }
    return
  }
  func.func @transform_0(%arg0: i32) -> (i32, i32) {
    %c0_i32 = arith.constant 0 : i32
    %c0_i32_0 = arith.constant 0 : i32
    return %c0_i32, %arg0 : i32, i32
  }
  func.func @transform_1(%arg0: i32) -> (i32, i32) {
    %c0_i32 = arith.constant 0 : i32
    %c0_i32_0 = arith.constant 0 : i32
    return %arg0, %c0_i32 : i32, i32
  }
  func.func @transform_2(%arg0: i32) -> (i32, i32) {
    %c0_i32 = arith.constant 0 : i32
    %c0_i32_0 = arith.constant 0 : i32
    %c0_i32_1 = arith.constant 0 : i32
    return %c0_i32, %c0_i32_0 : i32, i32
  }
  func.func @transform_3(%arg0: i32) -> (i32, i32) {
    %c0_i32 = arith.constant 0 : i32
    %c0_i32_0 = arith.constant 0 : i32
    %c0_i32_1 = arith.constant 0 : i32
    return %c0_i32, %c0_i32_0 : i32, i32
  }
  func.func @transform_4(%arg0: i32) -> (i32, i32) {
    %c0_i32 = arith.constant 0 : i32
    %c0_i32_0 = arith.constant 0 : i32
    %c0_i32_1 = arith.constant 0 : i32
    return %c0_i32, %c0_i32_0 : i32, i32
  }
  func.func @transform_5(%arg0: i32) -> (i32, i32) {
    %c0_i32 = arith.constant 0 : i32
    %c0_i32_0 = arith.constant 0 : i32
    %c0_i32_1 = arith.constant 0 : i32
    return %c0_i32, %c0_i32_0 : i32, i32
  }
  func.func @transform_6(%arg0: i32) -> (i32, i32) {
    %c0_i32 = arith.constant 0 : i32
    %c0_i32_0 = arith.constant 0 : i32
    %c0_i32_1 = arith.constant 0 : i32
    return %c0_i32, %c0_i32_0 : i32, i32
  }
}

module attributes {stable_mosaic.version = 11 : i64} {
  func.func @_fused_matmul_kernel(%arg0: i32, %arg1: i32, %arg2: memref<2x8xbf16, #tpu.memory_space<vmem>>, %arg3: memref<8x512xbf16, #tpu.memory_space<vmem>>, %arg4: memref<1x512xf32, #tpu.memory_space<vmem>>, %arg5: memref<2x512xbf16, #tpu.memory_space<vmem>>, %arg6: memref<2x512xf32, #tpu.memory_space<vmem>>) attributes {dimension_semantics = [#tpu.dimension_semantics<parallel>, #tpu.dimension_semantics<arbitrary>], iteration_bounds = array<i64: 2, 1>, scalar_prefetch = 0 : i64, scratch_operands = 1 : i64, tpu.core_type = #tpu.core_type<tc>, window_params = [{transform_indices = @transform_0, window_bounds = array<i64: 2, 8>}, {transform_indices = @transform_1, window_bounds = array<i64: 8, 512>}, {transform_indices = @transform_2, window_bounds = array<i64: 1, 512>}, {transform_indices = @transform_3, window_bounds = array<i64: 2, 512>}]} {
    %c0_i32 = arith.constant 0 : i32
    %0 = arith.cmpi eq, %arg1, %c0_i32 : i32
    %1 = arith.extui %0 : i1 to i32
    %c0_i32_0 = arith.constant 0 : i32
    %2 = arith.cmpi ne, %1, %c0_i32_0 : i32
    scf.if %2 {
      %cst_10 = arith.constant 0.000000e+00 : f32
      %12 = vector.broadcast %cst_10 : f32 to vector<2x512xf32>
      %c0_11 = arith.constant 0 : index
      %c0_12 = arith.constant 0 : index
      %13 = vector.load %arg6[%c0_11, %c0_12] : memref<2x512xf32, #tpu.memory_space<vmem>>, vector<2x512xf32>
      tpu.vector_store %arg6[%c0_11, %c0_12], %12 {strides = array<i32>} : memref<2x512xf32, #tpu.memory_space<vmem>>, vector<2x512xf32>,
    } else {
    }
    %c0 = arith.constant 0 : index
    %c0_1 = arith.constant 0 : index
    %3 = vector.load %arg6[%c0, %c0_1] : memref<2x512xf32, #tpu.memory_space<vmem>>, vector<2x512xf32>
    %c0_2 = arith.constant 0 : index
    %c0_3 = arith.constant 0 : index
    %4 = vector.load %arg2[%c0_2, %c0_3] : memref<2x8xbf16, #tpu.memory_space<vmem>>, vector<2x8xbf16>
    %c0_4 = arith.constant 0 : index
    %c0_5 = arith.constant 0 : index
    %5 = vector.load %arg3[%c0_4, %c0_5] : memref<8x512xbf16, #tpu.memory_space<vmem>>, vector<8x512xbf16>
    %cst = arith.constant dense<0.000000e+00> : vector<2x512xf32>
    %6 = tpu.matmul %4, %5, %cst {dimension_numbers = #tpu.dot_dimension_numbers<[1], [0], [0], [1], [0, 0, 1, 1], [], []>} : vector<2x8xbf16>, vector<8x512xbf16>, vector<2x512xf32> -> vector<2x512xf32>
    %7 = arith.addf %3, %6 : vector<2x512xf32>
    %c0_6 = arith.constant 0 : index
    %c0_7 = arith.constant 0 : index
    %8 = vector.load %arg6[%c0_6, %c0_7] : memref<2x512xf32, #tpu.memory_space<vmem>>, vector<2x512xf32>
    tpu.vector_store %arg6[%c0_6, %c0_7], %7 {strides = array<i32>} : memref<2x512xf32, #tpu.memory_space<vmem>>, vector<2x512xf32>,
    %c0_i32_8 = arith.constant 0 : i32
    %9 = arith.cmpi eq, %arg1, %c0_i32_8 : i32
    %10 = arith.extui %9 : i1 to i32
    %c0_i32_9 = arith.constant 0 : i32
    %11 = arith.cmpi ne, %10, %c0_i32_9 : i32
    scf.if %11 {
      %c0_10 = arith.constant 0 : index
      %c0_11 = arith.constant 0 : index
      %12 = vector.load %arg6[%c0_10, %c0_11] : memref<2x512xf32, #tpu.memory_space<vmem>>, vector<2x512xf32>
      %c0_12 = arith.constant 0 : index
      %c0_13 = arith.constant 0 : index
      %13 = vector.load %arg4[%c0_12, %c0_13] : memref<1x512xf32, #tpu.memory_space<vmem>>, vector<1x512xf32>
      %14 = vector.broadcast %13 : vector<1x512xf32> to vector<2x512xf32>
      %15 = arith.addf %12, %14 : vector<2x512xf32>
      %cst_14 = arith.constant dense<0.000000e+00> : vector<512xf32>
      %16 = vector.multi_reduction <add>, %15, %cst_14 [0] : vector<2x512xf32> to vector<512xf32>
      %17 = vector.shape_cast %16 : vector<512xf32> to vector<1x512xf32>
      %cst_15 = arith.constant 2.000000e+00 : f32
      %18 = vector.broadcast %cst_15 : f32 to vector<1x512xf32>
      %19 = arith.divf %17, %18 : vector<1x512xf32>
      %20 = vector.broadcast %19 : vector<1x512xf32> to vector<2x512xf32>
      %21 = arith.subf %15, %20 : vector<2x512xf32>
      %22 = arith.mulf %21, %21 : vector<2x512xf32>
      %cst_16 = arith.constant dense<0.000000e+00> : vector<512xf32>
      %23 = vector.multi_reduction <add>, %22, %cst_16 [0] : vector<2x512xf32> to vector<512xf32>
      %24 = vector.shape_cast %23 : vector<512xf32> to vector<1x512xf32>
      %cst_17 = arith.constant 2.000000e+00 : f32
      %25 = vector.broadcast %cst_17 : f32 to vector<1x512xf32>
      %26 = arith.divf %24, %25 : vector<1x512xf32>
      %cst_18 = arith.constant 9.99999974E-6 : f32
      %27 = vector.broadcast %cst_18 : f32 to vector<1x512xf32>
      %28 = arith.addf %26, %27 : vector<1x512xf32>
      %29 = math.rsqrt %28 : vector<1x512xf32>
      %30 = vector.broadcast %29 : vector<1x512xf32> to vector<2x512xf32>
      %31 = arith.mulf %21, %30 : vector<2x512xf32>
      %cst_19 = arith.constant 0.000000e+00 : f32
      %32 = vector.broadcast %cst_19 : f32 to vector<2x512xf32>
      %33 = arith.maximumf %31, %32 : vector<2x512xf32>
      %34 = arith.truncf %33 : vector<2x512xf32> to vector<2x512xbf16>
      %c0_20 = arith.constant 0 : index
      %c0_21 = arith.constant 0 : index
      %35 = vector.load %arg5[%c0_20, %c0_21] : memref<2x512xbf16, #tpu.memory_space<vmem>>, vector<2x512xbf16>
      tpu.vector_store %arg5[%c0_20, %c0_21], %34 {strides = array<i32>} : memref<2x512xbf16, #tpu.memory_space<vmem>>, vector<2x512xbf16>,
    } else {
    }
    return
  }
  func.func @transform_0(%arg0: i32, %arg1: i32) -> (i32, i32) {
    %c0_i32 = arith.constant 0 : i32
    %c0_i32_0 = arith.constant 0 : i32
    return %c0_i32, %arg1 : i32, i32
  }
  func.func @transform_1(%arg0: i32, %arg1: i32) -> (i32, i32) {
    %c0_i32 = arith.constant 0 : i32
    return %arg1, %arg0 : i32, i32
  }
  func.func @transform_2(%arg0: i32, %arg1: i32) -> (i32, i32) {
    %c0_i32 = arith.constant 0 : i32
    %c0_i32_0 = arith.constant 0 : i32
    return %c0_i32, %arg0 : i32, i32
  }
  func.func @transform_3(%arg0: i32, %arg1: i32) -> (i32, i32) {
    %c0_i32 = arith.constant 0 : i32
    %c0_i32_0 = arith.constant 0 : i32
    return %c0_i32, %arg0 : i32, i32
  }
}

module attributes {stable_mosaic.version = 11 : i64} {
  func.func @_fused_matmul_kernel(%arg0: i32, %arg1: i32, %arg2: memref<2x512xbf16, #tpu.memory_space<vmem>>, %arg3: memref<512x512xbf16, #tpu.memory_space<vmem>>, %arg4: memref<1x512xf32, #tpu.memory_space<vmem>>, %arg5: memref<2x512xbf16, #tpu.memory_space<vmem>>, %arg6: memref<2x512xf32, #tpu.memory_space<vmem>>) attributes {dimension_semantics = [#tpu.dimension_semantics<parallel>, #tpu.dimension_semantics<arbitrary>], iteration_bounds = array<i64: 4, 2>, scalar_prefetch = 0 : i64, scratch_operands = 1 : i64, tpu.core_type = #tpu.core_type<tc>, window_params = [{transform_indices = @transform_0, window_bounds = array<i64: 2, 512>}, {transform_indices = @transform_1, window_bounds = array<i64: 512, 512>}, {transform_indices = @transform_2, window_bounds = array<i64: 1, 512>}, {transform_indices = @transform_3, window_bounds = array<i64: 2, 512>}]} {
    %c0_i32 = arith.constant 0 : i32
    %0 = arith.cmpi eq, %arg1, %c0_i32 : i32
    %1 = arith.extui %0 : i1 to i32
    %c0_i32_0 = arith.constant 0 : i32
    %2 = arith.cmpi ne, %1, %c0_i32_0 : i32
    scf.if %2 {
      %cst_9 = arith.constant 0.000000e+00 : f32
      %12 = vector.broadcast %cst_9 : f32 to vector<2x512xf32>
      %c0_10 = arith.constant 0 : index
      %c0_11 = arith.constant 0 : index
      %13 = vector.load %arg6[%c0_10, %c0_11] : memref<2x512xf32, #tpu.memory_space<vmem>>, vector<2x512xf32>
      tpu.vector_store %arg6[%c0_10, %c0_11], %12 {strides = array<i32>} : memref<2x512xf32, #tpu.memory_space<vmem>>, vector<2x512xf32>,
    } else {
    }
    %c0 = arith.constant 0 : index
    %c0_1 = arith.constant 0 : index
    %3 = vector.load %arg6[%c0, %c0_1] : memref<2x512xf32, #tpu.memory_space<vmem>>, vector<2x512xf32>
    %c0_2 = arith.constant 0 : index
    %c0_3 = arith.constant 0 : index
    %4 = vector.load %arg2[%c0_2, %c0_3] : memref<2x512xbf16, #tpu.memory_space<vmem>>, vector<2x512xbf16>
    %c0_4 = arith.constant 0 : index
    %c0_5 = arith.constant 0 : index
    %5 = vector.load %arg3[%c0_4, %c0_5] : memref<512x512xbf16, #tpu.memory_space<vmem>>, vector<512x512xbf16>
    %cst = arith.constant dense<0.000000e+00> : vector<2x512xf32>
    %6 = tpu.matmul %4, %5, %cst {dimension_numbers = #tpu.dot_dimension_numbers<[1], [0], [0], [1], [0, 0, 1, 1], [], []>} : vector<2x512xbf16>, vector<512x512xbf16>, vector<2x512xf32> -> vector<2x512xf32>
    %7 = arith.addf %3, %6 : vector<2x512xf32>
    %c0_6 = arith.constant 0 : index
    %c0_7 = arith.constant 0 : index
    %8 = vector.load %arg6[%c0_6, %c0_7] : memref<2x512xf32, #tpu.memory_space<vmem>>, vector<2x512xf32>
    tpu.vector_store %arg6[%c0_6, %c0_7], %7 {strides = array<i32>} : memref<2x512xf32, #tpu.memory_space<vmem>>, vector<2x512xf32>,
    %c1_i32 = arith.constant 1 : i32
    %9 = arith.cmpi eq, %arg1, %c1_i32 : i32
    %10 = arith.extui %9 : i1 to i32
    %c0_i32_8 = arith.constant 0 : i32
    %11 = arith.cmpi ne, %10, %c0_i32_8 : i32
    scf.if %11 {
      %c0_9 = arith.constant 0 : index
      %c0_10 = arith.constant 0 : index
      %12 = vector.load %arg6[%c0_9, %c0_10] : memref<2x512xf32, #tpu.memory_space<vmem>>, vector<2x512xf32>
      %c0_11 = arith.constant 0 : index
      %c0_12 = arith.constant 0 : index
      %13 = vector.load %arg4[%c0_11, %c0_12] : memref<1x512xf32, #tpu.memory_space<vmem>>, vector<1x512xf32>
      %14 = vector.broadcast %13 : vector<1x512xf32> to vector<2x512xf32>
      %15 = arith.addf %12, %14 : vector<2x512xf32>
      %cst_13 = arith.constant dense<0.000000e+00> : vector<512xf32>
      %16 = vector.multi_reduction <add>, %15, %cst_13 [0] : vector<2x512xf32> to vector<512xf32>
      %17 = vector.shape_cast %16 : vector<512xf32> to vector<1x512xf32>
      %cst_14 = arith.constant 2.000000e+00 : f32
      %18 = vector.broadcast %cst_14 : f32 to vector<1x512xf32>
      %19 = arith.divf %17, %18 : vector<1x512xf32>
      %20 = vector.broadcast %19 : vector<1x512xf32> to vector<2x512xf32>
      %21 = arith.subf %15, %20 : vector<2x512xf32>
      %22 = arith.mulf %21, %21 : vector<2x512xf32>
      %cst_15 = arith.constant dense<0.000000e+00> : vector<512xf32>
      %23 = vector.multi_reduction <add>, %22, %cst_15 [0] : vector<2x512xf32> to vector<512xf32>
      %24 = vector.shape_cast %23 : vector<512xf32> to vector<1x512xf32>
      %cst_16 = arith.constant 2.000000e+00 : f32
      %25 = vector.broadcast %cst_16 : f32 to vector<1x512xf32>
      %26 = arith.divf %24, %25 : vector<1x512xf32>
      %cst_17 = arith.constant 9.99999974E-6 : f32
      %27 = vector.broadcast %cst_17 : f32 to vector<1x512xf32>
      %28 = arith.addf %26, %27 : vector<1x512xf32>
      %29 = math.rsqrt %28 : vector<1x512xf32>
      %30 = vector.broadcast %29 : vector<1x512xf32> to vector<2x512xf32>
      %31 = arith.mulf %21, %30 : vector<2x512xf32>
      %cst_18 = arith.constant 0.000000e+00 : f32
      %32 = vector.broadcast %cst_18 : f32 to vector<2x512xf32>
      %33 = arith.maximumf %31, %32 : vector<2x512xf32>
      %34 = arith.truncf %33 : vector<2x512xf32> to vector<2x512xbf16>
      %c0_19 = arith.constant 0 : index
      %c0_20 = arith.constant 0 : index
      %35 = vector.load %arg5[%c0_19, %c0_20] : memref<2x512xbf16, #tpu.memory_space<vmem>>, vector<2x512xbf16>
      tpu.vector_store %arg5[%c0_19, %c0_20], %34 {strides = array<i32>} : memref<2x512xbf16, #tpu.memory_space<vmem>>, vector<2x512xbf16>,
    } else {
    }
    return
  }
  func.func @transform_0(%arg0: i32, %arg1: i32) -> (i32, i32) {
    %c0_i32 = arith.constant 0 : i32
    %c0_i32_0 = arith.constant 0 : i32
    return %c0_i32, %arg1 : i32, i32
  }
  func.func @transform_1(%arg0: i32, %arg1: i32) -> (i32, i32) {
    %c0_i32 = arith.constant 0 : i32
    return %arg1, %arg0 : i32, i32
  }
  func.func @transform_2(%arg0: i32, %arg1: i32) -> (i32, i32) {
    %c0_i32 = arith.constant 0 : i32
    %c0_i32_0 = arith.constant 0 : i32
    return %c0_i32, %arg0 : i32, i32
  }
  func.func @transform_3(%arg0: i32, %arg1: i32) -> (i32, i32) {
    %c0_i32 = arith.constant 0 : i32
    %c0_i32_0 = arith.constant 0 : i32
    return %c0_i32, %arg0 : i32, i32
  }
}

module attributes {stable_mosaic.version = 11 : i64} {
  func.func @_fused_matmul_kernel(%arg0: i32, %arg1: i32, %arg2: memref<32x384xbf16, #tpu.memory_space<vmem>>, %arg3: memref<384x256xbf16, #tpu.memory_space<vmem>>, %arg4: memref<1x256xf32, #tpu.memory_space<vmem>>, %arg5: memref<32x256xbf16, #tpu.memory_space<vmem>>, %arg6: memref<32x256xf32, #tpu.memory_space<vmem>>) attributes {dimension_semantics = [#tpu.dimension_semantics<parallel>, #tpu.dimension_semantics<arbitrary>], iteration_bounds = array<i64: 1, 3>, scalar_prefetch = 0 : i64, scratch_operands = 1 : i64, tpu.core_type = #tpu.core_type<tc>, window_params = [{transform_indices = @transform_0, window_bounds = array<i64: 32, 384>}, {transform_indices = @transform_1, window_bounds = array<i64: 384, 256>}, {transform_indices = @transform_2, window_bounds = array<i64: 1, 256>}, {transform_indices = @transform_3, window_bounds = array<i64: 32, 256>}]} {
    %c0_i32 = arith.constant 0 : i32
    %0 = arith.cmpi eq, %arg1, %c0_i32 : i32
    %1 = arith.extui %0 : i1 to i32
    %c0_i32_0 = arith.constant 0 : i32
    %2 = arith.cmpi ne, %1, %c0_i32_0 : i32
    scf.if %2 {
      %cst_9 = arith.constant 0.000000e+00 : f32
      %12 = vector.broadcast %cst_9 : f32 to vector<32x256xf32>
      %c0_10 = arith.constant 0 : index
      %c0_11 = arith.constant 0 : index
      %13 = vector.load %arg6[%c0_10, %c0_11] : memref<32x256xf32, #tpu.memory_space<vmem>>, vector<32x256xf32>
      tpu.vector_store %arg6[%c0_10, %c0_11], %12 {strides = array<i32>} : memref<32x256xf32, #tpu.memory_space<vmem>>, vector<32x256xf32>,
    } else {
    }
    %c0 = arith.constant 0 : index
    %c0_1 = arith.constant 0 : index
    %3 = vector.load %arg6[%c0, %c0_1] : memref<32x256xf32, #tpu.memory_space<vmem>>, vector<32x256xf32>
    %c0_2 = arith.constant 0 : index
    %c0_3 = arith.constant 0 : index
    %4 = vector.load %arg2[%c0_2, %c0_3] : memref<32x384xbf16, #tpu.memory_space<vmem>>, vector<32x384xbf16>
    %c0_4 = arith.constant 0 : index
    %c0_5 = arith.constant 0 : index
    %5 = vector.load %arg3[%c0_4, %c0_5] : memref<384x256xbf16, #tpu.memory_space<vmem>>, vector<384x256xbf16>
    %cst = arith.constant dense<0.000000e+00> : vector<32x256xf32>
    %6 = tpu.matmul %4, %5, %cst {dimension_numbers = #tpu.dot_dimension_numbers<[1], [0], [0], [1], [0, 0, 1, 1], [], []>} : vector<32x384xbf16>, vector<384x256xbf16>, vector<32x256xf32> -> vector<32x256xf32>
    %7 = arith.addf %3, %6 : vector<32x256xf32>
    %c0_6 = arith.constant 0 : index
    %c0_7 = arith.constant 0 : index
    %8 = vector.load %arg6[%c0_6, %c0_7] : memref<32x256xf32, #tpu.memory_space<vmem>>, vector<32x256xf32>
    tpu.vector_store %arg6[%c0_6, %c0_7], %7 {strides = array<i32>} : memref<32x256xf32, #tpu.memory_space<vmem>>, vector<32x256xf32>,
    %c2_i32 = arith.constant 2 : i32
    %9 = arith.cmpi eq, %arg1, %c2_i32 : i32
    %10 = arith.extui %9 : i1 to i32
    %c0_i32_8 = arith.constant 0 : i32
    %11 = arith.cmpi ne, %10, %c0_i32_8 : i32
    scf.if %11 {
      %c0_9 = arith.constant 0 : index
      %c0_10 = arith.constant 0 : index
      %12 = vector.load %arg6[%c0_9, %c0_10] : memref<32x256xf32, #tpu.memory_space<vmem>>, vector<32x256xf32>
      %c0_11 = arith.constant 0 : index
      %c0_12 = arith.constant 0 : index
      %13 = vector.load %arg4[%c0_11, %c0_12] : memref<1x256xf32, #tpu.memory_space<vmem>>, vector<1x256xf32>
      %14 = vector.broadcast %13 : vector<1x256xf32> to vector<32x256xf32>
      %15 = arith.addf %12, %14 : vector<32x256xf32>
      %cst_13 = arith.constant dense<0.000000e+00> : vector<256xf32>
      %16 = vector.multi_reduction <add>, %15, %cst_13 [0] : vector<32x256xf32> to vector<256xf32>
      %17 = vector.shape_cast %16 : vector<256xf32> to vector<1x256xf32>
      %cst_14 = arith.constant 3.200000e+01 : f32
      %18 = vector.broadcast %cst_14 : f32 to vector<1x256xf32>
      %19 = arith.divf %17, %18 : vector<1x256xf32>
      %20 = vector.extract_strided_slice %19 {offsets = [0, 0], sizes = [1, 64], strides = [1, 1]} : vector<1x256xf32> to vector<1x64xf32>
      %cst_15 = arith.constant 0.000000e+00 : f32
      %21 = vector.broadcast %cst_15 : f32 to vector<1x64xf32>
      %22 = arith.addf %21, %20 : vector<1x64xf32>
      %23 = vector.extract_strided_slice %19 {offsets = [0, 64], sizes = [1, 64], strides = [1, 1]} : vector<1x256xf32> to vector<1x64xf32>
      %24 = arith.addf %22, %23 : vector<1x64xf32>
      %25 = vector.extract_strided_slice %19 {offsets = [0, 128], sizes = [1, 64], strides = [1, 1]} : vector<1x256xf32> to vector<1x64xf32>
      %26 = arith.addf %24, %25 : vector<1x64xf32>
      %27 = vector.extract_strided_slice %19 {offsets = [0, 192], sizes = [1, 64], strides = [1, 1]} : vector<1x256xf32> to vector<1x64xf32>
      %28 = arith.addf %26, %27 : vector<1x64xf32>
      %cst_16 = arith.constant 4.000000e+00 : f32
      %29 = vector.broadcast %cst_16 : f32 to vector<1x64xf32>
      %30 = arith.divf %28, %29 : vector<1x64xf32>
      %31 = tpu.concatenate %30, %30, %30, %30 in 1 : vector<1x64xf32>, vector<1x64xf32>, vector<1x64xf32>, vector<1x64xf32> -> vector<1x256xf32>
      %32 = vector.broadcast %31 : vector<1x256xf32> to vector<32x256xf32>
      %33 = arith.subf %15, %32 : vector<32x256xf32>
      %34 = arith.mulf %33, %33 : vector<32x256xf32>
      %cst_17 = arith.constant dense<0.000000e+00> : vector<256xf32>
      %35 = vector.multi_reduction <add>, %34, %cst_17 [0] : vector<32x256xf32> to vector<256xf32>
      %36 = vector.shape_cast %35 : vector<256xf32> to vector<1x256xf32>
      %cst_18 = arith.constant 3.200000e+01 : f32
      %37 = vector.broadcast %cst_18 : f32 to vector<1x256xf32>
      %38 = arith.divf %36, %37 : vector<1x256xf32>
      %39 = vector.extract_strided_slice %38 {offsets = [0, 0], sizes = [1, 64], strides = [1, 1]} : vector<1x256xf32> to vector<1x64xf32>
      %cst_19 = arith.constant 0.000000e+00 : f32
      %40 = vector.broadcast %cst_19 : f32 to vector<1x64xf32>
      %41 = arith.addf %40, %39 : vector<1x64xf32>
      %42 = vector.extract_strided_slice %38 {offsets = [0, 64], sizes = [1, 64], strides = [1, 1]} : vector<1x256xf32> to vector<1x64xf32>
      %43 = arith.addf %41, %42 : vector<1x64xf32>
      %44 = vector.extract_strided_slice %38 {offsets = [0, 128], sizes = [1, 64], strides = [1, 1]} : vector<1x256xf32> to vector<1x64xf32>
      %45 = arith.addf %43, %44 : vector<1x64xf32>
      %46 = vector.extract_strided_slice %38 {offsets = [0, 192], sizes = [1, 64], strides = [1, 1]} : vector<1x256xf32> to vector<1x64xf32>
      %47 = arith.addf %45, %46 : vector<1x64xf32>
      %cst_20 = arith.constant 4.000000e+00 : f32
      %48 = vector.broadcast %cst_20 : f32 to vector<1x64xf32>
      %49 = arith.divf %47, %48 : vector<1x64xf32>
      %50 = tpu.concatenate %49, %49, %49, %49 in 1 : vector<1x64xf32>, vector<1x64xf32>, vector<1x64xf32>, vector<1x64xf32> -> vector<1x256xf32>
      %cst_21 = arith.constant 9.99999974E-6 : f32
      %51 = vector.broadcast %cst_21 : f32 to vector<1x256xf32>
      %52 = arith.addf %50, %51 : vector<1x256xf32>
      %53 = math.rsqrt %52 : vector<1x256xf32>
      %54 = vector.broadcast %53 : vector<1x256xf32> to vector<32x256xf32>
      %55 = arith.mulf %33, %54 : vector<32x256xf32>
      %cst_22 = arith.constant 0.000000e+00 : f32
      %56 = vector.broadcast %cst_22 : f32 to vector<32x256xf32>
      %57 = arith.maximumf %55, %56 : vector<32x256xf32>
      %58 = arith.truncf %57 : vector<32x256xf32> to vector<32x256xbf16>
      %c0_23 = arith.constant 0 : index
      %c0_24 = arith.constant 0 : index
      %59 = vector.load %arg5[%c0_23, %c0_24] : memref<32x256xbf16, #tpu.memory_space<vmem>>, vector<32x256xbf16>
      tpu.vector_store %arg5[%c0_23, %c0_24], %58 {strides = array<i32>} : memref<32x256xbf16, #tpu.memory_space<vmem>>, vector<32x256xbf16>,
    } else {
    }
    return
  }
  func.func @transform_0(%arg0: i32, %arg1: i32) -> (i32, i32) {
    %c0_i32 = arith.constant 0 : i32
    %c0_i32_0 = arith.constant 0 : i32
    return %c0_i32, %arg1 : i32, i32
  }
  func.func @transform_1(%arg0: i32, %arg1: i32) -> (i32, i32) {
    %c0_i32 = arith.constant 0 : i32
    return %arg1, %arg0 : i32, i32
  }
  func.func @transform_2(%arg0: i32, %arg1: i32) -> (i32, i32) {
    %c0_i32 = arith.constant 0 : i32
    %c0_i32_0 = arith.constant 0 : i32
    return %c0_i32, %arg0 : i32, i32
  }
  func.func @transform_3(%arg0: i32, %arg1: i32) -> (i32, i32) {
    %c0_i32 = arith.constant 0 : i32
    %c0_i32_0 = arith.constant 0 : i32
    return %c0_i32, %arg0 : i32, i32
  }
}

module attributes {stable_mosaic.version = 11 : i64} {
  func.func @_fused_matmul_kernel(%arg0: i32, %arg1: i32, %arg2: memref<128x576xbf16, #tpu.memory_space<vmem>>, %arg3: memref<576x4xbf16, #tpu.memory_space<vmem>>, %arg4: memref<1x4xf32, #tpu.memory_space<vmem>>, %arg5: memref<128x4xf32, #tpu.memory_space<vmem>>, %arg6: memref<128x4xf32, #tpu.memory_space<vmem>>) attributes {dimension_semantics = [#tpu.dimension_semantics<parallel>, #tpu.dimension_semantics<arbitrary>], iteration_bounds = array<i64: 1, 1>, scalar_prefetch = 0 : i64, scratch_operands = 1 : i64, tpu.core_type = #tpu.core_type<tc>, window_params = [{transform_indices = @transform_0, window_bounds = array<i64: 128, 576>}, {transform_indices = @transform_1, window_bounds = array<i64: 576, 4>}, {transform_indices = @transform_2, window_bounds = array<i64: 1, 4>}, {transform_indices = @transform_3, window_bounds = array<i64: 128, 4>}]} {
    %c0_i32 = arith.constant 0 : i32
    %0 = arith.cmpi eq, %arg1, %c0_i32 : i32
    %1 = arith.extui %0 : i1 to i32
    %c0_i32_0 = arith.constant 0 : i32
    %2 = arith.cmpi ne, %1, %c0_i32_0 : i32
    scf.if %2 {
      %cst_10 = arith.constant 0.000000e+00 : f32
      %12 = vector.broadcast %cst_10 : f32 to vector<128x4xf32>
      %c0_11 = arith.constant 0 : index
      %c0_12 = arith.constant 0 : index
      %13 = vector.load %arg6[%c0_11, %c0_12] : memref<128x4xf32, #tpu.memory_space<vmem>>, vector<128x4xf32>
      tpu.vector_store %arg6[%c0_11, %c0_12], %12 {strides = array<i32>} : memref<128x4xf32, #tpu.memory_space<vmem>>, vector<128x4xf32>,
    } else {
    }
    %c0 = arith.constant 0 : index
    %c0_1 = arith.constant 0 : index
    %3 = vector.load %arg6[%c0, %c0_1] : memref<128x4xf32, #tpu.memory_space<vmem>>, vector<128x4xf32>
    %c0_2 = arith.constant 0 : index
    %c0_3 = arith.constant 0 : index
    %4 = vector.load %arg2[%c0_2, %c0_3] : memref<128x576xbf16, #tpu.memory_space<vmem>>, vector<128x576xbf16>
    %c0_4 = arith.constant 0 : index
    %c0_5 = arith.constant 0 : index
    %5 = vector.load %arg3[%c0_4, %c0_5] : memref<576x4xbf16, #tpu.memory_space<vmem>>, vector<576x4xbf16>
    %cst = arith.constant dense<0.000000e+00> : vector<128x4xf32>
    %6 = tpu.matmul %4, %5, %cst {dimension_numbers = #tpu.dot_dimension_numbers<[1], [0], [0], [1], [0, 0, 1, 1], [], []>} : vector<128x576xbf16>, vector<576x4xbf16>, vector<128x4xf32> -> vector<128x4xf32>
    %7 = arith.addf %3, %6 : vector<128x4xf32>
    %c0_6 = arith.constant 0 : index
    %c0_7 = arith.constant 0 : index
    %8 = vector.load %arg6[%c0_6, %c0_7] : memref<128x4xf32, #tpu.memory_space<vmem>>, vector<128x4xf32>
    tpu.vector_store %arg6[%c0_6, %c0_7], %7 {strides = array<i32>} : memref<128x4xf32, #tpu.memory_space<vmem>>, vector<128x4xf32>,
    %c0_i32_8 = arith.constant 0 : i32
    %9 = arith.cmpi eq, %arg1, %c0_i32_8 : i32
    %10 = arith.extui %9 : i1 to i32
    %c0_i32_9 = arith.constant 0 : i32
    %11 = arith.cmpi ne, %10, %c0_i32_9 : i32
    scf.if %11 {
      %c0_10 = arith.constant 0 : index
      %c0_11 = arith.constant 0 : index
      %12 = vector.load %arg6[%c0_10, %c0_11] : memref<128x4xf32, #tpu.memory_space<vmem>>, vector<128x4xf32>
      %c0_12 = arith.constant 0 : index
      %c0_13 = arith.constant 0 : index
      %13 = vector.load %arg4[%c0_12, %c0_13] : memref<1x4xf32, #tpu.memory_space<vmem>>, vector<1x4xf32>
      %14 = vector.broadcast %13 : vector<1x4xf32> to vector<128x4xf32>
      %15 = arith.addf %12, %14 : vector<128x4xf32>
      %16 = math.tanh %15 : vector<128x4xf32>
      %cst_14 = arith.constant 5.000000e-01 : f32
      %17 = vector.broadcast %cst_14 : f32 to vector<128x4xf32>
      %18 = arith.mulf %16, %17 : vector<128x4xf32>
      %cst_15 = arith.constant 5.000000e-01 : f32
      %19 = vector.broadcast %cst_15 : f32 to vector<128x4xf32>
      %20 = arith.addf %18, %19 : vector<128x4xf32>
      %c0_16 = arith.constant 0 : index
      %c0_17 = arith.constant 0 : index
      %21 = vector.load %arg5[%c0_16, %c0_17] : memref<128x4xf32, #tpu.memory_space<vmem>>, vector<128x4xf32>
      tpu.vector_store %arg5[%c0_16, %c0_17], %20 {strides = array<i32>} : memref<128x4xf32, #tpu.memory_space<vmem>>, vector<128x4xf32>,
    } else {
    }
    return
  }
  func.func @transform_0(%arg0: i32, %arg1: i32) -> (i32, i32) {
    %c0_i32 = arith.constant 0 : i32
    %c0_i32_0 = arith.constant 0 : i32
    return %c0_i32, %arg1 : i32, i32
  }
  func.func @transform_1(%arg0: i32, %arg1: i32) -> (i32, i32) {
    %c0_i32 = arith.constant 0 : i32
    return %arg1, %arg0 : i32, i32
  }
  func.func @transform_2(%arg0: i32, %arg1: i32) -> (i32, i32) {
    %c0_i32 = arith.constant 0 : i32
    %c0_i32_0 = arith.constant 0 : i32
    return %c0_i32, %arg0 : i32, i32
  }
  func.func @transform_3(%arg0: i32, %arg1: i32) -> (i32, i32) {
    %c0_i32 = arith.constant 0 : i32
    %c0_i32_0 = arith.constant 0 : i32
    return %c0_i32, %arg0 : i32, i32
  }
}

</mosaic_0001>

<llo_original>
// kernel: conv_vae_forward.8
$region0: #{conv_vae_forward.8}
  #allocation0 [shape = 'u32[]', space=smem, size = 0x4, offset = 0x4, fixed_abs, tag = 'smem constant byte address 0x4 - core index']
  #allocation1 [shape = 'u32[72,128]{1,0:T(1,128)}', space=vmem, size = 0x9000, scoped, tag = 'internal scratch']
  #allocation2 [shape = 'f32[128,64]{1,0:T(8,128)}', space=vmem, size = 0x10000, scoped, tag = 'scratch operand']
  %s0 = inlined_call_operand.vmem [shape: bf16[128,16], index: 0, kind: input, shape index: {}]
  %s1 = inlined_call_operand.hbm [shape: bf16[16,64], index: 1, kind: input, shape index: {}]
  %s2 = inlined_call_operand.hbm [shape: f32[1,64], index: 2, kind: input, shape index: {}]
  %s3 = inlined_call_operand.vmem [shape: bf16[128,64], index: 3, kind: output, shape index: {}]
  %s4 = sld [smem:[#allocation0]]
  $region38: #{conv_vae_forward.8} parent=0
    _
  %s6 = ssub.s32 1, %s4
  %s7 = scalar_select 0, %s6, %s4
  $region1: #{conv_vae_forward.8} parent=0
    #allocation3 [shape = 'u8[4096]{0}', space=vmem, size = 0x1000, scoped, tag = 'input window, operand 1, single buffered']
    #allocation4 [shape = 's32[1]{0}', space=sflag, size = 0x4, scoped, tag = 'scoped memory for conv_vae_forward.8']
    #allocation5 [shape = 'u8[512]{0}', space=vmem, size = 0x400, scoped, tag = 'input window, operand 2, single buffered']
    #allocation6 [shape = 's32[1]{0}', space=sflag, size = 0x4, scoped, tag = 'scoped memory for conv_vae_forward.8']
    %8 = vsyncpa [#allocation4], 0
    %9 = vsyncpa [#allocation6], 0
    // Predicated region
    $region2: #{conv_vae_forward.8} parent=1 // pred_check
      _
    $region3: #{conv_vae_forward.8} parent=1 // pred_check_branch
      %11 = sbr.rel (0) target = $region5
    $region4: #{conv_vae_forward.8} parent=1 // pred_region
      _
    $region5: #{conv_vae_forward.8} parent=1 // pred_fallthru
      _
    // Predicated region
    $region6: #{conv_vae_forward.8} parent=1 // pred_check
      _
    $region7: #{conv_vae_forward.8} parent=1 // pred_check_branch
      %13 = sbr.rel (0) target = $region9
    $region8: #{conv_vae_forward.8} parent=1 // pred_region
      %15 = vsyncadd [#allocation4], 0
      %s16 = sshll.u32 %s1, 4
      %s17 = int_to_ptr.hbm [resolvable:$true] %s16
      %s18 = sshll.u32 [#allocation3], 4
      %s19 = int_to_ptr.vmem [resolvable:$true] %s18
      %24 = dma.hbm_to_vmem [thread:$0]  %s17, 128, %s19, [#allocation4], 64, 64, 4
    $region9: #{conv_vae_forward.8} parent=1 // pred_fallthru
      _
    // Predicated region
    $region10: #{conv_vae_forward.8} parent=1 // pred_check
      _
    $region11: #{conv_vae_forward.8} parent=1 // pred_check_branch
      %26 = sbr.rel (0) target = $region13
    $region12: #{conv_vae_forward.8} parent=1 // pred_region
      %28 = vsyncadd [#allocation6], 0
      %s30 = sshll.u32 %s2, 4
      %s31 = int_to_ptr.hbm [resolvable:$true] %s30
      %s32 = sshll.u32 [#allocation5], 4
      %s33 = int_to_ptr.vmem [resolvable:$true] %s32
      %35 = dma.hbm_to_vmem [thread:$0]  %s31, 16, %s33, [#allocation6]
    $region13: #{conv_vae_forward.8} parent=1 // pred_fallthru
      _
    // Predicated region
    $region14: #{conv_vae_forward.8} parent=1 // pred_check
      _
    $region15: #{conv_vae_forward.8} parent=1 // pred_check_branch
      %37 = sbr.rel (0) target = $region17
    $region16: #{conv_vae_forward.8} parent=1 // pred_region
      %39 = dma.done [#allocation4], 128
    $region17: #{conv_vae_forward.8} parent=1 // pred_fallthru
      _
    // Predicated region
    $region18: #{conv_vae_forward.8} parent=1 // pred_check
      _
    $region19: #{conv_vae_forward.8} parent=1 // pred_check_branch
      %41 = sbr.rel (0) target = $region21
    $region20: #{conv_vae_forward.8} parent=1 // pred_region
      %43 = dma.done [#allocation6], 16
    $region21: #{conv_vae_forward.8} parent=1 // pred_fallthru
      _
    %p45 = scmp.eq.s32.totalorder 0, 0
    // Predicated region
    $region22: #{conv_vae_forward.8} parent=1 // pred_check
      %p46 = pneg %p45
    $region23: #{conv_vae_forward.8} parent=1 // pred_check_branch
      %48 = sbr.rel (%p46) target = $region25
    $region24: #{conv_vae_forward.8} parent=1 // pred_region
      %vm49 = vcmask 523264
      %50 = vst.msk [vmem:[#allocation2] sm:$0xff] %vm49, 0.0
      %51 = vst.msk [vmem:[#allocation2 + $0x8] sm:$0xff] %vm49, 0.0
      %52 = vst.msk [vmem:[#allocation2 + $0x10] sm:$0xff] %vm49, 0.0
      %53 = vst.msk [vmem:[#allocation2 + $0x18] sm:$0xff] %vm49, 0.0
      %54 = vst.msk [vmem:[#allocation2 + $0x20] sm:$0xff] %vm49, 0.0
      %55 = vst.msk [vmem:[#allocation2 + $0x28] sm:$0xff] %vm49, 0.0
      %56 = vst.msk [vmem:[#allocation2 + $0x30] sm:$0xff] %vm49, 0.0
      %57 = vst.msk [vmem:[#allocation2 + $0x38] sm:$0xff] %vm49, 0.0
      %58 = vst.msk [vmem:[#allocation2 + $0x40] sm:$0xff] %vm49, 0.0
      %59 = vst.msk [vmem:[#allocation2 + $0x48] sm:$0xff] %vm49, 0.0
      %60 = vst.msk [vmem:[#allocation2 + $0x50] sm:$0xff] %vm49, 0.0
      %61 = vst.msk [vmem:[#allocation2 + $0x58] sm:$0xff] %vm49, 0.0
      %62 = vst.msk [vmem:[#allocation2 + $0x60] sm:$0xff] %vm49, 0.0
      %63 = vst.msk [vmem:[#allocation2 + $0x68] sm:$0xff] %vm49, 0.0
      %64 = vst.msk [vmem:[#allocation2 + $0x70] sm:$0xff] %vm49, 0.0
      %65 = vst.msk [vmem:[#allocation2 + $0x78] sm:$0xff] %vm49, 0.0
    $region25: #{conv_vae_forward.8} parent=1 // pred_fallthru
      _
    %v66 = vld [vmem:[#allocation2] sm:$0xff]
    %v67 = vld [vmem:[#allocation2 + $0x8] sm:$0xff]
    %v68 = vld [vmem:[#allocation2 + $0x10] sm:$0xff]
    %v69 = vld [vmem:[#allocation2 + $0x18] sm:$0xff]
    %v70 = vld [vmem:[#allocation2 + $0x20] sm:$0xff]
    %v71 = vld [vmem:[#allocation2 + $0x28] sm:$0xff]
    %v72 = vld [vmem:[#allocation2 + $0x30] sm:$0xff]
    %v73 = vld [vmem:[#allocation2 + $0x38] sm:$0xff]
    %v74 = vld [vmem:[#allocation2 + $0x40] sm:$0xff]
    %v75 = vld [vmem:[#allocation2 + $0x48] sm:$0xff]
    %v76 = vld [vmem:[#allocation2 + $0x50] sm:$0xff]
    %v77 = vld [vmem:[#allocation2 + $0x58] sm:$0xff]
    %v78 = vld [vmem:[#allocation2 + $0x60] sm:$0xff]
    %v79 = vld [vmem:[#allocation2 + $0x68] sm:$0xff]
    %v80 = vld [vmem:[#allocation2 + $0x70] sm:$0xff]
    %v81 = vld [vmem:[#allocation2 + $0x78] sm:$0xff]
    %v82 = vld [vmem:[%s0] sm:$0xf]
    %v83 = vld [vmem:[%s0 + $0x4] sm:$0xf]
    %v84 = vld [vmem:[%s0 + $0x8] sm:$0xf]
    %v85 = vld [vmem:[%s0 + $0xc] sm:$0xf]
    %v86 = vld [vmem:[%s0 + $0x10] sm:$0xf]
    %v87 = vld [vmem:[%s0 + $0x14] sm:$0xf]
    %v88 = vld [vmem:[%s0 + $0x18] sm:$0xf]
    %v89 = vld [vmem:[%s0 + $0x1c] sm:$0xf]
    %v90 = vld [vmem:[%s0 + $0x20] sm:$0xf]
    %v91 = vld [vmem:[%s0 + $0x24] sm:$0xf]
    %v92 = vld [vmem:[%s0 + $0x28] sm:$0xf]
    %v93 = vld [vmem:[%s0 + $0x2c] sm:$0xf]
    %v94 = vld [vmem:[%s0 + $0x30] sm:$0xf]
    %v95 = vld [vmem:[%s0 + $0x34] sm:$0xf]
    %v96 = vld [vmem:[%s0 + $0x38] sm:$0xf]
    %v97 = vld [vmem:[%s0 + $0x3c] sm:$0xf]
    %v98 = vld [vmem:[#allocation3] sm:$0xf]
    %v99 = vld [vmem:[#allocation3 + $0x4] sm:$0xf]
    %v116 = vunpack.c.l.b16 %v82
    %v117 = vunpack.c.l.b16 %v83
    %v118 = vunpack.c.l.b16 %v84
    %v119 = vunpack.c.l.b16 %v85
    %v120 = vunpack.c.l.b16 %v86
    %v121 = vunpack.c.l.b16 %v87
    %v122 = vunpack.c.l.b16 %v88
    %v123 = vunpack.c.l.b16 %v89
    %v124 = vunpack.c.l.b16 %v90
    %v125 = vunpack.c.l.b16 %v91
    %v126 = vunpack.c.l.b16 %v92
    %v127 = vunpack.c.l.b16 %v93
    %v128 = vunpack.c.l.b16 %v94
    %v129 = vunpack.c.l.b16 %v95
    %v130 = vunpack.c.l.b16 %v96
    %v131 = vunpack.c.l.b16 %v97
    %v132 = vpack.c.b16 %v117, %v116
    %v133 = vpack.c.b16 %v119, %v118
    %v134 = vpack.c.b16 %v121, %v120
    %v135 = vpack.c.b16 %v123, %v122
    %v136 = vpack.c.b16 %v125, %v124
    %v137 = vpack.c.b16 %v127, %v126
    %v138 = vpack.c.b16 %v129, %v128
    %v139 = vpack.c.b16 %v131, %v130
    %v142 = vunpack.c.l.b16 %v98
    %v143 = vunpack.c.l.b16 %v99
    %v144 = vpack.c.b16 %v143, %v142
    %vm146 = vcmask 130048
    %v148 = vsel %vm146, %v132, 0
    %v151 = vsel %vm146, %v133, 0
    %v154 = vsel %vm146, %v134, 0
    %v157 = vsel %vm146, %v135, 0
    %v160 = vsel %vm146, %v136, 0
    %v163 = vsel %vm146, %v137, 0
    %v166 = vsel %vm146, %v138, 0
    %v169 = vsel %vm146, %v139, 0
    %171 = vmatpush.bf16.msra.mxu0 0
    %172 = vmatpush.bf16.msra.mxu0 0
    %173 = vmatpush.bf16.msra.mxu0 0
    %174 = vmatpush.bf16.msra.mxu0 0
    %175 = vmatpush.bf16.msra.mxu0 0
    %176 = vmatpush.bf16.msra.mxu0 0
    %177 = vmatpush.bf16.msra.mxu0 0
    %178 = vmatpush.bf16.msra.mxu0 %v144
    %179 = vmatmul.bf16.gmra.mxu0 %v148
    %v180 = vpop.f32.mrf.mxu0
    %v181 = vadd.f32 0.0, %v180
    %v182 = vpop.f32.mrf.mxu0
    %v183 = vadd.f32 0.0, %v182
    %184 = vmatmul.bf16.gmra.mxu0 %v151
    %v185 = vpop.f32.mrf.mxu0
    %v186 = vadd.f32 0.0, %v185
    %v187 = vpop.f32.mrf.mxu0
    %v188 = vadd.f32 0.0, %v187
    %189 = vmatmul.bf16.gmra.mxu0 %v154
    %v190 = vpop.f32.mrf.mxu0
    %v191 = vadd.f32 0.0, %v190
    %v192 = vpop.f32.mrf.mxu0
    %v193 = vadd.f32 0.0, %v192
    %194 = vmatmul.bf16.gmra.mxu0 %v157
    %v195 = vpop.f32.mrf.mxu0
    %v196 = vadd.f32 0.0, %v195
    %v197 = vpop.f32.mrf.mxu0
    %v198 = vadd.f32 0.0, %v197
    %199 = vmatmul.bf16.gmra.mxu0 %v160
    %v200 = vpop.f32.mrf.mxu0
    %v201 = vadd.f32 0.0, %v200
    %v202 = vpop.f32.mrf.mxu0
    %v203 = vadd.f32 0.0, %v202
    %204 = vmatmul.bf16.gmra.mxu0 %v163
    %v205 = vpop.f32.mrf.mxu0
    %v206 = vadd.f32 0.0, %v205
    %v207 = vpop.f32.mrf.mxu0
    %v208 = vadd.f32 0.0, %v207
    %209 = vmatmul.bf16.gmra.mxu0 %v166
    %v210 = vpop.f32.mrf.mxu0
    %v211 = vadd.f32 0.0, %v210
    %v212 = vpop.f32.mrf.mxu0
    %v213 = vadd.f32 0.0, %v212
    %214 = vmatmul.bf16.gmra.mxu0 %v169
    %v215 = vpop.f32.mrf.mxu0
    %v216 = vadd.f32 0.0, %v215
    %v217 = vpop.f32.mrf.mxu0
    %v218 = vadd.f32 0.0, %v217
    %219 = vdwg.mxu0
    %v220 = vadd.f32 %v66, %v181
    %v221 = vadd.f32 %v67, %v183
    %v222 = vadd.f32 %v68, %v186
    %v223 = vadd.f32 %v69, %v188
    %v224 = vadd.f32 %v70, %v191
    %v225 = vadd.f32 %v71, %v193
    %v226 = vadd.f32 %v72, %v196
    %v227 = vadd.f32 %v73, %v198
    %v228 = vadd.f32 %v74, %v201
    %v229 = vadd.f32 %v75, %v203
    %v230 = vadd.f32 %v76, %v206
    %v231 = vadd.f32 %v77, %v208
    %v232 = vadd.f32 %v78, %v211
    %v233 = vadd.f32 %v79, %v213
    %v234 = vadd.f32 %v80, %v216
    %v235 = vadd.f32 %v81, %v218
    %vm236 = vcmask 523264
    %237 = vst.msk [vmem:[#allocation2] sm:$0xff] %vm236, %v220
    %238 = vst.msk [vmem:[#allocation2 + $0x8] sm:$0xff] %vm236, %v221
    %239 = vst.msk [vmem:[#allocation2 + $0x10] sm:$0xff] %vm236, %v222
    %240 = vst.msk [vmem:[#allocation2 + $0x18] sm:$0xff] %vm236, %v223
    %241 = vst.msk [vmem:[#allocation2 + $0x20] sm:$0xff] %vm236, %v224
    %242 = vst.msk [vmem:[#allocation2 + $0x28] sm:$0xff] %vm236, %v225
    %243 = vst.msk [vmem:[#allocation2 + $0x30] sm:$0xff] %vm236, %v226
    %244 = vst.msk [vmem:[#allocation2 + $0x38] sm:$0xff] %vm236, %v227
    %245 = vst.msk [vmem:[#allocation2 + $0x40] sm:$0xff] %vm236, %v228
    %246 = vst.msk [vmem:[#allocation2 + $0x48] sm:$0xff] %vm236, %v229
    %247 = vst.msk [vmem:[#allocation2 + $0x50] sm:$0xff] %vm236, %v230
    %248 = vst.msk [vmem:[#allocation2 + $0x58] sm:$0xff] %vm236, %v231
    %249 = vst.msk [vmem:[#allocation2 + $0x60] sm:$0xff] %vm236, %v232
    %250 = vst.msk [vmem:[#allocation2 + $0x68] sm:$0xff] %vm236, %v233
    %251 = vst.msk [vmem:[#allocation2 + $0x70] sm:$0xff] %vm236, %v234
    %252 = vst.msk [vmem:[#allocation2 + $0x78] sm:$0xff] %vm236, %v235
    // Predicated region
    $region26: #{conv_vae_forward.8} parent=1 // pred_check
      %p253 = pneg %p45
    $region27: #{conv_vae_forward.8} parent=1 // pred_check_branch
      %255 = sbr.rel (%p253) target = $region29
    $region28: #{conv_vae_forward.8} parent=1 // pred_region
      %v256 = vld [vmem:[#allocation2] sm:$0xff]
      %v257 = vld [vmem:[#allocation2 + $0x8] sm:$0xff]
      %v258 = vld [vmem:[#allocation2 + $0x10] sm:$0xff]
      %v259 = vld [vmem:[#allocation2 + $0x18] sm:$0xff]
      %v260 = vld [vmem:[#allocation2 + $0x20] sm:$0xff]
      %v261 = vld [vmem:[#allocation2 + $0x28] sm:$0xff]
      %v262 = vld [vmem:[#allocation2 + $0x30] sm:$0xff]
      %v263 = vld [vmem:[#allocation2 + $0x38] sm:$0xff]
      %v264 = vld [vmem:[#allocation2 + $0x40] sm:$0xff]
      %v265 = vld [vmem:[#allocation2 + $0x48] sm:$0xff]
      %v266 = vld [vmem:[#allocation2 + $0x50] sm:$0xff]
      %v267 = vld [vmem:[#allocation2 + $0x58] sm:$0xff]
      %v268 = vld [vmem:[#allocation2 + $0x60] sm:$0xff]
      %v269 = vld [vmem:[#allocation2 + $0x68] sm:$0xff]
      %v270 = vld [vmem:[#allocation2 + $0x70] sm:$0xff]
      %v271 = vld [vmem:[#allocation2 + $0x78] sm:$0xff]
      %v272 = vld [vmem:[#allocation5] sm:$0x1]
      %v274 = vperm.slane %v272, 0
      %v276 = vadd.f32 %v256, %v274
      %v277 = vadd.f32 %v257, %v274
      %v278 = vadd.f32 %v258, %v274
      %v279 = vadd.f32 %v259, %v274
      %v280 = vadd.f32 %v260, %v274
      %v281 = vadd.f32 %v261, %v274
      %v282 = vadd.f32 %v262, %v274
      %v283 = vadd.f32 %v263, %v274
      %v284 = vadd.f32 %v264, %v274
      %v285 = vadd.f32 %v265, %v274
      %v286 = vadd.f32 %v266, %v274
      %v287 = vadd.f32 %v267, %v274
      %v288 = vadd.f32 %v268, %v274
      %v289 = vadd.f32 %v269, %v274
      %v290 = vadd.f32 %v270, %v274
      %v291 = vadd.f32 %v271, %v274
      %v292 = vmax.f32 %v276, 0.0
      %v293 = vmax.f32 %v277, 0.0
      %v294 = vmax.f32 %v278, 0.0
      %v295 = vmax.f32 %v279, 0.0
      %v296 = vmax.f32 %v280, 0.0
      %v297 = vmax.f32 %v281, 0.0
      %v298 = vmax.f32 %v282, 0.0
      %v299 = vmax.f32 %v283, 0.0
      %v300 = vmax.f32 %v284, 0.0
      %v301 = vmax.f32 %v285, 0.0
      %v302 = vmax.f32 %v286, 0.0
      %v303 = vmax.f32 %v287, 0.0
      %v304 = vmax.f32 %v288, 0.0
      %v305 = vmax.f32 %v289, 0.0
      %v306 = vmax.f32 %v290, 0.0
      %v307 = vmax.f32 %v291, 0.0
      %v308 = vpack.c.bf16 %v292, %v292
      %v309 = vpack.c.bf16 %v293, %v293
      %v310 = vpack.c.bf16 %v294, %v294
      %v311 = vpack.c.bf16 %v295, %v295
      %v312 = vpack.c.bf16 %v296, %v296
      %v313 = vpack.c.bf16 %v297, %v297
      %v314 = vpack.c.bf16 %v298, %v298
      %v315 = vpack.c.bf16 %v299, %v299
      %v316 = vpack.c.bf16 %v300, %v300
      %v317 = vpack.c.bf16 %v301, %v301
      %v318 = vpack.c.bf16 %v302, %v302
      %v319 = vpack.c.bf16 %v303, %v303
      %v320 = vpack.c.bf16 %v304, %v304
      %v321 = vpack.c.bf16 %v305, %v305
      %v322 = vpack.c.bf16 %v306, %v306
      %v323 = vpack.c.bf16 %v307, %v307
      %vm324 = vcmask 519168
      %325 = vst.msk [vmem:[%s3] sm:$0xf] %vm324, %v308
      %326 = vst.msk [vmem:[%s3 + $0x4] sm:$0xf] %vm324, %v309
      %327 = vst.msk [vmem:[%s3 + $0x8] sm:$0xf] %vm324, %v310
      %328 = vst.msk [vmem:[%s3 + $0xc] sm:$0xf] %vm324, %v311
      %329 = vst.msk [vmem:[%s3 + $0x10] sm:$0xf] %vm324, %v312
      %330 = vst.msk [vmem:[%s3 + $0x14] sm:$0xf] %vm324, %v313
      %331 = vst.msk [vmem:[%s3 + $0x18] sm:$0xf] %vm324, %v314
      %332 = vst.msk [vmem:[%s3 + $0x1c] sm:$0xf] %vm324, %v315
      %333 = vst.msk [vmem:[%s3 + $0x20] sm:$0xf] %vm324, %v316
      %334 = vst.msk [vmem:[%s3 + $0x24] sm:$0xf] %vm324, %v317
      %335 = vst.msk [vmem:[%s3 + $0x28] sm:$0xf] %vm324, %v318
      %336 = vst.msk [vmem:[%s3 + $0x2c] sm:$0xf] %vm324, %v319
      %337 = vst.msk [vmem:[%s3 + $0x30] sm:$0xf] %vm324, %v320
      %338 = vst.msk [vmem:[%s3 + $0x34] sm:$0xf] %vm324, %v321
      %339 = vst.msk [vmem:[%s3 + $0x38] sm:$0xf] %vm324, %v322
      %340 = vst.msk [vmem:[%s3 + $0x3c] sm:$0xf] %vm324, %v323
    $region29: #{conv_vae_forward.8} parent=1 // pred_fallthru
      _
    // Predicated region
    $region30: #{conv_vae_forward.8} parent=1 // pred_check
      _
    $region31: #{conv_vae_forward.8} parent=1 // pred_check_branch
      %342 = sbr.rel (0) target = $region33
    $region32: #{conv_vae_forward.8} parent=1 // pred_region
      _
    $region33: #{conv_vae_forward.8} parent=1 // pred_fallthru
      _
    // Predicated region
    $region34: #{conv_vae_forward.8} parent=1 // pred_check
      _
    $region35: #{conv_vae_forward.8} parent=1 // pred_check_branch
      %344 = sbr.rel (0) target = $region37
    $region36: #{conv_vae_forward.8} parent=1 // pred_region
      _
    $region37: #{conv_vae_forward.8} parent=1 // pred_fallthru
      _
    %345 = vsyncpa [#allocation4], 1
    %346 = vsyncpa [#allocation6], 1

// kernel: conv_vae_forward.9
$region0: #{conv_vae_forward.9}
  #allocation0 [shape = 'u32[]', space=smem, size = 0x4, offset = 0x4, fixed_abs, tag = 'smem constant byte address 0x4 - core index']
  #allocation1 [shape = 'u32[72,128]{1,0:T(1,128)}', space=vmem, size = 0x9000, scoped, tag = 'internal scratch']
  #allocation2 [shape = 'f32[32,128]{1,0:T(8,128)}', space=vmem, size = 0x4000, scoped, tag = 'scratch operand']
  %s0 = inlined_call_operand.vmem [shape: bf16[32,1024], index: 0, kind: input, shape index: {}]
  %s1 = inlined_call_operand.hbm [shape: bf16[1024,128], index: 1, kind: input, shape index: {}]
  %s2 = inlined_call_operand.hbm [shape: f32[1,128], index: 2, kind: input, shape index: {}]
  %s3 = inlined_call_operand.vmem [shape: bf16[32,128], index: 3, kind: output, shape index: {}]
  %s4 = sld [smem:[#allocation0]]
  $region84: #{conv_vae_forward.9} parent=0
    _
  %s6 = ssub.s32 1, %s4
  %s7 = scalar_select 0, %s6, %s4
  $region1: #{conv_vae_forward.9} parent=0
    #allocation3 [shape = 'u8[65536]{0}', space=vmem, size = 0x10000, scoped, tag = 'input window, operand 0']
    #allocation4 [shape = 'u8[262144]{0}', space=vmem, size = 0x40000, scoped, tag = 'input window, operand 1']
    #allocation5 [shape = 's32[2]{0}', space=sflag, size = 0x8, scoped, tag = 'scoped memory for conv_vae_forward.9']
    #allocation6 [shape = 'u8[512]{0}', space=vmem, size = 0x400, scoped, tag = 'input window, operand 2, single buffered']
    #allocation7 [shape = 's32[1]{0}', space=sflag, size = 0x4, scoped, tag = 'scoped memory for conv_vae_forward.9']
    %8 = vsyncpa [#allocation5], 0
    %s9 = scalar_lea.sflag [#allocation5], 1
    %10 = vsyncpa %s9, 0
    %11 = vsyncpa [#allocation7], 0
    loop: start=0, step=1, limit=4
    $region2: #{conv_vae_forward.9} parent=1 // loop_pre_header
      _
    $region3: #{conv_vae_forward.9} parent=1 // loop_header
      %s13 = sphi 0, %s17
      %p14 = scmp.ge.s32.totalorder %s13, 4
      %s20 = sphi 0, %s32
      %s21 = sphi 0, %s28
      %s22 = sphi 0, %s20
      %s23 = sphi 0, %s21
      %s24 = sphi 0, %s22
      %s25 = sphi 0, %s23
      %s35 = sphi 0, %s37
      %s38 = sphi 0, %s35
      %s39 = sphi 0, %s38
      %s55 = sphi 0, %s39
      %s63 = sphi 0, %s65
      %s66 = sphi 0, %s63
      %s67 = sphi 0, %s66
      %s83 = sphi 0, %s67
      %s89 = sphi 0, %s91
      %s92 = sphi 0, %s89
      %s93 = sphi 0, %s92
      %s109 = sphi 0, %s93
      %s115 = sphi 0, %s117
      %s118 = sphi 0, %s115
      %s119 = sphi 0, %s118
      %s135 = sphi 0, %s119
    $region4: #{conv_vae_forward.9} parent=1 // loop_header_branch
      %16 = sbr.rel (%p14) target = $region8
    $region5: #{conv_vae_forward.9} parent=1 // loop_body
      %s18 = ssub.s32 %s13, 1
      %s19 = ssub.s32 %s13, 2
      %s26 = sadd.s32 1, %s21
      %p27 = scmp.ge.s32.totalorder %s26, 2
      %s28 = scalar_select %p27, 0, %s26
      %s29 = sadd.s32 1, %s20
      %s30 = scalar_select %p27, %s29, %s20
      %p31 = scmp.ge.s32.totalorder %s30, 1
      %s32 = scalar_select %p31, 0, %s30
      %s33 = ssub.s32 %s21, %s28
      %p34 = scmp.eq.s32.totalorder %s33, 0
      %s36 = sadd.s32 %s35, 1
      %s37 = scalar_select %p34, %s35, %s36
      %p40 = pneg %p34
      %p41 = scmp.eq.s32.totalorder %s13, 1
      %p42 = por %p40, %p41
      %p43 = scmp.ne.s32.totalorder %s35, %s38
      %p44 = scmp.eq.s32.totalorder %s13, 0
      %p45 = por %p43, %p44
      %p46 = scmp.ne.s32.totalorder %s35, %s38
      %p47 = scmp.eq.s32.totalorder %s18, 1
      %p48 = por %p46, %p47
      %p49 = scmp.ne.s32.totalorder %s38, %s39
      %p50 = scmp.eq.s32.totalorder %s18, 0
      %p51 = por %p49, %p50
      %p52 = scmp.ne.s32.totalorder %s38, %s39
      %p53 = scmp.eq.s32.totalorder %s19, 1
      %p54 = por %p52, %p53
      %p56 = scmp.ne.s32.totalorder %s39, %s55
      %p57 = scmp.eq.s32.totalorder %s19, 0
      %p58 = por %p56, %p57
      %s59 = ssub.s32 %s21, %s28
      %s60 = ssub.s32 %s20, %s32
      %s61 = sor.u32 %s59, %s60
      %p62 = scmp.eq.s32.totalorder %s61, 0
      %s64 = sadd.s32 %s63, 1
      %s65 = scalar_select %p62, %s63, %s64
      %p68 = pneg %p62
      %p69 = scmp.eq.s32.totalorder %s13, 1
      %p70 = por %p68, %p69
      %p71 = scmp.ne.s32.totalorder %s63, %s66
      %p72 = scmp.eq.s32.totalorder %s13, 0
      %p73 = por %p71, %p72
      %p74 = scmp.ne.s32.totalorder %s63, %s66
      %p75 = scmp.eq.s32.totalorder %s18, 1
      %p76 = por %p74, %p75
      %p77 = scmp.ne.s32.totalorder %s66, %s67
      %p78 = scmp.eq.s32.totalorder %s18, 0
      %p79 = por %p77, %p78
      %p80 = scmp.ne.s32.totalorder %s66, %s67
      %p81 = scmp.eq.s32.totalorder %s19, 1
      %p82 = por %p80, %p81
      %p84 = scmp.ne.s32.totalorder %s67, %s83
      %p85 = scmp.eq.s32.totalorder %s19, 0
      %p86 = por %p84, %p85
      %s87 = ssub.s32 %s20, %s32
      %p88 = scmp.eq.s32.totalorder %s87, 0
      %s90 = sadd.s32 %s89, 1
      %s91 = scalar_select %p88, %s89, %s90
      %p94 = pneg %p88
      %p95 = scmp.eq.s32.totalorder %s13, 1
      %p96 = por %p94, %p95
      %p97 = scmp.ne.s32.totalorder %s89, %s92
      %p98 = scmp.eq.s32.totalorder %s13, 0
      %p99 = por %p97, %p98
      %p100 = scmp.ne.s32.totalorder %s89, %s92
      %p101 = scmp.eq.s32.totalorder %s18, 1
      %p102 = por %p100, %p101
      %p103 = scmp.ne.s32.totalorder %s92, %s93
      %p104 = scmp.eq.s32.totalorder %s18, 0
      %p105 = por %p103, %p104
      %p106 = scmp.ne.s32.totalorder %s92, %s93
      %p107 = scmp.eq.s32.totalorder %s19, 1
      %p108 = por %p106, %p107
      %p110 = scmp.ne.s32.totalorder %s93, %s109
      %p111 = scmp.eq.s32.totalorder %s19, 0
      %p112 = por %p110, %p111
      %s113 = ssub.s32 %s20, %s32
      %p114 = scmp.eq.s32.totalorder %s113, 0
      %s116 = sadd.s32 %s115, 1
      %s117 = scalar_select %p114, %s115, %s116
      %p120 = pneg %p114
      %p121 = scmp.eq.s32.totalorder %s13, 1
      %p122 = por %p120, %p121
      %p123 = scmp.ne.s32.totalorder %s115, %s118
      %p124 = scmp.eq.s32.totalorder %s13, 0
      %p125 = por %p123, %p124
      %p126 = scmp.ne.s32.totalorder %s115, %s118
      %p127 = scmp.eq.s32.totalorder %s18, 1
      %p128 = por %p126, %p127
      %p129 = scmp.ne.s32.totalorder %s118, %s119
      %p130 = scmp.eq.s32.totalorder %s18, 0
      %p131 = por %p129, %p130
      %p132 = scmp.ne.s32.totalorder %s118, %s119
      %p133 = scmp.eq.s32.totalorder %s19, 1
      %p134 = por %p132, %p133
      %p136 = scmp.ne.s32.totalorder %s119, %s135
      %p137 = scmp.eq.s32.totalorder %s19, 0
      %p138 = por %p136, %p137
      %p139 = scmp.le.s32.totalorder 1, %s13
      %p140 = scmp.lt.s32.totalorder %s13, 3
      %p141 = pnand %p139, %p140
      %p142 = pneg %p141
      // Predicated region
      $region9: #{conv_vae_forward.9} parent=5 // pred_check
        _
      $region10: #{conv_vae_forward.9} parent=5 // pred_check_branch
        %144 = sbr.rel (%p141) target = $region12
      $region11: #{conv_vae_forward.9} parent=5 // pred_region
        %s145 = ssub.s32 %s13, 1
        // Predicated region
        $region13: #{conv_vae_forward.9} parent=11 // pred_check
          %p146 = pneg %p105
        $region14: #{conv_vae_forward.9} parent=11 // pred_check_branch
          %148 = sbr.rel (%p146) target = $region16
        $region15: #{conv_vae_forward.9} parent=11 // pred_region
          %150 = vsyncadd [#allocation7], 0
          %s151 = scalar_lea.hbm %s2, %s22
          %s153 = sshll.u32 %s151, 4
          %s154 = int_to_ptr.hbm [resolvable:$true] %s153
          %s155 = sshll.u32 [#allocation6], 4
          %s156 = int_to_ptr.vmem [resolvable:$true] %s155
          %158 = dma.hbm_to_vmem [thread:$0]  %s154, 16, %s156, [#allocation7]
        $region16: #{conv_vae_forward.9} parent=11 // pred_fallthru
          _
      $region12: #{conv_vae_forward.9} parent=5 // pred_fallthru
        _
      %p159 = scmp.lt.s32.totalorder %s13, 2
      // Predicated region
      $region17: #{conv_vae_forward.9} parent=5 // pred_check
        %p160 = pneg %p159
      $region18: #{conv_vae_forward.9} parent=5 // pred_check_branch
        %162 = sbr.rel (%p160) target = $region20
      $region19: #{conv_vae_forward.9} parent=5 // pred_region
        // Predicated region
        $region21: #{conv_vae_forward.9} parent=19 // pred_check
          %p163 = pneg %p45
        $region22: #{conv_vae_forward.9} parent=19 // pred_check_branch
          %165 = sbr.rel (%p163) target = $region24
        $region23: #{conv_vae_forward.9} parent=19 // pred_region
          %s166 = sand.u32 %s35, 1
          %s167 = sand.u32 %s35, 1
          %s168 = smul.addr %s167, 64
          %s169 = scalar_lea.vmem [#allocation3], %s168
          %s170 = smul.u32 4, %s21
          %s171 = smul.addr %s170, 4
          %s172 = scalar_lea.vmem %s0, %s171
          // Predicated region
          $region25: #{conv_vae_forward.9} parent=23 // pred_check
            _
          $region26: #{conv_vae_forward.9} parent=23 // pred_check_branch
            %174 = sbr.rel (0) target = $region28
          $region27: #{conv_vae_forward.9} parent=23 // pred_region
            // Predicated region
            $region29: #{conv_vae_forward.9} parent=27 // pred_check
              _
            $region30: #{conv_vae_forward.9} parent=27 // pred_check_branch
              %176 = sbr.rel (0) target = $region32
            $region31: #{conv_vae_forward.9} parent=27 // pred_region
              loop: start=0, step=1, limit=1
              $region33: #{conv_vae_forward.9} parent=31 // loop_pre_header
                _
              $region34: #{conv_vae_forward.9} parent=31 // loop_header
                %s178 = sphi 0, %s182
                %p179 = scmp.ge.s32.totalorder %s178, 1
                %s183 = sphi %s172, %s172
                %s184 = sphi %s169, %s169
              $region35: #{conv_vae_forward.9} parent=31 // loop_header_branch
                %181 = sbr.rel (%p179) target = $region39
              $region36: #{conv_vae_forward.9} parent=31 // loop_body
                %v185 = vld [vmem:[%s183] sm:$0xff]
                %186 = vst [vmem:[%s184] sm:$0xff] %v185
                %v187 = vld [vmem:[%s183 + $0x8] sm:$0xff]
                %188 = vst [vmem:[%s184 + $0x8] sm:$0xff] %v187
                %v189 = vld [vmem:[%s183 + $0x20] sm:$0xff]
                %190 = vst [vmem:[%s184 + $0x10] sm:$0xff] %v189
                %v191 = vld [vmem:[%s183 + $0x28] sm:$0xff]
                %192 = vst [vmem:[%s184 + $0x18] sm:$0xff] %v191
                %v193 = vld [vmem:[%s183 + $0x40] sm:$0xff]
                %194 = vst [vmem:[%s184 + $0x20] sm:$0xff] %v193
                %v195 = vld [vmem:[%s183 + $0x48] sm:$0xff]
                %196 = vst [vmem:[%s184 + $0x28] sm:$0xff] %v195
                %v197 = vld [vmem:[%s183 + $0x60] sm:$0xff]
                %198 = vst [vmem:[%s184 + $0x30] sm:$0xff] %v197
                %v199 = vld [vmem:[%s183 + $0x68] sm:$0xff]
                %200 = vst [vmem:[%s184 + $0x38] sm:$0xff] %v199
              $region37: #{conv_vae_forward.9} parent=31 // loop_footer
                %s182 = sadd.s32 1, %s178
              $region38: #{conv_vae_forward.9} parent=31 // loop_footer_branch
                %177 = sbr.rel target = $region34
              $region39: #{conv_vae_forward.9} parent=31 // loop_exit
                _
            $region32: #{conv_vae_forward.9} parent=27 // pred_fallthru
              _
            // Predicated region
            $region40: #{conv_vae_forward.9} parent=27 // pred_check
              _
            $region41: #{conv_vae_forward.9} parent=27 // pred_check_branch
              %202 = sbr.rel target = $region43
            $region42: #{conv_vae_forward.9} parent=27 // pred_region
              _
            $region43: #{conv_vae_forward.9} parent=27 // pred_fallthru
              _
          $region28: #{conv_vae_forward.9} parent=23 // pred_fallthru
            _
          %203 = vnop
        $region24: #{conv_vae_forward.9} parent=19 // pred_fallthru
          _
        // Predicated region
        $region44: #{conv_vae_forward.9} parent=19 // pred_check
          %p204 = pneg %p73
        $region45: #{conv_vae_forward.9} parent=19 // pred_check_branch
          %206 = sbr.rel (%p204) target = $region47
        $region46: #{conv_vae_forward.9} parent=19 // pred_region
          %s207 = sand.u32 %s63, 1
          %s208 = scalar_lea.sflag [#allocation5], %s207
          %s209 = sand.u32 %s63, 1
          %s210 = smul.addr %s209, 256
          %s211 = scalar_lea.vmem [#allocation4], %s210
          %s212 = smul.u32 64, %s21
          %214 = vsyncadd %s208, 0
          %s215 = sadd.s32 %s20, %s212
          %s216 = smul.addr %s215, 4
          %s217 = scalar_lea.hbm %s1, %s216
          %s218 = sshll.u32 %s217, 4
          %s219 = int_to_ptr.hbm [resolvable:$true] %s218
          %s220 = sshll.u32 %s211, 4
          %s221 = int_to_ptr.vmem [resolvable:$true] %s220
          %226 = dma.hbm_to_vmem [thread:$0]  %s219, 4096, %s221, %s208, 64, 64, 4
        $region47: #{conv_vae_forward.9} parent=19 // pred_fallthru
          _
      $region20: #{conv_vae_forward.9} parent=5 // pred_fallthru
        _
      %p227 = scmp.le.s32.totalorder 1, %s13
      %p228 = scmp.lt.s32.totalorder %s13, 3
      %p229 = pnand %p227, %p228
      %p230 = pneg %p229
      // Predicated region
      $region48: #{conv_vae_forward.9} parent=5 // pred_check
        _
      $region49: #{conv_vae_forward.9} parent=5 // pred_check_branch
        %232 = sbr.rel (%p229) target = $region51
      $region50: #{conv_vae_forward.9} parent=5 // pred_region
        %s233 = ssub.s32 %s13, 1
        %s234 = sand.u32 %s38, 1
        %s235 = sand.u32 %s38, 1
        %s236 = smul.addr %s235, 64
        %s237 = scalar_lea.vmem [#allocation3], %s236
        // Predicated region
        $region52: #{conv_vae_forward.9} parent=50 // pred_check
          %p238 = pneg %p51
        $region53: #{conv_vae_forward.9} parent=50 // pred_check_branch
          %240 = sbr.rel (%p238) target = $region55
        $region54: #{conv_vae_forward.9} parent=50 // pred_region
          _
        $region55: #{conv_vae_forward.9} parent=50 // pred_fallthru
          _
        %s241 = sand.u32 %s66, 1
        %s242 = scalar_lea.sflag [#allocation5], %s241
        %s243 = sand.u32 %s66, 1
        %s244 = smul.addr %s243, 256
        %s245 = scalar_lea.vmem [#allocation4], %s244
        // Predicated region
        $region56: #{conv_vae_forward.9} parent=50 // pred_check
          %p246 = pneg %p79
        $region57: #{conv_vae_forward.9} parent=50 // pred_check_branch
          %248 = sbr.rel (%p246) target = $region59
        $region58: #{conv_vae_forward.9} parent=50 // pred_region
          %250 = dma.done %s242, 4096
        $region59: #{conv_vae_forward.9} parent=50 // pred_fallthru
          _
        // Predicated region
        $region60: #{conv_vae_forward.9} parent=50 // pred_check
          %p251 = pneg %p105
        $region61: #{conv_vae_forward.9} parent=50 // pred_check_branch
          %253 = sbr.rel (%p251) target = $region63
        $region62: #{conv_vae_forward.9} parent=50 // pred_region
          %255 = dma.done [#allocation7], 16
        $region63: #{conv_vae_forward.9} parent=50 // pred_fallthru
          _
        %s256 = sand.u32 %s38, 1
        %s257 = sand.u32 %s38, 1
        %s258 = smul.addr %s257, 64
        %s259 = scalar_lea.vmem [#allocation3], %s258
        %p260 = pneg %p51
        %p261 = pneg %p48
        %s262 = sand.u32 %s66, 1
        %s263 = scalar_lea.sflag [#allocation5], %s262
        %s264 = sand.u32 %s66, 1
        %s265 = smul.addr %s264, 256
        %s266 = scalar_lea.vmem [#allocation4], %s265
        %p267 = pneg %p79
        %p268 = pneg %p76
        %p269 = pneg %p105
        %p270 = pneg %p102
        %p271 = pneg %p131
        %p272 = pneg %p128
        %p273 = scmp.lt.s32.totalorder %s22, 0
        %s274 = scalar_select %p273, %s22, 0
        %s275 = smul.addr %s274, 4
        %s276 = scalar_lea.vmem %s3, %s275
        %s277 = smul.u32 4, %s23
        %s278 = smul.u32 64, %s23
        %p279 = scmp.lt.s32.totalorder %s22, 0
        %s280 = scalar_select %p279, %s22, 0
        %s281 = smul.addr %s280, 4
        %s282 = scalar_lea.vmem %s3, %s281
        %p283 = scmp.eq.s32.totalorder %s23, 0
        // Predicated region
        $region64: #{conv_vae_forward.9} parent=50 // pred_check
          %p284 = pneg %p283
        $region65: #{conv_vae_forward.9} parent=50 // pred_check_branch
          %286 = sbr.rel (%p284) target = $region67
        $region66: #{conv_vae_forward.9} parent=50 // pred_region
          %287 = vst [vmem:[#allocation2] sm:$0xff] 0.0
          %288 = vst [vmem:[#allocation2 + $0x8] sm:$0xff] 0.0
          %289 = vst [vmem:[#allocation2 + $0x10] sm:$0xff] 0.0
          %290 = vst [vmem:[#allocation2 + $0x18] sm:$0xff] 0.0
        $region67: #{conv_vae_forward.9} parent=50 // pred_fallthru
          _
        %v291 = vld [vmem:[#allocation2] sm:$0xff]
        %v292 = vld [vmem:[#allocation2 + $0x8] sm:$0xff]
        %v293 = vld [vmem:[#allocation2 + $0x10] sm:$0xff]
        %v294 = vld [vmem:[#allocation2 + $0x18] sm:$0xff]
        %v295 = vld [vmem:[%s237] sm:$0xff]
        %v296 = vld [vmem:[%s237 + $0x8] sm:$0xff]
        %v297 = vld [vmem:[%s237 + $0x10] sm:$0xff]
        %v298 = vld [vmem:[%s237 + $0x18] sm:$0xff]
        %v299 = vld [vmem:[%s237 + $0x20] sm:$0xff]
        %v300 = vld [vmem:[%s237 + $0x28] sm:$0xff]
        %v301 = vld [vmem:[%s237 + $0x30] sm:$0xff]
        %v302 = vld [vmem:[%s237 + $0x38] sm:$0xff]
        %v303 = vld [vmem:[%s245] sm:$0xf]
        %v304 = vld [vmem:[%s245 + $0x4] sm:$0xf]
        %v305 = vld [vmem:[%s245 + $0x8] sm:$0xf]
        %v306 = vld [vmem:[%s245 + $0xc] sm:$0xf]
        %v307 = vld [vmem:[%s245 + $0x10] sm:$0xf]
        %v308 = vld [vmem:[%s245 + $0x14] sm:$0xf]
        %v309 = vld [vmem:[%s245 + $0x18] sm:$0xf]
        %v310 = vld [vmem:[%s245 + $0x1c] sm:$0xf]
        %v311 = vld [vmem:[%s245 + $0x20] sm:$0xf]
        %v312 = vld [vmem:[%s245 + $0x24] sm:$0xf]
        %v313 = vld [vmem:[%s245 + $0x28] sm:$0xf]
        %v314 = vld [vmem:[%s245 + $0x2c] sm:$0xf]
        %v315 = vld [vmem:[%s245 + $0x30] sm:$0xf]
        %v316 = vld [vmem:[%s245 + $0x34] sm:$0xf]
        %v317 = vld [vmem:[%s245 + $0x38] sm:$0xf]
        %v318 = vld [vmem:[%s245 + $0x3c] sm:$0xf]
        %v319 = vld [vmem:[%s245 + $0x40] sm:$0xf]
        %v320 = vld [vmem:[%s245 + $0x44] sm:$0xf]
        %v321 = vld [vmem:[%s245 + $0x48] sm:$0xf]
        %v322 = vld [vmem:[%s245 + $0x4c] sm:$0xf]
        %v323 = vld [vmem:[%s245 + $0x50] sm:$0xf]
        %v324 = vld [vmem:[%s245 + $0x54] sm:$0xf]
        %v325 = vld [vmem:[%s245 + $0x58] sm:$0xf]
        %v326 = vld [vmem:[%s245 + $0x5c] sm:$0xf]
        %v327 = vld [vmem:[%s245 + $0x60] sm:$0xf]
        %v328 = vld [vmem:[%s245 + $0x64] sm:$0xf]
        %v329 = vld [vmem:[%s245 + $0x68] sm:$0xf]
        %v330 = vld [vmem:[%s245 + $0x6c] sm:$0xf]
        %v331 = vld [vmem:[%s245 + $0x70] sm:$0xf]
        %v332 = vld [vmem:[%s245 + $0x74] sm:$0xf]
        %v333 = vld [vmem:[%s245 + $0x78] sm:$0xf]
        %v334 = vld [vmem:[%s245 + $0x7c] sm:$0xf]
        %v335 = vld [vmem:[%s245 + $0x80] sm:$0xf]
        %v336 = vld [vmem:[%s245 + $0x84] sm:$0xf]
        %v337 = vld [vmem:[%s245 + $0x88] sm:$0xf]
        %v338 = vld [vmem:[%s245 + $0x8c] sm:$0xf]
        %v339 = vld [vmem:[%s245 + $0x90] sm:$0xf]
        %v340 = vld [vmem:[%s245 + $0x94] sm:$0xf]
        %v341 = vld [vmem:[%s245 + $0x98] sm:$0xf]
        %v342 = vld [vmem:[%s245 + $0x9c] sm:$0xf]
        %v343 = vld [vmem:[%s245 + $0xa0] sm:$0xf]
        %v344 = vld [vmem:[%s245 + $0xa4] sm:$0xf]
        %v345 = vld [vmem:[%s245 + $0xa8] sm:$0xf]
        %v346 = vld [vmem:[%s245 + $0xac] sm:$0xf]
        %v347 = vld [vmem:[%s245 + $0xb0] sm:$0xf]
        %v348 = vld [vmem:[%s245 + $0xb4] sm:$0xf]
        %v349 = vld [vmem:[%s245 + $0xb8] sm:$0xf]
        %v350 = vld [vmem:[%s245 + $0xbc] sm:$0xf]
        %v351 = vld [vmem:[%s245 + $0xc0] sm:$0xf]
        %v352 = vld [vmem:[%s245 + $0xc4] sm:$0xf]
        %v353 = vld [vmem:[%s245 + $0xc8] sm:$0xf]
        %v354 = vld [vmem:[%s245 + $0xcc] sm:$0xf]
        %v355 = vld [vmem:[%s245 + $0xd0] sm:$0xf]
        %v356 = vld [vmem:[%s245 + $0xd4] sm:$0xf]
        %v357 = vld [vmem:[%s245 + $0xd8] sm:$0xf]
        %v358 = vld [vmem:[%s245 + $0xdc] sm:$0xf]
        %v359 = vld [vmem:[%s245 + $0xe0] sm:$0xf]
        %v360 = vld [vmem:[%s245 + $0xe4] sm:$0xf]
        %v361 = vld [vmem:[%s245 + $0xe8] sm:$0xf]
        %v362 = vld [vmem:[%s245 + $0xec] sm:$0xf]
        %v363 = vld [vmem:[%s245 + $0xf0] sm:$0xf]
        %v364 = vld [vmem:[%s245 + $0xf4] sm:$0xf]
        %v365 = vld [vmem:[%s245 + $0xf8] sm:$0xf]
        %v366 = vld [vmem:[%s245 + $0xfc] sm:$0xf]
        %v375 = vunpack.c.l.b16 %v295
        %v376 = vunpack.c.h.b16 %v295
        %v377 = vunpack.c.l.b16 %v296
        %v378 = vunpack.c.h.b16 %v296
        %v379 = vunpack.c.l.b16 %v297
        %v380 = vunpack.c.h.b16 %v297
        %v381 = vunpack.c.l.b16 %v298
        %v382 = vunpack.c.h.b16 %v298
        %v383 = vunpack.c.l.b16 %v299
        %v384 = vunpack.c.h.b16 %v299
        %v385 = vunpack.c.l.b16 %v300
        %v386 = vunpack.c.h.b16 %v300
        %v387 = vunpack.c.l.b16 %v301
        %v388 = vunpack.c.h.b16 %v301
        %v389 = vunpack.c.l.b16 %v302
        %v390 = vunpack.c.h.b16 %v302
        %v391 = vpack.c.b16 %v379, %v375
        %v392 = vpack.c.b16 %v380, %v376
        %v393 = vpack.c.b16 %v381, %v377
        %v394 = vpack.c.b16 %v382, %v378
        %v395 = vpack.c.b16 %v387, %v383
        %v396 = vpack.c.b16 %v388, %v384
        %v397 = vpack.c.b16 %v389, %v385
        %v398 = vpack.c.b16 %v390, %v386
        %v471 = vunpack.c.l.b16 %v303
        %v472 = vunpack.c.l.b16 %v304
        %v473 = vunpack.c.l.b16 %v305
        %v474 = vunpack.c.l.b16 %v306
        %v475 = vunpack.c.l.b16 %v307
        %v476 = vunpack.c.l.b16 %v308
        %v477 = vunpack.c.l.b16 %v309
        %v478 = vunpack.c.l.b16 %v310
        %v479 = vunpack.c.l.b16 %v311
        %v480 = vunpack.c.l.b16 %v312
        %v481 = vunpack.c.l.b16 %v313
        %v482 = vunpack.c.l.b16 %v314
        %v483 = vunpack.c.l.b16 %v315
        %v484 = vunpack.c.l.b16 %v316
        %v485 = vunpack.c.l.b16 %v317
        %v486 = vunpack.c.l.b16 %v318
        %v487 = vunpack.c.l.b16 %v319
        %v488 = vunpack.c.l.b16 %v320
        %v489 = vunpack.c.l.b16 %v321
        %v490 = vunpack.c.l.b16 %v322
        %v491 = vunpack.c.l.b16 %v323
        %v492 = vunpack.c.l.b16 %v324
        %v493 = vunpack.c.l.b16 %v325
        %v494 = vunpack.c.l.b16 %v326
        %v495 = vunpack.c.l.b16 %v327
        %v496 = vunpack.c.l.b16 %v328
        %v497 = vunpack.c.l.b16 %v329
        %v498 = vunpack.c.l.b16 %v330
        %v499 = vunpack.c.l.b16 %v331
        %v500 = vunpack.c.l.b16 %v332
        %v501 = vunpack.c.l.b16 %v333
        %v502 = vunpack.c.l.b16 %v334
        %v503 = vunpack.c.l.b16 %v335
        %v504 = vunpack.c.l.b16 %v336
        %v505 = vunpack.c.l.b16 %v337
        %v506 = vunpack.c.l.b16 %v338
        %v507 = vunpack.c.l.b16 %v339
        %v508 = vunpack.c.l.b16 %v340
        %v509 = vunpack.c.l.b16 %v341
        %v510 = vunpack.c.l.b16 %v342
        %v511 = vunpack.c.l.b16 %v343
        %v512 = vunpack.c.l.b16 %v344
        %v513 = vunpack.c.l.b16 %v345
        %v514 = vunpack.c.l.b16 %v346
        %v515 = vunpack.c.l.b16 %v347
        %v516 = vunpack.c.l.b16 %v348
        %v517 = vunpack.c.l.b16 %v349
        %v518 = vunpack.c.l.b16 %v350
        %v519 = vunpack.c.l.b16 %v351
        %v520 = vunpack.c.l.b16 %v352
        %v521 = vunpack.c.l.b16 %v353
        %v522 = vunpack.c.l.b16 %v354
        %v523 = vunpack.c.l.b16 %v355
        %v524 = vunpack.c.l.b16 %v356
        %v525 = vunpack.c.l.b16 %v357
        %v526 = vunpack.c.l.b16 %v358
        %v527 = vunpack.c.l.b16 %v359
        %v528 = vunpack.c.l.b16 %v360
        %v529 = vunpack.c.l.b16 %v361
        %v530 = vunpack.c.l.b16 %v362
        %v531 = vunpack.c.l.b16 %v363
        %v532 = vunpack.c.l.b16 %v364
        %v533 = vunpack.c.l.b16 %v365
        %v534 = vunpack.c.l.b16 %v366
        %v535 = vpack.c.b16 %v472, %v471
        %v536 = vpack.c.b16 %v474, %v473
        %v537 = vpack.c.b16 %v476, %v475
        %v538 = vpack.c.b16 %v478, %v477
        %v539 = vpack.c.b16 %v480, %v479
        %v540 = vpack.c.b16 %v482, %v481
        %v541 = vpack.c.b16 %v484, %v483
        %v542 = vpack.c.b16 %v486, %v485
        %v543 = vpack.c.b16 %v488, %v487
        %v544 = vpack.c.b16 %v490, %v489
        %v545 = vpack.c.b16 %v492, %v491
        %v546 = vpack.c.b16 %v494, %v493
        %v547 = vpack.c.b16 %v496, %v495
        %v548 = vpack.c.b16 %v498, %v497
        %v549 = vpack.c.b16 %v500, %v499
        %v550 = vpack.c.b16 %v502, %v501
        %v551 = vpack.c.b16 %v504, %v503
        %v552 = vpack.c.b16 %v506, %v505
        %v553 = vpack.c.b16 %v508, %v507
        %v554 = vpack.c.b16 %v510, %v509
        %v555 = vpack.c.b16 %v512, %v511
        %v556 = vpack.c.b16 %v514, %v513
        %v557 = vpack.c.b16 %v516, %v515
        %v558 = vpack.c.b16 %v518, %v517
        %v559 = vpack.c.b16 %v520, %v519
        %v560 = vpack.c.b16 %v522, %v521
        %v561 = vpack.c.b16 %v524, %v523
        %v562 = vpack.c.b16 %v526, %v525
        %v563 = vpack.c.b16 %v528, %v527
        %v564 = vpack.c.b16 %v530, %v529
        %v565 = vpack.c.b16 %v532, %v531
        %v566 = vpack.c.b16 %v534, %v533
        %599 = vmatpush.bf16.msra.mxu0 %v542
        %600 = vmatpush.bf16.msra.mxu0 %v541
        %601 = vmatpush.bf16.msra.mxu0 %v540
        %602 = vmatpush.bf16.msra.mxu0 %v539
        %603 = vmatpush.bf16.msra.mxu0 %v538
        %604 = vmatpush.bf16.msra.mxu0 %v537
        %605 = vmatpush.bf16.msra.mxu0 %v536
        %606 = vmatpush.bf16.msra.mxu0 %v535
        %607 = vmatmul.bf16.gmra.mxu0 %v391
        %v608 = vpop.f32.mrf.mxu0
        %v609 = vadd.f32 0.0, %v608
        %v610 = vpop.f32.mrf.mxu0
        %v611 = vadd.f32 0.0, %v610
        %612 = vmatmul.bf16.gmra.mxu0 %v395
        %v613 = vpop.f32.mrf.mxu0
        %v614 = vadd.f32 0.0, %v613
        %v615 = vpop.f32.mrf.mxu0
        %v616 = vadd.f32 0.0, %v615
        %617 = vdwg.mxu0
        %618 = vmatpush.bf16.msra.mxu0 %v550
        %619 = vmatpush.bf16.msra.mxu0 %v549
        %620 = vmatpush.bf16.msra.mxu0 %v548
        %621 = vmatpush.bf16.msra.mxu0 %v547
        %622 = vmatpush.bf16.msra.mxu0 %v546
        %623 = vmatpush.bf16.msra.mxu0 %v545
        %624 = vmatpush.bf16.msra.mxu0 %v544
        %625 = vmatpush.bf16.msra.mxu0 %v543
        %626 = vmatmul.bf16.gmra.mxu0 %v392
        %v627 = vpop.f32.mrf.mxu0
        %v628 = vadd.f32 %v609, %v627
        %v629 = vpop.f32.mrf.mxu0
        %v630 = vadd.f32 %v611, %v629
        %631 = vmatmul.bf16.gmra.mxu0 %v396
        %v632 = vpop.f32.mrf.mxu0
        %v633 = vadd.f32 %v614, %v632
        %v634 = vpop.f32.mrf.mxu0
        %v635 = vadd.f32 %v616, %v634
        %636 = vdwg.mxu0
        %637 = vmatpush.bf16.msra.mxu0 %v558
        %638 = vmatpush.bf16.msra.mxu0 %v557
        %639 = vmatpush.bf16.msra.mxu0 %v556
        %640 = vmatpush.bf16.msra.mxu0 %v555
        %641 = vmatpush.bf16.msra.mxu0 %v554
        %642 = vmatpush.bf16.msra.mxu0 %v553
        %643 = vmatpush.bf16.msra.mxu0 %v552
        %644 = vmatpush.bf16.msra.mxu0 %v551
        %645 = vmatmul.bf16.gmra.mxu0 %v393
        %v646 = vpop.f32.mrf.mxu0
        %v647 = vadd.f32 %v628, %v646
        %v648 = vpop.f32.mrf.mxu0
        %v649 = vadd.f32 %v630, %v648
        %650 = vmatmul.bf16.gmra.mxu0 %v397
        %v651 = vpop.f32.mrf.mxu0
        %v652 = vadd.f32 %v633, %v651
        %v653 = vpop.f32.mrf.mxu0
        %v654 = vadd.f32 %v635, %v653
        %655 = vdwg.mxu0
        %656 = vmatpush.bf16.msra.mxu0 %v566
        %657 = vmatpush.bf16.msra.mxu0 %v565
        %658 = vmatpush.bf16.msra.mxu0 %v564
        %659 = vmatpush.bf16.msra.mxu0 %v563
        %660 = vmatpush.bf16.msra.mxu0 %v562
        %661 = vmatpush.bf16.msra.mxu0 %v561
        %662 = vmatpush.bf16.msra.mxu0 %v560
        %663 = vmatpush.bf16.msra.mxu0 %v559
        %664 = vmatmul.bf16.gmra.mxu0 %v394
        %v665 = vpop.f32.mrf.mxu0
        %v666 = vadd.f32 %v647, %v665
        %v667 = vpop.f32.mrf.mxu0
        %v668 = vadd.f32 %v649, %v667
        %669 = vmatmul.bf16.gmra.mxu0 %v398
        %v670 = vpop.f32.mrf.mxu0
        %v671 = vadd.f32 %v652, %v670
        %v672 = vpop.f32.mrf.mxu0
        %v673 = vadd.f32 %v654, %v672
        %674 = vdwg.mxu0
        %v675 = vadd.f32 %v291, %v666
        %v676 = vadd.f32 %v292, %v668
        %v677 = vadd.f32 %v293, %v671
        %v678 = vadd.f32 %v294, %v673
        %679 = vst [vmem:[#allocation2] sm:$0xff] %v675
        %680 = vst [vmem:[#allocation2 + $0x8] sm:$0xff] %v676
        %681 = vst [vmem:[#allocation2 + $0x10] sm:$0xff] %v677
        %682 = vst [vmem:[#allocation2 + $0x18] sm:$0xff] %v678
        %p683 = scmp.eq.s32.totalorder %s23, 1
        // Predicated region
        $region68: #{conv_vae_forward.9} parent=50 // pred_check
          %p684 = pneg %p683
        $region69: #{conv_vae_forward.9} parent=50 // pred_check_branch
          %686 = sbr.rel (%p684) target = $region71
        $region70: #{conv_vae_forward.9} parent=50 // pred_region
          %v687 = vld [vmem:[#allocation2] sm:$0xff]
          %v688 = vld [vmem:[#allocation2 + $0x8] sm:$0xff]
          %v689 = vld [vmem:[#allocation2 + $0x10] sm:$0xff]
          %v690 = vld [vmem:[#allocation2 + $0x18] sm:$0xff]
          %v691 = vld [vmem:[#allocation6] sm:$0x1]
          %v693 = vperm.slane %v691, 0
          %v695 = vadd.f32 %v687, %v693
          %v696 = vadd.f32 %v688, %v693
          %v697 = vadd.f32 %v689, %v693
          %v698 = vadd.f32 %v690, %v693
          %v699 = vadd.f32 %v695, %v696
          %v700 = vadd.f32 %v699, %v697
          %v701 = vadd.f32 %v700, %v698
          %v702 = vrot.slane %v701, 4
          %v703 = vadd.f32 %v701, %v702
          %v704 = vrot.slane %v703, 2
          %v705 = vadd.f32 %v703, %v704
          %v706 = vrot.slane %v705, 1
          %v707 = vadd.f32 %v705, %v706
          %v708 = vrcp.pop 32.0
          %v709 = vmul.f32 32.0, %v708
          %v710 = vsub.f32 1.0, %v709
          %v711 = vmul.f32 %v708, %v710
          %v712 = vadd.f32 %v708, %v711
          %vm713 = vweird.f32 %v708
          %v714 = vsel %vm713, %v708, %v712
          %v715 = vmul.f32 %v707, %v714
          %v716 = vsub.f32 %v695, %v715
          %v717 = vsub.f32 %v696, %v715
          %v718 = vsub.f32 %v697, %v715
          %v719 = vsub.f32 %v698, %v715
          %v720 = vmul.f32 %v716, %v716
          %v721 = vmul.f32 %v717, %v717
          %v722 = vmul.f32 %v718, %v718
          %v723 = vmul.f32 %v719, %v719
          %v724 = vadd.f32 %v720, %v721
          %v725 = vadd.f32 %v724, %v722
          %v726 = vadd.f32 %v725, %v723
          %v727 = vrot.slane %v726, 4
          %v728 = vadd.f32 %v726, %v727
          %v729 = vrot.slane %v728, 2
          %v730 = vadd.f32 %v728, %v729
          %v731 = vrot.slane %v730, 1
          %v732 = vadd.f32 %v730, %v731
          %v733 = vmul.f32 %v732, %v714
          %v734 = vadd.f32 %v733, 1e-05
          %v735 = vrsqrt.pop %v734
          %v736 = vmul.f32 %v735, %v734
          %v737 = vmul.f32 %v736, %v735
          %v738 = vmul.f32 0.5, %v737
          %v739 = vsub.f32 1.5, %v738
          %v740 = vmul.f32 %v735, %v739
          %vm741 = vweird.f32 %v734
          %vm742 = vweird.f32 %v735
          %vm743 = vmor %vm741, %vm742
          %v744 = vsel %vm743, %v735, %v740
          %v745 = vmul.f32 %v716, %v744
          %v746 = vmul.f32 %v717, %v744
          %v747 = vmul.f32 %v718, %v744
          %v748 = vmul.f32 %v719, %v744
          %v749 = vmax.f32 %v745, 0.0
          %v750 = vmax.f32 %v746, 0.0
          %v751 = vmax.f32 %v747, 0.0
          %v752 = vmax.f32 %v748, 0.0
          %v753 = vpack.c.bf16 %v749, %v749
          %v754 = vpack.c.bf16 %v750, %v750
          %v755 = vpack.c.bf16 %v751, %v751
          %v756 = vpack.c.bf16 %v752, %v752
          %757 = vst [vmem:[%s282] sm:$0xf] %v753
          %758 = vst [vmem:[%s282 + $0x4] sm:$0xf] %v754
          %759 = vst [vmem:[%s282 + $0x8] sm:$0xf] %v755
          %760 = vst [vmem:[%s282 + $0xc] sm:$0xf] %v756
        $region71: #{conv_vae_forward.9} parent=50 // pred_fallthru
          _
        %p761 = scmp.lt.s32.totalorder %s22, 0
        %s762 = scalar_select %p761, %s22, 0
        %s763 = smul.addr %s762, 4
        %s764 = scalar_lea.vmem %s3, %s763
        // Predicated region
        $region72: #{conv_vae_forward.9} parent=50 // pred_check
          %p765 = pneg %p128
        $region73: #{conv_vae_forward.9} parent=50 // pred_check_branch
          %767 = sbr.rel (%p765) target = $region75
        $region74: #{conv_vae_forward.9} parent=50 // pred_region
          _
        $region75: #{conv_vae_forward.9} parent=50 // pred_fallthru
          _
        // Predicated region
        $region76: #{conv_vae_forward.9} parent=50 // pred_check
          %p768 = pneg %p128
        $region77: #{conv_vae_forward.9} parent=50 // pred_check_branch
          %770 = sbr.rel (%p768) target = $region79
        $region78: #{conv_vae_forward.9} parent=50 // pred_region
          %p771 = scmp.lt.s32.totalorder %s22, 0
          %s772 = scalar_select %p771, %s22, 0
          %s773 = smul.addr %s772, 4
          %s774 = scalar_lea.vmem %s3, %s773
        $region79: #{conv_vae_forward.9} parent=50 // pred_fallthru
          _
      $region51: #{conv_vae_forward.9} parent=5 // pred_fallthru
        _
      %p775 = scmp.le.s32.totalorder 2, %s13
      // Predicated region
      $region80: #{conv_vae_forward.9} parent=5 // pred_check
        %p776 = pneg %p775
      $region81: #{conv_vae_forward.9} parent=5 // pred_check_branch
        %778 = sbr.rel (%p776) target = $region83
      $region82: #{conv_vae_forward.9} parent=5 // pred_region
        %s779 = ssub.s32 %s13, 2
      $region83: #{conv_vae_forward.9} parent=5 // pred_fallthru
        _
    $region6: #{conv_vae_forward.9} parent=1 // loop_footer
      %s17 = sadd.s32 1, %s13
    $region7: #{conv_vae_forward.9} parent=1 // loop_footer_branch
      %12 = sbr.rel target = $region3
    $region8: #{conv_vae_forward.9} parent=1 // loop_exit
      _
    %780 = vsyncpa [#allocation5], 1
    %s781 = scalar_lea.sflag [#allocation5], 1
    %782 = vsyncpa %s781, 1
    %783 = vsyncpa [#allocation7], 1

// kernel: conv_vae_forward.11
$region0: #{conv_vae_forward.11}
  #allocation0 [shape = 'u32[]', space=smem, size = 0x4, offset = 0x4, fixed_abs, tag = 'smem constant byte address 0x4 - core index']
  #allocation1 [shape = 'u32[72,128]{1,0:T(1,128)}', space=vmem, size = 0x9000, scoped, tag = 'internal scratch']
  #allocation2 [shape = 'f32[2,16]{1,0:T(2,128)}', space=vmem, size = 0x400, scoped, tag = 'scratch operand']
  %s0 = inlined_call_operand.vmem [shape: bf16[2,1024], index: 0, kind: input, shape index: {}]
  %s1 = inlined_call_operand.vmem [shape: bf16[1024,16], index: 1, kind: input, shape index: {}]
  %s2 = inlined_call_operand.hbm [shape: f32[1,16], index: 2, kind: input, shape index: {}]
  %s3 = inlined_call_operand.hbm [shape: f32[2,8], index: 3, kind: input, shape index: {}]
  %s4 = inlined_call_operand.vmem [shape: f32[2,8], index: 4, kind: output, shape index: {0}]
  %s5 = inlined_call_operand.hbm [shape: f32[2,8], index: 5, kind: output, shape index: {1}]
  %s6 = inlined_call_operand.hbm [shape: f32[2,8], index: 6, kind: output, shape index: {2}]
  %7 = xla_tuple %s4, %s5, %s6
  %s8 = sld [smem:[#allocation0]]
  $region81: #{conv_vae_forward.11} parent=0
    _
  %s10 = ssub.s32 1, %s8
  %s11 = scalar_select 0, %s10, %s8
  $region1: #{conv_vae_forward.11} parent=0
    #allocation3 [shape = 'u8[512]{0}', space=vmem, size = 0x400, scoped, tag = 'input window, operand 2, single buffered']
    #allocation4 [shape = 's32[2]{0}', space=sflag, size = 0x8, scoped, tag = 'scoped memory for conv_vae_forward.11']
    #allocation5 [shape = 's32[2]{0}', space=sflag, size = 0x8, scoped, tag = 'scoped memory for conv_vae_forward.11']
    #allocation6 [shape = 'u8[1024]{0}', space=vmem, size = 0x400, scoped, tag = 'input window, operand 3, single buffered']
    #allocation7 [shape = 's32[1]{0}', space=sflag, size = 0x4, scoped, tag = 'scoped memory for conv_vae_forward.11']
    #allocation8 [shape = 'u8[1024]{0}', space=vmem, size = 0x400, scoped, tag = 'output window, operand 1, single buffered']
    #allocation9 [shape = 'u8[1024]{0}', space=vmem, size = 0x400, scoped, tag = 'output window, operand 2, single buffered']
    #allocation10 [shape = 's32[1]{0}', space=sflag, size = 0x4, scoped, tag = 'scoped memory for conv_vae_forward.11']
    %12 = vsyncpa [#allocation4], 0
    %13 = vsyncpa [#allocation7], 0
    %14 = vsyncpa [#allocation5], 0
    %15 = vsyncpa [#allocation10], 0
    loop: start=0, step=1, limit=4
    $region2: #{conv_vae_forward.11} parent=1 // loop_pre_header
      _
    $region3: #{conv_vae_forward.11} parent=1 // loop_header
      %s17 = sphi 0, %s21
      %p18 = scmp.ge.s32.totalorder %s17, 4
      %s27 = sphi 0, %s29
      %s30 = sphi 0, %s27
      %s31 = sphi 0, %s30
      %s47 = sphi 0, %s31
      %s53 = sphi 0, %s55
      %s56 = sphi 0, %s53
      %s57 = sphi 0, %s56
      %s73 = sphi 0, %s57
      %s77 = sphi 0, %s77
      %s79 = sphi 0, %s77
      %s80 = sphi 0, %s79
      %s94 = sphi 0, %s80
      %s98 = sphi 0, %s98
      %s100 = sphi 0, %s98
      %s101 = sphi 0, %s100
      %s115 = sphi 0, %s101
      %s119 = sphi 0, %s119
      %s121 = sphi 0, %s119
      %s122 = sphi 0, %s121
      %s136 = sphi 0, %s122
      %s140 = sphi 0, %s140
      %s142 = sphi 0, %s140
      %s143 = sphi 0, %s142
      %s157 = sphi 0, %s143
      %s161 = sphi 0, %s161
      %s163 = sphi 0, %s161
      %s164 = sphi 0, %s163
      %s178 = sphi 0, %s164
    $region4: #{conv_vae_forward.11} parent=1 // loop_header_branch
      %20 = sbr.rel (%p18) target = $region8
    $region5: #{conv_vae_forward.11} parent=1 // loop_body
      %s22 = ssub.s32 %s17, 1
      %s23 = ssub.s32 %s17, 2
      %s24 = sadd.s32 %s17, 1
      %s25 = ssub.s32 %s17, %s24
      %p26 = scmp.eq.s32.totalorder %s25, 0
      %s28 = sadd.s32 %s27, 1
      %s29 = scalar_select %p26, %s27, %s28
      %p32 = pneg %p26
      %p33 = scmp.eq.s32.totalorder %s17, 1
      %p34 = por %p32, %p33
      %p35 = scmp.ne.s32.totalorder %s27, %s30
      %p36 = scmp.eq.s32.totalorder %s17, 0
      %p37 = por %p35, %p36
      %p38 = scmp.ne.s32.totalorder %s27, %s30
      %p39 = scmp.eq.s32.totalorder %s22, 1
      %p40 = por %p38, %p39
      %p41 = scmp.ne.s32.totalorder %s30, %s31
      %p42 = scmp.eq.s32.totalorder %s22, 0
      %p43 = por %p41, %p42
      %p44 = scmp.ne.s32.totalorder %s30, %s31
      %p45 = scmp.eq.s32.totalorder %s23, 1
      %p46 = por %p44, %p45
      %p48 = scmp.ne.s32.totalorder %s31, %s47
      %p49 = scmp.eq.s32.totalorder %s23, 0
      %p50 = por %p48, %p49
      %s51 = ssub.s32 %s17, %s24
      %p52 = scmp.eq.s32.totalorder %s51, 0
      %s54 = sadd.s32 %s53, 1
      %s55 = scalar_select %p52, %s53, %s54
      %p58 = pneg %p52
      %p59 = scmp.eq.s32.totalorder %s17, 1
      %p60 = por %p58, %p59
      %p61 = scmp.ne.s32.totalorder %s53, %s56
      %p62 = scmp.eq.s32.totalorder %s17, 0
      %p63 = por %p61, %p62
      %p64 = scmp.ne.s32.totalorder %s53, %s56
      %p65 = scmp.eq.s32.totalorder %s22, 1
      %p66 = por %p64, %p65
      %p67 = scmp.ne.s32.totalorder %s56, %s57
      %p68 = scmp.eq.s32.totalorder %s22, 0
      %p69 = por %p67, %p68
      %p70 = scmp.ne.s32.totalorder %s56, %s57
      %p71 = scmp.eq.s32.totalorder %s23, 1
      %p72 = por %p70, %p71
      %p74 = scmp.ne.s32.totalorder %s57, %s73
      %p75 = scmp.eq.s32.totalorder %s23, 0
      %p76 = por %p74, %p75
      %s78 = sadd.s32 %s77, 1
      %p81 = scmp.eq.s32.totalorder %s17, 1
      %p82 = scmp.ne.s32.totalorder %s77, %s79
      %p83 = scmp.eq.s32.totalorder %s17, 0
      %p84 = por %p82, %p83
      %p85 = scmp.ne.s32.totalorder %s77, %s79
      %p86 = scmp.eq.s32.totalorder %s22, 1
      %p87 = por %p85, %p86
      %p88 = scmp.ne.s32.totalorder %s79, %s80
      %p89 = scmp.eq.s32.totalorder %s22, 0
      %p90 = por %p88, %p89
      %p91 = scmp.ne.s32.totalorder %s79, %s80
      %p92 = scmp.eq.s32.totalorder %s23, 1
      %p93 = por %p91, %p92
      %p95 = scmp.ne.s32.totalorder %s80, %s94
      %p96 = scmp.eq.s32.totalorder %s23, 0
      %p97 = por %p95, %p96
      %s99 = sadd.s32 %s98, 1
      %p102 = scmp.eq.s32.totalorder %s17, 1
      %p103 = scmp.ne.s32.totalorder %s98, %s100
      %p104 = scmp.eq.s32.totalorder %s17, 0
      %p105 = por %p103, %p104
      %p106 = scmp.ne.s32.totalorder %s98, %s100
      %p107 = scmp.eq.s32.totalorder %s22, 1
      %p108 = por %p106, %p107
      %p109 = scmp.ne.s32.totalorder %s100, %s101
      %p110 = scmp.eq.s32.totalorder %s22, 0
      %p111 = por %p109, %p110
      %p112 = scmp.ne.s32.totalorder %s100, %s101
      %p113 = scmp.eq.s32.totalorder %s23, 1
      %p114 = por %p112, %p113
      %p116 = scmp.ne.s32.totalorder %s101, %s115
      %p117 = scmp.eq.s32.totalorder %s23, 0
      %p118 = por %p116, %p117
      %s120 = sadd.s32 %s119, 1
      %p123 = scmp.eq.s32.totalorder %s17, 1
      %p124 = scmp.ne.s32.totalorder %s119, %s121
      %p125 = scmp.eq.s32.totalorder %s17, 0
      %p126 = por %p124, %p125
      %p127 = scmp.ne.s32.totalorder %s119, %s121
      %p128 = scmp.eq.s32.totalorder %s22, 1
      %p129 = por %p127, %p128
      %p130 = scmp.ne.s32.totalorder %s121, %s122
      %p131 = scmp.eq.s32.totalorder %s22, 0
      %p132 = por %p130, %p131
      %p133 = scmp.ne.s32.totalorder %s121, %s122
      %p134 = scmp.eq.s32.totalorder %s23, 1
      %p135 = por %p133, %p134
      %p137 = scmp.ne.s32.totalorder %s122, %s136
      %p138 = scmp.eq.s32.totalorder %s23, 0
      %p139 = por %p137, %p138
      %s141 = sadd.s32 %s140, 1
      %p144 = scmp.eq.s32.totalorder %s17, 1
      %p145 = scmp.ne.s32.totalorder %s140, %s142
      %p146 = scmp.eq.s32.totalorder %s17, 0
      %p147 = por %p145, %p146
      %p148 = scmp.ne.s32.totalorder %s140, %s142
      %p149 = scmp.eq.s32.totalorder %s22, 1
      %p150 = por %p148, %p149
      %p151 = scmp.ne.s32.totalorder %s142, %s143
      %p152 = scmp.eq.s32.totalorder %s22, 0
      %p153 = por %p151, %p152
      %p154 = scmp.ne.s32.totalorder %s142, %s143
      %p155 = scmp.eq.s32.totalorder %s23, 1
      %p156 = por %p154, %p155
      %p158 = scmp.ne.s32.totalorder %s143, %s157
      %p159 = scmp.eq.s32.totalorder %s23, 0
      %p160 = por %p158, %p159
      %s162 = sadd.s32 %s161, 1
      %p165 = scmp.eq.s32.totalorder %s17, 1
      %p166 = scmp.ne.s32.totalorder %s161, %s163
      %p167 = scmp.eq.s32.totalorder %s17, 0
      %p168 = por %p166, %p167
      %p169 = scmp.ne.s32.totalorder %s161, %s163
      %p170 = scmp.eq.s32.totalorder %s22, 1
      %p171 = por %p169, %p170
      %p172 = scmp.ne.s32.totalorder %s163, %s164
      %p173 = scmp.eq.s32.totalorder %s22, 0
      %p174 = por %p172, %p173
      %p175 = scmp.ne.s32.totalorder %s163, %s164
      %p176 = scmp.eq.s32.totalorder %s23, 1
      %p177 = por %p175, %p176
      %p179 = scmp.ne.s32.totalorder %s164, %s178
      %p180 = scmp.eq.s32.totalorder %s23, 0
      %p181 = por %p179, %p180
      %p182 = scmp.le.s32.totalorder 1, %s17
      %p183 = scmp.lt.s32.totalorder %s17, 3
      %p184 = pnand %p182, %p183
      %p185 = pneg %p184
      // Predicated region
      $region9: #{conv_vae_forward.11} parent=5 // pred_check
        _
      $region10: #{conv_vae_forward.11} parent=5 // pred_check_branch
        %187 = sbr.rel (%p184) target = $region12
      $region11: #{conv_vae_forward.11} parent=5 // pred_region
        %s188 = ssub.s32 %s17, 1
        // Predicated region
        $region13: #{conv_vae_forward.11} parent=11 // pred_check
          %p189 = pneg %p90
        $region14: #{conv_vae_forward.11} parent=11 // pred_check_branch
          %191 = sbr.rel (%p189) target = $region16
        $region15: #{conv_vae_forward.11} parent=11 // pred_region
          %193 = vsyncadd [#allocation4], 0
          %s195 = sshll.u32 %s2, 4
          %s196 = int_to_ptr.hbm [resolvable:$true] %s195
          %s197 = sshll.u32 [#allocation3], 4
          %s198 = int_to_ptr.vmem [resolvable:$true] %s197
          %200 = dma.hbm_to_vmem [thread:$0]  %s196, 16, %s198, [#allocation4]
        $region16: #{conv_vae_forward.11} parent=11 // pred_fallthru
          _
        // Predicated region
        $region17: #{conv_vae_forward.11} parent=11 // pred_check
          %p201 = pneg %p111
        $region18: #{conv_vae_forward.11} parent=11 // pred_check_branch
          %203 = sbr.rel (%p201) target = $region20
        $region19: #{conv_vae_forward.11} parent=11 // pred_region
          %205 = vsyncadd [#allocation7], 0
          %s207 = sshll.u32 %s3, 4
          %s208 = int_to_ptr.hbm [resolvable:$true] %s207
          %s209 = sshll.u32 [#allocation6], 4
          %s210 = int_to_ptr.vmem [resolvable:$true] %s209
          %212 = dma.hbm_to_vmem [thread:$0]  %s208, 32, %s210, [#allocation7]
        $region20: #{conv_vae_forward.11} parent=11 // pred_fallthru
          _
      $region12: #{conv_vae_forward.11} parent=5 // pred_fallthru
        _
      %p213 = scmp.lt.s32.totalorder %s17, 2
      // Predicated region
      $region21: #{conv_vae_forward.11} parent=5 // pred_check
        %p214 = pneg %p213
      $region22: #{conv_vae_forward.11} parent=5 // pred_check_branch
        %216 = sbr.rel (%p214) target = $region24
      $region23: #{conv_vae_forward.11} parent=5 // pred_region
        // Predicated region
        $region25: #{conv_vae_forward.11} parent=23 // pred_check
          %p217 = pneg %p37
        $region26: #{conv_vae_forward.11} parent=23 // pred_check_branch
          %219 = sbr.rel (%p217) target = $region28
        $region27: #{conv_vae_forward.11} parent=23 // pred_region
          %s220 = smul.u32 4, %s17
          %p221 = scmp.lt.s32.totalorder %s220, 7
          %s222 = scalar_select %p221, %s220, 7
          %s223 = scalar_lea.vmem %s0, %s222
          %s224 = smul.u32 4, %s17
        $region28: #{conv_vae_forward.11} parent=23 // pred_fallthru
          _
        // Predicated region
        $region29: #{conv_vae_forward.11} parent=23 // pred_check
          %p225 = pneg %p63
        $region30: #{conv_vae_forward.11} parent=23 // pred_check_branch
          %227 = sbr.rel (%p225) target = $region32
        $region31: #{conv_vae_forward.11} parent=23 // pred_region
          %s228 = smul.u32 64, %s17
          %p229 = scmp.lt.s32.totalorder %s228, 127
          %s230 = scalar_select %p229, %s228, 127
          %s231 = smul.addr %s230, 4
          %s232 = scalar_lea.vmem %s1, %s231
          %s233 = smul.u32 64, %s17
        $region32: #{conv_vae_forward.11} parent=23 // pred_fallthru
          _
      $region24: #{conv_vae_forward.11} parent=5 // pred_fallthru
        _
      %p234 = scmp.le.s32.totalorder 1, %s17
      %p235 = scmp.lt.s32.totalorder %s17, 3
      %p236 = pnand %p234, %p235
      %p237 = pneg %p236
      // Predicated region
      $region33: #{conv_vae_forward.11} parent=5 // pred_check
        _
      $region34: #{conv_vae_forward.11} parent=5 // pred_check_branch
        %239 = sbr.rel (%p236) target = $region36
      $region35: #{conv_vae_forward.11} parent=5 // pred_region
        %s240 = ssub.s32 %s17, 1
        // Predicated region
        $region37: #{conv_vae_forward.11} parent=35 // pred_check
          %p241 = pneg %p90
        $region38: #{conv_vae_forward.11} parent=35 // pred_check_branch
          %243 = sbr.rel (%p241) target = $region40
        $region39: #{conv_vae_forward.11} parent=35 // pred_region
          %245 = dma.done [#allocation4], 16
        $region40: #{conv_vae_forward.11} parent=35 // pred_fallthru
          _
        // Predicated region
        $region41: #{conv_vae_forward.11} parent=35 // pred_check
          %p246 = pneg %p111
        $region42: #{conv_vae_forward.11} parent=35 // pred_check_branch
          %248 = sbr.rel (%p246) target = $region44
        $region43: #{conv_vae_forward.11} parent=35 // pred_region
          %250 = dma.done [#allocation7], 32
        $region44: #{conv_vae_forward.11} parent=35 // pred_fallthru
          _
        %s251 = smul.u32 4, %s22
        %p252 = scmp.lt.s32.totalorder %s251, 7
        %s253 = scalar_select %p252, %s251, 7
        %s254 = scalar_lea.vmem %s0, %s253
        %p255 = pneg %p43
        %p256 = pneg %p40
        %s257 = smul.u32 64, %s22
        %p258 = scmp.lt.s32.totalorder %s257, 127
        %s259 = scalar_select %p258, %s257, 127
        %s260 = smul.addr %s259, 4
        %s261 = scalar_lea.vmem %s1, %s260
        %p262 = pneg %p69
        %p263 = pneg %p66
        %p264 = pneg %p90
        %p265 = pneg %p87
        %p266 = pneg %p111
        %p267 = pneg %p108
        %p268 = pneg %p132
        %p269 = pneg %p129
        %p270 = pneg %p153
        %p271 = pneg %p150
        %p272 = pneg %p174
        %p273 = pneg %p171
        %s274 = smul.u32 4, %s22
        %p275 = scmp.lt.s32.totalorder %s274, 7
        %s276 = scalar_select %p275, %s274, 7
        %s277 = scalar_lea.vmem %s0, %s276
        %s278 = smul.u32 4, %s22
        %s279 = smul.u32 64, %s22
        %p280 = scmp.lt.s32.totalorder %s279, 127
        %s281 = scalar_select %p280, %s279, 127
        %s282 = smul.addr %s281, 4
        %s283 = scalar_lea.vmem %s1, %s282
        %s284 = smul.u32 64, %s22
        %p285 = scmp.eq.s32.totalorder %s22, 0
        // Predicated region
        $region45: #{conv_vae_forward.11} parent=35 // pred_check
          %p286 = pneg %p285
        $region46: #{conv_vae_forward.11} parent=35 // pred_check_branch
          %288 = sbr.rel (%p286) target = $region48
        $region47: #{conv_vae_forward.11} parent=35 // pred_region
          %vm289 = vcmask 123904
          %290 = vst.msk [vmem:[#allocation2] sm:$0x3] %vm289, 0.0
        $region48: #{conv_vae_forward.11} parent=35 // pred_fallthru
          _
        %v291 = vld [vmem:[#allocation2] sm:$0x3]
        %v292 = vld [vmem:[%s277] sm:$0xf]
        %v293 = vld [vmem:[%s283] sm:$0xf]
        %v294 = vld [vmem:[%s283 + $0x4] sm:$0xf]
        %v295 = vld [vmem:[%s283 + $0x8] sm:$0xf]
        %v296 = vld [vmem:[%s283 + $0xc] sm:$0xf]
        %v297 = vld [vmem:[%s283 + $0x10] sm:$0xf]
        %v298 = vld [vmem:[%s283 + $0x14] sm:$0xf]
        %v299 = vld [vmem:[%s283 + $0x18] sm:$0xf]
        %v300 = vld [vmem:[%s283 + $0x1c] sm:$0xf]
        %v301 = vld [vmem:[%s283 + $0x20] sm:$0xf]
        %v302 = vld [vmem:[%s283 + $0x24] sm:$0xf]
        %v303 = vld [vmem:[%s283 + $0x28] sm:$0xf]
        %v304 = vld [vmem:[%s283 + $0x2c] sm:$0xf]
        %v305 = vld [vmem:[%s283 + $0x30] sm:$0xf]
        %v306 = vld [vmem:[%s283 + $0x34] sm:$0xf]
        %v307 = vld [vmem:[%s283 + $0x38] sm:$0xf]
        %v308 = vld [vmem:[%s283 + $0x3c] sm:$0xf]
        %v309 = vld [vmem:[%s283 + $0x40] sm:$0xf]
        %v310 = vld [vmem:[%s283 + $0x44] sm:$0xf]
        %v311 = vld [vmem:[%s283 + $0x48] sm:$0xf]
        %v312 = vld [vmem:[%s283 + $0x4c] sm:$0xf]
        %v313 = vld [vmem:[%s283 + $0x50] sm:$0xf]
        %v314 = vld [vmem:[%s283 + $0x54] sm:$0xf]
        %v315 = vld [vmem:[%s283 + $0x58] sm:$0xf]
        %v316 = vld [vmem:[%s283 + $0x5c] sm:$0xf]
        %v317 = vld [vmem:[%s283 + $0x60] sm:$0xf]
        %v318 = vld [vmem:[%s283 + $0x64] sm:$0xf]
        %v319 = vld [vmem:[%s283 + $0x68] sm:$0xf]
        %v320 = vld [vmem:[%s283 + $0x6c] sm:$0xf]
        %v321 = vld [vmem:[%s283 + $0x70] sm:$0xf]
        %v322 = vld [vmem:[%s283 + $0x74] sm:$0xf]
        %v323 = vld [vmem:[%s283 + $0x78] sm:$0xf]
        %v324 = vld [vmem:[%s283 + $0x7c] sm:$0xf]
        %v325 = vld [vmem:[%s283 + $0x80] sm:$0xf]
        %v326 = vld [vmem:[%s283 + $0x84] sm:$0xf]
        %v327 = vld [vmem:[%s283 + $0x88] sm:$0xf]
        %v328 = vld [vmem:[%s283 + $0x8c] sm:$0xf]
        %v329 = vld [vmem:[%s283 + $0x90] sm:$0xf]
        %v330 = vld [vmem:[%s283 + $0x94] sm:$0xf]
        %v331 = vld [vmem:[%s283 + $0x98] sm:$0xf]
        %v332 = vld [vmem:[%s283 + $0x9c] sm:$0xf]
        %v333 = vld [vmem:[%s283 + $0xa0] sm:$0xf]
        %v334 = vld [vmem:[%s283 + $0xa4] sm:$0xf]
        %v335 = vld [vmem:[%s283 + $0xa8] sm:$0xf]
        %v336 = vld [vmem:[%s283 + $0xac] sm:$0xf]
        %v337 = vld [vmem:[%s283 + $0xb0] sm:$0xf]
        %v338 = vld [vmem:[%s283 + $0xb4] sm:$0xf]
        %v339 = vld [vmem:[%s283 + $0xb8] sm:$0xf]
        %v340 = vld [vmem:[%s283 + $0xbc] sm:$0xf]
        %v341 = vld [vmem:[%s283 + $0xc0] sm:$0xf]
        %v342 = vld [vmem:[%s283 + $0xc4] sm:$0xf]
        %v343 = vld [vmem:[%s283 + $0xc8] sm:$0xf]
        %v344 = vld [vmem:[%s283 + $0xcc] sm:$0xf]
        %v345 = vld [vmem:[%s283 + $0xd0] sm:$0xf]
        %v346 = vld [vmem:[%s283 + $0xd4] sm:$0xf]
        %v347 = vld [vmem:[%s283 + $0xd8] sm:$0xf]
        %v348 = vld [vmem:[%s283 + $0xdc] sm:$0xf]
        %v349 = vld [vmem:[%s283 + $0xe0] sm:$0xf]
        %v350 = vld [vmem:[%s283 + $0xe4] sm:$0xf]
        %v351 = vld [vmem:[%s283 + $0xe8] sm:$0xf]
        %v352 = vld [vmem:[%s283 + $0xec] sm:$0xf]
        %v353 = vld [vmem:[%s283 + $0xf0] sm:$0xf]
        %v354 = vld [vmem:[%s283 + $0xf4] sm:$0xf]
        %v355 = vld [vmem:[%s283 + $0xf8] sm:$0xf]
        %v356 = vld [vmem:[%s283 + $0xfc] sm:$0xf]
        %358 = vst [vmem:[#allocation1] ss:$9 sm:$0xff] %v292
        %v359 = vld [vmem:[#allocation1] sm:$0xff]
        %v360 = vld [vmem:[#allocation1 + $0x9] sm:$0xff]
        %v361 = vld [vmem:[#allocation1 + $0x12] sm:$0xff]
        %v362 = vld [vmem:[#allocation1 + $0x1b] sm:$0xff]
        %v431 = vunpack.c.l.b16 %v293
        %v432 = vunpack.c.l.b16 %v294
        %v433 = vunpack.c.l.b16 %v295
        %v434 = vunpack.c.l.b16 %v296
        %v435 = vunpack.c.l.b16 %v297
        %v436 = vunpack.c.l.b16 %v298
        %v437 = vunpack.c.l.b16 %v299
        %v438 = vunpack.c.l.b16 %v300
        %v439 = vunpack.c.l.b16 %v301
        %v440 = vunpack.c.l.b16 %v302
        %v441 = vunpack.c.l.b16 %v303
        %v442 = vunpack.c.l.b16 %v304
        %v443 = vunpack.c.l.b16 %v305
        %v444 = vunpack.c.l.b16 %v306
        %v445 = vunpack.c.l.b16 %v307
        %v446 = vunpack.c.l.b16 %v308
        %v447 = vunpack.c.l.b16 %v309
        %v448 = vunpack.c.l.b16 %v310
        %v449 = vunpack.c.l.b16 %v311
        %v450 = vunpack.c.l.b16 %v312
        %v451 = vunpack.c.l.b16 %v313
        %v452 = vunpack.c.l.b16 %v314
        %v453 = vunpack.c.l.b16 %v315
        %v454 = vunpack.c.l.b16 %v316
        %v455 = vunpack.c.l.b16 %v317
        %v456 = vunpack.c.l.b16 %v318
        %v457 = vunpack.c.l.b16 %v319
        %v458 = vunpack.c.l.b16 %v320
        %v459 = vunpack.c.l.b16 %v321
        %v460 = vunpack.c.l.b16 %v322
        %v461 = vunpack.c.l.b16 %v323
        %v462 = vunpack.c.l.b16 %v324
        %v463 = vunpack.c.l.b16 %v325
        %v464 = vunpack.c.l.b16 %v326
        %v465 = vunpack.c.l.b16 %v327
        %v466 = vunpack.c.l.b16 %v328
        %v467 = vunpack.c.l.b16 %v329
        %v468 = vunpack.c.l.b16 %v330
        %v469 = vunpack.c.l.b16 %v331
        %v470 = vunpack.c.l.b16 %v332
        %v471 = vunpack.c.l.b16 %v333
        %v472 = vunpack.c.l.b16 %v334
        %v473 = vunpack.c.l.b16 %v335
        %v474 = vunpack.c.l.b16 %v336
        %v475 = vunpack.c.l.b16 %v337
        %v476 = vunpack.c.l.b16 %v338
        %v477 = vunpack.c.l.b16 %v339
        %v478 = vunpack.c.l.b16 %v340
        %v479 = vunpack.c.l.b16 %v341
        %v480 = vunpack.c.l.b16 %v342
        %v481 = vunpack.c.l.b16 %v343
        %v482 = vunpack.c.l.b16 %v344
        %v483 = vunpack.c.l.b16 %v345
        %v484 = vunpack.c.l.b16 %v346
        %v485 = vunpack.c.l.b16 %v347
        %v486 = vunpack.c.l.b16 %v348
        %v487 = vunpack.c.l.b16 %v349
        %v488 = vunpack.c.l.b16 %v350
        %v489 = vunpack.c.l.b16 %v351
        %v490 = vunpack.c.l.b16 %v352
        %v491 = vunpack.c.l.b16 %v353
        %v492 = vunpack.c.l.b16 %v354
        %v493 = vunpack.c.l.b16 %v355
        %v494 = vunpack.c.l.b16 %v356
        %v495 = vpack.c.b16 %v432, %v431
        %v496 = vpack.c.b16 %v434, %v433
        %v497 = vpack.c.b16 %v436, %v435
        %v498 = vpack.c.b16 %v438, %v437
        %v499 = vpack.c.b16 %v440, %v439
        %v500 = vpack.c.b16 %v442, %v441
        %v501 = vpack.c.b16 %v444, %v443
        %v502 = vpack.c.b16 %v446, %v445
        %v503 = vpack.c.b16 %v448, %v447
        %v504 = vpack.c.b16 %v450, %v449
        %v505 = vpack.c.b16 %v452, %v451
        %v506 = vpack.c.b16 %v454, %v453
        %v507 = vpack.c.b16 %v456, %v455
        %v508 = vpack.c.b16 %v458, %v457
        %v509 = vpack.c.b16 %v460, %v459
        %v510 = vpack.c.b16 %v462, %v461
        %v511 = vpack.c.b16 %v464, %v463
        %v512 = vpack.c.b16 %v466, %v465
        %v513 = vpack.c.b16 %v468, %v467
        %v514 = vpack.c.b16 %v470, %v469
        %v515 = vpack.c.b16 %v472, %v471
        %v516 = vpack.c.b16 %v474, %v473
        %v517 = vpack.c.b16 %v476, %v475
        %v518 = vpack.c.b16 %v478, %v477
        %v519 = vpack.c.b16 %v480, %v479
        %v520 = vpack.c.b16 %v482, %v481
        %v521 = vpack.c.b16 %v484, %v483
        %v522 = vpack.c.b16 %v486, %v485
        %v523 = vpack.c.b16 %v488, %v487
        %v524 = vpack.c.b16 %v490, %v489
        %v525 = vpack.c.b16 %v492, %v491
        %v526 = vpack.c.b16 %v494, %v493
        %559 = vmatpush.bf16.msra.mxu0 %v502
        %560 = vmatpush.bf16.msra.mxu0 %v501
        %561 = vmatpush.bf16.msra.mxu0 %v500
        %562 = vmatpush.bf16.msra.mxu0 %v499
        %563 = vmatpush.bf16.msra.mxu0 %v498
        %564 = vmatpush.bf16.msra.mxu0 %v497
        %565 = vmatpush.bf16.msra.mxu0 %v496
        %566 = vmatpush.bf16.msra.mxu0 %v495
        %567 = vmatmul.bf16.gmra.mxu0 %v359
        %v568 = vpop.f32.mrf.mxu0
        %v569 = vadd.f32 0.0, %v568
        %v570 = vpop.f32.mrf.mxu0
        %571 = vdwg.mxu0
        %572 = vmatpush.bf16.msra.mxu0 %v510
        %573 = vmatpush.bf16.msra.mxu0 %v509
        %574 = vmatpush.bf16.msra.mxu0 %v508
        %575 = vmatpush.bf16.msra.mxu0 %v507
        %576 = vmatpush.bf16.msra.mxu0 %v506
        %577 = vmatpush.bf16.msra.mxu0 %v505
        %578 = vmatpush.bf16.msra.mxu0 %v504
        %579 = vmatpush.bf16.msra.mxu0 %v503
        %580 = vmatmul.bf16.gmra.mxu0 %v360
        %v581 = vpop.f32.mrf.mxu0
        %v582 = vadd.f32 %v569, %v581
        %v583 = vpop.f32.mrf.mxu0
        %584 = vdwg.mxu0
        %585 = vmatpush.bf16.msra.mxu0 %v518
        %586 = vmatpush.bf16.msra.mxu0 %v517
        %587 = vmatpush.bf16.msra.mxu0 %v516
        %588 = vmatpush.bf16.msra.mxu0 %v515
        %589 = vmatpush.bf16.msra.mxu0 %v514
        %590 = vmatpush.bf16.msra.mxu0 %v513
        %591 = vmatpush.bf16.msra.mxu0 %v512
        %592 = vmatpush.bf16.msra.mxu0 %v511
        %593 = vmatmul.bf16.gmra.mxu0 %v361
        %v594 = vpop.f32.mrf.mxu0
        %v595 = vadd.f32 %v582, %v594
        %v596 = vpop.f32.mrf.mxu0
        %597 = vdwg.mxu0
        %598 = vmatpush.bf16.msra.mxu0 %v526
        %599 = vmatpush.bf16.msra.mxu0 %v525
        %600 = vmatpush.bf16.msra.mxu0 %v524
        %601 = vmatpush.bf16.msra.mxu0 %v523
        %602 = vmatpush.bf16.msra.mxu0 %v522
        %603 = vmatpush.bf16.msra.mxu0 %v521
        %604 = vmatpush.bf16.msra.mxu0 %v520
        %605 = vmatpush.bf16.msra.mxu0 %v519
        %606 = vmatmul.bf16.gmra.mxu0 %v362
        %v607 = vpop.f32.mrf.mxu0
        %v608 = vadd.f32 %v595, %v607
        %v609 = vpop.f32.mrf.mxu0
        %610 = vdwg.mxu0
        %v611 = vadd.f32 %v291, %v608
        %vm612 = vcmask 123904
        %613 = vst.msk [vmem:[#allocation2] sm:$0x3] %vm612, %v611
        %p614 = scmp.eq.s32.totalorder %s22, 1
        // Predicated region
        $region49: #{conv_vae_forward.11} parent=35 // pred_check
          %p615 = pneg %p614
        $region50: #{conv_vae_forward.11} parent=35 // pred_check_branch
          %617 = sbr.rel (%p615) target = $region52
        $region51: #{conv_vae_forward.11} parent=35 // pred_region
          %v618 = vld [vmem:[#allocation2] sm:$0x3]
          %v619 = vld [vmem:[#allocation3] sm:$0x1]
          %v621 = vperm.slane %v619, 0
          %v623 = vadd.f32 %v618, %v621
          %vm624 = vcmask 58368
          %625 = vst.msk [vmem:[#allocation8] sm:$0x3] %vm624, %v623
          %627 = vrot.lane.b32.xlu0 %v623, 120
          %v628 = vpop.permute.xlu0 %627
          %630 = vst.msk [vmem:[#allocation9] sm:$0x3] %vm624, %v628
          %v631 = vmul.f32 %v623, 0.5
          %v632 = vmul.f32 %v631, 1.442695
          %v633 = vpow.pop %v632
          %v634 = vld [vmem:[#allocation6] sm:$0x3]
          %636 = vrot.lane.b32.xlu0 %v634, 8
          %v637 = vpop.permute.xlu0 %636
          %v639 = vmul.f32 %v633, %v637
          %641 = vrot.lane.b32.xlu0 %v639, 120
          %v642 = vpop.permute.xlu0 %641
          %v644 = vadd.f32 %v623, %v642
          %645 = vst.msk [vmem:[%s4] sm:$0x3] %vm624, %v644
        $region52: #{conv_vae_forward.11} parent=35 // pred_fallthru
          _
        // Predicated region
        $region53: #{conv_vae_forward.11} parent=35 // pred_check
          %p646 = pneg %p129
        $region54: #{conv_vae_forward.11} parent=35 // pred_check_branch
          %648 = sbr.rel (%p646) target = $region56
        $region55: #{conv_vae_forward.11} parent=35 // pred_region
          _
        $region56: #{conv_vae_forward.11} parent=35 // pred_fallthru
          _
        // Predicated region
        $region57: #{conv_vae_forward.11} parent=35 // pred_check
          %p649 = pneg %p150
        $region58: #{conv_vae_forward.11} parent=35 // pred_check_branch
          %651 = sbr.rel (%p649) target = $region60
        $region59: #{conv_vae_forward.11} parent=35 // pred_region
          %653 = vsyncadd [#allocation5], 0
          %s655 = sshll.u32 [#allocation8], 4
          %s656 = int_to_ptr.vmem [resolvable:$true] %s655
          %s657 = sshll.u32 %s5, 4
          %s658 = int_to_ptr.hbm [resolvable:$true] %s657
          %660 = dma.vmem_to_hbm [thread:$0]  %s656, 32, %s658, [#allocation5]
        $region60: #{conv_vae_forward.11} parent=35 // pred_fallthru
          _
        // Predicated region
        $region61: #{conv_vae_forward.11} parent=35 // pred_check
          %p661 = pneg %p171
        $region62: #{conv_vae_forward.11} parent=35 // pred_check_branch
          %663 = sbr.rel (%p661) target = $region64
        $region63: #{conv_vae_forward.11} parent=35 // pred_region
          %665 = vsyncadd [#allocation10], 0
          %s667 = sshll.u32 [#allocation9], 4
          %s668 = int_to_ptr.vmem [resolvable:$true] %s667
          %s669 = sshll.u32 %s6, 4
          %s670 = int_to_ptr.hbm [resolvable:$true] %s669
          %672 = dma.vmem_to_hbm [thread:$0]  %s668, 32, %s670, [#allocation10]
        $region64: #{conv_vae_forward.11} parent=35 // pred_fallthru
          _
        // Predicated region
        $region65: #{conv_vae_forward.11} parent=35 // pred_check
          %p673 = pneg %p129
        $region66: #{conv_vae_forward.11} parent=35 // pred_check_branch
          %675 = sbr.rel (%p673) target = $region68
        $region67: #{conv_vae_forward.11} parent=35 // pred_region
          _
        $region68: #{conv_vae_forward.11} parent=35 // pred_fallthru
          _
        // Predicated region
        $region69: #{conv_vae_forward.11} parent=35 // pred_check
          %p676 = pneg %p150
        $region70: #{conv_vae_forward.11} parent=35 // pred_check_branch
          %678 = sbr.rel (%p676) target = $region72
        $region71: #{conv_vae_forward.11} parent=35 // pred_region
          %680 = dma.done [#allocation5], 32
        $region72: #{conv_vae_forward.11} parent=35 // pred_fallthru
          _
        // Predicated region
        $region73: #{conv_vae_forward.11} parent=35 // pred_check
          %p681 = pneg %p171
        $region74: #{conv_vae_forward.11} parent=35 // pred_check_branch
          %683 = sbr.rel (%p681) target = $region76
        $region75: #{conv_vae_forward.11} parent=35 // pred_region
          %685 = dma.done [#allocation10], 32
        $region76: #{conv_vae_forward.11} parent=35 // pred_fallthru
          _
      $region36: #{conv_vae_forward.11} parent=5 // pred_fallthru
        _
      %p686 = scmp.le.s32.totalorder 2, %s17
      // Predicated region
      $region77: #{conv_vae_forward.11} parent=5 // pred_check
        %p687 = pneg %p686
      $region78: #{conv_vae_forward.11} parent=5 // pred_check_branch
        %689 = sbr.rel (%p687) target = $region80
      $region79: #{conv_vae_forward.11} parent=5 // pred_region
        %s690 = ssub.s32 %s17, 2
      $region80: #{conv_vae_forward.11} parent=5 // pred_fallthru
        _
    $region6: #{conv_vae_forward.11} parent=1 // loop_footer
      %s21 = sadd.s32 1, %s17
    $region7: #{conv_vae_forward.11} parent=1 // loop_footer_branch
      %16 = sbr.rel target = $region3
    $region8: #{conv_vae_forward.11} parent=1 // loop_exit
      _
    %691 = vsyncpa [#allocation4], 1
    %s692 = scalar_lea.sflag [#allocation4], 1
    %693 = vsyncpa %s692, 1
    %694 = vsyncpa [#allocation7], 1
    %695 = vsyncpa [#allocation5], 1
    %s696 = scalar_lea.sflag [#allocation5], 1
    %697 = vsyncpa %s696, 1
    %698 = vsyncpa [#allocation10], 1

// kernel: conv_vae_forward.12
$region0: #{conv_vae_forward.12}
  #allocation0 [shape = 'u32[]', space=smem, size = 0x4, offset = 0x4, fixed_abs, tag = 'smem constant byte address 0x4 - core index']
  #allocation1 [shape = 'u32[72,128]{1,0:T(1,128)}', space=vmem, size = 0x9000, scoped, tag = 'internal scratch']
  #allocation2 [shape = 'f32[2,512]{1,0:T(2,128)}', space=vmem, size = 0x1000, scoped, tag = 'scratch operand']
  %s0 = inlined_call_operand.vmem [shape: bf16[2,8], index: 0, kind: input, shape index: {}]
  %s1 = inlined_call_operand.hbm [shape: bf16[8,1024], index: 1, kind: input, shape index: {}]
  %s2 = inlined_call_operand.hbm [shape: f32[1,1024], index: 2, kind: input, shape index: {}]
  %s3 = inlined_call_operand.vmem [shape: bf16[2,1024], index: 3, kind: output, shape index: {}]
  %s4 = sld [smem:[#allocation0]]
  $region61: #{conv_vae_forward.12} parent=0
    _
  %s6 = ssub.s32 1, %s4
  %s7 = scalar_select 0, %s6, %s4
  $region1: #{conv_vae_forward.12} parent=0
    #allocation3 [shape = 'u8[16384]{0}', space=vmem, size = 0x4000, scoped, tag = 'input window, operand 1']
    #allocation4 [shape = 's32[2]{0}', space=sflag, size = 0x8, scoped, tag = 'scoped memory for conv_vae_forward.12']
    #allocation5 [shape = 'u8[4096]{0}', space=vmem, size = 0x1000, scoped, tag = 'input window, operand 2']
    #allocation6 [shape = 's32[2]{0}', space=sflag, size = 0x8, scoped, tag = 'scoped memory for conv_vae_forward.12']
    %8 = vsyncpa [#allocation4], 0
    %s9 = scalar_lea.sflag [#allocation4], 1
    %10 = vsyncpa %s9, 0
    %11 = vsyncpa [#allocation6], 0
    %s12 = scalar_lea.sflag [#allocation6], 1
    %13 = vsyncpa %s12, 0
    loop: start=0, step=1, limit=4
    $region2: #{conv_vae_forward.12} parent=1 // loop_pre_header
      _
    $region3: #{conv_vae_forward.12} parent=1 // loop_header
      %s15 = sphi 0, %s19
      %p16 = scmp.ge.s32.totalorder %s15, 4
      %s22 = sphi 0, %s34
      %s23 = sphi 0, %s30
      %s24 = sphi 0, %s22
      %s25 = sphi 0, %s23
      %s26 = sphi 0, %s24
      %s27 = sphi 0, %s25
      %s37 = sphi 0, %s39
      %s40 = sphi 0, %s37
      %s41 = sphi 0, %s40
      %s57 = sphi 0, %s41
      %s65 = sphi 0, %s67
      %s68 = sphi 0, %s65
      %s69 = sphi 0, %s68
      %s85 = sphi 0, %s69
      %s91 = sphi 0, %s93
      %s94 = sphi 0, %s91
      %s95 = sphi 0, %s94
      %s111 = sphi 0, %s95
      %s117 = sphi 0, %s119
      %s120 = sphi 0, %s117
      %s121 = sphi 0, %s120
      %s137 = sphi 0, %s121
    $region4: #{conv_vae_forward.12} parent=1 // loop_header_branch
      %18 = sbr.rel (%p16) target = $region8
    $region5: #{conv_vae_forward.12} parent=1 // loop_body
      %s20 = ssub.s32 %s15, 1
      %s21 = ssub.s32 %s15, 2
      %s28 = sadd.s32 1, %s23
      %p29 = scmp.ge.s32.totalorder %s28, 1
      %s30 = scalar_select %p29, 0, %s28
      %s31 = sadd.s32 1, %s22
      %s32 = scalar_select %p29, %s31, %s22
      %p33 = scmp.ge.s32.totalorder %s32, 2
      %s34 = scalar_select %p33, 0, %s32
      %s35 = ssub.s32 %s23, %s30
      %p36 = scmp.eq.s32.totalorder %s35, 0
      %s38 = sadd.s32 %s37, 1
      %s39 = scalar_select %p36, %s37, %s38
      %p42 = pneg %p36
      %p43 = scmp.eq.s32.totalorder %s15, 1
      %p44 = por %p42, %p43
      %p45 = scmp.ne.s32.totalorder %s37, %s40
      %p46 = scmp.eq.s32.totalorder %s15, 0
      %p47 = por %p45, %p46
      %p48 = scmp.ne.s32.totalorder %s37, %s40
      %p49 = scmp.eq.s32.totalorder %s20, 1
      %p50 = por %p48, %p49
      %p51 = scmp.ne.s32.totalorder %s40, %s41
      %p52 = scmp.eq.s32.totalorder %s20, 0
      %p53 = por %p51, %p52
      %p54 = scmp.ne.s32.totalorder %s40, %s41
      %p55 = scmp.eq.s32.totalorder %s21, 1
      %p56 = por %p54, %p55
      %p58 = scmp.ne.s32.totalorder %s41, %s57
      %p59 = scmp.eq.s32.totalorder %s21, 0
      %p60 = por %p58, %p59
      %s61 = ssub.s32 %s23, %s30
      %s62 = ssub.s32 %s22, %s34
      %s63 = sor.u32 %s61, %s62
      %p64 = scmp.eq.s32.totalorder %s63, 0
      %s66 = sadd.s32 %s65, 1
      %s67 = scalar_select %p64, %s65, %s66
      %p70 = pneg %p64
      %p71 = scmp.eq.s32.totalorder %s15, 1
      %p72 = por %p70, %p71
      %p73 = scmp.ne.s32.totalorder %s65, %s68
      %p74 = scmp.eq.s32.totalorder %s15, 0
      %p75 = por %p73, %p74
      %p76 = scmp.ne.s32.totalorder %s65, %s68
      %p77 = scmp.eq.s32.totalorder %s20, 1
      %p78 = por %p76, %p77
      %p79 = scmp.ne.s32.totalorder %s68, %s69
      %p80 = scmp.eq.s32.totalorder %s20, 0
      %p81 = por %p79, %p80
      %p82 = scmp.ne.s32.totalorder %s68, %s69
      %p83 = scmp.eq.s32.totalorder %s21, 1
      %p84 = por %p82, %p83
      %p86 = scmp.ne.s32.totalorder %s69, %s85
      %p87 = scmp.eq.s32.totalorder %s21, 0
      %p88 = por %p86, %p87
      %s89 = ssub.s32 %s22, %s34
      %p90 = scmp.eq.s32.totalorder %s89, 0
      %s92 = sadd.s32 %s91, 1
      %s93 = scalar_select %p90, %s91, %s92
      %p96 = pneg %p90
      %p97 = scmp.eq.s32.totalorder %s15, 1
      %p98 = por %p96, %p97
      %p99 = scmp.ne.s32.totalorder %s91, %s94
      %p100 = scmp.eq.s32.totalorder %s15, 0
      %p101 = por %p99, %p100
      %p102 = scmp.ne.s32.totalorder %s91, %s94
      %p103 = scmp.eq.s32.totalorder %s20, 1
      %p104 = por %p102, %p103
      %p105 = scmp.ne.s32.totalorder %s94, %s95
      %p106 = scmp.eq.s32.totalorder %s20, 0
      %p107 = por %p105, %p106
      %p108 = scmp.ne.s32.totalorder %s94, %s95
      %p109 = scmp.eq.s32.totalorder %s21, 1
      %p110 = por %p108, %p109
      %p112 = scmp.ne.s32.totalorder %s95, %s111
      %p113 = scmp.eq.s32.totalorder %s21, 0
      %p114 = por %p112, %p113
      %s115 = ssub.s32 %s22, %s34
      %p116 = scmp.eq.s32.totalorder %s115, 0
      %s118 = sadd.s32 %s117, 1
      %s119 = scalar_select %p116, %s117, %s118
      %p122 = pneg %p116
      %p123 = scmp.eq.s32.totalorder %s15, 1
      %p124 = por %p122, %p123
      %p125 = scmp.ne.s32.totalorder %s117, %s120
      %p126 = scmp.eq.s32.totalorder %s15, 0
      %p127 = por %p125, %p126
      %p128 = scmp.ne.s32.totalorder %s117, %s120
      %p129 = scmp.eq.s32.totalorder %s20, 1
      %p130 = por %p128, %p129
      %p131 = scmp.ne.s32.totalorder %s120, %s121
      %p132 = scmp.eq.s32.totalorder %s20, 0
      %p133 = por %p131, %p132
      %p134 = scmp.ne.s32.totalorder %s120, %s121
      %p135 = scmp.eq.s32.totalorder %s21, 1
      %p136 = por %p134, %p135
      %p138 = scmp.ne.s32.totalorder %s121, %s137
      %p139 = scmp.eq.s32.totalorder %s21, 0
      %p140 = por %p138, %p139
      %p141 = scmp.le.s32.totalorder 1, %s15
      %p142 = scmp.lt.s32.totalorder %s15, 3
      %p143 = pnand %p141, %p142
      %p144 = pneg %p143
      // Predicated region
      $region9: #{conv_vae_forward.12} parent=5 // pred_check
        _
      $region10: #{conv_vae_forward.12} parent=5 // pred_check_branch
        %146 = sbr.rel (%p143) target = $region12
      $region11: #{conv_vae_forward.12} parent=5 // pred_region
        %s147 = ssub.s32 %s15, 1
        // Predicated region
        $region13: #{conv_vae_forward.12} parent=11 // pred_check
          %p148 = pneg %p53
        $region14: #{conv_vae_forward.12} parent=11 // pred_check_branch
          %150 = sbr.rel (%p148) target = $region16
        $region15: #{conv_vae_forward.12} parent=11 // pred_region
          %p151 = scmp.lt.s32.totalorder %s25, 0
          %s152 = scalar_select %p151, %s25, 0
          %s153 = scalar_lea.vmem %s0, %s152
        $region16: #{conv_vae_forward.12} parent=11 // pred_fallthru
          _
      $region12: #{conv_vae_forward.12} parent=5 // pred_fallthru
        _
      %p154 = scmp.lt.s32.totalorder %s15, 2
      // Predicated region
      $region17: #{conv_vae_forward.12} parent=5 // pred_check
        %p155 = pneg %p154
      $region18: #{conv_vae_forward.12} parent=5 // pred_check_branch
        %157 = sbr.rel (%p155) target = $region20
      $region19: #{conv_vae_forward.12} parent=5 // pred_region
        // Predicated region
        $region21: #{conv_vae_forward.12} parent=19 // pred_check
          %p158 = pneg %p75
        $region22: #{conv_vae_forward.12} parent=19 // pred_check_branch
          %160 = sbr.rel (%p158) target = $region24
        $region23: #{conv_vae_forward.12} parent=19 // pred_region
          %s161 = sand.u32 %s65, 1
          %s162 = scalar_lea.sflag [#allocation4], %s161
          %s163 = sand.u32 %s65, 1
          %s164 = smul.addr %s163, 16
          %s165 = scalar_lea.vmem [#allocation3], %s164
          %s166 = smul.u32 4, %s22
          %168 = vsyncadd %s162, 0
          %s169 = smul.addr %s23, 8
          %s170 = sadd.s32 %s166, %s169
          %s171 = smul.addr %s170, 4
          %s172 = scalar_lea.hbm %s1, %s171
          %s174 = sshll.u32 %s172, 4
          %s175 = int_to_ptr.hbm [resolvable:$true] %s174
          %s176 = sshll.u32 %s165, 4
          %s177 = int_to_ptr.vmem [resolvable:$true] %s176
          %179 = dma.hbm_to_vmem [thread:$0]  %s175, 256, %s177, %s162
        $region24: #{conv_vae_forward.12} parent=19 // pred_fallthru
          _
        // Predicated region
        $region25: #{conv_vae_forward.12} parent=19 // pred_check
          %p180 = pneg %p101
        $region26: #{conv_vae_forward.12} parent=19 // pred_check_branch
          %182 = sbr.rel (%p180) target = $region28
        $region27: #{conv_vae_forward.12} parent=19 // pred_region
          %s183 = sand.u32 %s91, 1
          %s184 = scalar_lea.sflag [#allocation6], %s183
          %s185 = sand.u32 %s91, 1
          %s186 = smul.addr %s185, 4
          %s187 = scalar_lea.vmem [#allocation5], %s186
          %s188 = smul.u32 4, %s22
          %190 = vsyncadd %s184, 0
          %s191 = scalar_lea.hbm %s2, %s188
          %s193 = sshll.u32 %s191, 4
          %s194 = int_to_ptr.hbm [resolvable:$true] %s193
          %s195 = sshll.u32 %s187, 4
          %s196 = int_to_ptr.vmem [resolvable:$true] %s195
          %198 = dma.hbm_to_vmem [thread:$0]  %s194, 64, %s196, %s184
        $region28: #{conv_vae_forward.12} parent=19 // pred_fallthru
          _
      $region20: #{conv_vae_forward.12} parent=5 // pred_fallthru
        _
      %p199 = scmp.le.s32.totalorder 1, %s15
      %p200 = scmp.lt.s32.totalorder %s15, 3
      %p201 = pnand %p199, %p200
      %p202 = pneg %p201
      // Predicated region
      $region29: #{conv_vae_forward.12} parent=5 // pred_check
        _
      $region30: #{conv_vae_forward.12} parent=5 // pred_check_branch
        %204 = sbr.rel (%p201) target = $region32
      $region31: #{conv_vae_forward.12} parent=5 // pred_region
        %s205 = ssub.s32 %s15, 1
        %s206 = sand.u32 %s68, 1
        %s207 = scalar_lea.sflag [#allocation4], %s206
        %s208 = sand.u32 %s68, 1
        %s209 = smul.addr %s208, 16
        %s210 = scalar_lea.vmem [#allocation3], %s209
        // Predicated region
        $region33: #{conv_vae_forward.12} parent=31 // pred_check
          %p211 = pneg %p81
        $region34: #{conv_vae_forward.12} parent=31 // pred_check_branch
          %213 = sbr.rel (%p211) target = $region36
        $region35: #{conv_vae_forward.12} parent=31 // pred_region
          %215 = dma.done %s207, 256
        $region36: #{conv_vae_forward.12} parent=31 // pred_fallthru
          _
        %s216 = sand.u32 %s94, 1
        %s217 = scalar_lea.sflag [#allocation6], %s216
        %s218 = sand.u32 %s94, 1
        %s219 = smul.addr %s218, 4
        %s220 = scalar_lea.vmem [#allocation5], %s219
        // Predicated region
        $region37: #{conv_vae_forward.12} parent=31 // pred_check
          %p221 = pneg %p107
        $region38: #{conv_vae_forward.12} parent=31 // pred_check_branch
          %223 = sbr.rel (%p221) target = $region40
        $region39: #{conv_vae_forward.12} parent=31 // pred_region
          %225 = dma.done %s217, 64
        $region40: #{conv_vae_forward.12} parent=31 // pred_fallthru
          _
        %p226 = scmp.lt.s32.totalorder %s25, 0
        %s227 = scalar_select %p226, %s25, 0
        %s228 = scalar_lea.vmem %s0, %s227
        %p229 = pneg %p53
        %p230 = pneg %p50
        %s231 = sand.u32 %s68, 1
        %s232 = scalar_lea.sflag [#allocation4], %s231
        %s233 = sand.u32 %s68, 1
        %s234 = smul.addr %s233, 16
        %s235 = scalar_lea.vmem [#allocation3], %s234
        %p236 = pneg %p81
        %p237 = pneg %p78
        %s238 = sand.u32 %s94, 1
        %s239 = scalar_lea.sflag [#allocation6], %s238
        %s240 = sand.u32 %s94, 1
        %s241 = smul.addr %s240, 4
        %s242 = scalar_lea.vmem [#allocation5], %s241
        %p243 = pneg %p107
        %p244 = pneg %p104
        %p245 = pneg %p133
        %p246 = pneg %p130
        %s247 = smul.u32 4, %s24
        %p248 = scmp.lt.s32.totalorder %s247, 7
        %s249 = scalar_select %p248, %s247, 7
        %s250 = scalar_lea.vmem %s3, %s249
        %p251 = scmp.lt.s32.totalorder %s25, 0
        %s252 = scalar_select %p251, %s25, 0
        %s253 = scalar_lea.vmem %s0, %s252
        %s254 = smul.u32 4, %s24
        %s255 = smul.u32 4, %s24
        %s256 = smul.u32 4, %s24
        %p257 = scmp.lt.s32.totalorder %s256, 7
        %s258 = scalar_select %p257, %s256, 7
        %s259 = scalar_lea.vmem %s3, %s258
        %s260 = smul.u32 4, %s24
        %p262 = scmp.eq.s32.totalorder %s25, 0
        // Predicated region
        $region41: #{conv_vae_forward.12} parent=31 // pred_check
          %p263 = pneg %p262
        $region42: #{conv_vae_forward.12} parent=31 // pred_check_branch
          %265 = sbr.rel (%p263) target = $region44
        $region43: #{conv_vae_forward.12} parent=31 // pred_region
          %266 = vst [vmem:[#allocation2] sm:$0xff] 0.0
        $region44: #{conv_vae_forward.12} parent=31 // pred_fallthru
          _
        %v267 = vld [vmem:[#allocation2] sm:$0xff]
        %v268 = vld [vmem:[%s253] sm:$0x1]
        %v269 = vld [vmem:[%s210] sm:$0xff]
        %v270 = vld [vmem:[%s210 + $0x8] sm:$0xff]
        %v273 = vunpack.c.l.b16 %v269
        %v274 = vunpack.c.h.b16 %v269
        %v275 = vunpack.c.l.b16 %v270
        %v276 = vunpack.c.h.b16 %v270
        %v277 = vpack.c.b16 %v273, %v273
        %v278 = vpack.c.b16 %v274, %v274
        %v279 = vpack.c.b16 %v275, %v275
        %v280 = vpack.c.b16 %v276, %v276
        %vm281 = vcmask 64512
        %v283 = vsel %vm281, %v268, 0
        %vm285 = vcmask 1043456
        %v287 = vsel %vm285, %v277, 0
        %v290 = vsel %vm285, %v278, 0
        %v293 = vsel %vm285, %v279, 0
        %v296 = vsel %vm285, %v280, 0
        %298 = vmatpush.bf16.msra.mxu0 0
        %299 = vmatpush.bf16.msra.mxu0 0
        %300 = vmatpush.bf16.msra.mxu0 0
        %301 = vmatpush.bf16.msra.mxu0 0
        %302 = vmatpush.bf16.msra.mxu0 0
        %303 = vmatpush.bf16.msra.mxu0 0
        %304 = vmatpush.bf16.msra.mxu0 0
        %305 = vmatpush.bf16.msra.mxu0 %v287
        %306 = vmatmul.bf16.gmra.mxu0 %v283
        %v307 = vpop.f32.mrf.mxu0
        %v308 = vadd.f32 0.0, %v307
        %v309 = vpop.f32.mrf.mxu0
        %310 = vdwg.mxu0
        %311 = vmatpush.bf16.msra.mxu0 0
        %312 = vmatpush.bf16.msra.mxu0 0
        %313 = vmatpush.bf16.msra.mxu0 0
        %314 = vmatpush.bf16.msra.mxu0 0
        %315 = vmatpush.bf16.msra.mxu0 0
        %316 = vmatpush.bf16.msra.mxu0 0
        %317 = vmatpush.bf16.msra.mxu0 0
        %318 = vmatpush.bf16.msra.mxu0 %v290
        %319 = vmatmul.bf16.gmra.mxu0 %v283
        %v320 = vpop.f32.mrf.mxu0
        %v321 = vadd.f32 0.0, %v320
        %v322 = vpop.f32.mrf.mxu0
        %323 = vdwg.mxu0
        %324 = vmatpush.bf16.msra.mxu0 0
        %325 = vmatpush.bf16.msra.mxu0 0
        %326 = vmatpush.bf16.msra.mxu0 0
        %327 = vmatpush.bf16.msra.mxu0 0
        %328 = vmatpush.bf16.msra.mxu0 0
        %329 = vmatpush.bf16.msra.mxu0 0
        %330 = vmatpush.bf16.msra.mxu0 0
        %331 = vmatpush.bf16.msra.mxu0 %v293
        %332 = vmatmul.bf16.gmra.mxu0 %v283
        %v333 = vpop.f32.mrf.mxu0
        %v334 = vadd.f32 0.0, %v333
        %v335 = vpop.f32.mrf.mxu0
        %336 = vdwg.mxu0
        %337 = vmatpush.bf16.msra.mxu0 0
        %338 = vmatpush.bf16.msra.mxu0 0
        %339 = vmatpush.bf16.msra.mxu0 0
        %340 = vmatpush.bf16.msra.mxu0 0
        %341 = vmatpush.bf16.msra.mxu0 0
        %342 = vmatpush.bf16.msra.mxu0 0
        %343 = vmatpush.bf16.msra.mxu0 0
        %344 = vmatpush.bf16.msra.mxu0 %v296
        %345 = vmatmul.bf16.gmra.mxu0 %v283
        %v346 = vpop.f32.mrf.mxu0
        %v347 = vadd.f32 0.0, %v346
        %v348 = vpop.f32.mrf.mxu0
        %349 = vdwg.mxu0
        %v354 = vrot.slane %v321, 6
        %v355 = vrot.slane %v334, 4
        %v356 = vrot.slane %v347, 2
        %vm357 = vcmask 1041408
        %v358 = vsel %vm357, %v308, %v354
        %vm359 = vcmask 1045508
        %v360 = vsel %vm359, %v355, %v356
        %v361 = vsel %vm285, %v358, %v360
        %v363 = vadd.f32 %v267, %v361
        %364 = vst [vmem:[#allocation2] sm:$0xff] %v363
        // Predicated region
        $region45: #{conv_vae_forward.12} parent=31 // pred_check
          %p365 = pneg %p262
        $region46: #{conv_vae_forward.12} parent=31 // pred_check_branch
          %367 = sbr.rel (%p365) target = $region48
        $region47: #{conv_vae_forward.12} parent=31 // pred_region
          %v368 = vld [vmem:[#allocation2] sm:$0xff]
          %v369 = vld [vmem:[%s220] sm:$0xf]
          %v371 = vperm.slane %v369, 0
          %v372 = vperm.slane %v369, 1
          %v373 = vperm.slane %v369, 2
          %v374 = vperm.slane %v369, 3
          %v375 = vrot.slane %v372, 6
          %v376 = vrot.slane %v373, 4
          %v377 = vrot.slane %v374, 2
          %v378 = vsel %vm357, %v371, %v375
          %v379 = vsel %vm359, %v376, %v377
          %v380 = vsel %vm285, %v378, %v379
          %v382 = vadd.f32 %v368, %v380
          %384 = vst [vmem:[#allocation1] ss:$4 sm:$0xff] %v382
          %v385 = vld.sshfl [vmem:[#allocation1] sm:$0xff pattern:$0x73625140]
          %v386 = vld.sshfl [vmem:[#allocation1 + $0x8] sm:$0xff pattern:$0x73625140]
          %v387 = vld.sshfl [vmem:[#allocation1 + $0x10] sm:$0xff pattern:$0x73625140]
          %v388 = vld.sshfl [vmem:[#allocation1 + $0x18] sm:$0xff pattern:$0x73625140]
          %v393 = vsel %vm357, %v385, 0.0
          %v394 = vrot.slane %v393, 4
          %v395 = vadd.f32 %v393, %v394
          %v396 = vrot.slane %v395, 2
          %v397 = vadd.f32 %v395, %v396
          %v398 = vrot.slane %v397, 1
          %v399 = vadd.f32 %v397, %v398
          %v400 = vsel %vm357, %v386, 0.0
          %v401 = vrot.slane %v400, 4
          %v402 = vadd.f32 %v400, %v401
          %v403 = vrot.slane %v402, 2
          %v404 = vadd.f32 %v402, %v403
          %v405 = vrot.slane %v404, 1
          %v406 = vadd.f32 %v404, %v405
          %v407 = vsel %vm357, %v387, 0.0
          %v408 = vrot.slane %v407, 4
          %v409 = vadd.f32 %v407, %v408
          %v410 = vrot.slane %v409, 2
          %v411 = vadd.f32 %v409, %v410
          %v412 = vrot.slane %v411, 1
          %v413 = vadd.f32 %v411, %v412
          %v414 = vsel %vm357, %v388, 0.0
          %v415 = vrot.slane %v414, 4
          %v416 = vadd.f32 %v414, %v415
          %v417 = vrot.slane %v416, 2
          %v418 = vadd.f32 %v416, %v417
          %v419 = vrot.slane %v418, 1
          %v420 = vadd.f32 %v418, %v419
          %v421 = vrcp.pop 2.0
          %v422 = vmul.f32 2.0, %v421
          %v423 = vsub.f32 1.0, %v422
          %v424 = vmul.f32 %v421, %v423
          %v425 = vadd.f32 %v421, %v424
          %vm426 = vweird.f32 %v421
          %v427 = vsel %vm426, %v421, %v425
          %v428 = vmul.f32 %v399, %v427
          %v429 = vmul.f32 %v406, %v427
          %v430 = vmul.f32 %v413, %v427
          %v431 = vmul.f32 %v420, %v427
          %v436 = vrot.slane %v429, 6
          %v437 = vrot.slane %v430, 4
          %v438 = vrot.slane %v431, 2
          %v439 = vsel %vm357, %v428, %v436
          %v440 = vsel %vm359, %v437, %v438
          %v441 = vsel %vm285, %v439, %v440
          %v443 = vsub.f32 %v382, %v441
          %v444 = vmul.f32 %v443, %v443
          %446 = vst [vmem:[#allocation1] ss:$4 sm:$0xff] %v444
          %v447 = vld.sshfl [vmem:[#allocation1] sm:$0xff pattern:$0x73625140]
          %v448 = vld.sshfl [vmem:[#allocation1 + $0x8] sm:$0xff pattern:$0x73625140]
          %v449 = vld.sshfl [vmem:[#allocation1 + $0x10] sm:$0xff pattern:$0x73625140]
          %v450 = vld.sshfl [vmem:[#allocation1 + $0x18] sm:$0xff pattern:$0x73625140]
          %v455 = vsel %vm357, %v447, 0.0
          %v456 = vrot.slane %v455, 4
          %v457 = vadd.f32 %v455, %v456
          %v458 = vrot.slane %v457, 2
          %v459 = vadd.f32 %v457, %v458
          %v460 = vrot.slane %v459, 1
          %v461 = vadd.f32 %v459, %v460
          %v462 = vsel %vm357, %v448, 0.0
          %v463 = vrot.slane %v462, 4
          %v464 = vadd.f32 %v462, %v463
          %v465 = vrot.slane %v464, 2
          %v466 = vadd.f32 %v464, %v465
          %v467 = vrot.slane %v466, 1
          %v468 = vadd.f32 %v466, %v467
          %v469 = vsel %vm357, %v449, 0.0
          %v470 = vrot.slane %v469, 4
          %v471 = vadd.f32 %v469, %v470
          %v472 = vrot.slane %v471, 2
          %v473 = vadd.f32 %v471, %v472
          %v474 = vrot.slane %v473, 1
          %v475 = vadd.f32 %v473, %v474
          %v476 = vsel %vm357, %v450, 0.0
          %v477 = vrot.slane %v476, 4
          %v478 = vadd.f32 %v476, %v477
          %v479 = vrot.slane %v478, 2
          %v480 = vadd.f32 %v478, %v479
          %v481 = vrot.slane %v480, 1
          %v482 = vadd.f32 %v480, %v481
          %v483 = vmul.f32 %v461, %v427
          %v484 = vmul.f32 %v468, %v427
          %v485 = vmul.f32 %v475, %v427
          %v486 = vmul.f32 %v482, %v427
          %v487 = vadd.f32 %v483, 1e-05
          %v488 = vadd.f32 %v484, 1e-05
          %v489 = vadd.f32 %v485, 1e-05
          %v490 = vadd.f32 %v486, 1e-05
          %v491 = vrsqrt.pop %v487
          %v492 = vmul.f32 %v491, %v487
          %v493 = vmul.f32 %v492, %v491
          %v494 = vmul.f32 0.5, %v493
          %v495 = vsub.f32 1.5, %v494
          %v496 = vmul.f32 %v491, %v495
          %vm497 = vweird.f32 %v487
          %vm498 = vweird.f32 %v491
          %vm499 = vmor %vm497, %vm498
          %v500 = vsel %vm499, %v491, %v496
          %v501 = vrsqrt.pop %v488
          %v502 = vmul.f32 %v501, %v488
          %v503 = vmul.f32 %v502, %v501
          %v504 = vmul.f32 0.5, %v503
          %v505 = vsub.f32 1.5, %v504
          %v506 = vmul.f32 %v501, %v505
          %vm507 = vweird.f32 %v488
          %vm508 = vweird.f32 %v501
          %vm509 = vmor %vm507, %vm508
          %v510 = vsel %vm509, %v501, %v506
          %v511 = vrsqrt.pop %v489
          %v512 = vmul.f32 %v511, %v489
          %v513 = vmul.f32 %v512, %v511
          %v514 = vmul.f32 0.5, %v513
          %v515 = vsub.f32 1.5, %v514
          %v516 = vmul.f32 %v511, %v515
          %vm517 = vweird.f32 %v489
          %vm518 = vweird.f32 %v511
          %vm519 = vmor %vm517, %vm518
          %v520 = vsel %vm519, %v511, %v516
          %v521 = vrsqrt.pop %v490
          %v522 = vmul.f32 %v521, %v490
          %v523 = vmul.f32 %v522, %v521
          %v524 = vmul.f32 0.5, %v523
          %v525 = vsub.f32 1.5, %v524
          %v526 = vmul.f32 %v521, %v525
          %vm527 = vweird.f32 %v490
          %vm528 = vweird.f32 %v521
          %vm529 = vmor %vm527, %vm528
          %v530 = vsel %vm529, %v521, %v526
          %v535 = vrot.slane %v510, 6
          %v536 = vrot.slane %v520, 4
          %v537 = vrot.slane %v530, 2
          %v538 = vsel %vm357, %v500, %v535
          %v539 = vsel %vm359, %v536, %v537
          %v540 = vsel %vm285, %v538, %v539
          %v542 = vmul.f32 %v443, %v540
          %v543 = vmax.f32 %v542, 0.0
          %545 = vst [vmem:[#allocation1] ss:$4 sm:$0xff] %v543
          %v546 = vld.sshfl [vmem:[#allocation1] sm:$0xff pattern:$0x73625140]
          %v547 = vld.sshfl [vmem:[#allocation1 + $0x8] sm:$0xff pattern:$0x73625140]
          %v548 = vld.sshfl [vmem:[#allocation1 + $0x10] sm:$0xff pattern:$0x73625140]
          %v549 = vld.sshfl [vmem:[#allocation1 + $0x18] sm:$0xff pattern:$0x73625140]
          %v554 = vpack.c.bf16 %v547, %v546
          %v555 = vpack.c.bf16 %v549, %v548
          %v558 = vrot.slane %v554, 3
          %v559 = vrot.slane %v555, 6
          %v560 = vrot.slane %v555, 1
          %vm561 = vcmask 1040384
          %v564 = vsel %vm561, %v554, %v558
          %vm565 = vcmask 1042434
          %v568 = vsel %vm565, %v559, %v560
          %v569 = vsel %vm357, %v564, %v568
          %571 = vst [vmem:[%s259] sm:$0xf] %v569
        $region48: #{conv_vae_forward.12} parent=31 // pred_fallthru
          _
        %s572 = smul.u32 4, %s24
        %p573 = scmp.lt.s32.totalorder %s572, 7
        %s574 = scalar_select %p573, %s572, 7
        %s575 = scalar_lea.vmem %s3, %s574
        // Predicated region
        $region49: #{conv_vae_forward.12} parent=31 // pred_check
          %p576 = pneg %p130
        $region50: #{conv_vae_forward.12} parent=31 // pred_check_branch
          %578 = sbr.rel (%p576) target = $region52
        $region51: #{conv_vae_forward.12} parent=31 // pred_region
          %s579 = smul.u32 4, %s24
        $region52: #{conv_vae_forward.12} parent=31 // pred_fallthru
          _
      $region32: #{conv_vae_forward.12} parent=5 // pred_fallthru
        _
      %p580 = scmp.le.s32.totalorder 2, %s15
      // Predicated region
      $region53: #{conv_vae_forward.12} parent=5 // pred_check
        %p581 = pneg %p580
      $region54: #{conv_vae_forward.12} parent=5 // pred_check_branch
        %583 = sbr.rel (%p581) target = $region56
      $region55: #{conv_vae_forward.12} parent=5 // pred_region
        %s584 = ssub.s32 %s15, 2
        // Predicated region
        $region57: #{conv_vae_forward.12} parent=55 // pred_check
          %p585 = pneg %p136
        $region58: #{conv_vae_forward.12} parent=55 // pred_check_branch
          %587 = sbr.rel (%p585) target = $region60
        $region59: #{conv_vae_forward.12} parent=55 // pred_region
          %s588 = smul.u32 4, %s26
          %p589 = scmp.lt.s32.totalorder %s588, 7
          %s590 = scalar_select %p589, %s588, 7
          %s591 = scalar_lea.vmem %s3, %s590
        $region60: #{conv_vae_forward.12} parent=55 // pred_fallthru
          _
      $region56: #{conv_vae_forward.12} parent=5 // pred_fallthru
        _
    $region6: #{conv_vae_forward.12} parent=1 // loop_footer
      %s19 = sadd.s32 1, %s15
    $region7: #{conv_vae_forward.12} parent=1 // loop_footer_branch
      %14 = sbr.rel target = $region3
    $region8: #{conv_vae_forward.12} parent=1 // loop_exit
      _
    %592 = vsyncpa [#allocation4], 1
    %s593 = scalar_lea.sflag [#allocation4], 1
    %594 = vsyncpa %s593, 1
    %595 = vsyncpa [#allocation6], 1
    %s596 = scalar_lea.sflag [#allocation6], 1
    %597 = vsyncpa %s596, 1

// kernel: conv_vae_forward.10
$region0: #{conv_vae_forward.10}
  #allocation0 [shape = 'u32[]', space=smem, size = 0x4, offset = 0x4, fixed_abs, tag = 'smem constant byte address 0x4 - core index']
  #allocation1 [shape = 'u32[72,128]{1,0:T(1,128)}', space=vmem, size = 0x9000, scoped, tag = 'internal scratch']
  #allocation2 [shape = 'f32[2,512]{1,0:T(2,128)}', space=vmem, size = 0x1000, scoped, tag = 'scratch operand']
  %s0 = inlined_call_operand.vmem [shape: bf16[2,2048], index: 0, kind: input, shape index: {}]
  %s1 = inlined_call_operand.hbm [shape: bf16[2048,1024], index: 1, kind: input, shape index: {}]
  %s2 = inlined_call_operand.hbm [shape: f32[1,1024], index: 2, kind: input, shape index: {}]
  %s3 = inlined_call_operand.vmem [shape: bf16[2,1024], index: 3, kind: output, shape index: {}]
  %s4 = sld [smem:[#allocation0]]
  $region61: #{conv_vae_forward.10} parent=0
    _
  %s6 = ssub.s32 1, %s4
  %s7 = scalar_select 0, %s6, %s4
  $region1: #{conv_vae_forward.10} parent=0
    #allocation3 [shape = 'u8[1048576]{0}', space=vmem, size = 0x100000, scoped, tag = 'input window, operand 1']
    #allocation4 [shape = 's32[2]{0}', space=sflag, size = 0x8, scoped, tag = 'scoped memory for conv_vae_forward.10']
    #allocation5 [shape = 'u8[4096]{0}', space=vmem, size = 0x1000, scoped, tag = 'input window, operand 2']
    #allocation6 [shape = 's32[2]{0}', space=sflag, size = 0x8, scoped, tag = 'scoped memory for conv_vae_forward.10']
    %8 = vsyncpa [#allocation4], 0
    %s9 = scalar_lea.sflag [#allocation4], 1
    %10 = vsyncpa %s9, 0
    %11 = vsyncpa [#allocation6], 0
    %s12 = scalar_lea.sflag [#allocation6], 1
    %13 = vsyncpa %s12, 0
    loop: start=0, step=1, limit=10
    $region2: #{conv_vae_forward.10} parent=1 // loop_pre_header
      _
    $region3: #{conv_vae_forward.10} parent=1 // loop_header
      %s15 = sphi 0, %s19
      %p16 = scmp.ge.s32.totalorder %s15, 10
      %s22 = sphi 0, %s34
      %s23 = sphi 0, %s30
      %s24 = sphi 0, %s22
      %s25 = sphi 0, %s23
      %s26 = sphi 0, %s24
      %s27 = sphi 0, %s25
      %s37 = sphi 0, %s39
      %s40 = sphi 0, %s37
      %s41 = sphi 0, %s40
      %s57 = sphi 0, %s41
      %s65 = sphi 0, %s67
      %s68 = sphi 0, %s65
      %s69 = sphi 0, %s68
      %s85 = sphi 0, %s69
      %s91 = sphi 0, %s93
      %s94 = sphi 0, %s91
      %s95 = sphi 0, %s94
      %s111 = sphi 0, %s95
      %s117 = sphi 0, %s119
      %s120 = sphi 0, %s117
      %s121 = sphi 0, %s120
      %s137 = sphi 0, %s121
    $region4: #{conv_vae_forward.10} parent=1 // loop_header_branch
      %18 = sbr.rel (%p16) target = $region8
    $region5: #{conv_vae_forward.10} parent=1 // loop_body
      %s20 = ssub.s32 %s15, 1
      %s21 = ssub.s32 %s15, 2
      %s28 = sadd.s32 1, %s23
      %p29 = scmp.ge.s32.totalorder %s28, 4
      %s30 = scalar_select %p29, 0, %s28
      %s31 = sadd.s32 1, %s22
      %s32 = scalar_select %p29, %s31, %s22
      %p33 = scmp.ge.s32.totalorder %s32, 2
      %s34 = scalar_select %p33, 0, %s32
      %s35 = ssub.s32 %s23, %s30
      %p36 = scmp.eq.s32.totalorder %s35, 0
      %s38 = sadd.s32 %s37, 1
      %s39 = scalar_select %p36, %s37, %s38
      %p42 = pneg %p36
      %p43 = scmp.eq.s32.totalorder %s15, 7
      %p44 = por %p42, %p43
      %p45 = scmp.ne.s32.totalorder %s37, %s40
      %p46 = scmp.eq.s32.totalorder %s15, 0
      %p47 = por %p45, %p46
      %p48 = scmp.ne.s32.totalorder %s37, %s40
      %p49 = scmp.eq.s32.totalorder %s20, 7
      %p50 = por %p48, %p49
      %p51 = scmp.ne.s32.totalorder %s40, %s41
      %p52 = scmp.eq.s32.totalorder %s20, 0
      %p53 = por %p51, %p52
      %p54 = scmp.ne.s32.totalorder %s40, %s41
      %p55 = scmp.eq.s32.totalorder %s21, 7
      %p56 = por %p54, %p55
      %p58 = scmp.ne.s32.totalorder %s41, %s57
      %p59 = scmp.eq.s32.totalorder %s21, 0
      %p60 = por %p58, %p59
      %s61 = ssub.s32 %s23, %s30
      %s62 = ssub.s32 %s22, %s34
      %s63 = sor.u32 %s61, %s62
      %p64 = scmp.eq.s32.totalorder %s63, 0
      %s66 = sadd.s32 %s65, 1
      %s67 = scalar_select %p64, %s65, %s66
      %p70 = pneg %p64
      %p71 = scmp.eq.s32.totalorder %s15, 7
      %p72 = por %p70, %p71
      %p73 = scmp.ne.s32.totalorder %s65, %s68
      %p74 = scmp.eq.s32.totalorder %s15, 0
      %p75 = por %p73, %p74
      %p76 = scmp.ne.s32.totalorder %s65, %s68
      %p77 = scmp.eq.s32.totalorder %s20, 7
      %p78 = por %p76, %p77
      %p79 = scmp.ne.s32.totalorder %s68, %s69
      %p80 = scmp.eq.s32.totalorder %s20, 0
      %p81 = por %p79, %p80
      %p82 = scmp.ne.s32.totalorder %s68, %s69
      %p83 = scmp.eq.s32.totalorder %s21, 7
      %p84 = por %p82, %p83
      %p86 = scmp.ne.s32.totalorder %s69, %s85
      %p87 = scmp.eq.s32.totalorder %s21, 0
      %p88 = por %p86, %p87
      %s89 = ssub.s32 %s22, %s34
      %p90 = scmp.eq.s32.totalorder %s89, 0
      %s92 = sadd.s32 %s91, 1
      %s93 = scalar_select %p90, %s91, %s92
      %p96 = pneg %p90
      %p97 = scmp.eq.s32.totalorder %s15, 7
      %p98 = por %p96, %p97
      %p99 = scmp.ne.s32.totalorder %s91, %s94
      %p100 = scmp.eq.s32.totalorder %s15, 0
      %p101 = por %p99, %p100
      %p102 = scmp.ne.s32.totalorder %s91, %s94
      %p103 = scmp.eq.s32.totalorder %s20, 7
      %p104 = por %p102, %p103
      %p105 = scmp.ne.s32.totalorder %s94, %s95
      %p106 = scmp.eq.s32.totalorder %s20, 0
      %p107 = por %p105, %p106
      %p108 = scmp.ne.s32.totalorder %s94, %s95
      %p109 = scmp.eq.s32.totalorder %s21, 7
      %p110 = por %p108, %p109
      %p112 = scmp.ne.s32.totalorder %s95, %s111
      %p113 = scmp.eq.s32.totalorder %s21, 0
      %p114 = por %p112, %p113
      %s115 = ssub.s32 %s22, %s34
      %p116 = scmp.eq.s32.totalorder %s115, 0
      %s118 = sadd.s32 %s117, 1
      %s119 = scalar_select %p116, %s117, %s118
      %p122 = pneg %p116
      %p123 = scmp.eq.s32.totalorder %s15, 7
      %p124 = por %p122, %p123
      %p125 = scmp.ne.s32.totalorder %s117, %s120
      %p126 = scmp.eq.s32.totalorder %s15, 0
      %p127 = por %p125, %p126
      %p128 = scmp.ne.s32.totalorder %s117, %s120
      %p129 = scmp.eq.s32.totalorder %s20, 7
      %p130 = por %p128, %p129
      %p131 = scmp.ne.s32.totalorder %s120, %s121
      %p132 = scmp.eq.s32.totalorder %s20, 0
      %p133 = por %p131, %p132
      %p134 = scmp.ne.s32.totalorder %s120, %s121
      %p135 = scmp.eq.s32.totalorder %s21, 7
      %p136 = por %p134, %p135
      %p138 = scmp.ne.s32.totalorder %s121, %s137
      %p139 = scmp.eq.s32.totalorder %s21, 0
      %p140 = por %p138, %p139
      %p141 = scmp.le.s32.totalorder 1, %s15
      %p142 = scmp.lt.s32.totalorder %s15, 9
      %p143 = pnand %p141, %p142
      %p144 = pneg %p143
      // Predicated region
      $region9: #{conv_vae_forward.10} parent=5 // pred_check
        _
      $region10: #{conv_vae_forward.10} parent=5 // pred_check_branch
        %146 = sbr.rel (%p143) target = $region12
      $region11: #{conv_vae_forward.10} parent=5 // pred_region
        %s147 = ssub.s32 %s15, 1
      $region12: #{conv_vae_forward.10} parent=5 // pred_fallthru
        _
      %p148 = scmp.lt.s32.totalorder %s15, 8
      // Predicated region
      $region13: #{conv_vae_forward.10} parent=5 // pred_check
        %p149 = pneg %p148
      $region14: #{conv_vae_forward.10} parent=5 // pred_check_branch
        %151 = sbr.rel (%p149) target = $region16
      $region15: #{conv_vae_forward.10} parent=5 // pred_region
        // Predicated region
        $region17: #{conv_vae_forward.10} parent=15 // pred_check
          %p152 = pneg %p47
        $region18: #{conv_vae_forward.10} parent=15 // pred_check_branch
          %154 = sbr.rel (%p152) target = $region20
        $region19: #{conv_vae_forward.10} parent=15 // pred_region
          %s155 = smul.u32 4, %s23
          %p156 = scmp.lt.s32.totalorder %s155, 15
          %s157 = scalar_select %p156, %s155, 15
          %s158 = scalar_lea.vmem %s0, %s157
          %s159 = smul.u32 4, %s23
        $region20: #{conv_vae_forward.10} parent=15 // pred_fallthru
          _
        // Predicated region
        $region21: #{conv_vae_forward.10} parent=15 // pred_check
          %p160 = pneg %p75
        $region22: #{conv_vae_forward.10} parent=15 // pred_check_branch
          %162 = sbr.rel (%p160) target = $region24
        $region23: #{conv_vae_forward.10} parent=15 // pred_region
          %s163 = sand.u32 %s65, 1
          %s164 = scalar_lea.sflag [#allocation4], %s163
          %s165 = sand.u32 %s65, 1
          %s166 = smul.addr %s165, 1024
          %s167 = scalar_lea.vmem [#allocation3], %s166
          %s168 = smul.u32 64, %s23
          %s169 = smul.u32 4, %s22
          %171 = vsyncadd %s164, 0
          %s172 = smul.addr %s168, 8
          %s173 = sadd.s32 %s169, %s172
          %s174 = smul.addr %s173, 4
          %s175 = scalar_lea.hbm %s1, %s174
          %s176 = sshll.u32 %s175, 4
          %s177 = int_to_ptr.hbm [resolvable:$true] %s176
          %s178 = sshll.u32 %s167, 4
          %s179 = int_to_ptr.vmem [resolvable:$true] %s178
          %184 = dma.hbm_to_vmem [thread:$0]  %s177, 16384, %s179, %s164, 512, 256, 16
        $region24: #{conv_vae_forward.10} parent=15 // pred_fallthru
          _
        // Predicated region
        $region25: #{conv_vae_forward.10} parent=15 // pred_check
          %p185 = pneg %p101
        $region26: #{conv_vae_forward.10} parent=15 // pred_check_branch
          %187 = sbr.rel (%p185) target = $region28
        $region27: #{conv_vae_forward.10} parent=15 // pred_region
          %s188 = sand.u32 %s91, 1
          %s189 = scalar_lea.sflag [#allocation6], %s188
          %s190 = sand.u32 %s91, 1
          %s191 = smul.addr %s190, 4
          %s192 = scalar_lea.vmem [#allocation5], %s191
          %s193 = smul.u32 4, %s22
          %195 = vsyncadd %s189, 0
          %s196 = scalar_lea.hbm %s2, %s193
          %s198 = sshll.u32 %s196, 4
          %s199 = int_to_ptr.hbm [resolvable:$true] %s198
          %s200 = sshll.u32 %s192, 4
          %s201 = int_to_ptr.vmem [resolvable:$true] %s200
          %203 = dma.hbm_to_vmem [thread:$0]  %s199, 64, %s201, %s189
        $region28: #{conv_vae_forward.10} parent=15 // pred_fallthru
          _
      $region16: #{conv_vae_forward.10} parent=5 // pred_fallthru
        _
      %p204 = scmp.le.s32.totalorder 1, %s15
      %p205 = scmp.lt.s32.totalorder %s15, 9
      %p206 = pnand %p204, %p205
      %p207 = pneg %p206
      // Predicated region
      $region29: #{conv_vae_forward.10} parent=5 // pred_check
        _
      $region30: #{conv_vae_forward.10} parent=5 // pred_check_branch
        %209 = sbr.rel (%p206) target = $region32
      $region31: #{conv_vae_forward.10} parent=5 // pred_region
        %s210 = ssub.s32 %s15, 1
        %s211 = sand.u32 %s68, 1
        %s212 = scalar_lea.sflag [#allocation4], %s211
        %s213 = sand.u32 %s68, 1
        %s214 = smul.addr %s213, 1024
        %s215 = scalar_lea.vmem [#allocation3], %s214
        // Predicated region
        $region33: #{conv_vae_forward.10} parent=31 // pred_check
          %p216 = pneg %p81
        $region34: #{conv_vae_forward.10} parent=31 // pred_check_branch
          %218 = sbr.rel (%p216) target = $region36
        $region35: #{conv_vae_forward.10} parent=31 // pred_region
          %220 = dma.done %s212, 16384
        $region36: #{conv_vae_forward.10} parent=31 // pred_fallthru
          _
        %s221 = sand.u32 %s94, 1
        %s222 = scalar_lea.sflag [#allocation6], %s221
        %s223 = sand.u32 %s94, 1
        %s224 = smul.addr %s223, 4
        %s225 = scalar_lea.vmem [#allocation5], %s224
        // Predicated region
        $region37: #{conv_vae_forward.10} parent=31 // pred_check
          %p226 = pneg %p107
        $region38: #{conv_vae_forward.10} parent=31 // pred_check_branch
          %228 = sbr.rel (%p226) target = $region40
        $region39: #{conv_vae_forward.10} parent=31 // pred_region
          %230 = dma.done %s222, 64
        $region40: #{conv_vae_forward.10} parent=31 // pred_fallthru
          _
        %s231 = smul.u32 4, %s25
        %p232 = scmp.lt.s32.totalorder %s231, 15
        %s233 = scalar_select %p232, %s231, 15
        %s234 = scalar_lea.vmem %s0, %s233
        %p235 = pneg %p53
        %p236 = pneg %p50
        %s237 = sand.u32 %s68, 1
        %s238 = scalar_lea.sflag [#allocation4], %s237
        %s239 = sand.u32 %s68, 1
        %s240 = smul.addr %s239, 1024
        %s241 = scalar_lea.vmem [#allocation3], %s240
        %p242 = pneg %p81
        %p243 = pneg %p78
        %s244 = sand.u32 %s94, 1
        %s245 = scalar_lea.sflag [#allocation6], %s244
        %s246 = sand.u32 %s94, 1
        %s247 = smul.addr %s246, 4
        %s248 = scalar_lea.vmem [#allocation5], %s247
        %p249 = pneg %p107
        %p250 = pneg %p104
        %p251 = pneg %p133
        %p252 = pneg %p130
        %s253 = smul.u32 4, %s24
        %p254 = scmp.lt.s32.totalorder %s253, 7
        %s255 = scalar_select %p254, %s253, 7
        %s256 = scalar_lea.vmem %s3, %s255
        %s257 = smul.u32 4, %s25
        %p258 = scmp.lt.s32.totalorder %s257, 15
        %s259 = scalar_select %p258, %s257, 15
        %s260 = scalar_lea.vmem %s0, %s259
        %s261 = smul.u32 4, %s25
        %s262 = smul.u32 64, %s25
        %s263 = smul.u32 4, %s24
        %s264 = smul.u32 4, %s24
        %s265 = smul.u32 4, %s24
        %p266 = scmp.lt.s32.totalorder %s265, 7
        %s267 = scalar_select %p266, %s265, 7
        %s268 = scalar_lea.vmem %s3, %s267
        %s269 = smul.u32 4, %s24
        %p270 = scmp.eq.s32.totalorder %s25, 0
        // Predicated region
        $region41: #{conv_vae_forward.10} parent=31 // pred_check
          %p271 = pneg %p270
        $region42: #{conv_vae_forward.10} parent=31 // pred_check_branch
          %273 = sbr.rel (%p271) target = $region44
        $region43: #{conv_vae_forward.10} parent=31 // pred_region
          %274 = vst [vmem:[#allocation2] sm:$0xff] 0.0
        $region44: #{conv_vae_forward.10} parent=31 // pred_fallthru
          _
        %v275 = vld [vmem:[#allocation2] sm:$0xff]
        %v276 = vld [vmem:[%s260] sm:$0xf]
        %v277 = vld [vmem:[%s215] sm:$0xff]
        %v278 = vld [vmem:[%s215 + $0x8] sm:$0xff]
        %v279 = vld [vmem:[%s215 + $0x10] sm:$0xff]
        %v280 = vld [vmem:[%s215 + $0x18] sm:$0xff]
        %v281 = vld [vmem:[%s215 + $0x20] sm:$0xff]
        %v282 = vld [vmem:[%s215 + $0x28] sm:$0xff]
        %v283 = vld [vmem:[%s215 + $0x30] sm:$0xff]
        %v284 = vld [vmem:[%s215 + $0x38] sm:$0xff]
        %v285 = vld [vmem:[%s215 + $0x40] sm:$0xff]
        %v286 = vld [vmem:[%s215 + $0x48] sm:$0xff]
        %v287 = vld [vmem:[%s215 + $0x50] sm:$0xff]
        %v288 = vld [vmem:[%s215 + $0x58] sm:$0xff]
        %v289 = vld [vmem:[%s215 + $0x60] sm:$0xff]
        %v290 = vld [vmem:[%s215 + $0x68] sm:$0xff]
        %v291 = vld [vmem:[%s215 + $0x70] sm:$0xff]
        %v292 = vld [vmem:[%s215 + $0x78] sm:$0xff]
        %v293 = vld [vmem:[%s215 + $0x80] sm:$0xff]
        %v294 = vld [vmem:[%s215 + $0x88] sm:$0xff]
        %v295 = vld [vmem:[%s215 + $0x90] sm:$0xff]
        %v296 = vld [vmem:[%s215 + $0x98] sm:$0xff]
        %v297 = vld [vmem:[%s215 + $0xa0] sm:$0xff]
        %v298 = vld [vmem:[%s215 + $0xa8] sm:$0xff]
        %v299 = vld [vmem:[%s215 + $0xb0] sm:$0xff]
        %v300 = vld [vmem:[%s215 + $0xb8] sm:$0xff]
        %v301 = vld [vmem:[%s215 + $0xc0] sm:$0xff]
        %v302 = vld [vmem:[%s215 + $0xc8] sm:$0xff]
        %v303 = vld [vmem:[%s215 + $0xd0] sm:$0xff]
        %v304 = vld [vmem:[%s215 + $0xd8] sm:$0xff]
        %v305 = vld [vmem:[%s215 + $0xe0] sm:$0xff]
        %v306 = vld [vmem:[%s215 + $0xe8] sm:$0xff]
        %v307 = vld [vmem:[%s215 + $0xf0] sm:$0xff]
        %v308 = vld [vmem:[%s215 + $0xf8] sm:$0xff]
        %v309 = vld [vmem:[%s215 + $0x100] sm:$0xff]
        %v310 = vld [vmem:[%s215 + $0x108] sm:$0xff]
        %v311 = vld [vmem:[%s215 + $0x110] sm:$0xff]
        %v312 = vld [vmem:[%s215 + $0x118] sm:$0xff]
        %v313 = vld [vmem:[%s215 + $0x120] sm:$0xff]
        %v314 = vld [vmem:[%s215 + $0x128] sm:$0xff]
        %v315 = vld [vmem:[%s215 + $0x130] sm:$0xff]
        %v316 = vld [vmem:[%s215 + $0x138] sm:$0xff]
        %v317 = vld [vmem:[%s215 + $0x140] sm:$0xff]
        %v318 = vld [vmem:[%s215 + $0x148] sm:$0xff]
        %v319 = vld [vmem:[%s215 + $0x150] sm:$0xff]
        %v320 = vld [vmem:[%s215 + $0x158] sm:$0xff]
        %v321 = vld [vmem:[%s215 + $0x160] sm:$0xff]
        %v322 = vld [vmem:[%s215 + $0x168] sm:$0xff]
        %v323 = vld [vmem:[%s215 + $0x170] sm:$0xff]
        %v324 = vld [vmem:[%s215 + $0x178] sm:$0xff]
        %v325 = vld [vmem:[%s215 + $0x180] sm:$0xff]
        %v326 = vld [vmem:[%s215 + $0x188] sm:$0xff]
        %v327 = vld [vmem:[%s215 + $0x190] sm:$0xff]
        %v328 = vld [vmem:[%s215 + $0x198] sm:$0xff]
        %v329 = vld [vmem:[%s215 + $0x1a0] sm:$0xff]
        %v330 = vld [vmem:[%s215 + $0x1a8] sm:$0xff]
        %v331 = vld [vmem:[%s215 + $0x1b0] sm:$0xff]
        %v332 = vld [vmem:[%s215 + $0x1b8] sm:$0xff]
        %v333 = vld [vmem:[%s215 + $0x1c0] sm:$0xff]
        %v334 = vld [vmem:[%s215 + $0x1c8] sm:$0xff]
        %v335 = vld [vmem:[%s215 + $0x1d0] sm:$0xff]
        %v336 = vld [vmem:[%s215 + $0x1d8] sm:$0xff]
        %v337 = vld [vmem:[%s215 + $0x1e0] sm:$0xff]
        %v338 = vld [vmem:[%s215 + $0x1e8] sm:$0xff]
        %v339 = vld [vmem:[%s215 + $0x1f0] sm:$0xff]
        %v340 = vld [vmem:[%s215 + $0x1f8] sm:$0xff]
        %v341 = vld [vmem:[%s215 + $0x200] sm:$0xff]
        %v342 = vld [vmem:[%s215 + $0x208] sm:$0xff]
        %v343 = vld [vmem:[%s215 + $0x210] sm:$0xff]
        %v344 = vld [vmem:[%s215 + $0x218] sm:$0xff]
        %v345 = vld [vmem:[%s215 + $0x220] sm:$0xff]
        %v346 = vld [vmem:[%s215 + $0x228] sm:$0xff]
        %v347 = vld [vmem:[%s215 + $0x230] sm:$0xff]
        %v348 = vld [vmem:[%s215 + $0x238] sm:$0xff]
        %v349 = vld [vmem:[%s215 + $0x240] sm:$0xff]
        %v350 = vld [vmem:[%s215 + $0x248] sm:$0xff]
        %v351 = vld [vmem:[%s215 + $0x250] sm:$0xff]
        %v352 = vld [vmem:[%s215 + $0x258] sm:$0xff]
        %v353 = vld [vmem:[%s215 + $0x260] sm:$0xff]
        %v354 = vld [vmem:[%s215 + $0x268] sm:$0xff]
        %v355 = vld [vmem:[%s215 + $0x270] sm:$0xff]
        %v356 = vld [vmem:[%s215 + $0x278] sm:$0xff]
        %v357 = vld [vmem:[%s215 + $0x280] sm:$0xff]
        %v358 = vld [vmem:[%s215 + $0x288] sm:$0xff]
        %v359 = vld [vmem:[%s215 + $0x290] sm:$0xff]
        %v360 = vld [vmem:[%s215 + $0x298] sm:$0xff]
        %v361 = vld [vmem:[%s215 + $0x2a0] sm:$0xff]
        %v362 = vld [vmem:[%s215 + $0x2a8] sm:$0xff]
        %v363 = vld [vmem:[%s215 + $0x2b0] sm:$0xff]
        %v364 = vld [vmem:[%s215 + $0x2b8] sm:$0xff]
        %v365 = vld [vmem:[%s215 + $0x2c0] sm:$0xff]
        %v366 = vld [vmem:[%s215 + $0x2c8] sm:$0xff]
        %v367 = vld [vmem:[%s215 + $0x2d0] sm:$0xff]
        %v368 = vld [vmem:[%s215 + $0x2d8] sm:$0xff]
        %v369 = vld [vmem:[%s215 + $0x2e0] sm:$0xff]
        %v370 = vld [vmem:[%s215 + $0x2e8] sm:$0xff]
        %v371 = vld [vmem:[%s215 + $0x2f0] sm:$0xff]
        %v372 = vld [vmem:[%s215 + $0x2f8] sm:$0xff]
        %v373 = vld [vmem:[%s215 + $0x300] sm:$0xff]
        %v374 = vld [vmem:[%s215 + $0x308] sm:$0xff]
        %v375 = vld [vmem:[%s215 + $0x310] sm:$0xff]
        %v376 = vld [vmem:[%s215 + $0x318] sm:$0xff]
        %v377 = vld [vmem:[%s215 + $0x320] sm:$0xff]
        %v378 = vld [vmem:[%s215 + $0x328] sm:$0xff]
        %v379 = vld [vmem:[%s215 + $0x330] sm:$0xff]
        %v380 = vld [vmem:[%s215 + $0x338] sm:$0xff]
        %v381 = vld [vmem:[%s215 + $0x340] sm:$0xff]
        %v382 = vld [vmem:[%s215 + $0x348] sm:$0xff]
        %v383 = vld [vmem:[%s215 + $0x350] sm:$0xff]
        %v384 = vld [vmem:[%s215 + $0x358] sm:$0xff]
        %v385 = vld [vmem:[%s215 + $0x360] sm:$0xff]
        %v386 = vld [vmem:[%s215 + $0x368] sm:$0xff]
        %v387 = vld [vmem:[%s215 + $0x370] sm:$0xff]
        %v388 = vld [vmem:[%s215 + $0x378] sm:$0xff]
        %v389 = vld [vmem:[%s215 + $0x380] sm:$0xff]
        %v390 = vld [vmem:[%s215 + $0x388] sm:$0xff]
        %v391 = vld [vmem:[%s215 + $0x390] sm:$0xff]
        %v392 = vld [vmem:[%s215 + $0x398] sm:$0xff]
        %v393 = vld [vmem:[%s215 + $0x3a0] sm:$0xff]
        %v394 = vld [vmem:[%s215 + $0x3a8] sm:$0xff]
        %v395 = vld [vmem:[%s215 + $0x3b0] sm:$0xff]
        %v396 = vld [vmem:[%s215 + $0x3b8] sm:$0xff]
        %v397 = vld [vmem:[%s215 + $0x3c0] sm:$0xff]
        %v398 = vld [vmem:[%s215 + $0x3c8] sm:$0xff]
        %v399 = vld [vmem:[%s215 + $0x3d0] sm:$0xff]
        %v400 = vld [vmem:[%s215 + $0x3d8] sm:$0xff]
        %v401 = vld [vmem:[%s215 + $0x3e0] sm:$0xff]
        %v402 = vld [vmem:[%s215 + $0x3e8] sm:$0xff]
        %v403 = vld [vmem:[%s215 + $0x3f0] sm:$0xff]
        %v404 = vld [vmem:[%s215 + $0x3f8] sm:$0xff]
        %406 = vst [vmem:[#allocation1] ss:$9 sm:$0xff] %v276
        %v407 = vld [vmem:[#allocation1] sm:$0xff]
        %v408 = vld [vmem:[#allocation1 + $0x9] sm:$0xff]
        %v409 = vld [vmem:[#allocation1 + $0x12] sm:$0xff]
        %v410 = vld [vmem:[#allocation1 + $0x1b] sm:$0xff]
        %v543 = vunpack.c.l.b16 %v277
        %v544 = vunpack.c.h.b16 %v277
        %v545 = vunpack.c.l.b16 %v278
        %v546 = vunpack.c.h.b16 %v278
        %v547 = vunpack.c.l.b16 %v279
        %v548 = vunpack.c.h.b16 %v279
        %v549 = vunpack.c.l.b16 %v280
        %v550 = vunpack.c.h.b16 %v280
        %v551 = vunpack.c.l.b16 %v281
        %v552 = vunpack.c.h.b16 %v281
        %v553 = vunpack.c.l.b16 %v282
        %v554 = vunpack.c.h.b16 %v282
        %v555 = vunpack.c.l.b16 %v283
        %v556 = vunpack.c.h.b16 %v283
        %v557 = vunpack.c.l.b16 %v284
        %v558 = vunpack.c.h.b16 %v284
        %v559 = vunpack.c.l.b16 %v285
        %v560 = vunpack.c.h.b16 %v285
        %v561 = vunpack.c.l.b16 %v286
        %v562 = vunpack.c.h.b16 %v286
        %v563 = vunpack.c.l.b16 %v287
        %v564 = vunpack.c.h.b16 %v287
        %v565 = vunpack.c.l.b16 %v288
        %v566 = vunpack.c.h.b16 %v288
        %v567 = vunpack.c.l.b16 %v289
        %v568 = vunpack.c.h.b16 %v289
        %v569 = vunpack.c.l.b16 %v290
        %v570 = vunpack.c.h.b16 %v290
        %v571 = vunpack.c.l.b16 %v291
        %v572 = vunpack.c.h.b16 %v291
        %v573 = vunpack.c.l.b16 %v292
        %v574 = vunpack.c.h.b16 %v292
        %v575 = vunpack.c.l.b16 %v293
        %v576 = vunpack.c.h.b16 %v293
        %v577 = vunpack.c.l.b16 %v294
        %v578 = vunpack.c.h.b16 %v294
        %v579 = vunpack.c.l.b16 %v295
        %v580 = vunpack.c.h.b16 %v295
        %v581 = vunpack.c.l.b16 %v296
        %v582 = vunpack.c.h.b16 %v296
        %v583 = vunpack.c.l.b16 %v297
        %v584 = vunpack.c.h.b16 %v297
        %v585 = vunpack.c.l.b16 %v298
        %v586 = vunpack.c.h.b16 %v298
        %v587 = vunpack.c.l.b16 %v299
        %v588 = vunpack.c.h.b16 %v299
        %v589 = vunpack.c.l.b16 %v300
        %v590 = vunpack.c.h.b16 %v300
        %v591 = vunpack.c.l.b16 %v301
        %v592 = vunpack.c.h.b16 %v301
        %v593 = vunpack.c.l.b16 %v302
        %v594 = vunpack.c.h.b16 %v302
        %v595 = vunpack.c.l.b16 %v303
        %v596 = vunpack.c.h.b16 %v303
        %v597 = vunpack.c.l.b16 %v304
        %v598 = vunpack.c.h.b16 %v304
        %v599 = vunpack.c.l.b16 %v305
        %v600 = vunpack.c.h.b16 %v305
        %v601 = vunpack.c.l.b16 %v306
        %v602 = vunpack.c.h.b16 %v306
        %v603 = vunpack.c.l.b16 %v307
        %v604 = vunpack.c.h.b16 %v307
        %v605 = vunpack.c.l.b16 %v308
        %v606 = vunpack.c.h.b16 %v308
        %v607 = vunpack.c.l.b16 %v309
        %v608 = vunpack.c.h.b16 %v309
        %v609 = vunpack.c.l.b16 %v310
        %v610 = vunpack.c.h.b16 %v310
        %v611 = vunpack.c.l.b16 %v311
        %v612 = vunpack.c.h.b16 %v311
        %v613 = vunpack.c.l.b16 %v312
        %v614 = vunpack.c.h.b16 %v312
        %v615 = vunpack.c.l.b16 %v313
        %v616 = vunpack.c.h.b16 %v313
        %v617 = vunpack.c.l.b16 %v314
        %v618 = vunpack.c.h.b16 %v314
        %v619 = vunpack.c.l.b16 %v315
        %v620 = vunpack.c.h.b16 %v315
        %v621 = vunpack.c.l.b16 %v316
        %v622 = vunpack.c.h.b16 %v316
        %v623 = vunpack.c.l.b16 %v317
        %v624 = vunpack.c.h.b16 %v317
        %v625 = vunpack.c.l.b16 %v318
        %v626 = vunpack.c.h.b16 %v318
        %v627 = vunpack.c.l.b16 %v319
        %v628 = vunpack.c.h.b16 %v319
        %v629 = vunpack.c.l.b16 %v320
        %v630 = vunpack.c.h.b16 %v320
        %v631 = vunpack.c.l.b16 %v321
        %v632 = vunpack.c.h.b16 %v321
        %v633 = vunpack.c.l.b16 %v322
        %v634 = vunpack.c.h.b16 %v322
        %v635 = vunpack.c.l.b16 %v323
        %v636 = vunpack.c.h.b16 %v323
        %v637 = vunpack.c.l.b16 %v324
        %v638 = vunpack.c.h.b16 %v324
        %v639 = vunpack.c.l.b16 %v325
        %v640 = vunpack.c.h.b16 %v325
        %v641 = vunpack.c.l.b16 %v326
        %v642 = vunpack.c.h.b16 %v326
        %v643 = vunpack.c.l.b16 %v327
        %v644 = vunpack.c.h.b16 %v327
        %v645 = vunpack.c.l.b16 %v328
        %v646 = vunpack.c.h.b16 %v328
        %v647 = vunpack.c.l.b16 %v329
        %v648 = vunpack.c.h.b16 %v329
        %v649 = vunpack.c.l.b16 %v330
        %v650 = vunpack.c.h.b16 %v330
        %v651 = vunpack.c.l.b16 %v331
        %v652 = vunpack.c.h.b16 %v331
        %v653 = vunpack.c.l.b16 %v332
        %v654 = vunpack.c.h.b16 %v332
        %v655 = vunpack.c.l.b16 %v333
        %v656 = vunpack.c.h.b16 %v333
        %v657 = vunpack.c.l.b16 %v334
        %v658 = vunpack.c.h.b16 %v334
        %v659 = vunpack.c.l.b16 %v335
        %v660 = vunpack.c.h.b16 %v335
        %v661 = vunpack.c.l.b16 %v336
        %v662 = vunpack.c.h.b16 %v336
        %v663 = vunpack.c.l.b16 %v337
        %v664 = vunpack.c.h.b16 %v337
        %v665 = vunpack.c.l.b16 %v338
        %v666 = vunpack.c.h.b16 %v338
        %v667 = vunpack.c.l.b16 %v339
        %v668 = vunpack.c.h.b16 %v339
        %v669 = vunpack.c.l.b16 %v340
        %v670 = vunpack.c.h.b16 %v340
        %v671 = vunpack.c.l.b16 %v341
        %v672 = vunpack.c.h.b16 %v341
        %v673 = vunpack.c.l.b16 %v342
        %v674 = vunpack.c.h.b16 %v342
        %v675 = vunpack.c.l.b16 %v343
        %v676 = vunpack.c.h.b16 %v343
        %v677 = vunpack.c.l.b16 %v344
        %v678 = vunpack.c.h.b16 %v344
        %v679 = vunpack.c.l.b16 %v345
        %v680 = vunpack.c.h.b16 %v345
        %v681 = vunpack.c.l.b16 %v346
        %v682 = vunpack.c.h.b16 %v346
        %v683 = vunpack.c.l.b16 %v347
        %v684 = vunpack.c.h.b16 %v347
        %v685 = vunpack.c.l.b16 %v348
        %v686 = vunpack.c.h.b16 %v348
        %v687 = vunpack.c.l.b16 %v349
        %v688 = vunpack.c.h.b16 %v349
        %v689 = vunpack.c.l.b16 %v350
        %v690 = vunpack.c.h.b16 %v350
        %v691 = vunpack.c.l.b16 %v351
        %v692 = vunpack.c.h.b16 %v351
        %v693 = vunpack.c.l.b16 %v352
        %v694 = vunpack.c.h.b16 %v352
        %v695 = vunpack.c.l.b16 %v353
        %v696 = vunpack.c.h.b16 %v353
        %v697 = vunpack.c.l.b16 %v354
        %v698 = vunpack.c.h.b16 %v354
        %v699 = vunpack.c.l.b16 %v355
        %v700 = vunpack.c.h.b16 %v355
        %v701 = vunpack.c.l.b16 %v356
        %v702 = vunpack.c.h.b16 %v356
        %v703 = vunpack.c.l.b16 %v357
        %v704 = vunpack.c.h.b16 %v357
        %v705 = vunpack.c.l.b16 %v358
        %v706 = vunpack.c.h.b16 %v358
        %v707 = vunpack.c.l.b16 %v359
        %v708 = vunpack.c.h.b16 %v359
        %v709 = vunpack.c.l.b16 %v360
        %v710 = vunpack.c.h.b16 %v360
        %v711 = vunpack.c.l.b16 %v361
        %v712 = vunpack.c.h.b16 %v361
        %v713 = vunpack.c.l.b16 %v362
        %v714 = vunpack.c.h.b16 %v362
        %v715 = vunpack.c.l.b16 %v363
        %v716 = vunpack.c.h.b16 %v363
        %v717 = vunpack.c.l.b16 %v364
        %v718 = vunpack.c.h.b16 %v364
        %v719 = vunpack.c.l.b16 %v365
        %v720 = vunpack.c.h.b16 %v365
        %v721 = vunpack.c.l.b16 %v366
        %v722 = vunpack.c.h.b16 %v366
        %v723 = vunpack.c.l.b16 %v367
        %v724 = vunpack.c.h.b16 %v367
        %v725 = vunpack.c.l.b16 %v368
        %v726 = vunpack.c.h.b16 %v368
        %v727 = vunpack.c.l.b16 %v369
        %v728 = vunpack.c.h.b16 %v369
        %v729 = vunpack.c.l.b16 %v370
        %v730 = vunpack.c.h.b16 %v370
        %v731 = vunpack.c.l.b16 %v371
        %v732 = vunpack.c.h.b16 %v371
        %v733 = vunpack.c.l.b16 %v372
        %v734 = vunpack.c.h.b16 %v372
        %v735 = vunpack.c.l.b16 %v373
        %v736 = vunpack.c.h.b16 %v373
        %v737 = vunpack.c.l.b16 %v374
        %v738 = vunpack.c.h.b16 %v374
        %v739 = vunpack.c.l.b16 %v375
        %v740 = vunpack.c.h.b16 %v375
        %v741 = vunpack.c.l.b16 %v376
        %v742 = vunpack.c.h.b16 %v376
        %v743 = vunpack.c.l.b16 %v377
        %v744 = vunpack.c.h.b16 %v377
        %v745 = vunpack.c.l.b16 %v378
        %v746 = vunpack.c.h.b16 %v378
        %v747 = vunpack.c.l.b16 %v379
        %v748 = vunpack.c.h.b16 %v379
        %v749 = vunpack.c.l.b16 %v380
        %v750 = vunpack.c.h.b16 %v380
        %v751 = vunpack.c.l.b16 %v381
        %v752 = vunpack.c.h.b16 %v381
        %v753 = vunpack.c.l.b16 %v382
        %v754 = vunpack.c.h.b16 %v382
        %v755 = vunpack.c.l.b16 %v383
        %v756 = vunpack.c.h.b16 %v383
        %v757 = vunpack.c.l.b16 %v384
        %v758 = vunpack.c.h.b16 %v384
        %v759 = vunpack.c.l.b16 %v385
        %v760 = vunpack.c.h.b16 %v385
        %v761 = vunpack.c.l.b16 %v386
        %v762 = vunpack.c.h.b16 %v386
        %v763 = vunpack.c.l.b16 %v387
        %v764 = vunpack.c.h.b16 %v387
        %v765 = vunpack.c.l.b16 %v388
        %v766 = vunpack.c.h.b16 %v388
        %v767 = vunpack.c.l.b16 %v389
        %v768 = vunpack.c.h.b16 %v389
        %v769 = vunpack.c.l.b16 %v390
        %v770 = vunpack.c.h.b16 %v390
        %v771 = vunpack.c.l.b16 %v391
        %v772 = vunpack.c.h.b16 %v391
        %v773 = vunpack.c.l.b16 %v392
        %v774 = vunpack.c.h.b16 %v392
        %v775 = vunpack.c.l.b16 %v393
        %v776 = vunpack.c.h.b16 %v393
        %v777 = vunpack.c.l.b16 %v394
        %v778 = vunpack.c.h.b16 %v394
        %v779 = vunpack.c.l.b16 %v395
        %v780 = vunpack.c.h.b16 %v395
        %v781 = vunpack.c.l.b16 %v396
        %v782 = vunpack.c.h.b16 %v396
        %v783 = vunpack.c.l.b16 %v397
        %v784 = vunpack.c.h.b16 %v397
        %v785 = vunpack.c.l.b16 %v398
        %v786 = vunpack.c.h.b16 %v398
        %v787 = vunpack.c.l.b16 %v399
        %v788 = vunpack.c.h.b16 %v399
        %v789 = vunpack.c.l.b16 %v400
        %v790 = vunpack.c.h.b16 %v400
        %v791 = vunpack.c.l.b16 %v401
        %v792 = vunpack.c.h.b16 %v401
        %v793 = vunpack.c.l.b16 %v402
        %v794 = vunpack.c.h.b16 %v402
        %v795 = vunpack.c.l.b16 %v403
        %v796 = vunpack.c.h.b16 %v403
        %v797 = vunpack.c.l.b16 %v404
        %v798 = vunpack.c.h.b16 %v404
        %v799 = vpack.c.b16 %v547, %v543
        %v800 = vpack.c.b16 %v548, %v544
        %v801 = vpack.c.b16 %v549, %v545
        %v802 = vpack.c.b16 %v550, %v546
        %v803 = vpack.c.b16 %v555, %v551
        %v804 = vpack.c.b16 %v556, %v552
        %v805 = vpack.c.b16 %v557, %v553
        %v806 = vpack.c.b16 %v558, %v554
        %v807 = vpack.c.b16 %v563, %v559
        %v808 = vpack.c.b16 %v564, %v560
        %v809 = vpack.c.b16 %v565, %v561
        %v810 = vpack.c.b16 %v566, %v562
        %v811 = vpack.c.b16 %v571, %v567
        %v812 = vpack.c.b16 %v572, %v568
        %v813 = vpack.c.b16 %v573, %v569
        %v814 = vpack.c.b16 %v574, %v570
        %v815 = vpack.c.b16 %v579, %v575
        %v816 = vpack.c.b16 %v580, %v576
        %v817 = vpack.c.b16 %v581, %v577
        %v818 = vpack.c.b16 %v582, %v578
        %v819 = vpack.c.b16 %v587, %v583
        %v820 = vpack.c.b16 %v588, %v584
        %v821 = vpack.c.b16 %v589, %v585
        %v822 = vpack.c.b16 %v590, %v586
        %v823 = vpack.c.b16 %v595, %v591
        %v824 = vpack.c.b16 %v596, %v592
        %v825 = vpack.c.b16 %v597, %v593
        %v826 = vpack.c.b16 %v598, %v594
        %v827 = vpack.c.b16 %v603, %v599
        %v828 = vpack.c.b16 %v604, %v600
        %v829 = vpack.c.b16 %v605, %v601
        %v830 = vpack.c.b16 %v606, %v602
        %v831 = vpack.c.b16 %v611, %v607
        %v832 = vpack.c.b16 %v612, %v608
        %v833 = vpack.c.b16 %v613, %v609
        %v834 = vpack.c.b16 %v614, %v610
        %v835 = vpack.c.b16 %v619, %v615
        %v836 = vpack.c.b16 %v620, %v616
        %v837 = vpack.c.b16 %v621, %v617
        %v838 = vpack.c.b16 %v622, %v618
        %v839 = vpack.c.b16 %v627, %v623
        %v840 = vpack.c.b16 %v628, %v624
        %v841 = vpack.c.b16 %v629, %v625
        %v842 = vpack.c.b16 %v630, %v626
        %v843 = vpack.c.b16 %v635, %v631
        %v844 = vpack.c.b16 %v636, %v632
        %v845 = vpack.c.b16 %v637, %v633
        %v846 = vpack.c.b16 %v638, %v634
        %v847 = vpack.c.b16 %v643, %v639
        %v848 = vpack.c.b16 %v644, %v640
        %v849 = vpack.c.b16 %v645, %v641
        %v850 = vpack.c.b16 %v646, %v642
        %v851 = vpack.c.b16 %v651, %v647
        %v852 = vpack.c.b16 %v652, %v648
        %v853 = vpack.c.b16 %v653, %v649
        %v854 = vpack.c.b16 %v654, %v650
        %v855 = vpack.c.b16 %v659, %v655
        %v856 = vpack.c.b16 %v660, %v656
        %v857 = vpack.c.b16 %v661, %v657
        %v858 = vpack.c.b16 %v662, %v658
        %v859 = vpack.c.b16 %v667, %v663
        %v860 = vpack.c.b16 %v668, %v664
        %v861 = vpack.c.b16 %v669, %v665
        %v862 = vpack.c.b16 %v670, %v666
        %v863 = vpack.c.b16 %v675, %v671
        %v864 = vpack.c.b16 %v676, %v672
        %v865 = vpack.c.b16 %v677, %v673
        %v866 = vpack.c.b16 %v678, %v674
        %v867 = vpack.c.b16 %v683, %v679
        %v868 = vpack.c.b16 %v684, %v680
        %v869 = vpack.c.b16 %v685, %v681
        %v870 = vpack.c.b16 %v686, %v682
        %v871 = vpack.c.b16 %v691, %v687
        %v872 = vpack.c.b16 %v692, %v688
        %v873 = vpack.c.b16 %v693, %v689
        %v874 = vpack.c.b16 %v694, %v690
        %v875 = vpack.c.b16 %v699, %v695
        %v876 = vpack.c.b16 %v700, %v696
        %v877 = vpack.c.b16 %v701, %v697
        %v878 = vpack.c.b16 %v702, %v698
        %v879 = vpack.c.b16 %v707, %v703
        %v880 = vpack.c.b16 %v708, %v704
        %v881 = vpack.c.b16 %v709, %v705
        %v882 = vpack.c.b16 %v710, %v706
        %v883 = vpack.c.b16 %v715, %v711
        %v884 = vpack.c.b16 %v716, %v712
        %v885 = vpack.c.b16 %v717, %v713
        %v886 = vpack.c.b16 %v718, %v714
        %v887 = vpack.c.b16 %v723, %v719
        %v888 = vpack.c.b16 %v724, %v720
        %v889 = vpack.c.b16 %v725, %v721
        %v890 = vpack.c.b16 %v726, %v722
        %v891 = vpack.c.b16 %v731, %v727
        %v892 = vpack.c.b16 %v732, %v728
        %v893 = vpack.c.b16 %v733, %v729
        %v894 = vpack.c.b16 %v734, %v730
        %v895 = vpack.c.b16 %v739, %v735
        %v896 = vpack.c.b16 %v740, %v736
        %v897 = vpack.c.b16 %v741, %v737
        %v898 = vpack.c.b16 %v742, %v738
        %v899 = vpack.c.b16 %v747, %v743
        %v900 = vpack.c.b16 %v748, %v744
        %v901 = vpack.c.b16 %v749, %v745
        %v902 = vpack.c.b16 %v750, %v746
        %v903 = vpack.c.b16 %v755, %v751
        %v904 = vpack.c.b16 %v756, %v752
        %v905 = vpack.c.b16 %v757, %v753
        %v906 = vpack.c.b16 %v758, %v754
        %v907 = vpack.c.b16 %v763, %v759
        %v908 = vpack.c.b16 %v764, %v760
        %v909 = vpack.c.b16 %v765, %v761
        %v910 = vpack.c.b16 %v766, %v762
        %v911 = vpack.c.b16 %v771, %v767
        %v912 = vpack.c.b16 %v772, %v768
        %v913 = vpack.c.b16 %v773, %v769
        %v914 = vpack.c.b16 %v774, %v770
        %v915 = vpack.c.b16 %v779, %v775
        %v916 = vpack.c.b16 %v780, %v776
        %v917 = vpack.c.b16 %v781, %v777
        %v918 = vpack.c.b16 %v782, %v778
        %v919 = vpack.c.b16 %v787, %v783
        %v920 = vpack.c.b16 %v788, %v784
        %v921 = vpack.c.b16 %v789, %v785
        %v922 = vpack.c.b16 %v790, %v786
        %v923 = vpack.c.b16 %v795, %v791
        %v924 = vpack.c.b16 %v796, %v792
        %v925 = vpack.c.b16 %v797, %v793
        %v926 = vpack.c.b16 %v798, %v794
        %1055 = vmatpush.bf16.msra.mxu0 %v827
        %1056 = vmatpush.bf16.msra.mxu0 %v823
        %1057 = vmatpush.bf16.msra.mxu0 %v819
        %1058 = vmatpush.bf16.msra.mxu0 %v815
        %1059 = vmatpush.bf16.msra.mxu0 %v811
        %1060 = vmatpush.bf16.msra.mxu0 %v807
        %1061 = vmatpush.bf16.msra.mxu0 %v803
        %1062 = vmatpush.bf16.msra.mxu0 %v799
        %1063 = vmatmul.bf16.gmra.mxu0 %v407
        %v1064 = vpop.f32.mrf.mxu0
        %v1065 = vadd.f32 0.0, %v1064
        %v1066 = vpop.f32.mrf.mxu0
        %1067 = vdwg.mxu0
        %1068 = vmatpush.bf16.msra.mxu0 %v859
        %1069 = vmatpush.bf16.msra.mxu0 %v855
        %1070 = vmatpush.bf16.msra.mxu0 %v851
        %1071 = vmatpush.bf16.msra.mxu0 %v847
        %1072 = vmatpush.bf16.msra.mxu0 %v843
        %1073 = vmatpush.bf16.msra.mxu0 %v839
        %1074 = vmatpush.bf16.msra.mxu0 %v835
        %1075 = vmatpush.bf16.msra.mxu0 %v831
        %1076 = vmatmul.bf16.gmra.mxu0 %v408
        %v1077 = vpop.f32.mrf.mxu0
        %v1078 = vadd.f32 %v1065, %v1077
        %v1079 = vpop.f32.mrf.mxu0
        %1080 = vdwg.mxu0
        %1081 = vmatpush.bf16.msra.mxu0 %v891
        %1082 = vmatpush.bf16.msra.mxu0 %v887
        %1083 = vmatpush.bf16.msra.mxu0 %v883
        %1084 = vmatpush.bf16.msra.mxu0 %v879
        %1085 = vmatpush.bf16.msra.mxu0 %v875
        %1086 = vmatpush.bf16.msra.mxu0 %v871
        %1087 = vmatpush.bf16.msra.mxu0 %v867
        %1088 = vmatpush.bf16.msra.mxu0 %v863
        %1089 = vmatmul.bf16.gmra.mxu0 %v409
        %v1090 = vpop.f32.mrf.mxu0
        %v1091 = vadd.f32 %v1078, %v1090
        %v1092 = vpop.f32.mrf.mxu0
        %1093 = vdwg.mxu0
        %1094 = vmatpush.bf16.msra.mxu0 %v923
        %1095 = vmatpush.bf16.msra.mxu0 %v919
        %1096 = vmatpush.bf16.msra.mxu0 %v915
        %1097 = vmatpush.bf16.msra.mxu0 %v911
        %1098 = vmatpush.bf16.msra.mxu0 %v907
        %1099 = vmatpush.bf16.msra.mxu0 %v903
        %1100 = vmatpush.bf16.msra.mxu0 %v899
        %1101 = vmatpush.bf16.msra.mxu0 %v895
        %1102 = vmatmul.bf16.gmra.mxu0 %v410
        %v1103 = vpop.f32.mrf.mxu0
        %v1104 = vadd.f32 %v1091, %v1103
        %v1105 = vpop.f32.mrf.mxu0
        %1106 = vdwg.mxu0
        %1107 = vmatpush.bf16.msra.mxu0 %v828
        %1108 = vmatpush.bf16.msra.mxu0 %v824
        %1109 = vmatpush.bf16.msra.mxu0 %v820
        %1110 = vmatpush.bf16.msra.mxu0 %v816
        %1111 = vmatpush.bf16.msra.mxu0 %v812
        %1112 = vmatpush.bf16.msra.mxu0 %v808
        %1113 = vmatpush.bf16.msra.mxu0 %v804
        %1114 = vmatpush.bf16.msra.mxu0 %v800
        %1115 = vmatmul.bf16.gmra.mxu0 %v407
        %v1116 = vpop.f32.mrf.mxu0
        %v1117 = vadd.f32 0.0, %v1116
        %v1118 = vpop.f32.mrf.mxu0
        %1119 = vdwg.mxu0
        %1120 = vmatpush.bf16.msra.mxu0 %v860
        %1121 = vmatpush.bf16.msra.mxu0 %v856
        %1122 = vmatpush.bf16.msra.mxu0 %v852
        %1123 = vmatpush.bf16.msra.mxu0 %v848
        %1124 = vmatpush.bf16.msra.mxu0 %v844
        %1125 = vmatpush.bf16.msra.mxu0 %v840
        %1126 = vmatpush.bf16.msra.mxu0 %v836
        %1127 = vmatpush.bf16.msra.mxu0 %v832
        %1128 = vmatmul.bf16.gmra.mxu0 %v408
        %v1129 = vpop.f32.mrf.mxu0
        %v1130 = vadd.f32 %v1117, %v1129
        %v1131 = vpop.f32.mrf.mxu0
        %1132 = vdwg.mxu0
        %1133 = vmatpush.bf16.msra.mxu0 %v892
        %1134 = vmatpush.bf16.msra.mxu0 %v888
        %1135 = vmatpush.bf16.msra.mxu0 %v884
        %1136 = vmatpush.bf16.msra.mxu0 %v880
        %1137 = vmatpush.bf16.msra.mxu0 %v876
        %1138 = vmatpush.bf16.msra.mxu0 %v872
        %1139 = vmatpush.bf16.msra.mxu0 %v868
        %1140 = vmatpush.bf16.msra.mxu0 %v864
        %1141 = vmatmul.bf16.gmra.mxu0 %v409
        %v1142 = vpop.f32.mrf.mxu0
        %v1143 = vadd.f32 %v1130, %v1142
        %v1144 = vpop.f32.mrf.mxu0
        %1145 = vdwg.mxu0
        %1146 = vmatpush.bf16.msra.mxu0 %v924
        %1147 = vmatpush.bf16.msra.mxu0 %v920
        %1148 = vmatpush.bf16.msra.mxu0 %v916
        %1149 = vmatpush.bf16.msra.mxu0 %v912
        %1150 = vmatpush.bf16.msra.mxu0 %v908
        %1151 = vmatpush.bf16.msra.mxu0 %v904
        %1152 = vmatpush.bf16.msra.mxu0 %v900
        %1153 = vmatpush.bf16.msra.mxu0 %v896
        %1154 = vmatmul.bf16.gmra.mxu0 %v410
        %v1155 = vpop.f32.mrf.mxu0
        %v1156 = vadd.f32 %v1143, %v1155
        %v1157 = vpop.f32.mrf.mxu0
        %1158 = vdwg.mxu0
        %1159 = vmatpush.bf16.msra.mxu0 %v829
        %1160 = vmatpush.bf16.msra.mxu0 %v825
        %1161 = vmatpush.bf16.msra.mxu0 %v821
        %1162 = vmatpush.bf16.msra.mxu0 %v817
        %1163 = vmatpush.bf16.msra.mxu0 %v813
        %1164 = vmatpush.bf16.msra.mxu0 %v809
        %1165 = vmatpush.bf16.msra.mxu0 %v805
        %1166 = vmatpush.bf16.msra.mxu0 %v801
        %1167 = vmatmul.bf16.gmra.mxu0 %v407
        %v1168 = vpop.f32.mrf.mxu0
        %v1169 = vadd.f32 0.0, %v1168
        %v1170 = vpop.f32.mrf.mxu0
        %1171 = vdwg.mxu0
        %1172 = vmatpush.bf16.msra.mxu0 %v861
        %1173 = vmatpush.bf16.msra.mxu0 %v857
        %1174 = vmatpush.bf16.msra.mxu0 %v853
        %1175 = vmatpush.bf16.msra.mxu0 %v849
        %1176 = vmatpush.bf16.msra.mxu0 %v845
        %1177 = vmatpush.bf16.msra.mxu0 %v841
        %1178 = vmatpush.bf16.msra.mxu0 %v837
        %1179 = vmatpush.bf16.msra.mxu0 %v833
        %1180 = vmatmul.bf16.gmra.mxu0 %v408
        %v1181 = vpop.f32.mrf.mxu0
        %v1182 = vadd.f32 %v1169, %v1181
        %v1183 = vpop.f32.mrf.mxu0
        %1184 = vdwg.mxu0
        %1185 = vmatpush.bf16.msra.mxu0 %v893
        %1186 = vmatpush.bf16.msra.mxu0 %v889
        %1187 = vmatpush.bf16.msra.mxu0 %v885
        %1188 = vmatpush.bf16.msra.mxu0 %v881
        %1189 = vmatpush.bf16.msra.mxu0 %v877
        %1190 = vmatpush.bf16.msra.mxu0 %v873
        %1191 = vmatpush.bf16.msra.mxu0 %v869
        %1192 = vmatpush.bf16.msra.mxu0 %v865
        %1193 = vmatmul.bf16.gmra.mxu0 %v409
        %v1194 = vpop.f32.mrf.mxu0
        %v1195 = vadd.f32 %v1182, %v1194
        %v1196 = vpop.f32.mrf.mxu0
        %1197 = vdwg.mxu0
        %1198 = vmatpush.bf16.msra.mxu0 %v925
        %1199 = vmatpush.bf16.msra.mxu0 %v921
        %1200 = vmatpush.bf16.msra.mxu0 %v917
        %1201 = vmatpush.bf16.msra.mxu0 %v913
        %1202 = vmatpush.bf16.msra.mxu0 %v909
        %1203 = vmatpush.bf16.msra.mxu0 %v905
        %1204 = vmatpush.bf16.msra.mxu0 %v901
        %1205 = vmatpush.bf16.msra.mxu0 %v897
        %1206 = vmatmul.bf16.gmra.mxu0 %v410
        %v1207 = vpop.f32.mrf.mxu0
        %v1208 = vadd.f32 %v1195, %v1207
        %v1209 = vpop.f32.mrf.mxu0
        %1210 = vdwg.mxu0
        %1211 = vmatpush.bf16.msra.mxu0 %v830
        %1212 = vmatpush.bf16.msra.mxu0 %v826
        %1213 = vmatpush.bf16.msra.mxu0 %v822
        %1214 = vmatpush.bf16.msra.mxu0 %v818
        %1215 = vmatpush.bf16.msra.mxu0 %v814
        %1216 = vmatpush.bf16.msra.mxu0 %v810
        %1217 = vmatpush.bf16.msra.mxu0 %v806
        %1218 = vmatpush.bf16.msra.mxu0 %v802
        %1219 = vmatmul.bf16.gmra.mxu0 %v407
        %v1220 = vpop.f32.mrf.mxu0
        %v1221 = vadd.f32 0.0, %v1220
        %v1222 = vpop.f32.mrf.mxu0
        %1223 = vdwg.mxu0
        %1224 = vmatpush.bf16.msra.mxu0 %v862
        %1225 = vmatpush.bf16.msra.mxu0 %v858
        %1226 = vmatpush.bf16.msra.mxu0 %v854
        %1227 = vmatpush.bf16.msra.mxu0 %v850
        %1228 = vmatpush.bf16.msra.mxu0 %v846
        %1229 = vmatpush.bf16.msra.mxu0 %v842
        %1230 = vmatpush.bf16.msra.mxu0 %v838
        %1231 = vmatpush.bf16.msra.mxu0 %v834
        %1232 = vmatmul.bf16.gmra.mxu0 %v408
        %v1233 = vpop.f32.mrf.mxu0
        %v1234 = vadd.f32 %v1221, %v1233
        %v1235 = vpop.f32.mrf.mxu0
        %1236 = vdwg.mxu0
        %1237 = vmatpush.bf16.msra.mxu0 %v894
        %1238 = vmatpush.bf16.msra.mxu0 %v890
        %1239 = vmatpush.bf16.msra.mxu0 %v886
        %1240 = vmatpush.bf16.msra.mxu0 %v882
        %1241 = vmatpush.bf16.msra.mxu0 %v878
        %1242 = vmatpush.bf16.msra.mxu0 %v874
        %1243 = vmatpush.bf16.msra.mxu0 %v870
        %1244 = vmatpush.bf16.msra.mxu0 %v866
        %1245 = vmatmul.bf16.gmra.mxu0 %v409
        %v1246 = vpop.f32.mrf.mxu0
        %v1247 = vadd.f32 %v1234, %v1246
        %v1248 = vpop.f32.mrf.mxu0
        %1249 = vdwg.mxu0
        %1250 = vmatpush.bf16.msra.mxu0 %v926
        %1251 = vmatpush.bf16.msra.mxu0 %v922
        %1252 = vmatpush.bf16.msra.mxu0 %v918
        %1253 = vmatpush.bf16.msra.mxu0 %v914
        %1254 = vmatpush.bf16.msra.mxu0 %v910
        %1255 = vmatpush.bf16.msra.mxu0 %v906
        %1256 = vmatpush.bf16.msra.mxu0 %v902
        %1257 = vmatpush.bf16.msra.mxu0 %v898
        %1258 = vmatmul.bf16.gmra.mxu0 %v410
        %v1259 = vpop.f32.mrf.mxu0
        %v1260 = vadd.f32 %v1247, %v1259
        %v1261 = vpop.f32.mrf.mxu0
        %1262 = vdwg.mxu0
        %v1267 = vrot.slane %v1156, 6
        %v1268 = vrot.slane %v1208, 4
        %v1269 = vrot.slane %v1260, 2
        %vm1270 = vcmask 1041408
        %v1271 = vsel %vm1270, %v1104, %v1267
        %vm1272 = vcmask 1045508
        %v1273 = vsel %vm1272, %v1268, %v1269
        %vm1274 = vcmask 1043456
        %v1275 = vsel %vm1274, %v1271, %v1273
        %v1277 = vadd.f32 %v275, %v1275
        %1278 = vst [vmem:[#allocation2] sm:$0xff] %v1277
        %p1279 = scmp.eq.s32.totalorder %s25, 3
        // Predicated region
        $region45: #{conv_vae_forward.10} parent=31 // pred_check
          %p1280 = pneg %p1279
        $region46: #{conv_vae_forward.10} parent=31 // pred_check_branch
          %1282 = sbr.rel (%p1280) target = $region48
        $region47: #{conv_vae_forward.10} parent=31 // pred_region
          %v1283 = vld [vmem:[#allocation2] sm:$0xff]
          %v1284 = vld [vmem:[%s225] sm:$0xf]
          %v1286 = vperm.slane %v1284, 0
          %v1287 = vperm.slane %v1284, 1
          %v1288 = vperm.slane %v1284, 2
          %v1289 = vperm.slane %v1284, 3
          %v1290 = vrot.slane %v1287, 6
          %v1291 = vrot.slane %v1288, 4
          %v1292 = vrot.slane %v1289, 2
          %v1293 = vsel %vm1270, %v1286, %v1290
          %v1294 = vsel %vm1272, %v1291, %v1292
          %v1295 = vsel %vm1274, %v1293, %v1294
          %v1297 = vadd.f32 %v1283, %v1295
          %1299 = vst [vmem:[#allocation1] ss:$4 sm:$0xff] %v1297
          %v1300 = vld.sshfl [vmem:[#allocation1] sm:$0xff pattern:$0x73625140]
          %v1301 = vld.sshfl [vmem:[#allocation1 + $0x8] sm:$0xff pattern:$0x73625140]
          %v1302 = vld.sshfl [vmem:[#allocation1 + $0x10] sm:$0xff pattern:$0x73625140]
          %v1303 = vld.sshfl [vmem:[#allocation1 + $0x18] sm:$0xff pattern:$0x73625140]
          %v1308 = vsel %vm1270, %v1300, 0.0
          %v1309 = vrot.slane %v1308, 4
          %v1310 = vadd.f32 %v1308, %v1309
          %v1311 = vrot.slane %v1310, 2
          %v1312 = vadd.f32 %v1310, %v1311
          %v1313 = vrot.slane %v1312, 1
          %v1314 = vadd.f32 %v1312, %v1313
          %v1315 = vsel %vm1270, %v1301, 0.0
          %v1316 = vrot.slane %v1315, 4
          %v1317 = vadd.f32 %v1315, %v1316
          %v1318 = vrot.slane %v1317, 2
          %v1319 = vadd.f32 %v1317, %v1318
          %v1320 = vrot.slane %v1319, 1
          %v1321 = vadd.f32 %v1319, %v1320
          %v1322 = vsel %vm1270, %v1302, 0.0
          %v1323 = vrot.slane %v1322, 4
          %v1324 = vadd.f32 %v1322, %v1323
          %v1325 = vrot.slane %v1324, 2
          %v1326 = vadd.f32 %v1324, %v1325
          %v1327 = vrot.slane %v1326, 1
          %v1328 = vadd.f32 %v1326, %v1327
          %v1329 = vsel %vm1270, %v1303, 0.0
          %v1330 = vrot.slane %v1329, 4
          %v1331 = vadd.f32 %v1329, %v1330
          %v1332 = vrot.slane %v1331, 2
          %v1333 = vadd.f32 %v1331, %v1332
          %v1334 = vrot.slane %v1333, 1
          %v1335 = vadd.f32 %v1333, %v1334
          %v1336 = vrcp.pop 2.0
          %v1337 = vmul.f32 2.0, %v1336
          %v1338 = vsub.f32 1.0, %v1337
          %v1339 = vmul.f32 %v1336, %v1338
          %v1340 = vadd.f32 %v1336, %v1339
          %vm1341 = vweird.f32 %v1336
          %v1342 = vsel %vm1341, %v1336, %v1340
          %v1343 = vmul.f32 %v1314, %v1342
          %v1344 = vmul.f32 %v1321, %v1342
          %v1345 = vmul.f32 %v1328, %v1342
          %v1346 = vmul.f32 %v1335, %v1342
          %v1351 = vrot.slane %v1344, 6
          %v1352 = vrot.slane %v1345, 4
          %v1353 = vrot.slane %v1346, 2
          %v1354 = vsel %vm1270, %v1343, %v1351
          %v1355 = vsel %vm1272, %v1352, %v1353
          %v1356 = vsel %vm1274, %v1354, %v1355
          %v1358 = vsub.f32 %v1297, %v1356
          %v1359 = vmul.f32 %v1358, %v1358
          %1361 = vst [vmem:[#allocation1] ss:$4 sm:$0xff] %v1359
          %v1362 = vld.sshfl [vmem:[#allocation1] sm:$0xff pattern:$0x73625140]
          %v1363 = vld.sshfl [vmem:[#allocation1 + $0x8] sm:$0xff pattern:$0x73625140]
          %v1364 = vld.sshfl [vmem:[#allocation1 + $0x10] sm:$0xff pattern:$0x73625140]
          %v1365 = vld.sshfl [vmem:[#allocation1 + $0x18] sm:$0xff pattern:$0x73625140]
          %v1370 = vsel %vm1270, %v1362, 0.0
          %v1371 = vrot.slane %v1370, 4
          %v1372 = vadd.f32 %v1370, %v1371
          %v1373 = vrot.slane %v1372, 2
          %v1374 = vadd.f32 %v1372, %v1373
          %v1375 = vrot.slane %v1374, 1
          %v1376 = vadd.f32 %v1374, %v1375
          %v1377 = vsel %vm1270, %v1363, 0.0
          %v1378 = vrot.slane %v1377, 4
          %v1379 = vadd.f32 %v1377, %v1378
          %v1380 = vrot.slane %v1379, 2
          %v1381 = vadd.f32 %v1379, %v1380
          %v1382 = vrot.slane %v1381, 1
          %v1383 = vadd.f32 %v1381, %v1382
          %v1384 = vsel %vm1270, %v1364, 0.0
          %v1385 = vrot.slane %v1384, 4
          %v1386 = vadd.f32 %v1384, %v1385
          %v1387 = vrot.slane %v1386, 2
          %v1388 = vadd.f32 %v1386, %v1387
          %v1389 = vrot.slane %v1388, 1
          %v1390 = vadd.f32 %v1388, %v1389
          %v1391 = vsel %vm1270, %v1365, 0.0
          %v1392 = vrot.slane %v1391, 4
          %v1393 = vadd.f32 %v1391, %v1392
          %v1394 = vrot.slane %v1393, 2
          %v1395 = vadd.f32 %v1393, %v1394
          %v1396 = vrot.slane %v1395, 1
          %v1397 = vadd.f32 %v1395, %v1396
          %v1398 = vmul.f32 %v1376, %v1342
          %v1399 = vmul.f32 %v1383, %v1342
          %v1400 = vmul.f32 %v1390, %v1342
          %v1401 = vmul.f32 %v1397, %v1342
          %v1402 = vadd.f32 %v1398, 1e-05
          %v1403 = vadd.f32 %v1399, 1e-05
          %v1404 = vadd.f32 %v1400, 1e-05
          %v1405 = vadd.f32 %v1401, 1e-05
          %v1406 = vrsqrt.pop %v1402
          %v1407 = vmul.f32 %v1406, %v1402
          %v1408 = vmul.f32 %v1407, %v1406
          %v1409 = vmul.f32 0.5, %v1408
          %v1410 = vsub.f32 1.5, %v1409
          %v1411 = vmul.f32 %v1406, %v1410
          %vm1412 = vweird.f32 %v1402
          %vm1413 = vweird.f32 %v1406
          %vm1414 = vmor %vm1412, %vm1413
          %v1415 = vsel %vm1414, %v1406, %v1411
          %v1416 = vrsqrt.pop %v1403
          %v1417 = vmul.f32 %v1416, %v1403
          %v1418 = vmul.f32 %v1417, %v1416
          %v1419 = vmul.f32 0.5, %v1418
          %v1420 = vsub.f32 1.5, %v1419
          %v1421 = vmul.f32 %v1416, %v1420
          %vm1422 = vweird.f32 %v1403
          %vm1423 = vweird.f32 %v1416
          %vm1424 = vmor %vm1422, %vm1423
          %v1425 = vsel %vm1424, %v1416, %v1421
          %v1426 = vrsqrt.pop %v1404
          %v1427 = vmul.f32 %v1426, %v1404
          %v1428 = vmul.f32 %v1427, %v1426
          %v1429 = vmul.f32 0.5, %v1428
          %v1430 = vsub.f32 1.5, %v1429
          %v1431 = vmul.f32 %v1426, %v1430
          %vm1432 = vweird.f32 %v1404
          %vm1433 = vweird.f32 %v1426
          %vm1434 = vmor %vm1432, %vm1433
          %v1435 = vsel %vm1434, %v1426, %v1431
          %v1436 = vrsqrt.pop %v1405
          %v1437 = vmul.f32 %v1436, %v1405
          %v1438 = vmul.f32 %v1437, %v1436
          %v1439 = vmul.f32 0.5, %v1438
          %v1440 = vsub.f32 1.5, %v1439
          %v1441 = vmul.f32 %v1436, %v1440
          %vm1442 = vweird.f32 %v1405
          %vm1443 = vweird.f32 %v1436
          %vm1444 = vmor %vm1442, %vm1443
          %v1445 = vsel %vm1444, %v1436, %v1441
          %v1450 = vrot.slane %v1425, 6
          %v1451 = vrot.slane %v1435, 4
          %v1452 = vrot.slane %v1445, 2
          %v1453 = vsel %vm1270, %v1415, %v1450
          %v1454 = vsel %vm1272, %v1451, %v1452
          %v1455 = vsel %vm1274, %v1453, %v1454
          %v1457 = vmul.f32 %v1358, %v1455
          %v1458 = vmax.f32 %v1457, 0.0
          %1460 = vst [vmem:[#allocation1] ss:$4 sm:$0xff] %v1458
          %v1461 = vld.sshfl [vmem:[#allocation1] sm:$0xff pattern:$0x73625140]
          %v1462 = vld.sshfl [vmem:[#allocation1 + $0x8] sm:$0xff pattern:$0x73625140]
          %v1463 = vld.sshfl [vmem:[#allocation1 + $0x10] sm:$0xff pattern:$0x73625140]
          %v1464 = vld.sshfl [vmem:[#allocation1 + $0x18] sm:$0xff pattern:$0x73625140]
          %v1469 = vpack.c.bf16 %v1462, %v1461
          %v1470 = vpack.c.bf16 %v1464, %v1463
          %v1473 = vrot.slane %v1469, 3
          %v1474 = vrot.slane %v1470, 6
          %v1475 = vrot.slane %v1470, 1
          %vm1476 = vcmask 1040384
          %v1479 = vsel %vm1476, %v1469, %v1473
          %vm1480 = vcmask 1042434
          %v1483 = vsel %vm1480, %v1474, %v1475
          %v1484 = vsel %vm1270, %v1479, %v1483
          %1486 = vst [vmem:[%s268] sm:$0xf] %v1484
        $region48: #{conv_vae_forward.10} parent=31 // pred_fallthru
          _
        %s1487 = smul.u32 4, %s24
        %p1488 = scmp.lt.s32.totalorder %s1487, 7
        %s1489 = scalar_select %p1488, %s1487, 7
        %s1490 = scalar_lea.vmem %s3, %s1489
        // Predicated region
        $region49: #{conv_vae_forward.10} parent=31 // pred_check
          %p1491 = pneg %p130
        $region50: #{conv_vae_forward.10} parent=31 // pred_check_branch
          %1493 = sbr.rel (%p1491) target = $region52
        $region51: #{conv_vae_forward.10} parent=31 // pred_region
          %s1494 = smul.u32 4, %s24
        $region52: #{conv_vae_forward.10} parent=31 // pred_fallthru
          _
      $region32: #{conv_vae_forward.10} parent=5 // pred_fallthru
        _
      %p1495 = scmp.le.s32.totalorder 2, %s15
      // Predicated region
      $region53: #{conv_vae_forward.10} parent=5 // pred_check
        %p1496 = pneg %p1495
      $region54: #{conv_vae_forward.10} parent=5 // pred_check_branch
        %1498 = sbr.rel (%p1496) target = $region56
      $region55: #{conv_vae_forward.10} parent=5 // pred_region
        %s1499 = ssub.s32 %s15, 2
        // Predicated region
        $region57: #{conv_vae_forward.10} parent=55 // pred_check
          %p1500 = pneg %p136
        $region58: #{conv_vae_forward.10} parent=55 // pred_check_branch
          %1502 = sbr.rel (%p1500) target = $region60
        $region59: #{conv_vae_forward.10} parent=55 // pred_region
          %s1503 = smul.u32 4, %s26
          %p1504 = scmp.lt.s32.totalorder %s1503, 7
          %s1505 = scalar_select %p1504, %s1503, 7
          %s1506 = scalar_lea.vmem %s3, %s1505
        $region60: #{conv_vae_forward.10} parent=55 // pred_fallthru
          _
      $region56: #{conv_vae_forward.10} parent=5 // pred_fallthru
        _
    $region6: #{conv_vae_forward.10} parent=1 // loop_footer
      %s19 = sadd.s32 1, %s15
    $region7: #{conv_vae_forward.10} parent=1 // loop_footer_branch
      %14 = sbr.rel target = $region3
    $region8: #{conv_vae_forward.10} parent=1 // loop_exit
      _
    %1507 = vsyncpa [#allocation4], 1
    %s1508 = scalar_lea.sflag [#allocation4], 1
    %1509 = vsyncpa %s1508, 1
    %1510 = vsyncpa [#allocation6], 1
    %s1511 = scalar_lea.sflag [#allocation6], 1
    %1512 = vsyncpa %s1511, 1

// kernel: conv_vae_forward.13
$region0: #{conv_vae_forward.13}
  #allocation0 [shape = 'u32[]', space=smem, size = 0x4, offset = 0x4, fixed_abs, tag = 'smem constant byte address 0x4 - core index']
  #allocation1 [shape = 'u32[72,128]{1,0:T(1,128)}', space=vmem, size = 0x9000, scoped, tag = 'internal scratch']
  #allocation2 [shape = 'f32[2,512]{1,0:T(2,128)}', space=vmem, size = 0x1000, scoped, tag = 'scratch operand']
  %s0 = inlined_call_operand.vmem [shape: bf16[2,1024], index: 0, kind: input, shape index: {}]
  %s1 = inlined_call_operand.hbm [shape: bf16[1024,2048], index: 1, kind: input, shape index: {}]
  %s2 = inlined_call_operand.hbm [shape: f32[1,2048], index: 2, kind: input, shape index: {}]
  %s3 = inlined_call_operand.vmem [shape: bf16[2,2048], index: 3, kind: output, shape index: {}]
  %s4 = sld [smem:[#allocation0]]
  $region61: #{conv_vae_forward.13} parent=0
    _
  %s6 = ssub.s32 1, %s4
  %s7 = scalar_select 0, %s6, %s4
  $region1: #{conv_vae_forward.13} parent=0
    #allocation3 [shape = 'u8[1048576]{0}', space=vmem, size = 0x100000, scoped, tag = 'input window, operand 1']
    #allocation4 [shape = 's32[2]{0}', space=sflag, size = 0x8, scoped, tag = 'scoped memory for conv_vae_forward.13']
    #allocation5 [shape = 'u8[4096]{0}', space=vmem, size = 0x1000, scoped, tag = 'input window, operand 2']
    #allocation6 [shape = 's32[2]{0}', space=sflag, size = 0x8, scoped, tag = 'scoped memory for conv_vae_forward.13']
    %8 = vsyncpa [#allocation4], 0
    %s9 = scalar_lea.sflag [#allocation4], 1
    %10 = vsyncpa %s9, 0
    %11 = vsyncpa [#allocation6], 0
    %s12 = scalar_lea.sflag [#allocation6], 1
    %13 = vsyncpa %s12, 0
    loop: start=0, step=1, limit=10
    $region2: #{conv_vae_forward.13} parent=1 // loop_pre_header
      _
    $region3: #{conv_vae_forward.13} parent=1 // loop_header
      %s15 = sphi 0, %s19
      %p16 = scmp.ge.s32.totalorder %s15, 10
      %s22 = sphi 0, %s34
      %s23 = sphi 0, %s30
      %s24 = sphi 0, %s22
      %s25 = sphi 0, %s23
      %s26 = sphi 0, %s24
      %s27 = sphi 0, %s25
      %s37 = sphi 0, %s39
      %s40 = sphi 0, %s37
      %s41 = sphi 0, %s40
      %s57 = sphi 0, %s41
      %s65 = sphi 0, %s67
      %s68 = sphi 0, %s65
      %s69 = sphi 0, %s68
      %s85 = sphi 0, %s69
      %s91 = sphi 0, %s93
      %s94 = sphi 0, %s91
      %s95 = sphi 0, %s94
      %s111 = sphi 0, %s95
      %s117 = sphi 0, %s119
      %s120 = sphi 0, %s117
      %s121 = sphi 0, %s120
      %s137 = sphi 0, %s121
    $region4: #{conv_vae_forward.13} parent=1 // loop_header_branch
      %18 = sbr.rel (%p16) target = $region8
    $region5: #{conv_vae_forward.13} parent=1 // loop_body
      %s20 = ssub.s32 %s15, 1
      %s21 = ssub.s32 %s15, 2
      %s28 = sadd.s32 1, %s23
      %p29 = scmp.ge.s32.totalorder %s28, 2
      %s30 = scalar_select %p29, 0, %s28
      %s31 = sadd.s32 1, %s22
      %s32 = scalar_select %p29, %s31, %s22
      %p33 = scmp.ge.s32.totalorder %s32, 4
      %s34 = scalar_select %p33, 0, %s32
      %s35 = ssub.s32 %s23, %s30
      %p36 = scmp.eq.s32.totalorder %s35, 0
      %s38 = sadd.s32 %s37, 1
      %s39 = scalar_select %p36, %s37, %s38
      %p42 = pneg %p36
      %p43 = scmp.eq.s32.totalorder %s15, 7
      %p44 = por %p42, %p43
      %p45 = scmp.ne.s32.totalorder %s37, %s40
      %p46 = scmp.eq.s32.totalorder %s15, 0
      %p47 = por %p45, %p46
      %p48 = scmp.ne.s32.totalorder %s37, %s40
      %p49 = scmp.eq.s32.totalorder %s20, 7
      %p50 = por %p48, %p49
      %p51 = scmp.ne.s32.totalorder %s40, %s41
      %p52 = scmp.eq.s32.totalorder %s20, 0
      %p53 = por %p51, %p52
      %p54 = scmp.ne.s32.totalorder %s40, %s41
      %p55 = scmp.eq.s32.totalorder %s21, 7
      %p56 = por %p54, %p55
      %p58 = scmp.ne.s32.totalorder %s41, %s57
      %p59 = scmp.eq.s32.totalorder %s21, 0
      %p60 = por %p58, %p59
      %s61 = ssub.s32 %s23, %s30
      %s62 = ssub.s32 %s22, %s34
      %s63 = sor.u32 %s61, %s62
      %p64 = scmp.eq.s32.totalorder %s63, 0
      %s66 = sadd.s32 %s65, 1
      %s67 = scalar_select %p64, %s65, %s66
      %p70 = pneg %p64
      %p71 = scmp.eq.s32.totalorder %s15, 7
      %p72 = por %p70, %p71
      %p73 = scmp.ne.s32.totalorder %s65, %s68
      %p74 = scmp.eq.s32.totalorder %s15, 0
      %p75 = por %p73, %p74
      %p76 = scmp.ne.s32.totalorder %s65, %s68
      %p77 = scmp.eq.s32.totalorder %s20, 7
      %p78 = por %p76, %p77
      %p79 = scmp.ne.s32.totalorder %s68, %s69
      %p80 = scmp.eq.s32.totalorder %s20, 0
      %p81 = por %p79, %p80
      %p82 = scmp.ne.s32.totalorder %s68, %s69
      %p83 = scmp.eq.s32.totalorder %s21, 7
      %p84 = por %p82, %p83
      %p86 = scmp.ne.s32.totalorder %s69, %s85
      %p87 = scmp.eq.s32.totalorder %s21, 0
      %p88 = por %p86, %p87
      %s89 = ssub.s32 %s22, %s34
      %p90 = scmp.eq.s32.totalorder %s89, 0
      %s92 = sadd.s32 %s91, 1
      %s93 = scalar_select %p90, %s91, %s92
      %p96 = pneg %p90
      %p97 = scmp.eq.s32.totalorder %s15, 7
      %p98 = por %p96, %p97
      %p99 = scmp.ne.s32.totalorder %s91, %s94
      %p100 = scmp.eq.s32.totalorder %s15, 0
      %p101 = por %p99, %p100
      %p102 = scmp.ne.s32.totalorder %s91, %s94
      %p103 = scmp.eq.s32.totalorder %s20, 7
      %p104 = por %p102, %p103
      %p105 = scmp.ne.s32.totalorder %s94, %s95
      %p106 = scmp.eq.s32.totalorder %s20, 0
      %p107 = por %p105, %p106
      %p108 = scmp.ne.s32.totalorder %s94, %s95
      %p109 = scmp.eq.s32.totalorder %s21, 7
      %p110 = por %p108, %p109
      %p112 = scmp.ne.s32.totalorder %s95, %s111
      %p113 = scmp.eq.s32.totalorder %s21, 0
      %p114 = por %p112, %p113
      %s115 = ssub.s32 %s22, %s34
      %p116 = scmp.eq.s32.totalorder %s115, 0
      %s118 = sadd.s32 %s117, 1
      %s119 = scalar_select %p116, %s117, %s118
      %p122 = pneg %p116
      %p123 = scmp.eq.s32.totalorder %s15, 7
      %p124 = por %p122, %p123
      %p125 = scmp.ne.s32.totalorder %s117, %s120
      %p126 = scmp.eq.s32.totalorder %s15, 0
      %p127 = por %p125, %p126
      %p128 = scmp.ne.s32.totalorder %s117, %s120
      %p129 = scmp.eq.s32.totalorder %s20, 7
      %p130 = por %p128, %p129
      %p131 = scmp.ne.s32.totalorder %s120, %s121
      %p132 = scmp.eq.s32.totalorder %s20, 0
      %p133 = por %p131, %p132
      %p134 = scmp.ne.s32.totalorder %s120, %s121
      %p135 = scmp.eq.s32.totalorder %s21, 7
      %p136 = por %p134, %p135
      %p138 = scmp.ne.s32.totalorder %s121, %s137
      %p139 = scmp.eq.s32.totalorder %s21, 0
      %p140 = por %p138, %p139
      %p141 = scmp.le.s32.totalorder 1, %s15
      %p142 = scmp.lt.s32.totalorder %s15, 9
      %p143 = pnand %p141, %p142
      %p144 = pneg %p143
      // Predicated region
      $region9: #{conv_vae_forward.13} parent=5 // pred_check
        _
      $region10: #{conv_vae_forward.13} parent=5 // pred_check_branch
        %146 = sbr.rel (%p143) target = $region12
      $region11: #{conv_vae_forward.13} parent=5 // pred_region
        %s147 = ssub.s32 %s15, 1
      $region12: #{conv_vae_forward.13} parent=5 // pred_fallthru
        _
      %p148 = scmp.lt.s32.totalorder %s15, 8
      // Predicated region
      $region13: #{conv_vae_forward.13} parent=5 // pred_check
        %p149 = pneg %p148
      $region14: #{conv_vae_forward.13} parent=5 // pred_check_branch
        %151 = sbr.rel (%p149) target = $region16
      $region15: #{conv_vae_forward.13} parent=5 // pred_region
        // Predicated region
        $region17: #{conv_vae_forward.13} parent=15 // pred_check
          %p152 = pneg %p47
        $region18: #{conv_vae_forward.13} parent=15 // pred_check_branch
          %154 = sbr.rel (%p152) target = $region20
        $region19: #{conv_vae_forward.13} parent=15 // pred_region
          %s155 = smul.u32 4, %s23
          %p156 = scmp.lt.s32.totalorder %s155, 7
          %s157 = scalar_select %p156, %s155, 7
          %s158 = scalar_lea.vmem %s0, %s157
          %s159 = smul.u32 4, %s23
        $region20: #{conv_vae_forward.13} parent=15 // pred_fallthru
          _
        // Predicated region
        $region21: #{conv_vae_forward.13} parent=15 // pred_check
          %p160 = pneg %p75
        $region22: #{conv_vae_forward.13} parent=15 // pred_check_branch
          %162 = sbr.rel (%p160) target = $region24
        $region23: #{conv_vae_forward.13} parent=15 // pred_region
          %s163 = sand.u32 %s65, 1
          %s164 = scalar_lea.sflag [#allocation4], %s163
          %s165 = sand.u32 %s65, 1
          %s166 = smul.addr %s165, 1024
          %s167 = scalar_lea.vmem [#allocation3], %s166
          %s168 = smul.u32 64, %s23
          %s169 = smul.u32 4, %s22
          %171 = vsyncadd %s164, 0
          %s172 = smul.addr %s168, 16
          %s173 = sadd.s32 %s169, %s172
          %s174 = smul.addr %s173, 4
          %s175 = scalar_lea.hbm %s1, %s174
          %s176 = sshll.u32 %s175, 4
          %s177 = int_to_ptr.hbm [resolvable:$true] %s176
          %s178 = sshll.u32 %s167, 4
          %s179 = int_to_ptr.vmem [resolvable:$true] %s178
          %184 = dma.hbm_to_vmem [thread:$0]  %s177, 16384, %s179, %s164, 1024, 256, 16
        $region24: #{conv_vae_forward.13} parent=15 // pred_fallthru
          _
        // Predicated region
        $region25: #{conv_vae_forward.13} parent=15 // pred_check
          %p185 = pneg %p101
        $region26: #{conv_vae_forward.13} parent=15 // pred_check_branch
          %187 = sbr.rel (%p185) target = $region28
        $region27: #{conv_vae_forward.13} parent=15 // pred_region
          %s188 = sand.u32 %s91, 1
          %s189 = scalar_lea.sflag [#allocation6], %s188
          %s190 = sand.u32 %s91, 1
          %s191 = smul.addr %s190, 4
          %s192 = scalar_lea.vmem [#allocation5], %s191
          %s193 = smul.u32 4, %s22
          %195 = vsyncadd %s189, 0
          %s196 = scalar_lea.hbm %s2, %s193
          %s198 = sshll.u32 %s196, 4
          %s199 = int_to_ptr.hbm [resolvable:$true] %s198
          %s200 = sshll.u32 %s192, 4
          %s201 = int_to_ptr.vmem [resolvable:$true] %s200
          %203 = dma.hbm_to_vmem [thread:$0]  %s199, 64, %s201, %s189
        $region28: #{conv_vae_forward.13} parent=15 // pred_fallthru
          _
      $region16: #{conv_vae_forward.13} parent=5 // pred_fallthru
        _
      %p204 = scmp.le.s32.totalorder 1, %s15
      %p205 = scmp.lt.s32.totalorder %s15, 9
      %p206 = pnand %p204, %p205
      %p207 = pneg %p206
      // Predicated region
      $region29: #{conv_vae_forward.13} parent=5 // pred_check
        _
      $region30: #{conv_vae_forward.13} parent=5 // pred_check_branch
        %209 = sbr.rel (%p206) target = $region32
      $region31: #{conv_vae_forward.13} parent=5 // pred_region
        %s210 = ssub.s32 %s15, 1
        %s211 = sand.u32 %s68, 1
        %s212 = scalar_lea.sflag [#allocation4], %s211
        %s213 = sand.u32 %s68, 1
        %s214 = smul.addr %s213, 1024
        %s215 = scalar_lea.vmem [#allocation3], %s214
        // Predicated region
        $region33: #{conv_vae_forward.13} parent=31 // pred_check
          %p216 = pneg %p81
        $region34: #{conv_vae_forward.13} parent=31 // pred_check_branch
          %218 = sbr.rel (%p216) target = $region36
        $region35: #{conv_vae_forward.13} parent=31 // pred_region
          %220 = dma.done %s212, 16384
        $region36: #{conv_vae_forward.13} parent=31 // pred_fallthru
          _
        %s221 = sand.u32 %s94, 1
        %s222 = scalar_lea.sflag [#allocation6], %s221
        %s223 = sand.u32 %s94, 1
        %s224 = smul.addr %s223, 4
        %s225 = scalar_lea.vmem [#allocation5], %s224
        // Predicated region
        $region37: #{conv_vae_forward.13} parent=31 // pred_check
          %p226 = pneg %p107
        $region38: #{conv_vae_forward.13} parent=31 // pred_check_branch
          %228 = sbr.rel (%p226) target = $region40
        $region39: #{conv_vae_forward.13} parent=31 // pred_region
          %230 = dma.done %s222, 64
        $region40: #{conv_vae_forward.13} parent=31 // pred_fallthru
          _
        %s231 = smul.u32 4, %s25
        %p232 = scmp.lt.s32.totalorder %s231, 7
        %s233 = scalar_select %p232, %s231, 7
        %s234 = scalar_lea.vmem %s0, %s233
        %p235 = pneg %p53
        %p236 = pneg %p50
        %s237 = sand.u32 %s68, 1
        %s238 = scalar_lea.sflag [#allocation4], %s237
        %s239 = sand.u32 %s68, 1
        %s240 = smul.addr %s239, 1024
        %s241 = scalar_lea.vmem [#allocation3], %s240
        %p242 = pneg %p81
        %p243 = pneg %p78
        %s244 = sand.u32 %s94, 1
        %s245 = scalar_lea.sflag [#allocation6], %s244
        %s246 = sand.u32 %s94, 1
        %s247 = smul.addr %s246, 4
        %s248 = scalar_lea.vmem [#allocation5], %s247
        %p249 = pneg %p107
        %p250 = pneg %p104
        %p251 = pneg %p133
        %p252 = pneg %p130
        %s253 = smul.u32 4, %s24
        %p254 = scmp.lt.s32.totalorder %s253, 15
        %s255 = scalar_select %p254, %s253, 15
        %s256 = scalar_lea.vmem %s3, %s255
        %s257 = smul.u32 4, %s25
        %p258 = scmp.lt.s32.totalorder %s257, 7
        %s259 = scalar_select %p258, %s257, 7
        %s260 = scalar_lea.vmem %s0, %s259
        %s261 = smul.u32 4, %s25
        %s262 = smul.u32 64, %s25
        %s263 = smul.u32 4, %s24
        %s264 = smul.u32 4, %s24
        %s265 = smul.u32 4, %s24
        %p266 = scmp.lt.s32.totalorder %s265, 15
        %s267 = scalar_select %p266, %s265, 15
        %s268 = scalar_lea.vmem %s3, %s267
        %s269 = smul.u32 4, %s24
        %p270 = scmp.eq.s32.totalorder %s25, 0
        // Predicated region
        $region41: #{conv_vae_forward.13} parent=31 // pred_check
          %p271 = pneg %p270
        $region42: #{conv_vae_forward.13} parent=31 // pred_check_branch
          %273 = sbr.rel (%p271) target = $region44
        $region43: #{conv_vae_forward.13} parent=31 // pred_region
          %274 = vst [vmem:[#allocation2] sm:$0xff] 0.0
        $region44: #{conv_vae_forward.13} parent=31 // pred_fallthru
          _
        %v275 = vld [vmem:[#allocation2] sm:$0xff]
        %v276 = vld [vmem:[%s260] sm:$0xf]
        %v277 = vld [vmem:[%s215] sm:$0xff]
        %v278 = vld [vmem:[%s215 + $0x8] sm:$0xff]
        %v279 = vld [vmem:[%s215 + $0x10] sm:$0xff]
        %v280 = vld [vmem:[%s215 + $0x18] sm:$0xff]
        %v281 = vld [vmem:[%s215 + $0x20] sm:$0xff]
        %v282 = vld [vmem:[%s215 + $0x28] sm:$0xff]
        %v283 = vld [vmem:[%s215 + $0x30] sm:$0xff]
        %v284 = vld [vmem:[%s215 + $0x38] sm:$0xff]
        %v285 = vld [vmem:[%s215 + $0x40] sm:$0xff]
        %v286 = vld [vmem:[%s215 + $0x48] sm:$0xff]
        %v287 = vld [vmem:[%s215 + $0x50] sm:$0xff]
        %v288 = vld [vmem:[%s215 + $0x58] sm:$0xff]
        %v289 = vld [vmem:[%s215 + $0x60] sm:$0xff]
        %v290 = vld [vmem:[%s215 + $0x68] sm:$0xff]
        %v291 = vld [vmem:[%s215 + $0x70] sm:$0xff]
        %v292 = vld [vmem:[%s215 + $0x78] sm:$0xff]
        %v293 = vld [vmem:[%s215 + $0x80] sm:$0xff]
        %v294 = vld [vmem:[%s215 + $0x88] sm:$0xff]
        %v295 = vld [vmem:[%s215 + $0x90] sm:$0xff]
        %v296 = vld [vmem:[%s215 + $0x98] sm:$0xff]
        %v297 = vld [vmem:[%s215 + $0xa0] sm:$0xff]
        %v298 = vld [vmem:[%s215 + $0xa8] sm:$0xff]
        %v299 = vld [vmem:[%s215 + $0xb0] sm:$0xff]
        %v300 = vld [vmem:[%s215 + $0xb8] sm:$0xff]
        %v301 = vld [vmem:[%s215 + $0xc0] sm:$0xff]
        %v302 = vld [vmem:[%s215 + $0xc8] sm:$0xff]
        %v303 = vld [vmem:[%s215 + $0xd0] sm:$0xff]
        %v304 = vld [vmem:[%s215 + $0xd8] sm:$0xff]
        %v305 = vld [vmem:[%s215 + $0xe0] sm:$0xff]
        %v306 = vld [vmem:[%s215 + $0xe8] sm:$0xff]
        %v307 = vld [vmem:[%s215 + $0xf0] sm:$0xff]
        %v308 = vld [vmem:[%s215 + $0xf8] sm:$0xff]
        %v309 = vld [vmem:[%s215 + $0x100] sm:$0xff]
        %v310 = vld [vmem:[%s215 + $0x108] sm:$0xff]
        %v311 = vld [vmem:[%s215 + $0x110] sm:$0xff]
        %v312 = vld [vmem:[%s215 + $0x118] sm:$0xff]
        %v313 = vld [vmem:[%s215 + $0x120] sm:$0xff]
        %v314 = vld [vmem:[%s215 + $0x128] sm:$0xff]
        %v315 = vld [vmem:[%s215 + $0x130] sm:$0xff]
        %v316 = vld [vmem:[%s215 + $0x138] sm:$0xff]
        %v317 = vld [vmem:[%s215 + $0x140] sm:$0xff]
        %v318 = vld [vmem:[%s215 + $0x148] sm:$0xff]
        %v319 = vld [vmem:[%s215 + $0x150] sm:$0xff]
        %v320 = vld [vmem:[%s215 + $0x158] sm:$0xff]
        %v321 = vld [vmem:[%s215 + $0x160] sm:$0xff]
        %v322 = vld [vmem:[%s215 + $0x168] sm:$0xff]
        %v323 = vld [vmem:[%s215 + $0x170] sm:$0xff]
        %v324 = vld [vmem:[%s215 + $0x178] sm:$0xff]
        %v325 = vld [vmem:[%s215 + $0x180] sm:$0xff]
        %v326 = vld [vmem:[%s215 + $0x188] sm:$0xff]
        %v327 = vld [vmem:[%s215 + $0x190] sm:$0xff]
        %v328 = vld [vmem:[%s215 + $0x198] sm:$0xff]
        %v329 = vld [vmem:[%s215 + $0x1a0] sm:$0xff]
        %v330 = vld [vmem:[%s215 + $0x1a8] sm:$0xff]
        %v331 = vld [vmem:[%s215 + $0x1b0] sm:$0xff]
        %v332 = vld [vmem:[%s215 + $0x1b8] sm:$0xff]
        %v333 = vld [vmem:[%s215 + $0x1c0] sm:$0xff]
        %v334 = vld [vmem:[%s215 + $0x1c8] sm:$0xff]
        %v335 = vld [vmem:[%s215 + $0x1d0] sm:$0xff]
        %v336 = vld [vmem:[%s215 + $0x1d8] sm:$0xff]
        %v337 = vld [vmem:[%s215 + $0x1e0] sm:$0xff]
        %v338 = vld [vmem:[%s215 + $0x1e8] sm:$0xff]
        %v339 = vld [vmem:[%s215 + $0x1f0] sm:$0xff]
        %v340 = vld [vmem:[%s215 + $0x1f8] sm:$0xff]
        %v341 = vld [vmem:[%s215 + $0x200] sm:$0xff]
        %v342 = vld [vmem:[%s215 + $0x208] sm:$0xff]
        %v343 = vld [vmem:[%s215 + $0x210] sm:$0xff]
        %v344 = vld [vmem:[%s215 + $0x218] sm:$0xff]
        %v345 = vld [vmem:[%s215 + $0x220] sm:$0xff]
        %v346 = vld [vmem:[%s215 + $0x228] sm:$0xff]
        %v347 = vld [vmem:[%s215 + $0x230] sm:$0xff]
        %v348 = vld [vmem:[%s215 + $0x238] sm:$0xff]
        %v349 = vld [vmem:[%s215 + $0x240] sm:$0xff]
        %v350 = vld [vmem:[%s215 + $0x248] sm:$0xff]
        %v351 = vld [vmem:[%s215 + $0x250] sm:$0xff]
        %v352 = vld [vmem:[%s215 + $0x258] sm:$0xff]
        %v353 = vld [vmem:[%s215 + $0x260] sm:$0xff]
        %v354 = vld [vmem:[%s215 + $0x268] sm:$0xff]
        %v355 = vld [vmem:[%s215 + $0x270] sm:$0xff]
        %v356 = vld [vmem:[%s215 + $0x278] sm:$0xff]
        %v357 = vld [vmem:[%s215 + $0x280] sm:$0xff]
        %v358 = vld [vmem:[%s215 + $0x288] sm:$0xff]
        %v359 = vld [vmem:[%s215 + $0x290] sm:$0xff]
        %v360 = vld [vmem:[%s215 + $0x298] sm:$0xff]
        %v361 = vld [vmem:[%s215 + $0x2a0] sm:$0xff]
        %v362 = vld [vmem:[%s215 + $0x2a8] sm:$0xff]
        %v363 = vld [vmem:[%s215 + $0x2b0] sm:$0xff]
        %v364 = vld [vmem:[%s215 + $0x2b8] sm:$0xff]
        %v365 = vld [vmem:[%s215 + $0x2c0] sm:$0xff]
        %v366 = vld [vmem:[%s215 + $0x2c8] sm:$0xff]
        %v367 = vld [vmem:[%s215 + $0x2d0] sm:$0xff]
        %v368 = vld [vmem:[%s215 + $0x2d8] sm:$0xff]
        %v369 = vld [vmem:[%s215 + $0x2e0] sm:$0xff]
        %v370 = vld [vmem:[%s215 + $0x2e8] sm:$0xff]
        %v371 = vld [vmem:[%s215 + $0x2f0] sm:$0xff]
        %v372 = vld [vmem:[%s215 + $0x2f8] sm:$0xff]
        %v373 = vld [vmem:[%s215 + $0x300] sm:$0xff]
        %v374 = vld [vmem:[%s215 + $0x308] sm:$0xff]
        %v375 = vld [vmem:[%s215 + $0x310] sm:$0xff]
        %v376 = vld [vmem:[%s215 + $0x318] sm:$0xff]
        %v377 = vld [vmem:[%s215 + $0x320] sm:$0xff]
        %v378 = vld [vmem:[%s215 + $0x328] sm:$0xff]
        %v379 = vld [vmem:[%s215 + $0x330] sm:$0xff]
        %v380 = vld [vmem:[%s215 + $0x338] sm:$0xff]
        %v381 = vld [vmem:[%s215 + $0x340] sm:$0xff]
        %v382 = vld [vmem:[%s215 + $0x348] sm:$0xff]
        %v383 = vld [vmem:[%s215 + $0x350] sm:$0xff]
        %v384 = vld [vmem:[%s215 + $0x358] sm:$0xff]
        %v385 = vld [vmem:[%s215 + $0x360] sm:$0xff]
        %v386 = vld [vmem:[%s215 + $0x368] sm:$0xff]
        %v387 = vld [vmem:[%s215 + $0x370] sm:$0xff]
        %v388 = vld [vmem:[%s215 + $0x378] sm:$0xff]
        %v389 = vld [vmem:[%s215 + $0x380] sm:$0xff]
        %v390 = vld [vmem:[%s215 + $0x388] sm:$0xff]
        %v391 = vld [vmem:[%s215 + $0x390] sm:$0xff]
        %v392 = vld [vmem:[%s215 + $0x398] sm:$0xff]
        %v393 = vld [vmem:[%s215 + $0x3a0] sm:$0xff]
        %v394 = vld [vmem:[%s215 + $0x3a8] sm:$0xff]
        %v395 = vld [vmem:[%s215 + $0x3b0] sm:$0xff]
        %v396 = vld [vmem:[%s215 + $0x3b8] sm:$0xff]
        %v397 = vld [vmem:[%s215 + $0x3c0] sm:$0xff]
        %v398 = vld [vmem:[%s215 + $0x3c8] sm:$0xff]
        %v399 = vld [vmem:[%s215 + $0x3d0] sm:$0xff]
        %v400 = vld [vmem:[%s215 + $0x3d8] sm:$0xff]
        %v401 = vld [vmem:[%s215 + $0x3e0] sm:$0xff]
        %v402 = vld [vmem:[%s215 + $0x3e8] sm:$0xff]
        %v403 = vld [vmem:[%s215 + $0x3f0] sm:$0xff]
        %v404 = vld [vmem:[%s215 + $0x3f8] sm:$0xff]
        %406 = vst [vmem:[#allocation1] ss:$9 sm:$0xff] %v276
        %v407 = vld [vmem:[#allocation1] sm:$0xff]
        %v408 = vld [vmem:[#allocation1 + $0x9] sm:$0xff]
        %v409 = vld [vmem:[#allocation1 + $0x12] sm:$0xff]
        %v410 = vld [vmem:[#allocation1 + $0x1b] sm:$0xff]
        %v543 = vunpack.c.l.b16 %v277
        %v544 = vunpack.c.h.b16 %v277
        %v545 = vunpack.c.l.b16 %v278
        %v546 = vunpack.c.h.b16 %v278
        %v547 = vunpack.c.l.b16 %v279
        %v548 = vunpack.c.h.b16 %v279
        %v549 = vunpack.c.l.b16 %v280
        %v550 = vunpack.c.h.b16 %v280
        %v551 = vunpack.c.l.b16 %v281
        %v552 = vunpack.c.h.b16 %v281
        %v553 = vunpack.c.l.b16 %v282
        %v554 = vunpack.c.h.b16 %v282
        %v555 = vunpack.c.l.b16 %v283
        %v556 = vunpack.c.h.b16 %v283
        %v557 = vunpack.c.l.b16 %v284
        %v558 = vunpack.c.h.b16 %v284
        %v559 = vunpack.c.l.b16 %v285
        %v560 = vunpack.c.h.b16 %v285
        %v561 = vunpack.c.l.b16 %v286
        %v562 = vunpack.c.h.b16 %v286
        %v563 = vunpack.c.l.b16 %v287
        %v564 = vunpack.c.h.b16 %v287
        %v565 = vunpack.c.l.b16 %v288
        %v566 = vunpack.c.h.b16 %v288
        %v567 = vunpack.c.l.b16 %v289
        %v568 = vunpack.c.h.b16 %v289
        %v569 = vunpack.c.l.b16 %v290
        %v570 = vunpack.c.h.b16 %v290
        %v571 = vunpack.c.l.b16 %v291
        %v572 = vunpack.c.h.b16 %v291
        %v573 = vunpack.c.l.b16 %v292
        %v574 = vunpack.c.h.b16 %v292
        %v575 = vunpack.c.l.b16 %v293
        %v576 = vunpack.c.h.b16 %v293
        %v577 = vunpack.c.l.b16 %v294
        %v578 = vunpack.c.h.b16 %v294
        %v579 = vunpack.c.l.b16 %v295
        %v580 = vunpack.c.h.b16 %v295
        %v581 = vunpack.c.l.b16 %v296
        %v582 = vunpack.c.h.b16 %v296
        %v583 = vunpack.c.l.b16 %v297
        %v584 = vunpack.c.h.b16 %v297
        %v585 = vunpack.c.l.b16 %v298
        %v586 = vunpack.c.h.b16 %v298
        %v587 = vunpack.c.l.b16 %v299
        %v588 = vunpack.c.h.b16 %v299
        %v589 = vunpack.c.l.b16 %v300
        %v590 = vunpack.c.h.b16 %v300
        %v591 = vunpack.c.l.b16 %v301
        %v592 = vunpack.c.h.b16 %v301
        %v593 = vunpack.c.l.b16 %v302
        %v594 = vunpack.c.h.b16 %v302
        %v595 = vunpack.c.l.b16 %v303
        %v596 = vunpack.c.h.b16 %v303
        %v597 = vunpack.c.l.b16 %v304
        %v598 = vunpack.c.h.b16 %v304
        %v599 = vunpack.c.l.b16 %v305
        %v600 = vunpack.c.h.b16 %v305
        %v601 = vunpack.c.l.b16 %v306
        %v602 = vunpack.c.h.b16 %v306
        %v603 = vunpack.c.l.b16 %v307
        %v604 = vunpack.c.h.b16 %v307
        %v605 = vunpack.c.l.b16 %v308
        %v606 = vunpack.c.h.b16 %v308
        %v607 = vunpack.c.l.b16 %v309
        %v608 = vunpack.c.h.b16 %v309
        %v609 = vunpack.c.l.b16 %v310
        %v610 = vunpack.c.h.b16 %v310
        %v611 = vunpack.c.l.b16 %v311
        %v612 = vunpack.c.h.b16 %v311
        %v613 = vunpack.c.l.b16 %v312
        %v614 = vunpack.c.h.b16 %v312
        %v615 = vunpack.c.l.b16 %v313
        %v616 = vunpack.c.h.b16 %v313
        %v617 = vunpack.c.l.b16 %v314
        %v618 = vunpack.c.h.b16 %v314
        %v619 = vunpack.c.l.b16 %v315
        %v620 = vunpack.c.h.b16 %v315
        %v621 = vunpack.c.l.b16 %v316
        %v622 = vunpack.c.h.b16 %v316
        %v623 = vunpack.c.l.b16 %v317
        %v624 = vunpack.c.h.b16 %v317
        %v625 = vunpack.c.l.b16 %v318
        %v626 = vunpack.c.h.b16 %v318
        %v627 = vunpack.c.l.b16 %v319
        %v628 = vunpack.c.h.b16 %v319
        %v629 = vunpack.c.l.b16 %v320
        %v630 = vunpack.c.h.b16 %v320
        %v631 = vunpack.c.l.b16 %v321
        %v632 = vunpack.c.h.b16 %v321
        %v633 = vunpack.c.l.b16 %v322
        %v634 = vunpack.c.h.b16 %v322
        %v635 = vunpack.c.l.b16 %v323
        %v636 = vunpack.c.h.b16 %v323
        %v637 = vunpack.c.l.b16 %v324
        %v638 = vunpack.c.h.b16 %v324
        %v639 = vunpack.c.l.b16 %v325
        %v640 = vunpack.c.h.b16 %v325
        %v641 = vunpack.c.l.b16 %v326
        %v642 = vunpack.c.h.b16 %v326
        %v643 = vunpack.c.l.b16 %v327
        %v644 = vunpack.c.h.b16 %v327
        %v645 = vunpack.c.l.b16 %v328
        %v646 = vunpack.c.h.b16 %v328
        %v647 = vunpack.c.l.b16 %v329
        %v648 = vunpack.c.h.b16 %v329
        %v649 = vunpack.c.l.b16 %v330
        %v650 = vunpack.c.h.b16 %v330
        %v651 = vunpack.c.l.b16 %v331
        %v652 = vunpack.c.h.b16 %v331
        %v653 = vunpack.c.l.b16 %v332
        %v654 = vunpack.c.h.b16 %v332
        %v655 = vunpack.c.l.b16 %v333
        %v656 = vunpack.c.h.b16 %v333
        %v657 = vunpack.c.l.b16 %v334
        %v658 = vunpack.c.h.b16 %v334
        %v659 = vunpack.c.l.b16 %v335
        %v660 = vunpack.c.h.b16 %v335
        %v661 = vunpack.c.l.b16 %v336
        %v662 = vunpack.c.h.b16 %v336
        %v663 = vunpack.c.l.b16 %v337
        %v664 = vunpack.c.h.b16 %v337
        %v665 = vunpack.c.l.b16 %v338
        %v666 = vunpack.c.h.b16 %v338
        %v667 = vunpack.c.l.b16 %v339
        %v668 = vunpack.c.h.b16 %v339
        %v669 = vunpack.c.l.b16 %v340
        %v670 = vunpack.c.h.b16 %v340
        %v671 = vunpack.c.l.b16 %v341
        %v672 = vunpack.c.h.b16 %v341
        %v673 = vunpack.c.l.b16 %v342
        %v674 = vunpack.c.h.b16 %v342
        %v675 = vunpack.c.l.b16 %v343
        %v676 = vunpack.c.h.b16 %v343
        %v677 = vunpack.c.l.b16 %v344
        %v678 = vunpack.c.h.b16 %v344
        %v679 = vunpack.c.l.b16 %v345
        %v680 = vunpack.c.h.b16 %v345
        %v681 = vunpack.c.l.b16 %v346
        %v682 = vunpack.c.h.b16 %v346
        %v683 = vunpack.c.l.b16 %v347
        %v684 = vunpack.c.h.b16 %v347
        %v685 = vunpack.c.l.b16 %v348
        %v686 = vunpack.c.h.b16 %v348
        %v687 = vunpack.c.l.b16 %v349
        %v688 = vunpack.c.h.b16 %v349
        %v689 = vunpack.c.l.b16 %v350
        %v690 = vunpack.c.h.b16 %v350
        %v691 = vunpack.c.l.b16 %v351
        %v692 = vunpack.c.h.b16 %v351
        %v693 = vunpack.c.l.b16 %v352
        %v694 = vunpack.c.h.b16 %v352
        %v695 = vunpack.c.l.b16 %v353
        %v696 = vunpack.c.h.b16 %v353
        %v697 = vunpack.c.l.b16 %v354
        %v698 = vunpack.c.h.b16 %v354
        %v699 = vunpack.c.l.b16 %v355
        %v700 = vunpack.c.h.b16 %v355
        %v701 = vunpack.c.l.b16 %v356
        %v702 = vunpack.c.h.b16 %v356
        %v703 = vunpack.c.l.b16 %v357
        %v704 = vunpack.c.h.b16 %v357
        %v705 = vunpack.c.l.b16 %v358
        %v706 = vunpack.c.h.b16 %v358
        %v707 = vunpack.c.l.b16 %v359
        %v708 = vunpack.c.h.b16 %v359
        %v709 = vunpack.c.l.b16 %v360
        %v710 = vunpack.c.h.b16 %v360
        %v711 = vunpack.c.l.b16 %v361
        %v712 = vunpack.c.h.b16 %v361
        %v713 = vunpack.c.l.b16 %v362
        %v714 = vunpack.c.h.b16 %v362
        %v715 = vunpack.c.l.b16 %v363
        %v716 = vunpack.c.h.b16 %v363
        %v717 = vunpack.c.l.b16 %v364
        %v718 = vunpack.c.h.b16 %v364
        %v719 = vunpack.c.l.b16 %v365
        %v720 = vunpack.c.h.b16 %v365
        %v721 = vunpack.c.l.b16 %v366
        %v722 = vunpack.c.h.b16 %v366
        %v723 = vunpack.c.l.b16 %v367
        %v724 = vunpack.c.h.b16 %v367
        %v725 = vunpack.c.l.b16 %v368
        %v726 = vunpack.c.h.b16 %v368
        %v727 = vunpack.c.l.b16 %v369
        %v728 = vunpack.c.h.b16 %v369
        %v729 = vunpack.c.l.b16 %v370
        %v730 = vunpack.c.h.b16 %v370
        %v731 = vunpack.c.l.b16 %v371
        %v732 = vunpack.c.h.b16 %v371
        %v733 = vunpack.c.l.b16 %v372
        %v734 = vunpack.c.h.b16 %v372
        %v735 = vunpack.c.l.b16 %v373
        %v736 = vunpack.c.h.b16 %v373
        %v737 = vunpack.c.l.b16 %v374
        %v738 = vunpack.c.h.b16 %v374
        %v739 = vunpack.c.l.b16 %v375
        %v740 = vunpack.c.h.b16 %v375
        %v741 = vunpack.c.l.b16 %v376
        %v742 = vunpack.c.h.b16 %v376
        %v743 = vunpack.c.l.b16 %v377
        %v744 = vunpack.c.h.b16 %v377
        %v745 = vunpack.c.l.b16 %v378
        %v746 = vunpack.c.h.b16 %v378
        %v747 = vunpack.c.l.b16 %v379
        %v748 = vunpack.c.h.b16 %v379
        %v749 = vunpack.c.l.b16 %v380
        %v750 = vunpack.c.h.b16 %v380
        %v751 = vunpack.c.l.b16 %v381
        %v752 = vunpack.c.h.b16 %v381
        %v753 = vunpack.c.l.b16 %v382
        %v754 = vunpack.c.h.b16 %v382
        %v755 = vunpack.c.l.b16 %v383
        %v756 = vunpack.c.h.b16 %v383
        %v757 = vunpack.c.l.b16 %v384
        %v758 = vunpack.c.h.b16 %v384
        %v759 = vunpack.c.l.b16 %v385
        %v760 = vunpack.c.h.b16 %v385
        %v761 = vunpack.c.l.b16 %v386
        %v762 = vunpack.c.h.b16 %v386
        %v763 = vunpack.c.l.b16 %v387
        %v764 = vunpack.c.h.b16 %v387
        %v765 = vunpack.c.l.b16 %v388
        %v766 = vunpack.c.h.b16 %v388
        %v767 = vunpack.c.l.b16 %v389
        %v768 = vunpack.c.h.b16 %v389
        %v769 = vunpack.c.l.b16 %v390
        %v770 = vunpack.c.h.b16 %v390
        %v771 = vunpack.c.l.b16 %v391
        %v772 = vunpack.c.h.b16 %v391
        %v773 = vunpack.c.l.b16 %v392
        %v774 = vunpack.c.h.b16 %v392
        %v775 = vunpack.c.l.b16 %v393
        %v776 = vunpack.c.h.b16 %v393
        %v777 = vunpack.c.l.b16 %v394
        %v778 = vunpack.c.h.b16 %v394
        %v779 = vunpack.c.l.b16 %v395
        %v780 = vunpack.c.h.b16 %v395
        %v781 = vunpack.c.l.b16 %v396
        %v782 = vunpack.c.h.b16 %v396
        %v783 = vunpack.c.l.b16 %v397
        %v784 = vunpack.c.h.b16 %v397
        %v785 = vunpack.c.l.b16 %v398
        %v786 = vunpack.c.h.b16 %v398
        %v787 = vunpack.c.l.b16 %v399
        %v788 = vunpack.c.h.b16 %v399
        %v789 = vunpack.c.l.b16 %v400
        %v790 = vunpack.c.h.b16 %v400
        %v791 = vunpack.c.l.b16 %v401
        %v792 = vunpack.c.h.b16 %v401
        %v793 = vunpack.c.l.b16 %v402
        %v794 = vunpack.c.h.b16 %v402
        %v795 = vunpack.c.l.b16 %v403
        %v796 = vunpack.c.h.b16 %v403
        %v797 = vunpack.c.l.b16 %v404
        %v798 = vunpack.c.h.b16 %v404
        %v799 = vpack.c.b16 %v547, %v543
        %v800 = vpack.c.b16 %v548, %v544
        %v801 = vpack.c.b16 %v549, %v545
        %v802 = vpack.c.b16 %v550, %v546
        %v803 = vpack.c.b16 %v555, %v551
        %v804 = vpack.c.b16 %v556, %v552
        %v805 = vpack.c.b16 %v557, %v553
        %v806 = vpack.c.b16 %v558, %v554
        %v807 = vpack.c.b16 %v563, %v559
        %v808 = vpack.c.b16 %v564, %v560
        %v809 = vpack.c.b16 %v565, %v561
        %v810 = vpack.c.b16 %v566, %v562
        %v811 = vpack.c.b16 %v571, %v567
        %v812 = vpack.c.b16 %v572, %v568
        %v813 = vpack.c.b16 %v573, %v569
        %v814 = vpack.c.b16 %v574, %v570
        %v815 = vpack.c.b16 %v579, %v575
        %v816 = vpack.c.b16 %v580, %v576
        %v817 = vpack.c.b16 %v581, %v577
        %v818 = vpack.c.b16 %v582, %v578
        %v819 = vpack.c.b16 %v587, %v583
        %v820 = vpack.c.b16 %v588, %v584
        %v821 = vpack.c.b16 %v589, %v585
        %v822 = vpack.c.b16 %v590, %v586
        %v823 = vpack.c.b16 %v595, %v591
        %v824 = vpack.c.b16 %v596, %v592
        %v825 = vpack.c.b16 %v597, %v593
        %v826 = vpack.c.b16 %v598, %v594
        %v827 = vpack.c.b16 %v603, %v599
        %v828 = vpack.c.b16 %v604, %v600
        %v829 = vpack.c.b16 %v605, %v601
        %v830 = vpack.c.b16 %v606, %v602
        %v831 = vpack.c.b16 %v611, %v607
        %v832 = vpack.c.b16 %v612, %v608
        %v833 = vpack.c.b16 %v613, %v609
        %v834 = vpack.c.b16 %v614, %v610
        %v835 = vpack.c.b16 %v619, %v615
        %v836 = vpack.c.b16 %v620, %v616
        %v837 = vpack.c.b16 %v621, %v617
        %v838 = vpack.c.b16 %v622, %v618
        %v839 = vpack.c.b16 %v627, %v623
        %v840 = vpack.c.b16 %v628, %v624
        %v841 = vpack.c.b16 %v629, %v625
        %v842 = vpack.c.b16 %v630, %v626
        %v843 = vpack.c.b16 %v635, %v631
        %v844 = vpack.c.b16 %v636, %v632
        %v845 = vpack.c.b16 %v637, %v633
        %v846 = vpack.c.b16 %v638, %v634
        %v847 = vpack.c.b16 %v643, %v639
        %v848 = vpack.c.b16 %v644, %v640
        %v849 = vpack.c.b16 %v645, %v641
        %v850 = vpack.c.b16 %v646, %v642
        %v851 = vpack.c.b16 %v651, %v647
        %v852 = vpack.c.b16 %v652, %v648
        %v853 = vpack.c.b16 %v653, %v649
        %v854 = vpack.c.b16 %v654, %v650
        %v855 = vpack.c.b16 %v659, %v655
        %v856 = vpack.c.b16 %v660, %v656
        %v857 = vpack.c.b16 %v661, %v657
        %v858 = vpack.c.b16 %v662, %v658
        %v859 = vpack.c.b16 %v667, %v663
        %v860 = vpack.c.b16 %v668, %v664
        %v861 = vpack.c.b16 %v669, %v665
        %v862 = vpack.c.b16 %v670, %v666
        %v863 = vpack.c.b16 %v675, %v671
        %v864 = vpack.c.b16 %v676, %v672
        %v865 = vpack.c.b16 %v677, %v673
        %v866 = vpack.c.b16 %v678, %v674
        %v867 = vpack.c.b16 %v683, %v679
        %v868 = vpack.c.b16 %v684, %v680
        %v869 = vpack.c.b16 %v685, %v681
        %v870 = vpack.c.b16 %v686, %v682
        %v871 = vpack.c.b16 %v691, %v687
        %v872 = vpack.c.b16 %v692, %v688
        %v873 = vpack.c.b16 %v693, %v689
        %v874 = vpack.c.b16 %v694, %v690
        %v875 = vpack.c.b16 %v699, %v695
        %v876 = vpack.c.b16 %v700, %v696
        %v877 = vpack.c.b16 %v701, %v697
        %v878 = vpack.c.b16 %v702, %v698
        %v879 = vpack.c.b16 %v707, %v703
        %v880 = vpack.c.b16 %v708, %v704
        %v881 = vpack.c.b16 %v709, %v705
        %v882 = vpack.c.b16 %v710, %v706
        %v883 = vpack.c.b16 %v715, %v711
        %v884 = vpack.c.b16 %v716, %v712
        %v885 = vpack.c.b16 %v717, %v713
        %v886 = vpack.c.b16 %v718, %v714
        %v887 = vpack.c.b16 %v723, %v719
        %v888 = vpack.c.b16 %v724, %v720
        %v889 = vpack.c.b16 %v725, %v721
        %v890 = vpack.c.b16 %v726, %v722
        %v891 = vpack.c.b16 %v731, %v727
        %v892 = vpack.c.b16 %v732, %v728
        %v893 = vpack.c.b16 %v733, %v729
        %v894 = vpack.c.b16 %v734, %v730
        %v895 = vpack.c.b16 %v739, %v735
        %v896 = vpack.c.b16 %v740, %v736
        %v897 = vpack.c.b16 %v741, %v737
        %v898 = vpack.c.b16 %v742, %v738
        %v899 = vpack.c.b16 %v747, %v743
        %v900 = vpack.c.b16 %v748, %v744
        %v901 = vpack.c.b16 %v749, %v745
        %v902 = vpack.c.b16 %v750, %v746
        %v903 = vpack.c.b16 %v755, %v751
        %v904 = vpack.c.b16 %v756, %v752
        %v905 = vpack.c.b16 %v757, %v753
        %v906 = vpack.c.b16 %v758, %v754
        %v907 = vpack.c.b16 %v763, %v759
        %v908 = vpack.c.b16 %v764, %v760
        %v909 = vpack.c.b16 %v765, %v761
        %v910 = vpack.c.b16 %v766, %v762
        %v911 = vpack.c.b16 %v771, %v767
        %v912 = vpack.c.b16 %v772, %v768
        %v913 = vpack.c.b16 %v773, %v769
        %v914 = vpack.c.b16 %v774, %v770
        %v915 = vpack.c.b16 %v779, %v775
        %v916 = vpack.c.b16 %v780, %v776
        %v917 = vpack.c.b16 %v781, %v777
        %v918 = vpack.c.b16 %v782, %v778
        %v919 = vpack.c.b16 %v787, %v783
        %v920 = vpack.c.b16 %v788, %v784
        %v921 = vpack.c.b16 %v789, %v785
        %v922 = vpack.c.b16 %v790, %v786
        %v923 = vpack.c.b16 %v795, %v791
        %v924 = vpack.c.b16 %v796, %v792
        %v925 = vpack.c.b16 %v797, %v793
        %v926 = vpack.c.b16 %v798, %v794
        %1055 = vmatpush.bf16.msra.mxu0 %v827
        %1056 = vmatpush.bf16.msra.mxu0 %v823
        %1057 = vmatpush.bf16.msra.mxu0 %v819
        %1058 = vmatpush.bf16.msra.mxu0 %v815
        %1059 = vmatpush.bf16.msra.mxu0 %v811
        %1060 = vmatpush.bf16.msra.mxu0 %v807
        %1061 = vmatpush.bf16.msra.mxu0 %v803
        %1062 = vmatpush.bf16.msra.mxu0 %v799
        %1063 = vmatmul.bf16.gmra.mxu0 %v407
        %v1064 = vpop.f32.mrf.mxu0
        %v1065 = vadd.f32 0.0, %v1064
        %v1066 = vpop.f32.mrf.mxu0
        %1067 = vdwg.mxu0
        %1068 = vmatpush.bf16.msra.mxu0 %v859
        %1069 = vmatpush.bf16.msra.mxu0 %v855
        %1070 = vmatpush.bf16.msra.mxu0 %v851
        %1071 = vmatpush.bf16.msra.mxu0 %v847
        %1072 = vmatpush.bf16.msra.mxu0 %v843
        %1073 = vmatpush.bf16.msra.mxu0 %v839
        %1074 = vmatpush.bf16.msra.mxu0 %v835
        %1075 = vmatpush.bf16.msra.mxu0 %v831
        %1076 = vmatmul.bf16.gmra.mxu0 %v408
        %v1077 = vpop.f32.mrf.mxu0
        %v1078 = vadd.f32 %v1065, %v1077
        %v1079 = vpop.f32.mrf.mxu0
        %1080 = vdwg.mxu0
        %1081 = vmatpush.bf16.msra.mxu0 %v891
        %1082 = vmatpush.bf16.msra.mxu0 %v887
        %1083 = vmatpush.bf16.msra.mxu0 %v883
        %1084 = vmatpush.bf16.msra.mxu0 %v879
        %1085 = vmatpush.bf16.msra.mxu0 %v875
        %1086 = vmatpush.bf16.msra.mxu0 %v871
        %1087 = vmatpush.bf16.msra.mxu0 %v867
        %1088 = vmatpush.bf16.msra.mxu0 %v863
        %1089 = vmatmul.bf16.gmra.mxu0 %v409
        %v1090 = vpop.f32.mrf.mxu0
        %v1091 = vadd.f32 %v1078, %v1090
        %v1092 = vpop.f32.mrf.mxu0
        %1093 = vdwg.mxu0
        %1094 = vmatpush.bf16.msra.mxu0 %v923
        %1095 = vmatpush.bf16.msra.mxu0 %v919
        %1096 = vmatpush.bf16.msra.mxu0 %v915
        %1097 = vmatpush.bf16.msra.mxu0 %v911
        %1098 = vmatpush.bf16.msra.mxu0 %v907
        %1099 = vmatpush.bf16.msra.mxu0 %v903
        %1100 = vmatpush.bf16.msra.mxu0 %v899
        %1101 = vmatpush.bf16.msra.mxu0 %v895
        %1102 = vmatmul.bf16.gmra.mxu0 %v410
        %v1103 = vpop.f32.mrf.mxu0
        %v1104 = vadd.f32 %v1091, %v1103
        %v1105 = vpop.f32.mrf.mxu0
        %1106 = vdwg.mxu0
        %1107 = vmatpush.bf16.msra.mxu0 %v828
        %1108 = vmatpush.bf16.msra.mxu0 %v824
        %1109 = vmatpush.bf16.msra.mxu0 %v820
        %1110 = vmatpush.bf16.msra.mxu0 %v816
        %1111 = vmatpush.bf16.msra.mxu0 %v812
        %1112 = vmatpush.bf16.msra.mxu0 %v808
        %1113 = vmatpush.bf16.msra.mxu0 %v804
        %1114 = vmatpush.bf16.msra.mxu0 %v800
        %1115 = vmatmul.bf16.gmra.mxu0 %v407
        %v1116 = vpop.f32.mrf.mxu0
        %v1117 = vadd.f32 0.0, %v1116
        %v1118 = vpop.f32.mrf.mxu0
        %1119 = vdwg.mxu0
        %1120 = vmatpush.bf16.msra.mxu0 %v860
        %1121 = vmatpush.bf16.msra.mxu0 %v856
        %1122 = vmatpush.bf16.msra.mxu0 %v852
        %1123 = vmatpush.bf16.msra.mxu0 %v848
        %1124 = vmatpush.bf16.msra.mxu0 %v844
        %1125 = vmatpush.bf16.msra.mxu0 %v840
        %1126 = vmatpush.bf16.msra.mxu0 %v836
        %1127 = vmatpush.bf16.msra.mxu0 %v832
        %1128 = vmatmul.bf16.gmra.mxu0 %v408
        %v1129 = vpop.f32.mrf.mxu0
        %v1130 = vadd.f32 %v1117, %v1129
        %v1131 = vpop.f32.mrf.mxu0
        %1132 = vdwg.mxu0
        %1133 = vmatpush.bf16.msra.mxu0 %v892
        %1134 = vmatpush.bf16.msra.mxu0 %v888
        %1135 = vmatpush.bf16.msra.mxu0 %v884
        %1136 = vmatpush.bf16.msra.mxu0 %v880
        %1137 = vmatpush.bf16.msra.mxu0 %v876
        %1138 = vmatpush.bf16.msra.mxu0 %v872
        %1139 = vmatpush.bf16.msra.mxu0 %v868
        %1140 = vmatpush.bf16.msra.mxu0 %v864
        %1141 = vmatmul.bf16.gmra.mxu0 %v409
        %v1142 = vpop.f32.mrf.mxu0
        %v1143 = vadd.f32 %v1130, %v1142
        %v1144 = vpop.f32.mrf.mxu0
        %1145 = vdwg.mxu0
        %1146 = vmatpush.bf16.msra.mxu0 %v924
        %1147 = vmatpush.bf16.msra.mxu0 %v920
        %1148 = vmatpush.bf16.msra.mxu0 %v916
        %1149 = vmatpush.bf16.msra.mxu0 %v912
        %1150 = vmatpush.bf16.msra.mxu0 %v908
        %1151 = vmatpush.bf16.msra.mxu0 %v904
        %1152 = vmatpush.bf16.msra.mxu0 %v900
        %1153 = vmatpush.bf16.msra.mxu0 %v896
        %1154 = vmatmul.bf16.gmra.mxu0 %v410
        %v1155 = vpop.f32.mrf.mxu0
        %v1156 = vadd.f32 %v1143, %v1155
        %v1157 = vpop.f32.mrf.mxu0
        %1158 = vdwg.mxu0
        %1159 = vmatpush.bf16.msra.mxu0 %v829
        %1160 = vmatpush.bf16.msra.mxu0 %v825
        %1161 = vmatpush.bf16.msra.mxu0 %v821
        %1162 = vmatpush.bf16.msra.mxu0 %v817
        %1163 = vmatpush.bf16.msra.mxu0 %v813
        %1164 = vmatpush.bf16.msra.mxu0 %v809
        %1165 = vmatpush.bf16.msra.mxu0 %v805
        %1166 = vmatpush.bf16.msra.mxu0 %v801
        %1167 = vmatmul.bf16.gmra.mxu0 %v407
        %v1168 = vpop.f32.mrf.mxu0
        %v1169 = vadd.f32 0.0, %v1168
        %v1170 = vpop.f32.mrf.mxu0
        %1171 = vdwg.mxu0
        %1172 = vmatpush.bf16.msra.mxu0 %v861
        %1173 = vmatpush.bf16.msra.mxu0 %v857
        %1174 = vmatpush.bf16.msra.mxu0 %v853
        %1175 = vmatpush.bf16.msra.mxu0 %v849
        %1176 = vmatpush.bf16.msra.mxu0 %v845
        %1177 = vmatpush.bf16.msra.mxu0 %v841
        %1178 = vmatpush.bf16.msra.mxu0 %v837
        %1179 = vmatpush.bf16.msra.mxu0 %v833
        %1180 = vmatmul.bf16.gmra.mxu0 %v408
        %v1181 = vpop.f32.mrf.mxu0
        %v1182 = vadd.f32 %v1169, %v1181
        %v1183 = vpop.f32.mrf.mxu0
        %1184 = vdwg.mxu0
        %1185 = vmatpush.bf16.msra.mxu0 %v893
        %1186 = vmatpush.bf16.msra.mxu0 %v889
        %1187 = vmatpush.bf16.msra.mxu0 %v885
        %1188 = vmatpush.bf16.msra.mxu0 %v881
        %1189 = vmatpush.bf16.msra.mxu0 %v877
        %1190 = vmatpush.bf16.msra.mxu0 %v873
        %1191 = vmatpush.bf16.msra.mxu0 %v869
        %1192 = vmatpush.bf16.msra.mxu0 %v865
        %1193 = vmatmul.bf16.gmra.mxu0 %v409
        %v1194 = vpop.f32.mrf.mxu0
        %v1195 = vadd.f32 %v1182, %v1194
        %v1196 = vpop.f32.mrf.mxu0
        %1197 = vdwg.mxu0
        %1198 = vmatpush.bf16.msra.mxu0 %v925
        %1199 = vmatpush.bf16.msra.mxu0 %v921
        %1200 = vmatpush.bf16.msra.mxu0 %v917
        %1201 = vmatpush.bf16.msra.mxu0 %v913
        %1202 = vmatpush.bf16.msra.mxu0 %v909
        %1203 = vmatpush.bf16.msra.mxu0 %v905
        %1204 = vmatpush.bf16.msra.mxu0 %v901
        %1205 = vmatpush.bf16.msra.mxu0 %v897
        %1206 = vmatmul.bf16.gmra.mxu0 %v410
        %v1207 = vpop.f32.mrf.mxu0
        %v1208 = vadd.f32 %v1195, %v1207
        %v1209 = vpop.f32.mrf.mxu0
        %1210 = vdwg.mxu0
        %1211 = vmatpush.bf16.msra.mxu0 %v830
        %1212 = vmatpush.bf16.msra.mxu0 %v826
        %1213 = vmatpush.bf16.msra.mxu0 %v822
        %1214 = vmatpush.bf16.msra.mxu0 %v818
        %1215 = vmatpush.bf16.msra.mxu0 %v814
        %1216 = vmatpush.bf16.msra.mxu0 %v810
        %1217 = vmatpush.bf16.msra.mxu0 %v806
        %1218 = vmatpush.bf16.msra.mxu0 %v802
        %1219 = vmatmul.bf16.gmra.mxu0 %v407
        %v1220 = vpop.f32.mrf.mxu0
        %v1221 = vadd.f32 0.0, %v1220
        %v1222 = vpop.f32.mrf.mxu0
        %1223 = vdwg.mxu0
        %1224 = vmatpush.bf16.msra.mxu0 %v862
        %1225 = vmatpush.bf16.msra.mxu0 %v858
        %1226 = vmatpush.bf16.msra.mxu0 %v854
        %1227 = vmatpush.bf16.msra.mxu0 %v850
        %1228 = vmatpush.bf16.msra.mxu0 %v846
        %1229 = vmatpush.bf16.msra.mxu0 %v842
        %1230 = vmatpush.bf16.msra.mxu0 %v838
        %1231 = vmatpush.bf16.msra.mxu0 %v834
        %1232 = vmatmul.bf16.gmra.mxu0 %v408
        %v1233 = vpop.f32.mrf.mxu0
        %v1234 = vadd.f32 %v1221, %v1233
        %v1235 = vpop.f32.mrf.mxu0
        %1236 = vdwg.mxu0
        %1237 = vmatpush.bf16.msra.mxu0 %v894
        %1238 = vmatpush.bf16.msra.mxu0 %v890
        %1239 = vmatpush.bf16.msra.mxu0 %v886
        %1240 = vmatpush.bf16.msra.mxu0 %v882
        %1241 = vmatpush.bf16.msra.mxu0 %v878
        %1242 = vmatpush.bf16.msra.mxu0 %v874
        %1243 = vmatpush.bf16.msra.mxu0 %v870
        %1244 = vmatpush.bf16.msra.mxu0 %v866
        %1245 = vmatmul.bf16.gmra.mxu0 %v409
        %v1246 = vpop.f32.mrf.mxu0
        %v1247 = vadd.f32 %v1234, %v1246
        %v1248 = vpop.f32.mrf.mxu0
        %1249 = vdwg.mxu0
        %1250 = vmatpush.bf16.msra.mxu0 %v926
        %1251 = vmatpush.bf16.msra.mxu0 %v922
        %1252 = vmatpush.bf16.msra.mxu0 %v918
        %1253 = vmatpush.bf16.msra.mxu0 %v914
        %1254 = vmatpush.bf16.msra.mxu0 %v910
        %1255 = vmatpush.bf16.msra.mxu0 %v906
        %1256 = vmatpush.bf16.msra.mxu0 %v902
        %1257 = vmatpush.bf16.msra.mxu0 %v898
        %1258 = vmatmul.bf16.gmra.mxu0 %v410
        %v1259 = vpop.f32.mrf.mxu0
        %v1260 = vadd.f32 %v1247, %v1259
        %v1261 = vpop.f32.mrf.mxu0
        %1262 = vdwg.mxu0
        %v1267 = vrot.slane %v1156, 6
        %v1268 = vrot.slane %v1208, 4
        %v1269 = vrot.slane %v1260, 2
        %vm1270 = vcmask 1041408
        %v1271 = vsel %vm1270, %v1104, %v1267
        %vm1272 = vcmask 1045508
        %v1273 = vsel %vm1272, %v1268, %v1269
        %vm1274 = vcmask 1043456
        %v1275 = vsel %vm1274, %v1271, %v1273
        %v1277 = vadd.f32 %v275, %v1275
        %1278 = vst [vmem:[#allocation2] sm:$0xff] %v1277
        %p1279 = scmp.eq.s32.totalorder %s25, 1
        // Predicated region
        $region45: #{conv_vae_forward.13} parent=31 // pred_check
          %p1280 = pneg %p1279
        $region46: #{conv_vae_forward.13} parent=31 // pred_check_branch
          %1282 = sbr.rel (%p1280) target = $region48
        $region47: #{conv_vae_forward.13} parent=31 // pred_region
          %v1283 = vld [vmem:[#allocation2] sm:$0xff]
          %v1284 = vld [vmem:[%s225] sm:$0xf]
          %v1286 = vperm.slane %v1284, 0
          %v1287 = vperm.slane %v1284, 1
          %v1288 = vperm.slane %v1284, 2
          %v1289 = vperm.slane %v1284, 3
          %v1290 = vrot.slane %v1287, 6
          %v1291 = vrot.slane %v1288, 4
          %v1292 = vrot.slane %v1289, 2
          %v1293 = vsel %vm1270, %v1286, %v1290
          %v1294 = vsel %vm1272, %v1291, %v1292
          %v1295 = vsel %vm1274, %v1293, %v1294
          %v1297 = vadd.f32 %v1283, %v1295
          %1299 = vst [vmem:[#allocation1] ss:$4 sm:$0xff] %v1297
          %v1300 = vld.sshfl [vmem:[#allocation1] sm:$0xff pattern:$0x73625140]
          %v1301 = vld.sshfl [vmem:[#allocation1 + $0x8] sm:$0xff pattern:$0x73625140]
          %v1302 = vld.sshfl [vmem:[#allocation1 + $0x10] sm:$0xff pattern:$0x73625140]
          %v1303 = vld.sshfl [vmem:[#allocation1 + $0x18] sm:$0xff pattern:$0x73625140]
          %v1308 = vsel %vm1270, %v1300, 0.0
          %v1309 = vrot.slane %v1308, 4
          %v1310 = vadd.f32 %v1308, %v1309
          %v1311 = vrot.slane %v1310, 2
          %v1312 = vadd.f32 %v1310, %v1311
          %v1313 = vrot.slane %v1312, 1
          %v1314 = vadd.f32 %v1312, %v1313
          %v1315 = vsel %vm1270, %v1301, 0.0
          %v1316 = vrot.slane %v1315, 4
          %v1317 = vadd.f32 %v1315, %v1316
          %v1318 = vrot.slane %v1317, 2
          %v1319 = vadd.f32 %v1317, %v1318
          %v1320 = vrot.slane %v1319, 1
          %v1321 = vadd.f32 %v1319, %v1320
          %v1322 = vsel %vm1270, %v1302, 0.0
          %v1323 = vrot.slane %v1322, 4
          %v1324 = vadd.f32 %v1322, %v1323
          %v1325 = vrot.slane %v1324, 2
          %v1326 = vadd.f32 %v1324, %v1325
          %v1327 = vrot.slane %v1326, 1
          %v1328 = vadd.f32 %v1326, %v1327
          %v1329 = vsel %vm1270, %v1303, 0.0
          %v1330 = vrot.slane %v1329, 4
          %v1331 = vadd.f32 %v1329, %v1330
          %v1332 = vrot.slane %v1331, 2
          %v1333 = vadd.f32 %v1331, %v1332
          %v1334 = vrot.slane %v1333, 1
          %v1335 = vadd.f32 %v1333, %v1334
          %v1336 = vrcp.pop 2.0
          %v1337 = vmul.f32 2.0, %v1336
          %v1338 = vsub.f32 1.0, %v1337
          %v1339 = vmul.f32 %v1336, %v1338
          %v1340 = vadd.f32 %v1336, %v1339
          %vm1341 = vweird.f32 %v1336
          %v1342 = vsel %vm1341, %v1336, %v1340
          %v1343 = vmul.f32 %v1314, %v1342
          %v1344 = vmul.f32 %v1321, %v1342
          %v1345 = vmul.f32 %v1328, %v1342
          %v1346 = vmul.f32 %v1335, %v1342
          %v1351 = vrot.slane %v1344, 6
          %v1352 = vrot.slane %v1345, 4
          %v1353 = vrot.slane %v1346, 2
          %v1354 = vsel %vm1270, %v1343, %v1351
          %v1355 = vsel %vm1272, %v1352, %v1353
          %v1356 = vsel %vm1274, %v1354, %v1355
          %v1358 = vsub.f32 %v1297, %v1356
          %v1359 = vmul.f32 %v1358, %v1358
          %1361 = vst [vmem:[#allocation1] ss:$4 sm:$0xff] %v1359
          %v1362 = vld.sshfl [vmem:[#allocation1] sm:$0xff pattern:$0x73625140]
          %v1363 = vld.sshfl [vmem:[#allocation1 + $0x8] sm:$0xff pattern:$0x73625140]
          %v1364 = vld.sshfl [vmem:[#allocation1 + $0x10] sm:$0xff pattern:$0x73625140]
          %v1365 = vld.sshfl [vmem:[#allocation1 + $0x18] sm:$0xff pattern:$0x73625140]
          %v1370 = vsel %vm1270, %v1362, 0.0
          %v1371 = vrot.slane %v1370, 4
          %v1372 = vadd.f32 %v1370, %v1371
          %v1373 = vrot.slane %v1372, 2
          %v1374 = vadd.f32 %v1372, %v1373
          %v1375 = vrot.slane %v1374, 1
          %v1376 = vadd.f32 %v1374, %v1375
          %v1377 = vsel %vm1270, %v1363, 0.0
          %v1378 = vrot.slane %v1377, 4
          %v1379 = vadd.f32 %v1377, %v1378
          %v1380 = vrot.slane %v1379, 2
          %v1381 = vadd.f32 %v1379, %v1380
          %v1382 = vrot.slane %v1381, 1
          %v1383 = vadd.f32 %v1381, %v1382
          %v1384 = vsel %vm1270, %v1364, 0.0
          %v1385 = vrot.slane %v1384, 4
          %v1386 = vadd.f32 %v1384, %v1385
          %v1387 = vrot.slane %v1386, 2
          %v1388 = vadd.f32 %v1386, %v1387
          %v1389 = vrot.slane %v1388, 1
          %v1390 = vadd.f32 %v1388, %v1389
          %v1391 = vsel %vm1270, %v1365, 0.0
          %v1392 = vrot.slane %v1391, 4
          %v1393 = vadd.f32 %v1391, %v1392
          %v1394 = vrot.slane %v1393, 2
          %v1395 = vadd.f32 %v1393, %v1394
          %v1396 = vrot.slane %v1395, 1
          %v1397 = vadd.f32 %v1395, %v1396
          %v1398 = vmul.f32 %v1376, %v1342
          %v1399 = vmul.f32 %v1383, %v1342
          %v1400 = vmul.f32 %v1390, %v1342
          %v1401 = vmul.f32 %v1397, %v1342
          %v1402 = vadd.f32 %v1398, 1e-05
          %v1403 = vadd.f32 %v1399, 1e-05
          %v1404 = vadd.f32 %v1400, 1e-05
          %v1405 = vadd.f32 %v1401, 1e-05
          %v1406 = vrsqrt.pop %v1402
          %v1407 = vmul.f32 %v1406, %v1402
          %v1408 = vmul.f32 %v1407, %v1406
          %v1409 = vmul.f32 0.5, %v1408
          %v1410 = vsub.f32 1.5, %v1409
          %v1411 = vmul.f32 %v1406, %v1410
          %vm1412 = vweird.f32 %v1402
          %vm1413 = vweird.f32 %v1406
          %vm1414 = vmor %vm1412, %vm1413
          %v1415 = vsel %vm1414, %v1406, %v1411
          %v1416 = vrsqrt.pop %v1403
          %v1417 = vmul.f32 %v1416, %v1403
          %v1418 = vmul.f32 %v1417, %v1416
          %v1419 = vmul.f32 0.5, %v1418
          %v1420 = vsub.f32 1.5, %v1419
          %v1421 = vmul.f32 %v1416, %v1420
          %vm1422 = vweird.f32 %v1403
          %vm1423 = vweird.f32 %v1416
          %vm1424 = vmor %vm1422, %vm1423
          %v1425 = vsel %vm1424, %v1416, %v1421
          %v1426 = vrsqrt.pop %v1404
          %v1427 = vmul.f32 %v1426, %v1404
          %v1428 = vmul.f32 %v1427, %v1426
          %v1429 = vmul.f32 0.5, %v1428
          %v1430 = vsub.f32 1.5, %v1429
          %v1431 = vmul.f32 %v1426, %v1430
          %vm1432 = vweird.f32 %v1404
          %vm1433 = vweird.f32 %v1426
          %vm1434 = vmor %vm1432, %vm1433
          %v1435 = vsel %vm1434, %v1426, %v1431
          %v1436 = vrsqrt.pop %v1405
          %v1437 = vmul.f32 %v1436, %v1405
          %v1438 = vmul.f32 %v1437, %v1436
          %v1439 = vmul.f32 0.5, %v1438
          %v1440 = vsub.f32 1.5, %v1439
          %v1441 = vmul.f32 %v1436, %v1440
          %vm1442 = vweird.f32 %v1405
          %vm1443 = vweird.f32 %v1436
          %vm1444 = vmor %vm1442, %vm1443
          %v1445 = vsel %vm1444, %v1436, %v1441
          %v1450 = vrot.slane %v1425, 6
          %v1451 = vrot.slane %v1435, 4
          %v1452 = vrot.slane %v1445, 2
          %v1453 = vsel %vm1270, %v1415, %v1450
          %v1454 = vsel %vm1272, %v1451, %v1452
          %v1455 = vsel %vm1274, %v1453, %v1454
          %v1457 = vmul.f32 %v1358, %v1455
          %v1458 = vmax.f32 %v1457, 0.0
          %1460 = vst [vmem:[#allocation1] ss:$4 sm:$0xff] %v1458
          %v1461 = vld.sshfl [vmem:[#allocation1] sm:$0xff pattern:$0x73625140]
          %v1462 = vld.sshfl [vmem:[#allocation1 + $0x8] sm:$0xff pattern:$0x73625140]
          %v1463 = vld.sshfl [vmem:[#allocation1 + $0x10] sm:$0xff pattern:$0x73625140]
          %v1464 = vld.sshfl [vmem:[#allocation1 + $0x18] sm:$0xff pattern:$0x73625140]
          %v1469 = vpack.c.bf16 %v1462, %v1461
          %v1470 = vpack.c.bf16 %v1464, %v1463
          %v1473 = vrot.slane %v1469, 3
          %v1474 = vrot.slane %v1470, 6
          %v1475 = vrot.slane %v1470, 1
          %vm1476 = vcmask 1040384
          %v1479 = vsel %vm1476, %v1469, %v1473
          %vm1480 = vcmask 1042434
          %v1483 = vsel %vm1480, %v1474, %v1475
          %v1484 = vsel %vm1270, %v1479, %v1483
          %1486 = vst [vmem:[%s268] sm:$0xf] %v1484
        $region48: #{conv_vae_forward.13} parent=31 // pred_fallthru
          _
        %s1487 = smul.u32 4, %s24
        %p1488 = scmp.lt.s32.totalorder %s1487, 15
        %s1489 = scalar_select %p1488, %s1487, 15
        %s1490 = scalar_lea.vmem %s3, %s1489
        // Predicated region
        $region49: #{conv_vae_forward.13} parent=31 // pred_check
          %p1491 = pneg %p130
        $region50: #{conv_vae_forward.13} parent=31 // pred_check_branch
          %1493 = sbr.rel (%p1491) target = $region52
        $region51: #{conv_vae_forward.13} parent=31 // pred_region
          %s1494 = smul.u32 4, %s24
        $region52: #{conv_vae_forward.13} parent=31 // pred_fallthru
          _
      $region32: #{conv_vae_forward.13} parent=5 // pred_fallthru
        _
      %p1495 = scmp.le.s32.totalorder 2, %s15
      // Predicated region
      $region53: #{conv_vae_forward.13} parent=5 // pred_check
        %p1496 = pneg %p1495
      $region54: #{conv_vae_forward.13} parent=5 // pred_check_branch
        %1498 = sbr.rel (%p1496) target = $region56
      $region55: #{conv_vae_forward.13} parent=5 // pred_region
        %s1499 = ssub.s32 %s15, 2
        // Predicated region
        $region57: #{conv_vae_forward.13} parent=55 // pred_check
          %p1500 = pneg %p136
        $region58: #{conv_vae_forward.13} parent=55 // pred_check_branch
          %1502 = sbr.rel (%p1500) target = $region60
        $region59: #{conv_vae_forward.13} parent=55 // pred_region
          %s1503 = smul.u32 4, %s26
          %p1504 = scmp.lt.s32.totalorder %s1503, 15
          %s1505 = scalar_select %p1504, %s1503, 15
          %s1506 = scalar_lea.vmem %s3, %s1505
        $region60: #{conv_vae_forward.13} parent=55 // pred_fallthru
          _
      $region56: #{conv_vae_forward.13} parent=5 // pred_fallthru
        _
    $region6: #{conv_vae_forward.13} parent=1 // loop_footer
      %s19 = sadd.s32 1, %s15
    $region7: #{conv_vae_forward.13} parent=1 // loop_footer_branch
      %14 = sbr.rel target = $region3
    $region8: #{conv_vae_forward.13} parent=1 // loop_exit
      _
    %1507 = vsyncpa [#allocation4], 1
    %s1508 = scalar_lea.sflag [#allocation4], 1
    %1509 = vsyncpa %s1508, 1
    %1510 = vsyncpa [#allocation6], 1
    %s1511 = scalar_lea.sflag [#allocation6], 1
    %1512 = vsyncpa %s1511, 1

// kernel: conv_vae_forward.14
$region0: #{conv_vae_forward.14}
  #allocation0 [shape = 'u32[]', space=smem, size = 0x4, offset = 0x4, fixed_abs, tag = 'smem constant byte address 0x4 - core index']
  #allocation1 [shape = 'u32[72,128]{1,0:T(1,128)}', space=vmem, size = 0x9000, scoped, tag = 'internal scratch']
  #allocation2 [shape = 'f32[32,256]{1,0:T(8,128)}', space=vmem, size = 0x8000, scoped, tag = 'scratch operand']
  %s0 = inlined_call_operand.vmem [shape: bf16[32,1152], index: 0, kind: input, shape index: {}]
  %s1 = inlined_call_operand.hbm [shape: bf16[1152,256], index: 1, kind: input, shape index: {}]
  %s2 = inlined_call_operand.hbm [shape: f32[1,256], index: 2, kind: input, shape index: {}]
  %s3 = inlined_call_operand.vmem [shape: bf16[32,256], index: 3, kind: output, shape index: {}]
  %s4 = sld [smem:[#allocation0]]
  $region87: #{conv_vae_forward.14} parent=0
    _
  %s6 = ssub.s32 1, %s4
  %s7 = scalar_select 0, %s6, %s4
  $region1: #{conv_vae_forward.14} parent=0
    #allocation3 [shape = 'u8[49152]{0}', space=vmem, size = 0xc000, scoped, tag = 'input window, operand 0']
    #allocation4 [shape = 'u8[393216]{0}', space=vmem, size = 0x60000, scoped, tag = 'input window, operand 1']
    #allocation5 [shape = 's32[2]{0}', space=sflag, size = 0x8, scoped, tag = 'scoped memory for conv_vae_forward.14']
    #allocation6 [shape = 'u8[1024]{0}', space=vmem, size = 0x400, scoped, tag = 'input window, operand 2, single buffered']
    #allocation7 [shape = 's32[1]{0}', space=sflag, size = 0x4, scoped, tag = 'scoped memory for conv_vae_forward.14']
    %8 = vsyncpa [#allocation5], 0
    %s9 = scalar_lea.sflag [#allocation5], 1
    %10 = vsyncpa %s9, 0
    %11 = vsyncpa [#allocation7], 0
    loop: start=0, step=1, limit=5
    $region2: #{conv_vae_forward.14} parent=1 // loop_pre_header
      _
    $region3: #{conv_vae_forward.14} parent=1 // loop_header
      %s13 = sphi 0, %s17
      %p14 = scmp.ge.s32.totalorder %s13, 5
      %s20 = sphi 0, %s32
      %s21 = sphi 0, %s28
      %s22 = sphi 0, %s20
      %s23 = sphi 0, %s21
      %s24 = sphi 0, %s22
      %s25 = sphi 0, %s23
      %s35 = sphi 0, %s37
      %s38 = sphi 0, %s35
      %s39 = sphi 0, %s38
      %s55 = sphi 0, %s39
      %s63 = sphi 0, %s65
      %s66 = sphi 0, %s63
      %s67 = sphi 0, %s66
      %s83 = sphi 0, %s67
      %s89 = sphi 0, %s91
      %s92 = sphi 0, %s89
      %s93 = sphi 0, %s92
      %s109 = sphi 0, %s93
      %s115 = sphi 0, %s117
      %s118 = sphi 0, %s115
      %s119 = sphi 0, %s118
      %s135 = sphi 0, %s119
    $region4: #{conv_vae_forward.14} parent=1 // loop_header_branch
      %16 = sbr.rel (%p14) target = $region8
    $region5: #{conv_vae_forward.14} parent=1 // loop_body
      %s18 = ssub.s32 %s13, 1
      %s19 = ssub.s32 %s13, 2
      %s26 = sadd.s32 1, %s21
      %p27 = scmp.ge.s32.totalorder %s26, 3
      %s28 = scalar_select %p27, 0, %s26
      %s29 = sadd.s32 1, %s20
      %s30 = scalar_select %p27, %s29, %s20
      %p31 = scmp.ge.s32.totalorder %s30, 1
      %s32 = scalar_select %p31, 0, %s30
      %s33 = ssub.s32 %s21, %s28
      %p34 = scmp.eq.s32.totalorder %s33, 0
      %s36 = sadd.s32 %s35, 1
      %s37 = scalar_select %p34, %s35, %s36
      %p40 = pneg %p34
      %p41 = scmp.eq.s32.totalorder %s13, 2
      %p42 = por %p40, %p41
      %p43 = scmp.ne.s32.totalorder %s35, %s38
      %p44 = scmp.eq.s32.totalorder %s13, 0
      %p45 = por %p43, %p44
      %p46 = scmp.ne.s32.totalorder %s35, %s38
      %p47 = scmp.eq.s32.totalorder %s18, 2
      %p48 = por %p46, %p47
      %p49 = scmp.ne.s32.totalorder %s38, %s39
      %p50 = scmp.eq.s32.totalorder %s18, 0
      %p51 = por %p49, %p50
      %p52 = scmp.ne.s32.totalorder %s38, %s39
      %p53 = scmp.eq.s32.totalorder %s19, 2
      %p54 = por %p52, %p53
      %p56 = scmp.ne.s32.totalorder %s39, %s55
      %p57 = scmp.eq.s32.totalorder %s19, 0
      %p58 = por %p56, %p57
      %s59 = ssub.s32 %s21, %s28
      %s60 = ssub.s32 %s20, %s32
      %s61 = sor.u32 %s59, %s60
      %p62 = scmp.eq.s32.totalorder %s61, 0
      %s64 = sadd.s32 %s63, 1
      %s65 = scalar_select %p62, %s63, %s64
      %p68 = pneg %p62
      %p69 = scmp.eq.s32.totalorder %s13, 2
      %p70 = por %p68, %p69
      %p71 = scmp.ne.s32.totalorder %s63, %s66
      %p72 = scmp.eq.s32.totalorder %s13, 0
      %p73 = por %p71, %p72
      %p74 = scmp.ne.s32.totalorder %s63, %s66
      %p75 = scmp.eq.s32.totalorder %s18, 2
      %p76 = por %p74, %p75
      %p77 = scmp.ne.s32.totalorder %s66, %s67
      %p78 = scmp.eq.s32.totalorder %s18, 0
      %p79 = por %p77, %p78
      %p80 = scmp.ne.s32.totalorder %s66, %s67
      %p81 = scmp.eq.s32.totalorder %s19, 2
      %p82 = por %p80, %p81
      %p84 = scmp.ne.s32.totalorder %s67, %s83
      %p85 = scmp.eq.s32.totalorder %s19, 0
      %p86 = por %p84, %p85
      %s87 = ssub.s32 %s20, %s32
      %p88 = scmp.eq.s32.totalorder %s87, 0
      %s90 = sadd.s32 %s89, 1
      %s91 = scalar_select %p88, %s89, %s90
      %p94 = pneg %p88
      %p95 = scmp.eq.s32.totalorder %s13, 2
      %p96 = por %p94, %p95
      %p97 = scmp.ne.s32.totalorder %s89, %s92
      %p98 = scmp.eq.s32.totalorder %s13, 0
      %p99 = por %p97, %p98
      %p100 = scmp.ne.s32.totalorder %s89, %s92
      %p101 = scmp.eq.s32.totalorder %s18, 2
      %p102 = por %p100, %p101
      %p103 = scmp.ne.s32.totalorder %s92, %s93
      %p104 = scmp.eq.s32.totalorder %s18, 0
      %p105 = por %p103, %p104
      %p106 = scmp.ne.s32.totalorder %s92, %s93
      %p107 = scmp.eq.s32.totalorder %s19, 2
      %p108 = por %p106, %p107
      %p110 = scmp.ne.s32.totalorder %s93, %s109
      %p111 = scmp.eq.s32.totalorder %s19, 0
      %p112 = por %p110, %p111
      %s113 = ssub.s32 %s20, %s32
      %p114 = scmp.eq.s32.totalorder %s113, 0
      %s116 = sadd.s32 %s115, 1
      %s117 = scalar_select %p114, %s115, %s116
      %p120 = pneg %p114
      %p121 = scmp.eq.s32.totalorder %s13, 2
      %p122 = por %p120, %p121
      %p123 = scmp.ne.s32.totalorder %s115, %s118
      %p124 = scmp.eq.s32.totalorder %s13, 0
      %p125 = por %p123, %p124
      %p126 = scmp.ne.s32.totalorder %s115, %s118
      %p127 = scmp.eq.s32.totalorder %s18, 2
      %p128 = por %p126, %p127
      %p129 = scmp.ne.s32.totalorder %s118, %s119
      %p130 = scmp.eq.s32.totalorder %s18, 0
      %p131 = por %p129, %p130
      %p132 = scmp.ne.s32.totalorder %s118, %s119
      %p133 = scmp.eq.s32.totalorder %s19, 2
      %p134 = por %p132, %p133
      %p136 = scmp.ne.s32.totalorder %s119, %s135
      %p137 = scmp.eq.s32.totalorder %s19, 0
      %p138 = por %p136, %p137
      %p139 = scmp.le.s32.totalorder 1, %s13
      %p140 = scmp.lt.s32.totalorder %s13, 4
      %p141 = pnand %p139, %p140
      %p142 = pneg %p141
      // Predicated region
      $region9: #{conv_vae_forward.14} parent=5 // pred_check
        _
      $region10: #{conv_vae_forward.14} parent=5 // pred_check_branch
        %144 = sbr.rel (%p141) target = $region12
      $region11: #{conv_vae_forward.14} parent=5 // pred_region
        %s145 = ssub.s32 %s13, 1
        // Predicated region
        $region13: #{conv_vae_forward.14} parent=11 // pred_check
          %p146 = pneg %p105
        $region14: #{conv_vae_forward.14} parent=11 // pred_check_branch
          %148 = sbr.rel (%p146) target = $region16
        $region15: #{conv_vae_forward.14} parent=11 // pred_region
          %s149 = smul.u32 2, %s22
          %151 = vsyncadd [#allocation7], 0
          %s152 = scalar_lea.hbm %s2, %s149
          %s154 = sshll.u32 %s152, 4
          %s155 = int_to_ptr.hbm [resolvable:$true] %s154
          %s156 = sshll.u32 [#allocation6], 4
          %s157 = int_to_ptr.vmem [resolvable:$true] %s156
          %159 = dma.hbm_to_vmem [thread:$0]  %s155, 32, %s157, [#allocation7]
        $region16: #{conv_vae_forward.14} parent=11 // pred_fallthru
          _
      $region12: #{conv_vae_forward.14} parent=5 // pred_fallthru
        _
      %p160 = scmp.lt.s32.totalorder %s13, 3
      // Predicated region
      $region17: #{conv_vae_forward.14} parent=5 // pred_check
        %p161 = pneg %p160
      $region18: #{conv_vae_forward.14} parent=5 // pred_check_branch
        %163 = sbr.rel (%p161) target = $region20
      $region19: #{conv_vae_forward.14} parent=5 // pred_region
        // Predicated region
        $region21: #{conv_vae_forward.14} parent=19 // pred_check
          %p164 = pneg %p45
        $region22: #{conv_vae_forward.14} parent=19 // pred_check_branch
          %166 = sbr.rel (%p164) target = $region24
        $region23: #{conv_vae_forward.14} parent=19 // pred_region
          %s167 = sand.u32 %s35, 1
          %s168 = sand.u32 %s35, 1
          %s169 = smul.addr %s168, 48
          %s170 = scalar_lea.vmem [#allocation3], %s169
          %s171 = smul.u32 3, %s21
          %s172 = smul.addr %s171, 4
          %s173 = scalar_lea.vmem %s0, %s172
          // Predicated region
          $region25: #{conv_vae_forward.14} parent=23 // pred_check
            _
          $region26: #{conv_vae_forward.14} parent=23 // pred_check_branch
            %175 = sbr.rel (0) target = $region28
          $region27: #{conv_vae_forward.14} parent=23 // pred_region
            // Predicated region
            $region29: #{conv_vae_forward.14} parent=27 // pred_check
              _
            $region30: #{conv_vae_forward.14} parent=27 // pred_check_branch
              %177 = sbr.rel (0) target = $region32
            $region31: #{conv_vae_forward.14} parent=27 // pred_region
              %s178 = scalar_lea.vmem %s173, 8
              %s179 = scalar_lea.vmem %s170, 8 [#allocation3]
              loop: start=0, step=1, limit=1
              $region33: #{conv_vae_forward.14} parent=31 // loop_pre_header
                _
              $region34: #{conv_vae_forward.14} parent=31 // loop_header
                %s181 = sphi 0, %s185
                %p182 = scmp.ge.s32.totalorder %s181, 1
                %s186 = sphi %s173, %s173
                %s187 = sphi %s170, %s170
              $region35: #{conv_vae_forward.14} parent=31 // loop_header_branch
                %184 = sbr.rel (%p182) target = $region39
              $region36: #{conv_vae_forward.14} parent=31 // loop_body
                %v188 = vld [vmem:[%s186] sm:$0xff]
                %189 = vst [vmem:[%s187] sm:$0xff] %v188
                %v190 = vld [vmem:[%s186 + $0x24] sm:$0xff]
                %191 = vst [vmem:[%s187 + $0xc] sm:$0xff] %v190
                %v192 = vld [vmem:[%s186 + $0x48] sm:$0xff]
                %193 = vst [vmem:[%s187 + $0x18] sm:$0xff] %v192
                %v194 = vld [vmem:[%s186 + $0x6c] sm:$0xff]
                %195 = vst [vmem:[%s187 + $0x24] sm:$0xff] %v194
              $region37: #{conv_vae_forward.14} parent=31 // loop_footer
                %s185 = sadd.s32 1, %s181
              $region38: #{conv_vae_forward.14} parent=31 // loop_footer_branch
                %180 = sbr.rel target = $region34
              $region39: #{conv_vae_forward.14} parent=31 // loop_exit
                _
              %s197 = ssub.s32 16, 1
              loop: start=0, step=1, limit=1
              $region40: #{conv_vae_forward.14} parent=31 // loop_pre_header
                _
              $region41: #{conv_vae_forward.14} parent=31 // loop_header
                %s199 = sphi 0, %s203
                %p200 = scmp.ge.s32.totalorder %s199, 1
                %s204 = sphi %s178, %s178
                %s205 = sphi %s179, %s179
              $region42: #{conv_vae_forward.14} parent=31 // loop_header_branch
                %202 = sbr.rel (%p200) target = $region46
              $region43: #{conv_vae_forward.14} parent=31 // loop_body
                %v206 = vld [vmem:[%s204] sm:%s197]
                %207 = vst [vmem:[%s205] sm:%s197] %v206
                %v208 = vld [vmem:[%s204 + $0x24] sm:%s197]
                %209 = vst [vmem:[%s205 + $0xc] sm:%s197] %v208
                %v210 = vld [vmem:[%s204 + $0x48] sm:%s197]
                %211 = vst [vmem:[%s205 + $0x18] sm:%s197] %v210
                %v212 = vld [vmem:[%s204 + $0x6c] sm:%s197]
                %213 = vst [vmem:[%s205 + $0x24] sm:%s197] %v212
              $region44: #{conv_vae_forward.14} parent=31 // loop_footer
                %s203 = sadd.s32 1, %s199
              $region45: #{conv_vae_forward.14} parent=31 // loop_footer_branch
                %198 = sbr.rel target = $region41
              $region46: #{conv_vae_forward.14} parent=31 // loop_exit
                _
            $region32: #{conv_vae_forward.14} parent=27 // pred_fallthru
              _
          $region28: #{conv_vae_forward.14} parent=23 // pred_fallthru
            _
          %214 = vnop
        $region24: #{conv_vae_forward.14} parent=19 // pred_fallthru
          _
        // Predicated region
        $region47: #{conv_vae_forward.14} parent=19 // pred_check
          %p215 = pneg %p73
        $region48: #{conv_vae_forward.14} parent=19 // pred_check_branch
          %217 = sbr.rel (%p215) target = $region50
        $region49: #{conv_vae_forward.14} parent=19 // pred_region
          %s218 = sand.u32 %s63, 1
          %s219 = scalar_lea.sflag [#allocation5], %s218
          %s220 = sand.u32 %s63, 1
          %s221 = smul.addr %s220, 384
          %s222 = scalar_lea.vmem [#allocation4], %s221
          %s223 = smul.u32 48, %s21
          %s224 = smul.u32 2, %s20
          %226 = vsyncadd %s219, 0
          %s227 = smul.addr %s223, 2
          %s228 = sadd.s32 %s224, %s227
          %s229 = smul.addr %s228, 4
          %s230 = scalar_lea.hbm %s1, %s229
          %s231 = sshll.u32 %s230, 4
          %s232 = int_to_ptr.hbm [resolvable:$true] %s231
          %s233 = sshll.u32 %s222, 4
          %s234 = int_to_ptr.vmem [resolvable:$true] %s233
          %239 = dma.hbm_to_vmem [thread:$0]  %s232, 6144, %s234, %s219, 128, 128, 8
        $region50: #{conv_vae_forward.14} parent=19 // pred_fallthru
          _
      $region20: #{conv_vae_forward.14} parent=5 // pred_fallthru
        _
      %p240 = scmp.le.s32.totalorder 1, %s13
      %p241 = scmp.lt.s32.totalorder %s13, 4
      %p242 = pnand %p240, %p241
      %p243 = pneg %p242
      // Predicated region
      $region51: #{conv_vae_forward.14} parent=5 // pred_check
        _
      $region52: #{conv_vae_forward.14} parent=5 // pred_check_branch
        %245 = sbr.rel (%p242) target = $region54
      $region53: #{conv_vae_forward.14} parent=5 // pred_region
        %s246 = ssub.s32 %s13, 1
        %s247 = sand.u32 %s38, 1
        %s248 = sand.u32 %s38, 1
        %s249 = smul.addr %s248, 48
        %s250 = scalar_lea.vmem [#allocation3], %s249
        // Predicated region
        $region55: #{conv_vae_forward.14} parent=53 // pred_check
          %p251 = pneg %p51
        $region56: #{conv_vae_forward.14} parent=53 // pred_check_branch
          %253 = sbr.rel (%p251) target = $region58
        $region57: #{conv_vae_forward.14} parent=53 // pred_region
          _
        $region58: #{conv_vae_forward.14} parent=53 // pred_fallthru
          _
        %s254 = sand.u32 %s66, 1
        %s255 = scalar_lea.sflag [#allocation5], %s254
        %s256 = sand.u32 %s66, 1
        %s257 = smul.addr %s256, 384
        %s258 = scalar_lea.vmem [#allocation4], %s257
        // Predicated region
        $region59: #{conv_vae_forward.14} parent=53 // pred_check
          %p259 = pneg %p79
        $region60: #{conv_vae_forward.14} parent=53 // pred_check_branch
          %261 = sbr.rel (%p259) target = $region62
        $region61: #{conv_vae_forward.14} parent=53 // pred_region
          %263 = dma.done %s255, 6144
        $region62: #{conv_vae_forward.14} parent=53 // pred_fallthru
          _
        // Predicated region
        $region63: #{conv_vae_forward.14} parent=53 // pred_check
          %p264 = pneg %p105
        $region64: #{conv_vae_forward.14} parent=53 // pred_check_branch
          %266 = sbr.rel (%p264) target = $region66
        $region65: #{conv_vae_forward.14} parent=53 // pred_region
          %268 = dma.done [#allocation7], 32
        $region66: #{conv_vae_forward.14} parent=53 // pred_fallthru
          _
        %s269 = sand.u32 %s38, 1
        %s270 = sand.u32 %s38, 1
        %s271 = smul.addr %s270, 48
        %s272 = scalar_lea.vmem [#allocation3], %s271
        %p273 = pneg %p51
        %p274 = pneg %p48
        %s275 = sand.u32 %s66, 1
        %s276 = scalar_lea.sflag [#allocation5], %s275
        %s277 = sand.u32 %s66, 1
        %s278 = smul.addr %s277, 384
        %s279 = scalar_lea.vmem [#allocation4], %s278
        %p280 = pneg %p79
        %p281 = pneg %p76
        %p282 = pneg %p105
        %p283 = pneg %p102
        %p284 = pneg %p131
        %p285 = pneg %p128
        %s286 = smul.u32 2, %s22
        %p287 = scmp.lt.s32.totalorder %s286, 1
        %s288 = scalar_select %p287, %s286, 1
        %s289 = smul.addr %s288, 4
        %s290 = scalar_lea.vmem %s3, %s289
        %s291 = smul.u32 3, %s23
        %s292 = smul.u32 48, %s23
        %s293 = smul.u32 2, %s22
        %s294 = smul.u32 2, %s22
        %s295 = smul.u32 2, %s22
        %p296 = scmp.lt.s32.totalorder %s295, 1
        %s297 = scalar_select %p296, %s295, 1
        %s298 = smul.addr %s297, 4
        %s299 = scalar_lea.vmem %s3, %s298
        %s300 = smul.u32 2, %s22
        %p301 = scmp.eq.s32.totalorder %s23, 0
        // Predicated region
        $region67: #{conv_vae_forward.14} parent=53 // pred_check
          %p302 = pneg %p301
        $region68: #{conv_vae_forward.14} parent=53 // pred_check_branch
          %304 = sbr.rel (%p302) target = $region70
        $region69: #{conv_vae_forward.14} parent=53 // pred_region
          %305 = vst [vmem:[#allocation2] sm:$0xff] 0.0
          %306 = vst [vmem:[#allocation2 + $0x8] sm:$0xff] 0.0
          %307 = vst [vmem:[#allocation2 + $0x10] sm:$0xff] 0.0
          %308 = vst [vmem:[#allocation2 + $0x18] sm:$0xff] 0.0
          %309 = vst [vmem:[#allocation2 + $0x20] sm:$0xff] 0.0
          %310 = vst [vmem:[#allocation2 + $0x28] sm:$0xff] 0.0
          %311 = vst [vmem:[#allocation2 + $0x30] sm:$0xff] 0.0
          %312 = vst [vmem:[#allocation2 + $0x38] sm:$0xff] 0.0
        $region70: #{conv_vae_forward.14} parent=53 // pred_fallthru
          _
        %v313 = vld [vmem:[#allocation2] sm:$0xff]
        %v314 = vld [vmem:[#allocation2 + $0x8] sm:$0xff]
        %v315 = vld [vmem:[#allocation2 + $0x10] sm:$0xff]
        %v316 = vld [vmem:[#allocation2 + $0x18] sm:$0xff]
        %v317 = vld [vmem:[#allocation2 + $0x20] sm:$0xff]
        %v318 = vld [vmem:[#allocation2 + $0x28] sm:$0xff]
        %v319 = vld [vmem:[#allocation2 + $0x30] sm:$0xff]
        %v320 = vld [vmem:[#allocation2 + $0x38] sm:$0xff]
        %v321 = vld [vmem:[%s250] sm:$0xff]
        %v322 = vld [vmem:[%s250 + $0x8] sm:$0xf]
        %v323 = vld [vmem:[%s250 + $0xc] sm:$0xff]
        %v324 = vld [vmem:[%s250 + $0x14] sm:$0xf]
        %v325 = vld [vmem:[%s250 + $0x18] sm:$0xff]
        %v326 = vld [vmem:[%s250 + $0x20] sm:$0xf]
        %v327 = vld [vmem:[%s250 + $0x24] sm:$0xff]
        %v328 = vld [vmem:[%s250 + $0x2c] sm:$0xf]
        %v329 = vld [vmem:[%s258] sm:$0xff]
        %v330 = vld [vmem:[%s258 + $0x8] sm:$0xff]
        %v331 = vld [vmem:[%s258 + $0x10] sm:$0xff]
        %v332 = vld [vmem:[%s258 + $0x18] sm:$0xff]
        %v333 = vld [vmem:[%s258 + $0x20] sm:$0xff]
        %v334 = vld [vmem:[%s258 + $0x28] sm:$0xff]
        %v335 = vld [vmem:[%s258 + $0x30] sm:$0xff]
        %v336 = vld [vmem:[%s258 + $0x38] sm:$0xff]
        %v337 = vld [vmem:[%s258 + $0x40] sm:$0xff]
        %v338 = vld [vmem:[%s258 + $0x48] sm:$0xff]
        %v339 = vld [vmem:[%s258 + $0x50] sm:$0xff]
        %v340 = vld [vmem:[%s258 + $0x58] sm:$0xff]
        %v341 = vld [vmem:[%s258 + $0x60] sm:$0xff]
        %v342 = vld [vmem:[%s258 + $0x68] sm:$0xff]
        %v343 = vld [vmem:[%s258 + $0x70] sm:$0xff]
        %v344 = vld [vmem:[%s258 + $0x78] sm:$0xff]
        %v345 = vld [vmem:[%s258 + $0x80] sm:$0xff]
        %v346 = vld [vmem:[%s258 + $0x88] sm:$0xff]
        %v347 = vld [vmem:[%s258 + $0x90] sm:$0xff]
        %v348 = vld [vmem:[%s258 + $0x98] sm:$0xff]
        %v349 = vld [vmem:[%s258 + $0xa0] sm:$0xff]
        %v350 = vld [vmem:[%s258 + $0xa8] sm:$0xff]
        %v351 = vld [vmem:[%s258 + $0xb0] sm:$0xff]
        %v352 = vld [vmem:[%s258 + $0xb8] sm:$0xff]
        %v353 = vld [vmem:[%s258 + $0xc0] sm:$0xff]
        %v354 = vld [vmem:[%s258 + $0xc8] sm:$0xff]
        %v355 = vld [vmem:[%s258 + $0xd0] sm:$0xff]
        %v356 = vld [vmem:[%s258 + $0xd8] sm:$0xff]
        %v357 = vld [vmem:[%s258 + $0xe0] sm:$0xff]
        %v358 = vld [vmem:[%s258 + $0xe8] sm:$0xff]
        %v359 = vld [vmem:[%s258 + $0xf0] sm:$0xff]
        %v360 = vld [vmem:[%s258 + $0xf8] sm:$0xff]
        %v361 = vld [vmem:[%s258 + $0x100] sm:$0xff]
        %v362 = vld [vmem:[%s258 + $0x108] sm:$0xff]
        %v363 = vld [vmem:[%s258 + $0x110] sm:$0xff]
        %v364 = vld [vmem:[%s258 + $0x118] sm:$0xff]
        %v365 = vld [vmem:[%s258 + $0x120] sm:$0xff]
        %v366 = vld [vmem:[%s258 + $0x128] sm:$0xff]
        %v367 = vld [vmem:[%s258 + $0x130] sm:$0xff]
        %v368 = vld [vmem:[%s258 + $0x138] sm:$0xff]
        %v369 = vld [vmem:[%s258 + $0x140] sm:$0xff]
        %v370 = vld [vmem:[%s258 + $0x148] sm:$0xff]
        %v371 = vld [vmem:[%s258 + $0x150] sm:$0xff]
        %v372 = vld [vmem:[%s258 + $0x158] sm:$0xff]
        %v373 = vld [vmem:[%s258 + $0x160] sm:$0xff]
        %v374 = vld [vmem:[%s258 + $0x168] sm:$0xff]
        %v375 = vld [vmem:[%s258 + $0x170] sm:$0xff]
        %v376 = vld [vmem:[%s258 + $0x178] sm:$0xff]
        %v385 = vunpack.c.l.b16 %v321
        %v386 = vunpack.c.h.b16 %v321
        %v387 = vunpack.c.l.b16 %v322
        %v388 = vunpack.c.l.b16 %v323
        %v389 = vunpack.c.h.b16 %v323
        %v390 = vunpack.c.l.b16 %v324
        %v391 = vunpack.c.l.b16 %v325
        %v392 = vunpack.c.h.b16 %v325
        %v393 = vunpack.c.l.b16 %v326
        %v394 = vunpack.c.l.b16 %v327
        %v395 = vunpack.c.h.b16 %v327
        %v396 = vunpack.c.l.b16 %v328
        %v397 = vpack.c.b16 %v388, %v385
        %v398 = vpack.c.b16 %v389, %v386
        %v399 = vpack.c.b16 %v390, %v387
        %v400 = vpack.c.b16 %v394, %v391
        %v401 = vpack.c.b16 %v395, %v392
        %v402 = vpack.c.b16 %v396, %v393
        %v457 = vunpack.c.l.b16 %v329
        %v458 = vunpack.c.h.b16 %v329
        %v459 = vunpack.c.l.b16 %v330
        %v460 = vunpack.c.h.b16 %v330
        %v461 = vunpack.c.l.b16 %v331
        %v462 = vunpack.c.h.b16 %v331
        %v463 = vunpack.c.l.b16 %v332
        %v464 = vunpack.c.h.b16 %v332
        %v465 = vunpack.c.l.b16 %v333
        %v466 = vunpack.c.h.b16 %v333
        %v467 = vunpack.c.l.b16 %v334
        %v468 = vunpack.c.h.b16 %v334
        %v469 = vunpack.c.l.b16 %v335
        %v470 = vunpack.c.h.b16 %v335
        %v471 = vunpack.c.l.b16 %v336
        %v472 = vunpack.c.h.b16 %v336
        %v473 = vunpack.c.l.b16 %v337
        %v474 = vunpack.c.h.b16 %v337
        %v475 = vunpack.c.l.b16 %v338
        %v476 = vunpack.c.h.b16 %v338
        %v477 = vunpack.c.l.b16 %v339
        %v478 = vunpack.c.h.b16 %v339
        %v479 = vunpack.c.l.b16 %v340
        %v480 = vunpack.c.h.b16 %v340
        %v481 = vunpack.c.l.b16 %v341
        %v482 = vunpack.c.h.b16 %v341
        %v483 = vunpack.c.l.b16 %v342
        %v484 = vunpack.c.h.b16 %v342
        %v485 = vunpack.c.l.b16 %v343
        %v486 = vunpack.c.h.b16 %v343
        %v487 = vunpack.c.l.b16 %v344
        %v488 = vunpack.c.h.b16 %v344
        %v489 = vunpack.c.l.b16 %v345
        %v490 = vunpack.c.h.b16 %v345
        %v491 = vunpack.c.l.b16 %v346
        %v492 = vunpack.c.h.b16 %v346
        %v493 = vunpack.c.l.b16 %v347
        %v494 = vunpack.c.h.b16 %v347
        %v495 = vunpack.c.l.b16 %v348
        %v496 = vunpack.c.h.b16 %v348
        %v497 = vunpack.c.l.b16 %v349
        %v498 = vunpack.c.h.b16 %v349
        %v499 = vunpack.c.l.b16 %v350
        %v500 = vunpack.c.h.b16 %v350
        %v501 = vunpack.c.l.b16 %v351
        %v502 = vunpack.c.h.b16 %v351
        %v503 = vunpack.c.l.b16 %v352
        %v504 = vunpack.c.h.b16 %v352
        %v505 = vunpack.c.l.b16 %v353
        %v506 = vunpack.c.h.b16 %v353
        %v507 = vunpack.c.l.b16 %v354
        %v508 = vunpack.c.h.b16 %v354
        %v509 = vunpack.c.l.b16 %v355
        %v510 = vunpack.c.h.b16 %v355
        %v511 = vunpack.c.l.b16 %v356
        %v512 = vunpack.c.h.b16 %v356
        %v513 = vunpack.c.l.b16 %v357
        %v514 = vunpack.c.h.b16 %v357
        %v515 = vunpack.c.l.b16 %v358
        %v516 = vunpack.c.h.b16 %v358
        %v517 = vunpack.c.l.b16 %v359
        %v518 = vunpack.c.h.b16 %v359
        %v519 = vunpack.c.l.b16 %v360
        %v520 = vunpack.c.h.b16 %v360
        %v521 = vunpack.c.l.b16 %v361
        %v522 = vunpack.c.h.b16 %v361
        %v523 = vunpack.c.l.b16 %v362
        %v524 = vunpack.c.h.b16 %v362
        %v525 = vunpack.c.l.b16 %v363
        %v526 = vunpack.c.h.b16 %v363
        %v527 = vunpack.c.l.b16 %v364
        %v528 = vunpack.c.h.b16 %v364
        %v529 = vunpack.c.l.b16 %v365
        %v530 = vunpack.c.h.b16 %v365
        %v531 = vunpack.c.l.b16 %v366
        %v532 = vunpack.c.h.b16 %v366
        %v533 = vunpack.c.l.b16 %v367
        %v534 = vunpack.c.h.b16 %v367
        %v535 = vunpack.c.l.b16 %v368
        %v536 = vunpack.c.h.b16 %v368
        %v537 = vunpack.c.l.b16 %v369
        %v538 = vunpack.c.h.b16 %v369
        %v539 = vunpack.c.l.b16 %v370
        %v540 = vunpack.c.h.b16 %v370
        %v541 = vunpack.c.l.b16 %v371
        %v542 = vunpack.c.h.b16 %v371
        %v543 = vunpack.c.l.b16 %v372
        %v544 = vunpack.c.h.b16 %v372
        %v545 = vunpack.c.l.b16 %v373
        %v546 = vunpack.c.h.b16 %v373
        %v547 = vunpack.c.l.b16 %v374
        %v548 = vunpack.c.h.b16 %v374
        %v549 = vunpack.c.l.b16 %v375
        %v550 = vunpack.c.h.b16 %v375
        %v551 = vunpack.c.l.b16 %v376
        %v552 = vunpack.c.h.b16 %v376
        %v553 = vpack.c.b16 %v459, %v457
        %v554 = vpack.c.b16 %v460, %v458
        %v555 = vpack.c.b16 %v463, %v461
        %v556 = vpack.c.b16 %v464, %v462
        %v557 = vpack.c.b16 %v467, %v465
        %v558 = vpack.c.b16 %v468, %v466
        %v559 = vpack.c.b16 %v471, %v469
        %v560 = vpack.c.b16 %v472, %v470
        %v561 = vpack.c.b16 %v475, %v473
        %v562 = vpack.c.b16 %v476, %v474
        %v563 = vpack.c.b16 %v479, %v477
        %v564 = vpack.c.b16 %v480, %v478
        %v565 = vpack.c.b16 %v483, %v481
        %v566 = vpack.c.b16 %v484, %v482
        %v567 = vpack.c.b16 %v487, %v485
        %v568 = vpack.c.b16 %v488, %v486
        %v569 = vpack.c.b16 %v491, %v489
        %v570 = vpack.c.b16 %v492, %v490
        %v571 = vpack.c.b16 %v495, %v493
        %v572 = vpack.c.b16 %v496, %v494
        %v573 = vpack.c.b16 %v499, %v497
        %v574 = vpack.c.b16 %v500, %v498
        %v575 = vpack.c.b16 %v503, %v501
        %v576 = vpack.c.b16 %v504, %v502
        %v577 = vpack.c.b16 %v507, %v505
        %v578 = vpack.c.b16 %v508, %v506
        %v579 = vpack.c.b16 %v511, %v509
        %v580 = vpack.c.b16 %v512, %v510
        %v581 = vpack.c.b16 %v515, %v513
        %v582 = vpack.c.b16 %v516, %v514
        %v583 = vpack.c.b16 %v519, %v517
        %v584 = vpack.c.b16 %v520, %v518
        %v585 = vpack.c.b16 %v523, %v521
        %v586 = vpack.c.b16 %v524, %v522
        %v587 = vpack.c.b16 %v527, %v525
        %v588 = vpack.c.b16 %v528, %v526
        %v589 = vpack.c.b16 %v531, %v529
        %v590 = vpack.c.b16 %v532, %v530
        %v591 = vpack.c.b16 %v535, %v533
        %v592 = vpack.c.b16 %v536, %v534
        %v593 = vpack.c.b16 %v539, %v537
        %v594 = vpack.c.b16 %v540, %v538
        %v595 = vpack.c.b16 %v543, %v541
        %v596 = vpack.c.b16 %v544, %v542
        %v597 = vpack.c.b16 %v547, %v545
        %v598 = vpack.c.b16 %v548, %v546
        %v599 = vpack.c.b16 %v551, %v549
        %v600 = vpack.c.b16 %v552, %v550
        %649 = vmatpush.bf16.msra.mxu0 %v567
        %650 = vmatpush.bf16.msra.mxu0 %v565
        %651 = vmatpush.bf16.msra.mxu0 %v563
        %652 = vmatpush.bf16.msra.mxu0 %v561
        %653 = vmatpush.bf16.msra.mxu0 %v559
        %654 = vmatpush.bf16.msra.mxu0 %v557
        %655 = vmatpush.bf16.msra.mxu0 %v555
        %656 = vmatpush.bf16.msra.mxu0 %v553
        %657 = vmatmul.bf16.gmra.mxu0 %v397
        %v658 = vpop.f32.mrf.mxu0
        %v659 = vadd.f32 0.0, %v658
        %v660 = vpop.f32.mrf.mxu0
        %v661 = vadd.f32 0.0, %v660
        %662 = vmatmul.bf16.gmra.mxu0 %v400
        %v663 = vpop.f32.mrf.mxu0
        %v664 = vadd.f32 0.0, %v663
        %v665 = vpop.f32.mrf.mxu0
        %v666 = vadd.f32 0.0, %v665
        %667 = vdwg.mxu0
        %668 = vmatpush.bf16.msra.mxu0 %v583
        %669 = vmatpush.bf16.msra.mxu0 %v581
        %670 = vmatpush.bf16.msra.mxu0 %v579
        %671 = vmatpush.bf16.msra.mxu0 %v577
        %672 = vmatpush.bf16.msra.mxu0 %v575
        %673 = vmatpush.bf16.msra.mxu0 %v573
        %674 = vmatpush.bf16.msra.mxu0 %v571
        %675 = vmatpush.bf16.msra.mxu0 %v569
        %676 = vmatmul.bf16.gmra.mxu0 %v398
        %v677 = vpop.f32.mrf.mxu0
        %v678 = vadd.f32 %v659, %v677
        %v679 = vpop.f32.mrf.mxu0
        %v680 = vadd.f32 %v661, %v679
        %681 = vmatmul.bf16.gmra.mxu0 %v401
        %v682 = vpop.f32.mrf.mxu0
        %v683 = vadd.f32 %v664, %v682
        %v684 = vpop.f32.mrf.mxu0
        %v685 = vadd.f32 %v666, %v684
        %686 = vdwg.mxu0
        %687 = vmatpush.bf16.msra.mxu0 %v599
        %688 = vmatpush.bf16.msra.mxu0 %v597
        %689 = vmatpush.bf16.msra.mxu0 %v595
        %690 = vmatpush.bf16.msra.mxu0 %v593
        %691 = vmatpush.bf16.msra.mxu0 %v591
        %692 = vmatpush.bf16.msra.mxu0 %v589
        %693 = vmatpush.bf16.msra.mxu0 %v587
        %694 = vmatpush.bf16.msra.mxu0 %v585
        %695 = vmatmul.bf16.gmra.mxu0 %v399
        %v696 = vpop.f32.mrf.mxu0
        %v697 = vadd.f32 %v678, %v696
        %v698 = vpop.f32.mrf.mxu0
        %v699 = vadd.f32 %v680, %v698
        %700 = vmatmul.bf16.gmra.mxu0 %v402
        %v701 = vpop.f32.mrf.mxu0
        %v702 = vadd.f32 %v683, %v701
        %v703 = vpop.f32.mrf.mxu0
        %v704 = vadd.f32 %v685, %v703
        %705 = vdwg.mxu0
        %706 = vmatpush.bf16.msra.mxu0 %v568
        %707 = vmatpush.bf16.msra.mxu0 %v566
        %708 = vmatpush.bf16.msra.mxu0 %v564
        %709 = vmatpush.bf16.msra.mxu0 %v562
        %710 = vmatpush.bf16.msra.mxu0 %v560
        %711 = vmatpush.bf16.msra.mxu0 %v558
        %712 = vmatpush.bf16.msra.mxu0 %v556
        %713 = vmatpush.bf16.msra.mxu0 %v554
        %714 = vmatmul.bf16.gmra.mxu0 %v397
        %v715 = vpop.f32.mrf.mxu0
        %v716 = vadd.f32 0.0, %v715
        %v717 = vpop.f32.mrf.mxu0
        %v718 = vadd.f32 0.0, %v717
        %719 = vmatmul.bf16.gmra.mxu0 %v400
        %v720 = vpop.f32.mrf.mxu0
        %v721 = vadd.f32 0.0, %v720
        %v722 = vpop.f32.mrf.mxu0
        %v723 = vadd.f32 0.0, %v722
        %724 = vdwg.mxu0
        %725 = vmatpush.bf16.msra.mxu0 %v584
        %726 = vmatpush.bf16.msra.mxu0 %v582
        %727 = vmatpush.bf16.msra.mxu0 %v580
        %728 = vmatpush.bf16.msra.mxu0 %v578
        %729 = vmatpush.bf16.msra.mxu0 %v576
        %730 = vmatpush.bf16.msra.mxu0 %v574
        %731 = vmatpush.bf16.msra.mxu0 %v572
        %732 = vmatpush.bf16.msra.mxu0 %v570
        %733 = vmatmul.bf16.gmra.mxu0 %v398
        %v734 = vpop.f32.mrf.mxu0
        %v735 = vadd.f32 %v716, %v734
        %v736 = vpop.f32.mrf.mxu0
        %v737 = vadd.f32 %v718, %v736
        %738 = vmatmul.bf16.gmra.mxu0 %v401
        %v739 = vpop.f32.mrf.mxu0
        %v740 = vadd.f32 %v721, %v739
        %v741 = vpop.f32.mrf.mxu0
        %v742 = vadd.f32 %v723, %v741
        %743 = vdwg.mxu0
        %744 = vmatpush.bf16.msra.mxu0 %v600
        %745 = vmatpush.bf16.msra.mxu0 %v598
        %746 = vmatpush.bf16.msra.mxu0 %v596
        %747 = vmatpush.bf16.msra.mxu0 %v594
        %748 = vmatpush.bf16.msra.mxu0 %v592
        %749 = vmatpush.bf16.msra.mxu0 %v590
        %750 = vmatpush.bf16.msra.mxu0 %v588
        %751 = vmatpush.bf16.msra.mxu0 %v586
        %752 = vmatmul.bf16.gmra.mxu0 %v399
        %v753 = vpop.f32.mrf.mxu0
        %v754 = vadd.f32 %v735, %v753
        %v755 = vpop.f32.mrf.mxu0
        %v756 = vadd.f32 %v737, %v755
        %757 = vmatmul.bf16.gmra.mxu0 %v402
        %v758 = vpop.f32.mrf.mxu0
        %v759 = vadd.f32 %v740, %v758
        %v760 = vpop.f32.mrf.mxu0
        %v761 = vadd.f32 %v742, %v760
        %762 = vdwg.mxu0
        %v763 = vadd.f32 %v313, %v697
        %v764 = vadd.f32 %v314, %v754
        %v765 = vadd.f32 %v315, %v699
        %v766 = vadd.f32 %v316, %v756
        %v767 = vadd.f32 %v317, %v702
        %v768 = vadd.f32 %v318, %v759
        %v769 = vadd.f32 %v319, %v704
        %v770 = vadd.f32 %v320, %v761
        %771 = vst [vmem:[#allocation2] sm:$0xff] %v763
        %772 = vst [vmem:[#allocation2 + $0x8] sm:$0xff] %v764
        %773 = vst [vmem:[#allocation2 + $0x10] sm:$0xff] %v765
        %774 = vst [vmem:[#allocation2 + $0x18] sm:$0xff] %v766
        %775 = vst [vmem:[#allocation2 + $0x20] sm:$0xff] %v767
        %776 = vst [vmem:[#allocation2 + $0x28] sm:$0xff] %v768
        %777 = vst [vmem:[#allocation2 + $0x30] sm:$0xff] %v769
        %778 = vst [vmem:[#allocation2 + $0x38] sm:$0xff] %v770
        %p779 = scmp.eq.s32.totalorder %s23, 2
        // Predicated region
        $region71: #{conv_vae_forward.14} parent=53 // pred_check
          %p780 = pneg %p779
        $region72: #{conv_vae_forward.14} parent=53 // pred_check_branch
          %782 = sbr.rel (%p780) target = $region74
        $region73: #{conv_vae_forward.14} parent=53 // pred_region
          %v783 = vld [vmem:[#allocation2] sm:$0xff]
          %v784 = vld [vmem:[#allocation2 + $0x8] sm:$0xff]
          %v785 = vld [vmem:[#allocation2 + $0x10] sm:$0xff]
          %v786 = vld [vmem:[#allocation2 + $0x18] sm:$0xff]
          %v787 = vld [vmem:[#allocation2 + $0x20] sm:$0xff]
          %v788 = vld [vmem:[#allocation2 + $0x28] sm:$0xff]
          %v789 = vld [vmem:[#allocation2 + $0x30] sm:$0xff]
          %v790 = vld [vmem:[#allocation2 + $0x38] sm:$0xff]
          %v791 = vld [vmem:[#allocation6] sm:$0x3]
          %v793 = vperm.slane %v791, 0
          %v794 = vperm.slane %v791, 1
          %v797 = vadd.f32 %v783, %v793
          %v798 = vadd.f32 %v784, %v794
          %v799 = vadd.f32 %v785, %v793
          %v800 = vadd.f32 %v786, %v794
          %v801 = vadd.f32 %v787, %v793
          %v802 = vadd.f32 %v788, %v794
          %v803 = vadd.f32 %v789, %v793
          %v804 = vadd.f32 %v790, %v794
          %v805 = vadd.f32 %v797, %v799
          %v806 = vadd.f32 %v805, %v801
          %v807 = vadd.f32 %v806, %v803
          %v808 = vrot.slane %v807, 4
          %v809 = vadd.f32 %v807, %v808
          %v810 = vrot.slane %v809, 2
          %v811 = vadd.f32 %v809, %v810
          %v812 = vrot.slane %v811, 1
          %v813 = vadd.f32 %v811, %v812
          %v814 = vadd.f32 %v798, %v800
          %v815 = vadd.f32 %v814, %v802
          %v816 = vadd.f32 %v815, %v804
          %v817 = vrot.slane %v816, 4
          %v818 = vadd.f32 %v816, %v817
          %v819 = vrot.slane %v818, 2
          %v820 = vadd.f32 %v818, %v819
          %v821 = vrot.slane %v820, 1
          %v822 = vadd.f32 %v820, %v821
          %v823 = vrcp.pop 32.0
          %v824 = vmul.f32 32.0, %v823
          %v825 = vsub.f32 1.0, %v824
          %v826 = vmul.f32 %v823, %v825
          %v827 = vadd.f32 %v823, %v826
          %vm828 = vweird.f32 %v823
          %v829 = vsel %vm828, %v823, %v827
          %v830 = vmul.f32 %v813, %v829
          %v831 = vmul.f32 %v822, %v829
          %v832 = vadd.f32 %v830, 0.0
          %834 = vrot.lane.b32.xlu0 %v830, 64
          %v835 = vpop.permute.xlu0 %834
          %v837 = vadd.f32 %v832, %v835
          %v838 = vadd.f32 %v837, %v831
          %840 = vrot.lane.b32.xlu0 %v831, 64
          %v841 = vpop.permute.xlu0 %840
          %v843 = vadd.f32 %v838, %v841
          %v844 = vrcp.pop 4.0
          %v845 = vmul.f32 4.0, %v844
          %v846 = vsub.f32 1.0, %v845
          %v847 = vmul.f32 %v844, %v846
          %v848 = vadd.f32 %v844, %v847
          %vm849 = vweird.f32 %v844
          %v850 = vsel %vm849, %v844, %v848
          %v851 = vmul.f32 %v843, %v850
          %853 = vrot.lane.b32.xlu0 %v851, 64
          %v854 = vpop.permute.xlu0 %853
          %vm856 = vcmask 523264
          %v857 = vsel %vm856, %v851, %v854
          %v858 = vperm.slane %v857, 0
          %v859 = vsub.f32 %v797, %v858
          %v860 = vsub.f32 %v798, %v858
          %v861 = vsub.f32 %v799, %v858
          %v862 = vsub.f32 %v800, %v858
          %v863 = vsub.f32 %v801, %v858
          %v864 = vsub.f32 %v802, %v858
          %v865 = vsub.f32 %v803, %v858
          %v866 = vsub.f32 %v804, %v858
          %v867 = vmul.f32 %v859, %v859
          %v868 = vmul.f32 %v860, %v860
          %v869 = vmul.f32 %v861, %v861
          %v870 = vmul.f32 %v862, %v862
          %v871 = vmul.f32 %v863, %v863
          %v872 = vmul.f32 %v864, %v864
          %v873 = vmul.f32 %v865, %v865
          %v874 = vmul.f32 %v866, %v866
          %v875 = vadd.f32 %v867, %v869
          %v876 = vadd.f32 %v875, %v871
          %v877 = vadd.f32 %v876, %v873
          %v878 = vrot.slane %v877, 4
          %v879 = vadd.f32 %v877, %v878
          %v880 = vrot.slane %v879, 2
          %v881 = vadd.f32 %v879, %v880
          %v882 = vrot.slane %v881, 1
          %v883 = vadd.f32 %v881, %v882
          %v884 = vadd.f32 %v868, %v870
          %v885 = vadd.f32 %v884, %v872
          %v886 = vadd.f32 %v885, %v874
          %v887 = vrot.slane %v886, 4
          %v888 = vadd.f32 %v886, %v887
          %v889 = vrot.slane %v888, 2
          %v890 = vadd.f32 %v888, %v889
          %v891 = vrot.slane %v890, 1
          %v892 = vadd.f32 %v890, %v891
          %v893 = vmul.f32 %v883, %v829
          %v894 = vmul.f32 %v892, %v829
          %v895 = vadd.f32 %v893, 0.0
          %897 = vrot.lane.b32.xlu0 %v893, 64
          %v898 = vpop.permute.xlu0 %897
          %v900 = vadd.f32 %v895, %v898
          %v901 = vadd.f32 %v900, %v894
          %903 = vrot.lane.b32.xlu0 %v894, 64
          %v904 = vpop.permute.xlu0 %903
          %v906 = vadd.f32 %v901, %v904
          %v907 = vmul.f32 %v906, %v850
          %909 = vrot.lane.b32.xlu0 %v907, 64
          %v910 = vpop.permute.xlu0 %909
          %v912 = vsel %vm856, %v907, %v910
          %v913 = vadd.f32 %v912, 1e-05
          %v914 = vrsqrt.pop %v913
          %v915 = vmul.f32 %v914, %v913
          %v916 = vmul.f32 %v915, %v914
          %v917 = vmul.f32 0.5, %v916
          %v918 = vsub.f32 1.5, %v917
          %v919 = vmul.f32 %v914, %v918
          %vm920 = vweird.f32 %v913
          %vm921 = vweird.f32 %v914
          %vm922 = vmor %vm920, %vm921
          %v923 = vsel %vm922, %v914, %v919
          %v924 = vperm.slane %v923, 0
          %v925 = vmul.f32 %v859, %v924
          %v926 = vmul.f32 %v860, %v924
          %v927 = vmul.f32 %v861, %v924
          %v928 = vmul.f32 %v862, %v924
          %v929 = vmul.f32 %v863, %v924
          %v930 = vmul.f32 %v864, %v924
          %v931 = vmul.f32 %v865, %v924
          %v932 = vmul.f32 %v866, %v924
          %v933 = vmax.f32 %v925, 0.0
          %v934 = vmax.f32 %v926, 0.0
          %v935 = vmax.f32 %v927, 0.0
          %v936 = vmax.f32 %v928, 0.0
          %v937 = vmax.f32 %v929, 0.0
          %v938 = vmax.f32 %v930, 0.0
          %v939 = vmax.f32 %v931, 0.0
          %v940 = vmax.f32 %v932, 0.0
          %v941 = vpack.c.bf16 %v934, %v933
          %v942 = vpack.c.bf16 %v936, %v935
          %v943 = vpack.c.bf16 %v938, %v937
          %v944 = vpack.c.bf16 %v940, %v939
          %945 = vst [vmem:[%s299] sm:$0xff] %v941
          %946 = vst [vmem:[%s299 + $0x8] sm:$0xff] %v942
          %947 = vst [vmem:[%s299 + $0x10] sm:$0xff] %v943
          %948 = vst [vmem:[%s299 + $0x18] sm:$0xff] %v944
        $region74: #{conv_vae_forward.14} parent=53 // pred_fallthru
          _
        %s949 = smul.u32 2, %s22
        %p950 = scmp.lt.s32.totalorder %s949, 1
        %s951 = scalar_select %p950, %s949, 1
        %s952 = smul.addr %s951, 4
        %s953 = scalar_lea.vmem %s3, %s952
        // Predicated region
        $region75: #{conv_vae_forward.14} parent=53 // pred_check
          %p954 = pneg %p128
        $region76: #{conv_vae_forward.14} parent=53 // pred_check_branch
          %956 = sbr.rel (%p954) target = $region78
        $region77: #{conv_vae_forward.14} parent=53 // pred_region
          %s957 = smul.u32 2, %s22
        $region78: #{conv_vae_forward.14} parent=53 // pred_fallthru
          _
        // Predicated region
        $region79: #{conv_vae_forward.14} parent=53 // pred_check
          %p958 = pneg %p128
        $region80: #{conv_vae_forward.14} parent=53 // pred_check_branch
          %960 = sbr.rel (%p958) target = $region82
        $region81: #{conv_vae_forward.14} parent=53 // pred_region
          %s961 = smul.u32 2, %s22
          %p962 = scmp.lt.s32.totalorder %s961, 1
          %s963 = scalar_select %p962, %s961, 1
          %s964 = smul.addr %s963, 4
          %s965 = scalar_lea.vmem %s3, %s964
        $region82: #{conv_vae_forward.14} parent=53 // pred_fallthru
          _
      $region54: #{conv_vae_forward.14} parent=5 // pred_fallthru
        _
      %p966 = scmp.le.s32.totalorder 2, %s13
      // Predicated region
      $region83: #{conv_vae_forward.14} parent=5 // pred_check
        %p967 = pneg %p966
      $region84: #{conv_vae_forward.14} parent=5 // pred_check_branch
        %969 = sbr.rel (%p967) target = $region86
      $region85: #{conv_vae_forward.14} parent=5 // pred_region
        %s970 = ssub.s32 %s13, 2
      $region86: #{conv_vae_forward.14} parent=5 // pred_fallthru
        _
    $region6: #{conv_vae_forward.14} parent=1 // loop_footer
      %s17 = sadd.s32 1, %s13
    $region7: #{conv_vae_forward.14} parent=1 // loop_footer_branch
      %12 = sbr.rel target = $region3
    $region8: #{conv_vae_forward.14} parent=1 // loop_exit
      _
    %971 = vsyncpa [#allocation5], 1
    %s972 = scalar_lea.sflag [#allocation5], 1
    %973 = vsyncpa %s972, 1
    %974 = vsyncpa [#allocation7], 1

// kernel: conv_vae_forward.15
$region0: #{conv_vae_forward.15}
  #allocation0 [shape = 'u32[]', space=smem, size = 0x4, offset = 0x4, fixed_abs, tag = 'smem constant byte address 0x4 - core index']
  #allocation1 [shape = 'u32[72,128]{1,0:T(1,128)}', space=vmem, size = 0x9000, scoped, tag = 'internal scratch']
  #allocation2 [shape = 'f32[128,4]{1,0:T(8,128)}', space=vmem, size = 0x10000, scoped, tag = 'scratch operand']
  %s0 = inlined_call_operand.vmem [shape: bf16[128,576], index: 0, kind: input, shape index: {}]
  %s1 = inlined_call_operand.vmem [shape: bf16[576,4], index: 1, kind: input, shape index: {}]
  %s2 = inlined_call_operand.vmem [shape: f32[1,4], index: 2, kind: input, shape index: {}]
  %s3 = inlined_call_operand.vmem [shape: f32[128,4], index: 3, kind: output, shape index: {}]
  %s4 = sld [smem:[#allocation0]]
  $region30: #{conv_vae_forward.15} parent=0
    _
  %s6 = ssub.s32 1, %s4
  %s7 = scalar_select 0, %s6, %s4
  // Predicated region
  $region2: #{conv_vae_forward.15} parent=0 // pred_check
    _
  $region3: #{conv_vae_forward.15} parent=0 // pred_check_branch
    %9 = sbr.rel (0) target = $region5
  $region4: #{conv_vae_forward.15} parent=0 // pred_region
    _
  $region5: #{conv_vae_forward.15} parent=0 // pred_fallthru
    _
  // Predicated region
  $region6: #{conv_vae_forward.15} parent=0 // pred_check
    _
  $region7: #{conv_vae_forward.15} parent=0 // pred_check_branch
    %11 = sbr.rel (0) target = $region9
  $region8: #{conv_vae_forward.15} parent=0 // pred_region
    _
  $region9: #{conv_vae_forward.15} parent=0 // pred_fallthru
    _
  // Predicated region
  $region10: #{conv_vae_forward.15} parent=0 // pred_check
    _
  $region11: #{conv_vae_forward.15} parent=0 // pred_check_branch
    %13 = sbr.rel (0) target = $region13
  $region12: #{conv_vae_forward.15} parent=0 // pred_region
    _
  $region13: #{conv_vae_forward.15} parent=0 // pred_fallthru
    _
  %p15 = scmp.eq.s32.totalorder 0, 0
  // Predicated region
  $region14: #{conv_vae_forward.15} parent=0 // pred_check
    %p16 = pneg %p15
  $region15: #{conv_vae_forward.15} parent=0 // pred_check_branch
    %18 = sbr.rel (%p16) target = $region17
  $region16: #{conv_vae_forward.15} parent=0 // pred_region
    %vm19 = vcmask 31744
    %20 = vst.msk [vmem:[#allocation2] sm:$0xff] %vm19, 0.0
    %21 = vst.msk [vmem:[#allocation2 + $0x8] sm:$0xff] %vm19, 0.0
    %22 = vst.msk [vmem:[#allocation2 + $0x10] sm:$0xff] %vm19, 0.0
    %23 = vst.msk [vmem:[#allocation2 + $0x18] sm:$0xff] %vm19, 0.0
    %24 = vst.msk [vmem:[#allocation2 + $0x20] sm:$0xff] %vm19, 0.0
    %25 = vst.msk [vmem:[#allocation2 + $0x28] sm:$0xff] %vm19, 0.0
    %26 = vst.msk [vmem:[#allocation2 + $0x30] sm:$0xff] %vm19, 0.0
    %27 = vst.msk [vmem:[#allocation2 + $0x38] sm:$0xff] %vm19, 0.0
    %28 = vst.msk [vmem:[#allocation2 + $0x40] sm:$0xff] %vm19, 0.0
    %29 = vst.msk [vmem:[#allocation2 + $0x48] sm:$0xff] %vm19, 0.0
    %30 = vst.msk [vmem:[#allocation2 + $0x50] sm:$0xff] %vm19, 0.0
    %31 = vst.msk [vmem:[#allocation2 + $0x58] sm:$0xff] %vm19, 0.0
    %32 = vst.msk [vmem:[#allocation2 + $0x60] sm:$0xff] %vm19, 0.0
    %33 = vst.msk [vmem:[#allocation2 + $0x68] sm:$0xff] %vm19, 0.0
    %34 = vst.msk [vmem:[#allocation2 + $0x70] sm:$0xff] %vm19, 0.0
    %35 = vst.msk [vmem:[#allocation2 + $0x78] sm:$0xff] %vm19, 0.0
  $region17: #{conv_vae_forward.15} parent=0 // pred_fallthru
    _
  %v36 = vld [vmem:[#allocation2] sm:$0xff]
  %v37 = vld [vmem:[#allocation2 + $0x8] sm:$0xff]
  %v38 = vld [vmem:[#allocation2 + $0x10] sm:$0xff]
  %v39 = vld [vmem:[#allocation2 + $0x18] sm:$0xff]
  %v40 = vld [vmem:[#allocation2 + $0x20] sm:$0xff]
  %v41 = vld [vmem:[#allocation2 + $0x28] sm:$0xff]
  %v42 = vld [vmem:[#allocation2 + $0x30] sm:$0xff]
  %v43 = vld [vmem:[#allocation2 + $0x38] sm:$0xff]
  %v44 = vld [vmem:[#allocation2 + $0x40] sm:$0xff]
  %v45 = vld [vmem:[#allocation2 + $0x48] sm:$0xff]
  %v46 = vld [vmem:[#allocation2 + $0x50] sm:$0xff]
  %v47 = vld [vmem:[#allocation2 + $0x58] sm:$0xff]
  %v48 = vld [vmem:[#allocation2 + $0x60] sm:$0xff]
  %v49 = vld [vmem:[#allocation2 + $0x68] sm:$0xff]
  %v50 = vld [vmem:[#allocation2 + $0x70] sm:$0xff]
  %v51 = vld [vmem:[#allocation2 + $0x78] sm:$0xff]
  %v52 = vld [vmem:[%s0] sm:$0xff]
  %v53 = vld [vmem:[%s0 + $0x8] sm:$0xff]
  %v54 = vld [vmem:[%s0 + $0x10] sm:$0xf]
  %v55 = vld [vmem:[%s0 + $0x14] sm:$0xff]
  %v56 = vld [vmem:[%s0 + $0x1c] sm:$0xff]
  %v57 = vld [vmem:[%s0 + $0x24] sm:$0xf]
  %v58 = vld [vmem:[%s0 + $0x28] sm:$0xff]
  %v59 = vld [vmem:[%s0 + $0x30] sm:$0xff]
  %v60 = vld [vmem:[%s0 + $0x38] sm:$0xf]
  %v61 = vld [vmem:[%s0 + $0x3c] sm:$0xff]
  %v62 = vld [vmem:[%s0 + $0x44] sm:$0xff]
  %v63 = vld [vmem:[%s0 + $0x4c] sm:$0xf]
  %v64 = vld [vmem:[%s0 + $0x50] sm:$0xff]
  %v65 = vld [vmem:[%s0 + $0x58] sm:$0xff]
  %v66 = vld [vmem:[%s0 + $0x60] sm:$0xf]
  %v67 = vld [vmem:[%s0 + $0x64] sm:$0xff]
  %v68 = vld [vmem:[%s0 + $0x6c] sm:$0xff]
  %v69 = vld [vmem:[%s0 + $0x74] sm:$0xf]
  %v70 = vld [vmem:[%s0 + $0x78] sm:$0xff]
  %v71 = vld [vmem:[%s0 + $0x80] sm:$0xff]
  %v72 = vld [vmem:[%s0 + $0x88] sm:$0xf]
  %v73 = vld [vmem:[%s0 + $0x8c] sm:$0xff]
  %v74 = vld [vmem:[%s0 + $0x94] sm:$0xff]
  %v75 = vld [vmem:[%s0 + $0x9c] sm:$0xf]
  %v76 = vld [vmem:[%s0 + $0xa0] sm:$0xff]
  %v77 = vld [vmem:[%s0 + $0xa8] sm:$0xff]
  %v78 = vld [vmem:[%s0 + $0xb0] sm:$0xf]
  %v79 = vld [vmem:[%s0 + $0xb4] sm:$0xff]
  %v80 = vld [vmem:[%s0 + $0xbc] sm:$0xff]
  %v81 = vld [vmem:[%s0 + $0xc4] sm:$0xf]
  %v82 = vld [vmem:[%s0 + $0xc8] sm:$0xff]
  %v83 = vld [vmem:[%s0 + $0xd0] sm:$0xff]
  %v84 = vld [vmem:[%s0 + $0xd8] sm:$0xf]
  %v85 = vld [vmem:[%s0 + $0xdc] sm:$0xff]
  %v86 = vld [vmem:[%s0 + $0xe4] sm:$0xff]
  %v87 = vld [vmem:[%s0 + $0xec] sm:$0xf]
  %v88 = vld [vmem:[%s0 + $0xf0] sm:$0xff]
  %v89 = vld [vmem:[%s0 + $0xf8] sm:$0xff]
  %v90 = vld [vmem:[%s0 + $0x100] sm:$0xf]
  %v91 = vld [vmem:[%s0 + $0x104] sm:$0xff]
  %v92 = vld [vmem:[%s0 + $0x10c] sm:$0xff]
  %v93 = vld [vmem:[%s0 + $0x114] sm:$0xf]
  %v94 = vld [vmem:[%s0 + $0x118] sm:$0xff]
  %v95 = vld [vmem:[%s0 + $0x120] sm:$0xff]
  %v96 = vld [vmem:[%s0 + $0x128] sm:$0xf]
  %v97 = vld [vmem:[%s0 + $0x12c] sm:$0xff]
  %v98 = vld [vmem:[%s0 + $0x134] sm:$0xff]
  %v99 = vld [vmem:[%s0 + $0x13c] sm:$0xf]
  %v100 = vld [vmem:[%s1] sm:$0xf]
  %v101 = vld [vmem:[%s1 + $0x4] sm:$0xf]
  %v102 = vld [vmem:[%s1 + $0x8] sm:$0xf]
  %v103 = vld [vmem:[%s1 + $0xc] sm:$0xf]
  %v104 = vld [vmem:[%s1 + $0x10] sm:$0xf]
  %v105 = vld [vmem:[%s1 + $0x14] sm:$0xf]
  %v106 = vld [vmem:[%s1 + $0x18] sm:$0xf]
  %v107 = vld [vmem:[%s1 + $0x1c] sm:$0xf]
  %v108 = vld [vmem:[%s1 + $0x20] sm:$0xf]
  %v109 = vld [vmem:[%s1 + $0x24] sm:$0xf]
  %v110 = vld [vmem:[%s1 + $0x28] sm:$0xf]
  %v111 = vld [vmem:[%s1 + $0x2c] sm:$0xf]
  %v112 = vld [vmem:[%s1 + $0x30] sm:$0xf]
  %v113 = vld [vmem:[%s1 + $0x34] sm:$0xf]
  %v114 = vld [vmem:[%s1 + $0x38] sm:$0xf]
  %v115 = vld [vmem:[%s1 + $0x3c] sm:$0xf]
  %v116 = vld [vmem:[%s1 + $0x40] sm:$0xf]
  %v117 = vld [vmem:[%s1 + $0x44] sm:$0xf]
  %v118 = vld [vmem:[%s1 + $0x48] sm:$0xf]
  %v119 = vld [vmem:[%s1 + $0x4c] sm:$0xf]
  %v120 = vld [vmem:[%s1 + $0x50] sm:$0xf]
  %v121 = vld [vmem:[%s1 + $0x54] sm:$0xf]
  %v122 = vld [vmem:[%s1 + $0x58] sm:$0xf]
  %v123 = vld [vmem:[%s1 + $0x5c] sm:$0xf]
  %v124 = vld [vmem:[%s1 + $0x60] sm:$0xf]
  %v125 = vld [vmem:[%s1 + $0x64] sm:$0xf]
  %v126 = vld [vmem:[%s1 + $0x68] sm:$0xf]
  %v127 = vld [vmem:[%s1 + $0x6c] sm:$0xf]
  %v128 = vld [vmem:[%s1 + $0x70] sm:$0xf]
  %v129 = vld [vmem:[%s1 + $0x74] sm:$0xf]
  %v130 = vld [vmem:[%s1 + $0x78] sm:$0xf]
  %v131 = vld [vmem:[%s1 + $0x7c] sm:$0xf]
  %v132 = vld [vmem:[%s1 + $0x80] sm:$0xf]
  %v133 = vld [vmem:[%s1 + $0x84] sm:$0xf]
  %v134 = vld [vmem:[%s1 + $0x88] sm:$0xf]
  %v135 = vld [vmem:[%s1 + $0x8c] sm:$0xf]
  %v136 = vld [vmem:[%s1 + $0x90] sm:$0xf]
  %v137 = vld [vmem:[%s1 + $0x94] sm:$0xf]
  %v138 = vld [vmem:[%s1 + $0x98] sm:$0xf]
  %v139 = vld [vmem:[%s1 + $0x9c] sm:$0xf]
  %v140 = vld [vmem:[%s1 + $0xa0] sm:$0xf]
  %v141 = vld [vmem:[%s1 + $0xa4] sm:$0xf]
  %v142 = vld [vmem:[%s1 + $0xa8] sm:$0xf]
  %v143 = vld [vmem:[%s1 + $0xac] sm:$0xf]
  %v144 = vld [vmem:[%s1 + $0xb0] sm:$0xf]
  %v145 = vld [vmem:[%s1 + $0xb4] sm:$0xf]
  %v146 = vld [vmem:[%s1 + $0xb8] sm:$0xf]
  %v147 = vld [vmem:[%s1 + $0xbc] sm:$0xf]
  %v148 = vld [vmem:[%s1 + $0xc0] sm:$0xf]
  %v149 = vld [vmem:[%s1 + $0xc4] sm:$0xf]
  %v150 = vld [vmem:[%s1 + $0xc8] sm:$0xf]
  %v151 = vld [vmem:[%s1 + $0xcc] sm:$0xf]
  %v152 = vld [vmem:[%s1 + $0xd0] sm:$0xf]
  %v153 = vld [vmem:[%s1 + $0xd4] sm:$0xf]
  %v154 = vld [vmem:[%s1 + $0xd8] sm:$0xf]
  %v155 = vld [vmem:[%s1 + $0xdc] sm:$0xf]
  %v156 = vld [vmem:[%s1 + $0xe0] sm:$0xf]
  %v157 = vld [vmem:[%s1 + $0xe4] sm:$0xf]
  %v158 = vld [vmem:[%s1 + $0xe8] sm:$0xf]
  %v159 = vld [vmem:[%s1 + $0xec] sm:$0xf]
  %v160 = vld [vmem:[%s1 + $0xf0] sm:$0xf]
  %v161 = vld [vmem:[%s1 + $0xf4] sm:$0xf]
  %v162 = vld [vmem:[%s1 + $0xf8] sm:$0xf]
  %v163 = vld [vmem:[%s1 + $0xfc] sm:$0xf]
  %v164 = vld [vmem:[%s1 + $0x100] sm:$0xf]
  %v165 = vld [vmem:[%s1 + $0x104] sm:$0xf]
  %v166 = vld [vmem:[%s1 + $0x108] sm:$0xf]
  %v167 = vld [vmem:[%s1 + $0x10c] sm:$0xf]
  %v168 = vld [vmem:[%s1 + $0x110] sm:$0xf]
  %v169 = vld [vmem:[%s1 + $0x114] sm:$0xf]
  %v170 = vld [vmem:[%s1 + $0x118] sm:$0xf]
  %v171 = vld [vmem:[%s1 + $0x11c] sm:$0xf]
  %v220 = vunpack.c.l.b16 %v52
  %v221 = vunpack.c.h.b16 %v52
  %v222 = vunpack.c.l.b16 %v53
  %v223 = vunpack.c.h.b16 %v53
  %v224 = vunpack.c.l.b16 %v54
  %v225 = vunpack.c.l.b16 %v55
  %v226 = vunpack.c.h.b16 %v55
  %v227 = vunpack.c.l.b16 %v56
  %v228 = vunpack.c.h.b16 %v56
  %v229 = vunpack.c.l.b16 %v57
  %v230 = vunpack.c.l.b16 %v58
  %v231 = vunpack.c.h.b16 %v58
  %v232 = vunpack.c.l.b16 %v59
  %v233 = vunpack.c.h.b16 %v59
  %v234 = vunpack.c.l.b16 %v60
  %v235 = vunpack.c.l.b16 %v61
  %v236 = vunpack.c.h.b16 %v61
  %v237 = vunpack.c.l.b16 %v62
  %v238 = vunpack.c.h.b16 %v62
  %v239 = vunpack.c.l.b16 %v63
  %v240 = vunpack.c.l.b16 %v64
  %v241 = vunpack.c.h.b16 %v64
  %v242 = vunpack.c.l.b16 %v65
  %v243 = vunpack.c.h.b16 %v65
  %v244 = vunpack.c.l.b16 %v66
  %v245 = vunpack.c.l.b16 %v67
  %v246 = vunpack.c.h.b16 %v67
  %v247 = vunpack.c.l.b16 %v68
  %v248 = vunpack.c.h.b16 %v68
  %v249 = vunpack.c.l.b16 %v69
  %v250 = vunpack.c.l.b16 %v70
  %v251 = vunpack.c.h.b16 %v70
  %v252 = vunpack.c.l.b16 %v71
  %v253 = vunpack.c.h.b16 %v71
  %v254 = vunpack.c.l.b16 %v72
  %v255 = vunpack.c.l.b16 %v73
  %v256 = vunpack.c.h.b16 %v73
  %v257 = vunpack.c.l.b16 %v74
  %v258 = vunpack.c.h.b16 %v74
  %v259 = vunpack.c.l.b16 %v75
  %v260 = vunpack.c.l.b16 %v76
  %v261 = vunpack.c.h.b16 %v76
  %v262 = vunpack.c.l.b16 %v77
  %v263 = vunpack.c.h.b16 %v77
  %v264 = vunpack.c.l.b16 %v78
  %v265 = vunpack.c.l.b16 %v79
  %v266 = vunpack.c.h.b16 %v79
  %v267 = vunpack.c.l.b16 %v80
  %v268 = vunpack.c.h.b16 %v80
  %v269 = vunpack.c.l.b16 %v81
  %v270 = vunpack.c.l.b16 %v82
  %v271 = vunpack.c.h.b16 %v82
  %v272 = vunpack.c.l.b16 %v83
  %v273 = vunpack.c.h.b16 %v83
  %v274 = vunpack.c.l.b16 %v84
  %v275 = vunpack.c.l.b16 %v85
  %v276 = vunpack.c.h.b16 %v85
  %v277 = vunpack.c.l.b16 %v86
  %v278 = vunpack.c.h.b16 %v86
  %v279 = vunpack.c.l.b16 %v87
  %v280 = vunpack.c.l.b16 %v88
  %v281 = vunpack.c.h.b16 %v88
  %v282 = vunpack.c.l.b16 %v89
  %v283 = vunpack.c.h.b16 %v89
  %v284 = vunpack.c.l.b16 %v90
  %v285 = vunpack.c.l.b16 %v91
  %v286 = vunpack.c.h.b16 %v91
  %v287 = vunpack.c.l.b16 %v92
  %v288 = vunpack.c.h.b16 %v92
  %v289 = vunpack.c.l.b16 %v93
  %v290 = vunpack.c.l.b16 %v94
  %v291 = vunpack.c.h.b16 %v94
  %v292 = vunpack.c.l.b16 %v95
  %v293 = vunpack.c.h.b16 %v95
  %v294 = vunpack.c.l.b16 %v96
  %v295 = vunpack.c.l.b16 %v97
  %v296 = vunpack.c.h.b16 %v97
  %v297 = vunpack.c.l.b16 %v98
  %v298 = vunpack.c.h.b16 %v98
  %v299 = vunpack.c.l.b16 %v99
  %v300 = vpack.c.b16 %v225, %v220
  %v301 = vpack.c.b16 %v226, %v221
  %v302 = vpack.c.b16 %v227, %v222
  %v303 = vpack.c.b16 %v228, %v223
  %v304 = vpack.c.b16 %v229, %v224
  %v305 = vpack.c.b16 %v235, %v230
  %v306 = vpack.c.b16 %v236, %v231
  %v307 = vpack.c.b16 %v237, %v232
  %v308 = vpack.c.b16 %v238, %v233
  %v309 = vpack.c.b16 %v239, %v234
  %v310 = vpack.c.b16 %v245, %v240
  %v311 = vpack.c.b16 %v246, %v241
  %v312 = vpack.c.b16 %v247, %v242
  %v313 = vpack.c.b16 %v248, %v243
  %v314 = vpack.c.b16 %v249, %v244
  %v315 = vpack.c.b16 %v255, %v250
  %v316 = vpack.c.b16 %v256, %v251
  %v317 = vpack.c.b16 %v257, %v252
  %v318 = vpack.c.b16 %v258, %v253
  %v319 = vpack.c.b16 %v259, %v254
  %v320 = vpack.c.b16 %v265, %v260
  %v321 = vpack.c.b16 %v266, %v261
  %v322 = vpack.c.b16 %v267, %v262
  %v323 = vpack.c.b16 %v268, %v263
  %v324 = vpack.c.b16 %v269, %v264
  %v325 = vpack.c.b16 %v275, %v270
  %v326 = vpack.c.b16 %v276, %v271
  %v327 = vpack.c.b16 %v277, %v272
  %v328 = vpack.c.b16 %v278, %v273
  %v329 = vpack.c.b16 %v279, %v274
  %v330 = vpack.c.b16 %v285, %v280
  %v331 = vpack.c.b16 %v286, %v281
  %v332 = vpack.c.b16 %v287, %v282
  %v333 = vpack.c.b16 %v288, %v283
  %v334 = vpack.c.b16 %v289, %v284
  %v335 = vpack.c.b16 %v295, %v290
  %v336 = vpack.c.b16 %v296, %v291
  %v337 = vpack.c.b16 %v297, %v292
  %v338 = vpack.c.b16 %v298, %v293
  %v339 = vpack.c.b16 %v299, %v294
  %v444 = vunpack.c.l.b16 %v100
  %v445 = vunpack.c.l.b16 %v101
  %v446 = vunpack.c.l.b16 %v102
  %v447 = vunpack.c.l.b16 %v103
  %v448 = vunpack.c.l.b16 %v104
  %v449 = vunpack.c.l.b16 %v105
  %v450 = vunpack.c.l.b16 %v106
  %v451 = vunpack.c.l.b16 %v107
  %v452 = vunpack.c.l.b16 %v108
  %v453 = vunpack.c.l.b16 %v109
  %v454 = vunpack.c.l.b16 %v110
  %v455 = vunpack.c.l.b16 %v111
  %v456 = vunpack.c.l.b16 %v112
  %v457 = vunpack.c.l.b16 %v113
  %v458 = vunpack.c.l.b16 %v114
  %v459 = vunpack.c.l.b16 %v115
  %v460 = vunpack.c.l.b16 %v116
  %v461 = vunpack.c.l.b16 %v117
  %v462 = vunpack.c.l.b16 %v118
  %v463 = vunpack.c.l.b16 %v119
  %v464 = vunpack.c.l.b16 %v120
  %v465 = vunpack.c.l.b16 %v121
  %v466 = vunpack.c.l.b16 %v122
  %v467 = vunpack.c.l.b16 %v123
  %v468 = vunpack.c.l.b16 %v124
  %v469 = vunpack.c.l.b16 %v125
  %v470 = vunpack.c.l.b16 %v126
  %v471 = vunpack.c.l.b16 %v127
  %v472 = vunpack.c.l.b16 %v128
  %v473 = vunpack.c.l.b16 %v129
  %v474 = vunpack.c.l.b16 %v130
  %v475 = vunpack.c.l.b16 %v131
  %v476 = vunpack.c.l.b16 %v132
  %v477 = vunpack.c.l.b16 %v133
  %v478 = vunpack.c.l.b16 %v134
  %v479 = vunpack.c.l.b16 %v135
  %v480 = vunpack.c.l.b16 %v136
  %v481 = vunpack.c.l.b16 %v137
  %v482 = vunpack.c.l.b16 %v138
  %v483 = vunpack.c.l.b16 %v139
  %v484 = vunpack.c.l.b16 %v140
  %v485 = vunpack.c.l.b16 %v141
  %v486 = vunpack.c.l.b16 %v142
  %v487 = vunpack.c.l.b16 %v143
  %v488 = vunpack.c.l.b16 %v144
  %v489 = vunpack.c.l.b16 %v145
  %v490 = vunpack.c.l.b16 %v146
  %v491 = vunpack.c.l.b16 %v147
  %v492 = vunpack.c.l.b16 %v148
  %v493 = vunpack.c.l.b16 %v149
  %v494 = vunpack.c.l.b16 %v150
  %v495 = vunpack.c.l.b16 %v151
  %v496 = vunpack.c.l.b16 %v152
  %v497 = vunpack.c.l.b16 %v153
  %v498 = vunpack.c.l.b16 %v154
  %v499 = vunpack.c.l.b16 %v155
  %v500 = vunpack.c.l.b16 %v156
  %v501 = vunpack.c.l.b16 %v157
  %v502 = vunpack.c.l.b16 %v158
  %v503 = vunpack.c.l.b16 %v159
  %v504 = vunpack.c.l.b16 %v160
  %v505 = vunpack.c.l.b16 %v161
  %v506 = vunpack.c.l.b16 %v162
  %v507 = vunpack.c.l.b16 %v163
  %v508 = vunpack.c.l.b16 %v164
  %v509 = vunpack.c.l.b16 %v165
  %v510 = vunpack.c.l.b16 %v166
  %v511 = vunpack.c.l.b16 %v167
  %v512 = vunpack.c.l.b16 %v168
  %v513 = vunpack.c.l.b16 %v169
  %v514 = vunpack.c.l.b16 %v170
  %v515 = vunpack.c.l.b16 %v171
  %v516 = vpack.c.b16 %v445, %v444
  %v517 = vpack.c.b16 %v447, %v446
  %v518 = vpack.c.b16 %v449, %v448
  %v519 = vpack.c.b16 %v451, %v450
  %v520 = vpack.c.b16 %v453, %v452
  %v521 = vpack.c.b16 %v455, %v454
  %v522 = vpack.c.b16 %v457, %v456
  %v523 = vpack.c.b16 %v459, %v458
  %v524 = vpack.c.b16 %v461, %v460
  %v525 = vpack.c.b16 %v463, %v462
  %v526 = vpack.c.b16 %v465, %v464
  %v527 = vpack.c.b16 %v467, %v466
  %v528 = vpack.c.b16 %v469, %v468
  %v529 = vpack.c.b16 %v471, %v470
  %v530 = vpack.c.b16 %v473, %v472
  %v531 = vpack.c.b16 %v475, %v474
  %v532 = vpack.c.b16 %v477, %v476
  %v533 = vpack.c.b16 %v479, %v478
  %v534 = vpack.c.b16 %v481, %v480
  %v535 = vpack.c.b16 %v483, %v482
  %v536 = vpack.c.b16 %v485, %v484
  %v537 = vpack.c.b16 %v487, %v486
  %v538 = vpack.c.b16 %v489, %v488
  %v539 = vpack.c.b16 %v491, %v490
  %v540 = vpack.c.b16 %v493, %v492
  %v541 = vpack.c.b16 %v495, %v494
  %v542 = vpack.c.b16 %v497, %v496
  %v543 = vpack.c.b16 %v499, %v498
  %v544 = vpack.c.b16 %v501, %v500
  %v545 = vpack.c.b16 %v503, %v502
  %v546 = vpack.c.b16 %v505, %v504
  %v547 = vpack.c.b16 %v507, %v506
  %v548 = vpack.c.b16 %v509, %v508
  %v549 = vpack.c.b16 %v511, %v510
  %v550 = vpack.c.b16 %v513, %v512
  %v551 = vpack.c.b16 %v515, %v514
  %vm588 = vcmask 523264
  %v590 = vsel %vm588, %v304, 0
  %v593 = vsel %vm588, %v309, 0
  %v596 = vsel %vm588, %v314, 0
  %v599 = vsel %vm588, %v319, 0
  %v602 = vsel %vm588, %v324, 0
  %v605 = vsel %vm588, %v329, 0
  %v608 = vsel %vm588, %v334, 0
  %v611 = vsel %vm588, %v339, 0
  %613 = vmatpush.bf16.msra.mxu0 %v523
  %614 = vmatpush.bf16.msra.mxu0 %v522
  %615 = vmatpush.bf16.msra.mxu0 %v521
  %616 = vmatpush.bf16.msra.mxu0 %v520
  %617 = vmatpush.bf16.msra.mxu0 %v519
  %618 = vmatpush.bf16.msra.mxu0 %v518
  %619 = vmatpush.bf16.msra.mxu0 %v517
  %620 = vmatpush.bf16.msra.mxu0 %v516
  %621 = vmatmul.bf16.gmra.mxu0 %v300
  %v622 = vpop.f32.mrf.mxu0
  %v623 = vadd.f32 0.0, %v622
  %v624 = vpop.f32.mrf.mxu0
  %v625 = vadd.f32 0.0, %v624
  %626 = vmatmul.bf16.gmra.mxu0 %v305
  %v627 = vpop.f32.mrf.mxu0
  %v628 = vadd.f32 0.0, %v627
  %v629 = vpop.f32.mrf.mxu0
  %v630 = vadd.f32 0.0, %v629
  %631 = vmatmul.bf16.gmra.mxu0 %v310
  %v632 = vpop.f32.mrf.mxu0
  %v633 = vadd.f32 0.0, %v632
  %v634 = vpop.f32.mrf.mxu0
  %v635 = vadd.f32 0.0, %v634
  %636 = vmatmul.bf16.gmra.mxu0 %v315
  %v637 = vpop.f32.mrf.mxu0
  %v638 = vadd.f32 0.0, %v637
  %v639 = vpop.f32.mrf.mxu0
  %v640 = vadd.f32 0.0, %v639
  %641 = vmatmul.bf16.gmra.mxu0 %v320
  %v642 = vpop.f32.mrf.mxu0
  %v643 = vadd.f32 0.0, %v642
  %v644 = vpop.f32.mrf.mxu0
  %v645 = vadd.f32 0.0, %v644
  %646 = vmatmul.bf16.gmra.mxu0 %v325
  %v647 = vpop.f32.mrf.mxu0
  %v648 = vadd.f32 0.0, %v647
  %v649 = vpop.f32.mrf.mxu0
  %v650 = vadd.f32 0.0, %v649
  %651 = vmatmul.bf16.gmra.mxu0 %v330
  %v652 = vpop.f32.mrf.mxu0
  %v653 = vadd.f32 0.0, %v652
  %v654 = vpop.f32.mrf.mxu0
  %v655 = vadd.f32 0.0, %v654
  %656 = vmatmul.bf16.gmra.mxu0 %v335
  %v657 = vpop.f32.mrf.mxu0
  %v658 = vadd.f32 0.0, %v657
  %v659 = vpop.f32.mrf.mxu0
  %v660 = vadd.f32 0.0, %v659
  %661 = vdwg.mxu0
  %662 = vmatpush.bf16.msra.mxu0 %v531
  %663 = vmatpush.bf16.msra.mxu0 %v530
  %664 = vmatpush.bf16.msra.mxu0 %v529
  %665 = vmatpush.bf16.msra.mxu0 %v528
  %666 = vmatpush.bf16.msra.mxu0 %v527
  %667 = vmatpush.bf16.msra.mxu0 %v526
  %668 = vmatpush.bf16.msra.mxu0 %v525
  %669 = vmatpush.bf16.msra.mxu0 %v524
  %670 = vmatmul.bf16.gmra.mxu0 %v301
  %v671 = vpop.f32.mrf.mxu0
  %v672 = vadd.f32 %v623, %v671
  %v673 = vpop.f32.mrf.mxu0
  %v674 = vadd.f32 %v625, %v673
  %675 = vmatmul.bf16.gmra.mxu0 %v306
  %v676 = vpop.f32.mrf.mxu0
  %v677 = vadd.f32 %v628, %v676
  %v678 = vpop.f32.mrf.mxu0
  %v679 = vadd.f32 %v630, %v678
  %680 = vmatmul.bf16.gmra.mxu0 %v311
  %v681 = vpop.f32.mrf.mxu0
  %v682 = vadd.f32 %v633, %v681
  %v683 = vpop.f32.mrf.mxu0
  %v684 = vadd.f32 %v635, %v683
  %685 = vmatmul.bf16.gmra.mxu0 %v316
  %v686 = vpop.f32.mrf.mxu0
  %v687 = vadd.f32 %v638, %v686
  %v688 = vpop.f32.mrf.mxu0
  %v689 = vadd.f32 %v640, %v688
  %690 = vmatmul.bf16.gmra.mxu0 %v321
  %v691 = vpop.f32.mrf.mxu0
  %v692 = vadd.f32 %v643, %v691
  %v693 = vpop.f32.mrf.mxu0
  %v694 = vadd.f32 %v645, %v693
  %695 = vmatmul.bf16.gmra.mxu0 %v326
  %v696 = vpop.f32.mrf.mxu0
  %v697 = vadd.f32 %v648, %v696
  %v698 = vpop.f32.mrf.mxu0
  %v699 = vadd.f32 %v650, %v698
  %700 = vmatmul.bf16.gmra.mxu0 %v331
  %v701 = vpop.f32.mrf.mxu0
  %v702 = vadd.f32 %v653, %v701
  %v703 = vpop.f32.mrf.mxu0
  %v704 = vadd.f32 %v655, %v703
  %705 = vmatmul.bf16.gmra.mxu0 %v336
  %v706 = vpop.f32.mrf.mxu0
  %v707 = vadd.f32 %v658, %v706
  %v708 = vpop.f32.mrf.mxu0
  %v709 = vadd.f32 %v660, %v708
  %710 = vdwg.mxu0
  %711 = vmatpush.bf16.msra.mxu0 %v539
  %712 = vmatpush.bf16.msra.mxu0 %v538
  %713 = vmatpush.bf16.msra.mxu0 %v537
  %714 = vmatpush.bf16.msra.mxu0 %v536
  %715 = vmatpush.bf16.msra.mxu0 %v535
  %716 = vmatpush.bf16.msra.mxu0 %v534
  %717 = vmatpush.bf16.msra.mxu0 %v533
  %718 = vmatpush.bf16.msra.mxu0 %v532
  %719 = vmatmul.bf16.gmra.mxu0 %v302
  %v720 = vpop.f32.mrf.mxu0
  %v721 = vadd.f32 %v672, %v720
  %v722 = vpop.f32.mrf.mxu0
  %v723 = vadd.f32 %v674, %v722
  %724 = vmatmul.bf16.gmra.mxu0 %v307
  %v725 = vpop.f32.mrf.mxu0
  %v726 = vadd.f32 %v677, %v725
  %v727 = vpop.f32.mrf.mxu0
  %v728 = vadd.f32 %v679, %v727
  %729 = vmatmul.bf16.gmra.mxu0 %v312
  %v730 = vpop.f32.mrf.mxu0
  %v731 = vadd.f32 %v682, %v730
  %v732 = vpop.f32.mrf.mxu0
  %v733 = vadd.f32 %v684, %v732
  %734 = vmatmul.bf16.gmra.mxu0 %v317
  %v735 = vpop.f32.mrf.mxu0
  %v736 = vadd.f32 %v687, %v735
  %v737 = vpop.f32.mrf.mxu0
  %v738 = vadd.f32 %v689, %v737
  %739 = vmatmul.bf16.gmra.mxu0 %v322
  %v740 = vpop.f32.mrf.mxu0
  %v741 = vadd.f32 %v692, %v740
  %v742 = vpop.f32.mrf.mxu0
  %v743 = vadd.f32 %v694, %v742
  %744 = vmatmul.bf16.gmra.mxu0 %v327
  %v745 = vpop.f32.mrf.mxu0
  %v746 = vadd.f32 %v697, %v745
  %v747 = vpop.f32.mrf.mxu0
  %v748 = vadd.f32 %v699, %v747
  %749 = vmatmul.bf16.gmra.mxu0 %v332
  %v750 = vpop.f32.mrf.mxu0
  %v751 = vadd.f32 %v702, %v750
  %v752 = vpop.f32.mrf.mxu0
  %v753 = vadd.f32 %v704, %v752
  %754 = vmatmul.bf16.gmra.mxu0 %v337
  %v755 = vpop.f32.mrf.mxu0
  %v756 = vadd.f32 %v707, %v755
  %v757 = vpop.f32.mrf.mxu0
  %v758 = vadd.f32 %v709, %v757
  %759 = vdwg.mxu0
  %760 = vmatpush.bf16.msra.mxu0 %v547
  %761 = vmatpush.bf16.msra.mxu0 %v546
  %762 = vmatpush.bf16.msra.mxu0 %v545
  %763 = vmatpush.bf16.msra.mxu0 %v544
  %764 = vmatpush.bf16.msra.mxu0 %v543
  %765 = vmatpush.bf16.msra.mxu0 %v542
  %766 = vmatpush.bf16.msra.mxu0 %v541
  %767 = vmatpush.bf16.msra.mxu0 %v540
  %768 = vmatmul.bf16.gmra.mxu0 %v303
  %v769 = vpop.f32.mrf.mxu0
  %v770 = vadd.f32 %v721, %v769
  %v771 = vpop.f32.mrf.mxu0
  %v772 = vadd.f32 %v723, %v771
  %773 = vmatmul.bf16.gmra.mxu0 %v308
  %v774 = vpop.f32.mrf.mxu0
  %v775 = vadd.f32 %v726, %v774
  %v776 = vpop.f32.mrf.mxu0
  %v777 = vadd.f32 %v728, %v776
  %778 = vmatmul.bf16.gmra.mxu0 %v313
  %v779 = vpop.f32.mrf.mxu0
  %v780 = vadd.f32 %v731, %v779
  %v781 = vpop.f32.mrf.mxu0
  %v782 = vadd.f32 %v733, %v781
  %783 = vmatmul.bf16.gmra.mxu0 %v318
  %v784 = vpop.f32.mrf.mxu0
  %v785 = vadd.f32 %v736, %v784
  %v786 = vpop.f32.mrf.mxu0
  %v787 = vadd.f32 %v738, %v786
  %788 = vmatmul.bf16.gmra.mxu0 %v323
  %v789 = vpop.f32.mrf.mxu0
  %v790 = vadd.f32 %v741, %v789
  %v791 = vpop.f32.mrf.mxu0
  %v792 = vadd.f32 %v743, %v791
  %793 = vmatmul.bf16.gmra.mxu0 %v328
  %v794 = vpop.f32.mrf.mxu0
  %v795 = vadd.f32 %v746, %v794
  %v796 = vpop.f32.mrf.mxu0
  %v797 = vadd.f32 %v748, %v796
  %798 = vmatmul.bf16.gmra.mxu0 %v333
  %v799 = vpop.f32.mrf.mxu0
  %v800 = vadd.f32 %v751, %v799
  %v801 = vpop.f32.mrf.mxu0
  %v802 = vadd.f32 %v753, %v801
  %803 = vmatmul.bf16.gmra.mxu0 %v338
  %v804 = vpop.f32.mrf.mxu0
  %v805 = vadd.f32 %v756, %v804
  %v806 = vpop.f32.mrf.mxu0
  %v807 = vadd.f32 %v758, %v806
  %808 = vdwg.mxu0
  %809 = vmatpush.bf16.msra.mxu0 0
  %810 = vmatpush.bf16.msra.mxu0 0
  %811 = vmatpush.bf16.msra.mxu0 0
  %812 = vmatpush.bf16.msra.mxu0 0
  %813 = vmatpush.bf16.msra.mxu0 %v551
  %814 = vmatpush.bf16.msra.mxu0 %v550
  %815 = vmatpush.bf16.msra.mxu0 %v549
  %816 = vmatpush.bf16.msra.mxu0 %v548
  %817 = vmatmul.bf16.gmra.mxu0 %v590
  %v818 = vpop.f32.mrf.mxu0
  %v819 = vadd.f32 %v770, %v818
  %v820 = vpop.f32.mrf.mxu0
  %v821 = vadd.f32 %v772, %v820
  %822 = vmatmul.bf16.gmra.mxu0 %v593
  %v823 = vpop.f32.mrf.mxu0
  %v824 = vadd.f32 %v775, %v823
  %v825 = vpop.f32.mrf.mxu0
  %v826 = vadd.f32 %v777, %v825
  %827 = vmatmul.bf16.gmra.mxu0 %v596
  %v828 = vpop.f32.mrf.mxu0
  %v829 = vadd.f32 %v780, %v828
  %v830 = vpop.f32.mrf.mxu0
  %v831 = vadd.f32 %v782, %v830
  %832 = vmatmul.bf16.gmra.mxu0 %v599
  %v833 = vpop.f32.mrf.mxu0
  %v834 = vadd.f32 %v785, %v833
  %v835 = vpop.f32.mrf.mxu0
  %v836 = vadd.f32 %v787, %v835
  %837 = vmatmul.bf16.gmra.mxu0 %v602
  %v838 = vpop.f32.mrf.mxu0
  %v839 = vadd.f32 %v790, %v838
  %v840 = vpop.f32.mrf.mxu0
  %v841 = vadd.f32 %v792, %v840
  %842 = vmatmul.bf16.gmra.mxu0 %v605
  %v843 = vpop.f32.mrf.mxu0
  %v844 = vadd.f32 %v795, %v843
  %v845 = vpop.f32.mrf.mxu0
  %v846 = vadd.f32 %v797, %v845
  %847 = vmatmul.bf16.gmra.mxu0 %v608
  %v848 = vpop.f32.mrf.mxu0
  %v849 = vadd.f32 %v800, %v848
  %v850 = vpop.f32.mrf.mxu0
  %v851 = vadd.f32 %v802, %v850
  %852 = vmatmul.bf16.gmra.mxu0 %v611
  %v853 = vpop.f32.mrf.mxu0
  %v854 = vadd.f32 %v805, %v853
  %v855 = vpop.f32.mrf.mxu0
  %v856 = vadd.f32 %v807, %v855
  %857 = vdwg.mxu0
  %v858 = vadd.f32 %v36, %v819
  %v859 = vadd.f32 %v37, %v821
  %v860 = vadd.f32 %v38, %v824
  %v861 = vadd.f32 %v39, %v826
  %v862 = vadd.f32 %v40, %v829
  %v863 = vadd.f32 %v41, %v831
  %v864 = vadd.f32 %v42, %v834
  %v865 = vadd.f32 %v43, %v836
  %v866 = vadd.f32 %v44, %v839
  %v867 = vadd.f32 %v45, %v841
  %v868 = vadd.f32 %v46, %v844
  %v869 = vadd.f32 %v47, %v846
  %v870 = vadd.f32 %v48, %v849
  %v871 = vadd.f32 %v49, %v851
  %v872 = vadd.f32 %v50, %v854
  %v873 = vadd.f32 %v51, %v856
  %vm874 = vcmask 31744
  %875 = vst.msk [vmem:[#allocation2] sm:$0xff] %vm874, %v858
  %876 = vst.msk [vmem:[#allocation2 + $0x8] sm:$0xff] %vm874, %v859
  %877 = vst.msk [vmem:[#allocation2 + $0x10] sm:$0xff] %vm874, %v860
  %878 = vst.msk [vmem:[#allocation2 + $0x18] sm:$0xff] %vm874, %v861
  %879 = vst.msk [vmem:[#allocation2 + $0x20] sm:$0xff] %vm874, %v862
  %880 = vst.msk [vmem:[#allocation2 + $0x28] sm:$0xff] %vm874, %v863
  %881 = vst.msk [vmem:[#allocation2 + $0x30] sm:$0xff] %vm874, %v864
  %882 = vst.msk [vmem:[#allocation2 + $0x38] sm:$0xff] %vm874, %v865
  %883 = vst.msk [vmem:[#allocation2 + $0x40] sm:$0xff] %vm874, %v866
  %884 = vst.msk [vmem:[#allocation2 + $0x48] sm:$0xff] %vm874, %v867
  %885 = vst.msk [vmem:[#allocation2 + $0x50] sm:$0xff] %vm874, %v868
  %886 = vst.msk [vmem:[#allocation2 + $0x58] sm:$0xff] %vm874, %v869
  %887 = vst.msk [vmem:[#allocation2 + $0x60] sm:$0xff] %vm874, %v870
  %888 = vst.msk [vmem:[#allocation2 + $0x68] sm:$0xff] %vm874, %v871
  %889 = vst.msk [vmem:[#allocation2 + $0x70] sm:$0xff] %vm874, %v872
  %890 = vst.msk [vmem:[#allocation2 + $0x78] sm:$0xff] %vm874, %v873
  // Predicated region
  $region18: #{conv_vae_forward.15} parent=0 // pred_check
    %p891 = pneg %p15
  $region19: #{conv_vae_forward.15} parent=0 // pred_check_branch
    %893 = sbr.rel (%p891) target = $region21
  $region20: #{conv_vae_forward.15} parent=0 // pred_region
    %v894 = vld [vmem:[#allocation2] sm:$0xff]
    %v895 = vld [vmem:[#allocation2 + $0x8] sm:$0xff]
    %v896 = vld [vmem:[#allocation2 + $0x10] sm:$0xff]
    %v897 = vld [vmem:[#allocation2 + $0x18] sm:$0xff]
    %v898 = vld [vmem:[#allocation2 + $0x20] sm:$0xff]
    %v899 = vld [vmem:[#allocation2 + $0x28] sm:$0xff]
    %v900 = vld [vmem:[#allocation2 + $0x30] sm:$0xff]
    %v901 = vld [vmem:[#allocation2 + $0x38] sm:$0xff]
    %v902 = vld [vmem:[#allocation2 + $0x40] sm:$0xff]
    %v903 = vld [vmem:[#allocation2 + $0x48] sm:$0xff]
    %v904 = vld [vmem:[#allocation2 + $0x50] sm:$0xff]
    %v905 = vld [vmem:[#allocation2 + $0x58] sm:$0xff]
    %v906 = vld [vmem:[#allocation2 + $0x60] sm:$0xff]
    %v907 = vld [vmem:[#allocation2 + $0x68] sm:$0xff]
    %v908 = vld [vmem:[#allocation2 + $0x70] sm:$0xff]
    %v909 = vld [vmem:[#allocation2 + $0x78] sm:$0xff]
    %v910 = vld [vmem:[%s2] sm:$0x1]
    %v912 = vperm.slane %v910, 0
    %v914 = vadd.f32 %v894, %v912
    %v915 = vadd.f32 %v895, %v912
    %v916 = vadd.f32 %v896, %v912
    %v917 = vadd.f32 %v897, %v912
    %v918 = vadd.f32 %v898, %v912
    %v919 = vadd.f32 %v899, %v912
    %v920 = vadd.f32 %v900, %v912
    %v921 = vadd.f32 %v901, %v912
    %v922 = vadd.f32 %v902, %v912
    %v923 = vadd.f32 %v903, %v912
    %v924 = vadd.f32 %v904, %v912
    %v925 = vadd.f32 %v905, %v912
    %v926 = vadd.f32 %v906, %v912
    %v927 = vadd.f32 %v907, %v912
    %v928 = vadd.f32 %v908, %v912
    %v929 = vadd.f32 %v909, %v912
    %v930 = vtanh.pop %v914
    %v931 = vtanh.pop %v915
    %v932 = vtanh.pop %v916
    %v933 = vtanh.pop %v917
    %v934 = vtanh.pop %v918
    %v935 = vtanh.pop %v919
    %v936 = vtanh.pop %v920
    %v937 = vtanh.pop %v921
    %v938 = vtanh.pop %v922
    %v939 = vtanh.pop %v923
    %v940 = vtanh.pop %v924
    %v941 = vtanh.pop %v925
    %v942 = vtanh.pop %v926
    %v943 = vtanh.pop %v927
    %v944 = vtanh.pop %v928
    %v945 = vtanh.pop %v929
    %v946 = vmul.f32 %v930, 0.5
    %v947 = vmul.f32 %v931, 0.5
    %v948 = vmul.f32 %v932, 0.5
    %v949 = vmul.f32 %v933, 0.5
    %v950 = vmul.f32 %v934, 0.5
    %v951 = vmul.f32 %v935, 0.5
    %v952 = vmul.f32 %v936, 0.5
    %v953 = vmul.f32 %v937, 0.5
    %v954 = vmul.f32 %v938, 0.5
    %v955 = vmul.f32 %v939, 0.5
    %v956 = vmul.f32 %v940, 0.5
    %v957 = vmul.f32 %v941, 0.5
    %v958 = vmul.f32 %v942, 0.5
    %v959 = vmul.f32 %v943, 0.5
    %v960 = vmul.f32 %v944, 0.5
    %v961 = vmul.f32 %v945, 0.5
    %v962 = vadd.f32 %v946, 0.5
    %v963 = vadd.f32 %v947, 0.5
    %v964 = vadd.f32 %v948, 0.5
    %v965 = vadd.f32 %v949, 0.5
    %v966 = vadd.f32 %v950, 0.5
    %v967 = vadd.f32 %v951, 0.5
    %v968 = vadd.f32 %v952, 0.5
    %v969 = vadd.f32 %v953, 0.5
    %v970 = vadd.f32 %v954, 0.5
    %v971 = vadd.f32 %v955, 0.5
    %v972 = vadd.f32 %v956, 0.5
    %v973 = vadd.f32 %v957, 0.5
    %v974 = vadd.f32 %v958, 0.5
    %v975 = vadd.f32 %v959, 0.5
    %v976 = vadd.f32 %v960, 0.5
    %v977 = vadd.f32 %v961, 0.5
    %978 = vst.msk [vmem:[%s3] sm:$0xff] %vm874, %v962
    %979 = vst.msk [vmem:[%s3 + $0x8] sm:$0xff] %vm874, %v963
    %980 = vst.msk [vmem:[%s3 + $0x10] sm:$0xff] %vm874, %v964
    %981 = vst.msk [vmem:[%s3 + $0x18] sm:$0xff] %vm874, %v965
    %982 = vst.msk [vmem:[%s3 + $0x20] sm:$0xff] %vm874, %v966
    %983 = vst.msk [vmem:[%s3 + $0x28] sm:$0xff] %vm874, %v967
    %984 = vst.msk [vmem:[%s3 + $0x30] sm:$0xff] %vm874, %v968
    %985 = vst.msk [vmem:[%s3 + $0x38] sm:$0xff] %vm874, %v969
    %986 = vst.msk [vmem:[%s3 + $0x40] sm:$0xff] %vm874, %v970
    %987 = vst.msk [vmem:[%s3 + $0x48] sm:$0xff] %vm874, %v971
    %988 = vst.msk [vmem:[%s3 + $0x50] sm:$0xff] %vm874, %v972
    %989 = vst.msk [vmem:[%s3 + $0x58] sm:$0xff] %vm874, %v973
    %990 = vst.msk [vmem:[%s3 + $0x60] sm:$0xff] %vm874, %v974
    %991 = vst.msk [vmem:[%s3 + $0x68] sm:$0xff] %vm874, %v975
    %992 = vst.msk [vmem:[%s3 + $0x70] sm:$0xff] %vm874, %v976
    %993 = vst.msk [vmem:[%s3 + $0x78] sm:$0xff] %vm874, %v977
  $region21: #{conv_vae_forward.15} parent=0 // pred_fallthru
    _
  // Predicated region
  $region22: #{conv_vae_forward.15} parent=0 // pred_check
    _
  $region23: #{conv_vae_forward.15} parent=0 // pred_check_branch
    %995 = sbr.rel (0) target = $region25
  $region24: #{conv_vae_forward.15} parent=0 // pred_region
    _
  $region25: #{conv_vae_forward.15} parent=0 // pred_fallthru
    _
  // Predicated region
  $region26: #{conv_vae_forward.15} parent=0 // pred_check
    _
  $region27: #{conv_vae_forward.15} parent=0 // pred_check_branch
    %997 = sbr.rel (0) target = $region29
  $region28: #{conv_vae_forward.15} parent=0 // pred_region
    _
  $region29: #{conv_vae_forward.15} parent=0 // pred_fallthru
    _

</llo_original>
